<compile_context>
chip_gen: v6e
topology: v6e:2x2x1
jax: 0.10.0
libtpu: 0.0.40
codegen_flags: <defaults>
</compile_context>

<pallas_src>
import jax
import jax.numpy as jnp
from jax import lax
from jax.experimental import pallas as pl
from jax.experimental.pallas import tpu as pltpu

NEG_SLOPE = 0.2   # LeakyReLU slope
BN_EPS = 1e-5     # PyTorch BatchNorm default eps

NC, NDF, NZ, LF, DIM_OUT = 1, 8, 1024, (3, 4), 16


# ----------------------------------------------------------------------------
# Small helpers
# ----------------------------------------------------------------------------
def _leaky(x):
    return jnp.where(x >= 0.0, x, NEG_SLOPE * x)


def _pick_tile(m):
    """Largest tile that divides M while still giving >= 2 grid steps (v7x dual-TC)."""
    for t in (1024, 512, 256, 128, 64, 32, 16, 8):
        if m % t == 0 and m // t >= 2:
            return t
    return m


# ----------------------------------------------------------------------------
# Pallas kernels
# ----------------------------------------------------------------------------
def conv_lrelu_pallas(patches, w_mat, out_dtype=jnp.bfloat16):
    """(M,K)@(K,N) on the MXU (bf16 in / f32 acc) fused with LeakyReLU(0.2)."""
    M, K = patches.shape
    _, N = w_mat.shape
    tm = _pick_tile(M)

    def kernel(p_ref, w_ref, o_ref):
        acc = jnp.dot(p_ref[...], w_ref[...], preferred_element_type=jnp.float32)
        o_ref[...] = _leaky(acc).astype(o_ref.dtype)

    return pl.pallas_call(
        kernel,
        out_shape=jax.ShapeDtypeStruct((M, N), out_dtype),
        grid=(M // tm,),
        in_specs=[pl.BlockSpec((tm, K), lambda i: (i, 0)),
                  pl.BlockSpec((K, N), lambda i: (0, 0))],
        out_specs=pl.BlockSpec((tm, N), lambda i: (i, 0)),
        compiler_params=pltpu.CompilerParams(
            dimension_semantics=("parallel",)),
    )(patches, w_mat)


def conv_bn_lrelu_pallas(patches, w_mat, gamma_row, beta_row, out_dtype=jnp.bfloat16):
    """Fused Conv(im2col matmul) + training-mode BatchNorm (batch stats over all
    (N,H,W) rows, biased var) + LeakyReLU(0.2).  Whole layer fits in one block,
    so stats and normalization happen in the same kernel invocation (no extra
    launch, no HBM round trip of the conv output)."""
    M, K = patches.shape
    _, N = w_mat.shape

    def kernel(p_ref, w_ref, g_ref, b_ref, o_ref):
        acc = jnp.dot(p_ref[...], w_ref[...], preferred_element_type=jnp.float32)
        mean = jnp.mean(acc, axis=0, keepdims=True)
        var = jnp.mean((acc - mean) ** 2, axis=0, keepdims=True)      # biased var
        y = (acc - mean) * lax.rsqrt(var + BN_EPS) * g_ref[...] + b_ref[...]
        o_ref[...] = _leaky(y).astype(o_ref.dtype)

    return pl.pallas_call(
        kernel,
        out_shape=jax.ShapeDtypeStruct((M, N), out_dtype),
        grid=(1,),
        in_specs=[pl.BlockSpec((M, K), lambda i: (0, 0)),
                  pl.BlockSpec((K, N), lambda i: (0, 0)),
                  pl.BlockSpec((1, N), lambda i: (0, 0)),
                  pl.BlockSpec((1, N), lambda i: (0, 0))],
        out_specs=pl.BlockSpec((M, N), lambda i: (0, 0)),
    )(patches, w_mat, gamma_row, beta_row)


def tail_pallas(h4, w5_mat, gamma_row, beta_row, w_heads, b_heads):
    """Fused tail: conv5 (1x1 output -> plain matmul) + BatchNorm1d(1024) +
    LeakyReLU + merged fc_mu/fc_logsigma matmul (+bias).  Output is (B, 2*dim_out)."""
    B, K = h4.shape
    _, NZc = w5_mat.shape
    _, NO = w_heads.shape

    def kernel(h_ref, w5_ref, g_ref, b_ref, wh_ref, bh_ref, o_ref):
        h = jnp.dot(h_ref[...], w5_ref[...], preferred_element_type=jnp.float32)   # (B, nz) f32
        mean = jnp.mean(h, axis=0, keepdims=True)
        var = jnp.mean((h - mean) ** 2, axis=0, keepdims=True)                     # biased var
        y = (h - mean) * lax.rsqrt(var + BN_EPS) * g_ref[...] + b_ref[...]
        y = _leaky(y)                                                              # f32 VPU math
        out = jnp.dot(y.astype(jnp.bfloat16), wh_ref[...],
                      preferred_element_type=jnp.float32) + bh_ref[...]
        o_ref[...] = out

    return pl.pallas_call(
        kernel,
        out_shape=jax.ShapeDtypeStruct((B, NO), jnp.float32),
        grid=(1,),
        in_specs=[pl.BlockSpec((B, K), lambda i: (0, 0)),
                  pl.BlockSpec((K, NZc), lambda i: (0, 0)),
                  pl.BlockSpec((1, NZc), lambda i: (0, 0)),
                  pl.BlockSpec((1, NZc), lambda i: (0, 0)),
                  pl.BlockSpec((NZc, NO), lambda i: (0, 0)),
                  pl.BlockSpec((1, NO), lambda i: (0, 0))],
        out_specs=pl.BlockSpec((B, NO), lambda i: (0, 0)),
    )(h4, w5_mat, gamma_row, beta_row, w_heads, b_heads)


# ----------------------------------------------------------------------------
# im2col glue (XLA; patch tensors here are < 0.3 MB each)
# ----------------------------------------------------------------------------
def im2col(x_nhwc, kh, kw, sh, sw, ph, pw):
    B, H, W, C = x_nhwc.shape
    OH = (H + 2 * ph - kh) // sh + 1
    OW = (W + 2 * pw - kw) // sw + 1
    xp = jnp.pad(x_nhwc, ((0, 0), (ph, ph), (pw, pw), (0, 0)))
    cols = [xp[:, i:i + sh * OH:sh, j:j + sw * OW:sw, :]
            for i in range(kh) for j in range(kw)]
    patches = jnp.concatenate(cols, axis=-1)          # (B, OH, OW, KH*KW*C), order (kh, kw, c)
    return patches.reshape(B * OH * OW, kh * kw * C), OH, OW


# ----------------------------------------------------------------------------
# Parameters (raw PyTorch-layout init, then packed once into MXU layouts)
# ----------------------------------------------------------------------------
def init_params(key):
    ks = jax.random.split(key, 9)

    def w(k, shape):
        fan_in = 1
        for d in shape[1:]:
            fan_in *= d
        return jax.random.normal(k, shape, jnp.float32) / jnp.sqrt(float(fan_in))

    p = {}
    p["w1"] = w(ks[0], (NDF, NC, 4, 4))
    p["w2"] = w(ks[1], (NDF * 2, NDF, 4, 4))
    p["g2"], p["b2"] = jnp.ones((1, NDF * 2)), jnp.zeros((1, NDF * 2))
    p["w3"] = w(ks[2], (NDF * 4, NDF * 2, 4, 4))
    p["g3"], p["b3"] = jnp.ones((1, NDF * 4)), jnp.zeros((1, NDF * 4))
    p["w4"] = w(ks[3], (NDF * 8, NDF * 4, 3, 4))
    p["g4"], p["b4"] = jnp.ones((1, NDF * 8)), jnp.zeros((1, NDF * 8))
    p["w5"] = w(ks[4], (NZ, NDF * 8, LF[0], LF[1]))
    p["g_bn1d"], p["b_bn1d"] = jnp.ones((1, NZ)), jnp.zeros((1, NZ))
    p["w_mu"] = w(ks[5], (DIM_OUT, NZ))
    p["b_mu"] = 0.01 * jax.random.normal(ks[6], (1, DIM_OUT), jnp.float32)
    p["w_ls"] = w(ks[7], (DIM_OUT, NZ))
    p["b_ls"] = 0.01 * jax.random.normal(ks[8], (1, DIM_OUT), jnp.float32)
    return p


def _fold_conv(w_oihw):
    """(Cout,Cin,KH,KW) -> (KH*KW*Cin, Cout) bf16, matching im2col (kh,kw,c) ordering."""
    cout, cin, kh, kw = w_oihw.shape
    return jnp.transpose(w_oihw, (2, 3, 1, 0)).reshape(kh * kw * cin, cout).astype(jnp.bfloat16)


def pack_params(p):
    """Pre-fold all weight layout transforms / bf16 casts once, outside the jitted forward."""
    q = {
        "w1m": _fold_conv(p["w1"]),
        "w2m": _fold_conv(p["w2"]), "g2": p["g2"], "b2": p["b2"],
        "w3m": _fold_conv(p["w3"]), "g3": p["g3"], "b3": p["b3"],
        "w4m": _fold_conv(p["w4"]), "g4": p["g4"], "b4": p["b4"],
        "w5m": _fold_conv(p["w5"]),
        "g_bn1d": p["g_bn1d"], "b_bn1d": p["b_bn1d"],
        # merge fc_mu / fc_logsigma into one (nz, 2*dim_out) head
        "wh": jnp.concatenate([p["w_mu"].T, p["w_ls"].T], axis=1).astype(jnp.bfloat16),
        "bh": jnp.concatenate([p["b_mu"], p["b_ls"]], axis=1),
    }
    return q


# ----------------------------------------------------------------------------
# Forward (mirrors LidarEncoder.forward, nz != 1, bn=True path)
# ----------------------------------------------------------------------------
def lidar_encoder_forward(params, x_nchw):
    x = jnp.transpose(x_nchw, (0, 2, 3, 1)).astype(jnp.bfloat16)   # NCHW -> NHWC, bf16
    B = x.shape[0]

    # --- self.main ---
    p, oh, ow = im2col(x, 4, 4, 2, 2, 1, 1)                        # conv1 + LReLU
    x = conv_lrelu_pallas(p, params["w1m"]).reshape(B, oh, ow, -1)
    p, oh, ow = im2col(x, 4, 4, 2, 2, 1, 1)                        # conv2 + BN2d + LReLU (fused)
    x = conv_bn_lrelu_pallas(p, params["w2m"], params["g2"], params["b2"]).reshape(B, oh, ow, -1)

    # --- self.main_ ---
    p, oh, ow = im2col(x, 4, 4, 2, 2, 1, 1)                        # conv3 + BN2d + LReLU (fused)
    x = conv_bn_lrelu_pallas(p, params["w3m"], params["g3"], params["b3"]).reshape(B, oh, ow, -1)
    p, oh, ow = im2col(x, 3, 4, 2, 2, 0, 1)                        # conv4 (3,4) + BN2d + LReLU (fused)
    x = conv_bn_lrelu_pallas(p, params["w4m"], params["g4"], params["b4"]).reshape(B, oh, ow, -1)

    # --- self.main__ + view + BN1d + LReLU + fc_mu/fc_logsigma, all in one kernel ---
    # conv5 kernel == remaining spatial map (3,4), stride 1, pad 0  ->  flatten (kh,kw,c) row-major
    h4 = x.reshape(B, -1)                                          # (B, 768) bf16
    out = tail_pallas(h4, params["w5m"], params["g_bn1d"], params["b_bn1d"],
                      params["wh"], params["bh"])                  # (B, 2*dim_out) f32
    return out[:, :DIM_OUT], out[:, DIM_OUT:]


if __name__ == "__main__":
    key = jax.random.PRNGKey(0)
    pkey, xkey = jax.random.split(key)
    params = pack_params(init_params(pkey))
    # PyTorch-convention NCHW input; spatial 64x64 so main/main_ shrink it to lf=(3,4).
    x = jax.random.normal(xkey, (2, NC, 64, 64), jnp.float32)
    mu, logsigma = jax.jit(lidar_encoder_forward)(params, x)
    jax.block_until_ready((mu, logsigma))
    assert mu.shape == (2, DIM_OUT) and logsigma.shape == (2, DIM_OUT)
    assert bool(jnp.all(jnp.isfinite(mu))) and bool(jnp.all(jnp.isfinite(logsigma)))
    print("KERNEL_OK")
</pallas_src>

<mosaic_0001>
module attributes {stable_mosaic.version = 11 : i64} {
  func.func @kernel(%arg0: i32, %arg1: memref<1024x16xbf16, #tpu.memory_space<vmem>>, %arg2: memref<16x8xbf16, #tpu.memory_space<vmem>>, %arg3: memref<1024x8xbf16, #tpu.memory_space<vmem>>) attributes {dimension_semantics = [#tpu.dimension_semantics<parallel>], iteration_bounds = array<i64: 2>, scalar_prefetch = 0 : i64, scratch_operands = 0 : i64, tpu.core_type = #tpu.core_type<tc>, window_params = [{transform_indices = @transform_0, window_bounds = array<i64: 1024, 16>}, {pipeline_mode = #tpu.pipeline_mode<synchronous>, transform_indices = @transform_1, window_bounds = array<i64: 16, 8>}, {transform_indices = @transform_2, window_bounds = array<i64: 1024, 8>}]} {
    %c0 = arith.constant 0 : index
    %c0_0 = arith.constant 0 : index
    %0 = vector.load %arg1[%c0, %c0_0] : memref<1024x16xbf16, #tpu.memory_space<vmem>>, vector<1024x16xbf16>
    %c0_1 = arith.constant 0 : index
    %c0_2 = arith.constant 0 : index
    %1 = vector.load %arg2[%c0_1, %c0_2] : memref<16x8xbf16, #tpu.memory_space<vmem>>, vector<16x8xbf16>
    %cst = arith.constant dense<0.000000e+00> : vector<1024x8xf32>
    %2 = tpu.matmul %0, %1, %cst {dimension_numbers = #tpu.dot_dimension_numbers<[1], [0], [0], [1], [0, 0, 1, 1], [], []>} : vector<1024x16xbf16>, vector<16x8xbf16>, vector<1024x8xf32> -> vector<1024x8xf32>
    %cst_3 = arith.constant 0.000000e+00 : f32
    %3 = vector.broadcast %cst_3 : f32 to vector<1024x8xf32>
    %4 = arith.cmpf oge, %2, %3 : vector<1024x8xf32>
    %cst_4 = arith.constant 2.000000e-01 : f32
    %5 = vector.broadcast %cst_4 : f32 to vector<1024x8xf32>
    %6 = arith.mulf %5, %2 : vector<1024x8xf32>
    %7 = arith.select %4, %2, %6 : vector<1024x8xi1>, vector<1024x8xf32>
    %8 = arith.truncf %7 : vector<1024x8xf32> to vector<1024x8xbf16>
    %c0_5 = arith.constant 0 : index
    %c0_6 = arith.constant 0 : index
    %9 = vector.load %arg3[%c0_5, %c0_6] : memref<1024x8xbf16, #tpu.memory_space<vmem>>, vector<1024x8xbf16>
    tpu.vector_store %arg3[%c0_5, %c0_6], %8 {strides = array<i32>} : memref<1024x8xbf16, #tpu.memory_space<vmem>>, vector<1024x8xbf16>,
    return
  }
  func.func @transform_0(%arg0: i32) -> (i32, i32) {
    %c0_i32 = arith.constant 0 : i32
    %c0_i32_0 = arith.constant 0 : i32
    return %arg0, %c0_i32 : i32, i32
  }
  func.func @transform_1(%arg0: i32) -> (i32, i32) {
    %c0_i32 = arith.constant 0 : i32
    %c0_i32_0 = arith.constant 0 : i32
    %c0_i32_1 = arith.constant 0 : i32
    return %c0_i32, %c0_i32_0 : i32, i32
  }
  func.func @transform_2(%arg0: i32) -> (i32, i32) {
    %c0_i32 = arith.constant 0 : i32
    %c0_i32_0 = arith.constant 0 : i32
    return %arg0, %c0_i32 : i32, i32
  }
}

module attributes {stable_mosaic.version = 11 : i64} {
  func.func @kernel(%arg0: i32, %arg1: memref<512x128xbf16, #tpu.memory_space<vmem>>, %arg2: memref<128x16xbf16, #tpu.memory_space<vmem>>, %arg3: memref<1x16xf32, #tpu.memory_space<vmem>>, %arg4: memref<1x16xf32, #tpu.memory_space<vmem>>, %arg5: memref<512x16xbf16, #tpu.memory_space<vmem>>) attributes {dimension_semantics = [#tpu.dimension_semantics<arbitrary>], iteration_bounds = array<i64: 1>, scalar_prefetch = 0 : i64, scratch_operands = 0 : i64, tpu.core_type = #tpu.core_type<tc>, window_params = [{pipeline_mode = #tpu.pipeline_mode<synchronous>, transform_indices = @transform_0, window_bounds = array<i64: 512, 128>}, {pipeline_mode = #tpu.pipeline_mode<synchronous>, transform_indices = @transform_1, window_bounds = array<i64: 128, 16>}, {pipeline_mode = #tpu.pipeline_mode<synchronous>, transform_indices = @transform_2, window_bounds = array<i64: 1, 16>}, {pipeline_mode = #tpu.pipeline_mode<synchronous>, transform_indices = @transform_3, window_bounds = array<i64: 1, 16>}, {pipeline_mode = #tpu.pipeline_mode<synchronous>, transform_indices = @transform_4, window_bounds = array<i64: 512, 16>}]} {
    %c0 = arith.constant 0 : index
    %c0_0 = arith.constant 0 : index
    %0 = vector.load %arg1[%c0, %c0_0] : memref<512x128xbf16, #tpu.memory_space<vmem>>, vector<512x128xbf16>
    %c0_1 = arith.constant 0 : index
    %c0_2 = arith.constant 0 : index
    %1 = vector.load %arg2[%c0_1, %c0_2] : memref<128x16xbf16, #tpu.memory_space<vmem>>, vector<128x16xbf16>
    %cst = arith.constant dense<0.000000e+00> : vector<512x16xf32>
    %2 = tpu.matmul %0, %1, %cst {dimension_numbers = #tpu.dot_dimension_numbers<[1], [0], [0], [1], [0, 0, 1, 1], [], []>} : vector<512x128xbf16>, vector<128x16xbf16>, vector<512x16xf32> -> vector<512x16xf32>
    %cst_3 = arith.constant dense<0.000000e+00> : vector<16xf32>
    %3 = vector.multi_reduction <add>, %2, %cst_3 [0] : vector<512x16xf32> to vector<16xf32>
    %4 = vector.shape_cast %3 : vector<16xf32> to vector<1x16xf32>
    %cst_4 = arith.constant 5.120000e+02 : f32
    %5 = vector.broadcast %cst_4 : f32 to vector<1x16xf32>
    %6 = arith.divf %4, %5 : vector<1x16xf32>
    %7 = vector.broadcast %6 : vector<1x16xf32> to vector<512x16xf32>
    %8 = arith.subf %2, %7 : vector<512x16xf32>
    %9 = arith.mulf %8, %8 : vector<512x16xf32>
    %cst_5 = arith.constant dense<0.000000e+00> : vector<16xf32>
    %10 = vector.multi_reduction <add>, %9, %cst_5 [0] : vector<512x16xf32> to vector<16xf32>
    %11 = vector.shape_cast %10 : vector<16xf32> to vector<1x16xf32>
    %cst_6 = arith.constant 5.120000e+02 : f32
    %12 = vector.broadcast %cst_6 : f32 to vector<1x16xf32>
    %13 = arith.divf %11, %12 : vector<1x16xf32>
    %14 = vector.broadcast %6 : vector<1x16xf32> to vector<512x16xf32>
    %15 = arith.subf %2, %14 : vector<512x16xf32>
    %cst_7 = arith.constant 9.99999974E-6 : f32
    %16 = vector.broadcast %cst_7 : f32 to vector<1x16xf32>
    %17 = arith.addf %13, %16 : vector<1x16xf32>
    %18 = math.rsqrt %17 : vector<1x16xf32>
    %19 = vector.broadcast %18 : vector<1x16xf32> to vector<512x16xf32>
    %20 = arith.mulf %15, %19 : vector<512x16xf32>
    %c0_8 = arith.constant 0 : index
    %c0_9 = arith.constant 0 : index
    %21 = vector.load %arg3[%c0_8, %c0_9] : memref<1x16xf32, #tpu.memory_space<vmem>>, vector<1x16xf32>
    %22 = vector.broadcast %21 : vector<1x16xf32> to vector<512x16xf32>
    %23 = arith.mulf %20, %22 : vector<512x16xf32>
    %c0_10 = arith.constant 0 : index
    %c0_11 = arith.constant 0 : index
    %24 = vector.load %arg4[%c0_10, %c0_11] : memref<1x16xf32, #tpu.memory_space<vmem>>, vector<1x16xf32>
    %25 = vector.broadcast %24 : vector<1x16xf32> to vector<512x16xf32>
    %26 = arith.addf %23, %25 : vector<512x16xf32>
    %cst_12 = arith.constant 0.000000e+00 : f32
    %27 = vector.broadcast %cst_12 : f32 to vector<512x16xf32>
    %28 = arith.cmpf oge, %26, %27 : vector<512x16xf32>
    %cst_13 = arith.constant 2.000000e-01 : f32
    %29 = vector.broadcast %cst_13 : f32 to vector<512x16xf32>
    %30 = arith.mulf %29, %26 : vector<512x16xf32>
    %31 = arith.select %28, %26, %30 : vector<512x16xi1>, vector<512x16xf32>
    %32 = arith.truncf %31 : vector<512x16xf32> to vector<512x16xbf16>
    %c0_14 = arith.constant 0 : index
    %c0_15 = arith.constant 0 : index
    %33 = vector.load %arg5[%c0_14, %c0_15] : memref<512x16xbf16, #tpu.memory_space<vmem>>, vector<512x16xbf16>
    tpu.vector_store %arg5[%c0_14, %c0_15], %32 {strides = array<i32>} : memref<512x16xbf16, #tpu.memory_space<vmem>>, vector<512x16xbf16>,
    return
  }
  func.func @transform_0(%arg0: i32) -> (i32, i32) {
    %c0_i32 = arith.constant 0 : i32
    %c0_i32_0 = arith.constant 0 : i32
    %c0_i32_1 = arith.constant 0 : i32
    return %c0_i32, %c0_i32_0 : i32, i32
  }
  func.func @transform_1(%arg0: i32) -> (i32, i32) {
    %c0_i32 = arith.constant 0 : i32
    %c0_i32_0 = arith.constant 0 : i32
    %c0_i32_1 = arith.constant 0 : i32
    return %c0_i32, %c0_i32_0 : i32, i32
  }
  func.func @transform_2(%arg0: i32) -> (i32, i32) {
    %c0_i32 = arith.constant 0 : i32
    %c0_i32_0 = arith.constant 0 : i32
    %c0_i32_1 = arith.constant 0 : i32
    return %c0_i32, %c0_i32_0 : i32, i32
  }
  func.func @transform_3(%arg0: i32) -> (i32, i32) {
    %c0_i32 = arith.constant 0 : i32
    %c0_i32_0 = arith.constant 0 : i32
    %c0_i32_1 = arith.constant 0 : i32
    return %c0_i32, %c0_i32_0 : i32, i32
  }
  func.func @transform_4(%arg0: i32) -> (i32, i32) {
    %c0_i32 = arith.constant 0 : i32
    %c0_i32_0 = arith.constant 0 : i32
    %c0_i32_1 = arith.constant 0 : i32
    return %c0_i32, %c0_i32_0 : i32, i32
  }
}

module attributes {stable_mosaic.version = 11 : i64} {
  func.func @kernel(%arg0: i32, %arg1: memref<128x256xbf16, #tpu.memory_space<vmem>>, %arg2: memref<256x32xbf16, #tpu.memory_space<vmem>>, %arg3: memref<1x32xf32, #tpu.memory_space<vmem>>, %arg4: memref<1x32xf32, #tpu.memory_space<vmem>>, %arg5: memref<128x32xbf16, #tpu.memory_space<vmem>>) attributes {dimension_semantics = [#tpu.dimension_semantics<arbitrary>], iteration_bounds = array<i64: 1>, scalar_prefetch = 0 : i64, scratch_operands = 0 : i64, tpu.core_type = #tpu.core_type<tc>, window_params = [{pipeline_mode = #tpu.pipeline_mode<synchronous>, transform_indices = @transform_0, window_bounds = array<i64: 128, 256>}, {pipeline_mode = #tpu.pipeline_mode<synchronous>, transform_indices = @transform_1, window_bounds = array<i64: 256, 32>}, {pipeline_mode = #tpu.pipeline_mode<synchronous>, transform_indices = @transform_2, window_bounds = array<i64: 1, 32>}, {pipeline_mode = #tpu.pipeline_mode<synchronous>, transform_indices = @transform_3, window_bounds = array<i64: 1, 32>}, {pipeline_mode = #tpu.pipeline_mode<synchronous>, transform_indices = @transform_4, window_bounds = array<i64: 128, 32>}]} {
    %c0 = arith.constant 0 : index
    %c0_0 = arith.constant 0 : index
    %0 = vector.load %arg1[%c0, %c0_0] : memref<128x256xbf16, #tpu.memory_space<vmem>>, vector<128x256xbf16>
    %c0_1 = arith.constant 0 : index
    %c0_2 = arith.constant 0 : index
    %1 = vector.load %arg2[%c0_1, %c0_2] : memref<256x32xbf16, #tpu.memory_space<vmem>>, vector<256x32xbf16>
    %cst = arith.constant dense<0.000000e+00> : vector<128x32xf32>
    %2 = tpu.matmul %0, %1, %cst {dimension_numbers = #tpu.dot_dimension_numbers<[1], [0], [0], [1], [0, 0, 1, 1], [], []>} : vector<128x256xbf16>, vector<256x32xbf16>, vector<128x32xf32> -> vector<128x32xf32>
    %cst_3 = arith.constant dense<0.000000e+00> : vector<32xf32>
    %3 = vector.multi_reduction <add>, %2, %cst_3 [0] : vector<128x32xf32> to vector<32xf32>
    %4 = vector.shape_cast %3 : vector<32xf32> to vector<1x32xf32>
    %cst_4 = arith.constant 1.280000e+02 : f32
    %5 = vector.broadcast %cst_4 : f32 to vector<1x32xf32>
    %6 = arith.divf %4, %5 : vector<1x32xf32>
    %7 = vector.broadcast %6 : vector<1x32xf32> to vector<128x32xf32>
    %8 = arith.subf %2, %7 : vector<128x32xf32>
    %9 = arith.mulf %8, %8 : vector<128x32xf32>
    %cst_5 = arith.constant dense<0.000000e+00> : vector<32xf32>
    %10 = vector.multi_reduction <add>, %9, %cst_5 [0] : vector<128x32xf32> to vector<32xf32>
    %11 = vector.shape_cast %10 : vector<32xf32> to vector<1x32xf32>
    %cst_6 = arith.constant 1.280000e+02 : f32
    %12 = vector.broadcast %cst_6 : f32 to vector<1x32xf32>
    %13 = arith.divf %11, %12 : vector<1x32xf32>
    %14 = vector.broadcast %6 : vector<1x32xf32> to vector<128x32xf32>
    %15 = arith.subf %2, %14 : vector<128x32xf32>
    %cst_7 = arith.constant 9.99999974E-6 : f32
    %16 = vector.broadcast %cst_7 : f32 to vector<1x32xf32>
    %17 = arith.addf %13, %16 : vector<1x32xf32>
    %18 = math.rsqrt %17 : vector<1x32xf32>
    %19 = vector.broadcast %18 : vector<1x32xf32> to vector<128x32xf32>
    %20 = arith.mulf %15, %19 : vector<128x32xf32>
    %c0_8 = arith.constant 0 : index
    %c0_9 = arith.constant 0 : index
    %21 = vector.load %arg3[%c0_8, %c0_9] : memref<1x32xf32, #tpu.memory_space<vmem>>, vector<1x32xf32>
    %22 = vector.broadcast %21 : vector<1x32xf32> to vector<128x32xf32>
    %23 = arith.mulf %20, %22 : vector<128x32xf32>
    %c0_10 = arith.constant 0 : index
    %c0_11 = arith.constant 0 : index
    %24 = vector.load %arg4[%c0_10, %c0_11] : memref<1x32xf32, #tpu.memory_space<vmem>>, vector<1x32xf32>
    %25 = vector.broadcast %24 : vector<1x32xf32> to vector<128x32xf32>
    %26 = arith.addf %23, %25 : vector<128x32xf32>
    %cst_12 = arith.constant 0.000000e+00 : f32
    %27 = vector.broadcast %cst_12 : f32 to vector<128x32xf32>
    %28 = arith.cmpf oge, %26, %27 : vector<128x32xf32>
    %cst_13 = arith.constant 2.000000e-01 : f32
    %29 = vector.broadcast %cst_13 : f32 to vector<128x32xf32>
    %30 = arith.mulf %29, %26 : vector<128x32xf32>
    %31 = arith.select %28, %26, %30 : vector<128x32xi1>, vector<128x32xf32>
    %32 = arith.truncf %31 : vector<128x32xf32> to vector<128x32xbf16>
    %c0_14 = arith.constant 0 : index
    %c0_15 = arith.constant 0 : index
    %33 = vector.load %arg5[%c0_14, %c0_15] : memref<128x32xbf16, #tpu.memory_space<vmem>>, vector<128x32xbf16>
    tpu.vector_store %arg5[%c0_14, %c0_15], %32 {strides = array<i32>} : memref<128x32xbf16, #tpu.memory_space<vmem>>, vector<128x32xbf16>,
    return
  }
  func.func @transform_0(%arg0: i32) -> (i32, i32) {
    %c0_i32 = arith.constant 0 : i32
    %c0_i32_0 = arith.constant 0 : i32
    %c0_i32_1 = arith.constant 0 : i32
    return %c0_i32, %c0_i32_0 : i32, i32
  }
  func.func @transform_1(%arg0: i32) -> (i32, i32) {
    %c0_i32 = arith.constant 0 : i32
    %c0_i32_0 = arith.constant 0 : i32
    %c0_i32_1 = arith.constant 0 : i32
    return %c0_i32, %c0_i32_0 : i32, i32
  }
  func.func @transform_2(%arg0: i32) -> (i32, i32) {
    %c0_i32 = arith.constant 0 : i32
    %c0_i32_0 = arith.constant 0 : i32
    %c0_i32_1 = arith.constant 0 : i32
    return %c0_i32, %c0_i32_0 : i32, i32
  }
  func.func @transform_3(%arg0: i32) -> (i32, i32) {
    %c0_i32 = arith.constant 0 : i32
    %c0_i32_0 = arith.constant 0 : i32
    %c0_i32_1 = arith.constant 0 : i32
    return %c0_i32, %c0_i32_0 : i32, i32
  }
  func.func @transform_4(%arg0: i32) -> (i32, i32) {
    %c0_i32 = arith.constant 0 : i32
    %c0_i32_0 = arith.constant 0 : i32
    %c0_i32_1 = arith.constant 0 : i32
    return %c0_i32, %c0_i32_0 : i32, i32
  }
}

module attributes {stable_mosaic.version = 11 : i64} {
  func.func @kernel(%arg0: i32, %arg1: memref<24x384xbf16, #tpu.memory_space<vmem>>, %arg2: memref<384x64xbf16, #tpu.memory_space<vmem>>, %arg3: memref<1x64xf32, #tpu.memory_space<vmem>>, %arg4: memref<1x64xf32, #tpu.memory_space<vmem>>, %arg5: memref<24x64xbf16, #tpu.memory_space<vmem>>) attributes {dimension_semantics = [#tpu.dimension_semantics<arbitrary>], iteration_bounds = array<i64: 1>, scalar_prefetch = 0 : i64, scratch_operands = 0 : i64, tpu.core_type = #tpu.core_type<tc>, window_params = [{pipeline_mode = #tpu.pipeline_mode<synchronous>, transform_indices = @transform_0, window_bounds = array<i64: 24, 384>}, {pipeline_mode = #tpu.pipeline_mode<synchronous>, transform_indices = @transform_1, window_bounds = array<i64: 384, 64>}, {pipeline_mode = #tpu.pipeline_mode<synchronous>, transform_indices = @transform_2, window_bounds = array<i64: 1, 64>}, {pipeline_mode = #tpu.pipeline_mode<synchronous>, transform_indices = @transform_3, window_bounds = array<i64: 1, 64>}, {pipeline_mode = #tpu.pipeline_mode<synchronous>, transform_indices = @transform_4, window_bounds = array<i64: 24, 64>}]} {
    %c0 = arith.constant 0 : index
    %c0_0 = arith.constant 0 : index
    %0 = vector.load %arg1[%c0, %c0_0] : memref<24x384xbf16, #tpu.memory_space<vmem>>, vector<24x384xbf16>
    %c0_1 = arith.constant 0 : index
    %c0_2 = arith.constant 0 : index
    %1 = vector.load %arg2[%c0_1, %c0_2] : memref<384x64xbf16, #tpu.memory_space<vmem>>, vector<384x64xbf16>
    %cst = arith.constant dense<0.000000e+00> : vector<24x64xf32>
    %2 = tpu.matmul %0, %1, %cst {dimension_numbers = #tpu.dot_dimension_numbers<[1], [0], [0], [1], [0, 0, 1, 1], [], []>} : vector<24x384xbf16>, vector<384x64xbf16>, vector<24x64xf32> -> vector<24x64xf32>
    %cst_3 = arith.constant dense<0.000000e+00> : vector<64xf32>
    %3 = vector.multi_reduction <add>, %2, %cst_3 [0] : vector<24x64xf32> to vector<64xf32>
    %4 = vector.shape_cast %3 : vector<64xf32> to vector<1x64xf32>
    %cst_4 = arith.constant 2.400000e+01 : f32
    %5 = vector.broadcast %cst_4 : f32 to vector<1x64xf32>
    %6 = arith.divf %4, %5 : vector<1x64xf32>
    %7 = vector.broadcast %6 : vector<1x64xf32> to vector<24x64xf32>
    %8 = arith.subf %2, %7 : vector<24x64xf32>
    %9 = arith.mulf %8, %8 : vector<24x64xf32>
    %cst_5 = arith.constant dense<0.000000e+00> : vector<64xf32>
    %10 = vector.multi_reduction <add>, %9, %cst_5 [0] : vector<24x64xf32> to vector<64xf32>
    %11 = vector.shape_cast %10 : vector<64xf32> to vector<1x64xf32>
    %cst_6 = arith.constant 2.400000e+01 : f32
    %12 = vector.broadcast %cst_6 : f32 to vector<1x64xf32>
    %13 = arith.divf %11, %12 : vector<1x64xf32>
    %14 = vector.broadcast %6 : vector<1x64xf32> to vector<24x64xf32>
    %15 = arith.subf %2, %14 : vector<24x64xf32>
    %cst_7 = arith.constant 9.99999974E-6 : f32
    %16 = vector.broadcast %cst_7 : f32 to vector<1x64xf32>
    %17 = arith.addf %13, %16 : vector<1x64xf32>
    %18 = math.rsqrt %17 : vector<1x64xf32>
    %19 = vector.broadcast %18 : vector<1x64xf32> to vector<24x64xf32>
    %20 = arith.mulf %15, %19 : vector<24x64xf32>
    %c0_8 = arith.constant 0 : index
    %c0_9 = arith.constant 0 : index
    %21 = vector.load %arg3[%c0_8, %c0_9] : memref<1x64xf32, #tpu.memory_space<vmem>>, vector<1x64xf32>
    %22 = vector.broadcast %21 : vector<1x64xf32> to vector<24x64xf32>
    %23 = arith.mulf %20, %22 : vector<24x64xf32>
    %c0_10 = arith.constant 0 : index
    %c0_11 = arith.constant 0 : index
    %24 = vector.load %arg4[%c0_10, %c0_11] : memref<1x64xf32, #tpu.memory_space<vmem>>, vector<1x64xf32>
    %25 = vector.broadcast %24 : vector<1x64xf32> to vector<24x64xf32>
    %26 = arith.addf %23, %25 : vector<24x64xf32>
    %cst_12 = arith.constant 0.000000e+00 : f32
    %27 = vector.broadcast %cst_12 : f32 to vector<24x64xf32>
    %28 = arith.cmpf oge, %26, %27 : vector<24x64xf32>
    %cst_13 = arith.constant 2.000000e-01 : f32
    %29 = vector.broadcast %cst_13 : f32 to vector<24x64xf32>
    %30 = arith.mulf %29, %26 : vector<24x64xf32>
    %31 = arith.select %28, %26, %30 : vector<24x64xi1>, vector<24x64xf32>
    %32 = arith.truncf %31 : vector<24x64xf32> to vector<24x64xbf16>
    %c0_14 = arith.constant 0 : index
    %c0_15 = arith.constant 0 : index
    %33 = vector.load %arg5[%c0_14, %c0_15] : memref<24x64xbf16, #tpu.memory_space<vmem>>, vector<24x64xbf16>
    tpu.vector_store %arg5[%c0_14, %c0_15], %32 {strides = array<i32>} : memref<24x64xbf16, #tpu.memory_space<vmem>>, vector<24x64xbf16>,
    return
  }
  func.func @transform_0(%arg0: i32) -> (i32, i32) {
    %c0_i32 = arith.constant 0 : i32
    %c0_i32_0 = arith.constant 0 : i32
    %c0_i32_1 = arith.constant 0 : i32
    return %c0_i32, %c0_i32_0 : i32, i32
  }
  func.func @transform_1(%arg0: i32) -> (i32, i32) {
    %c0_i32 = arith.constant 0 : i32
    %c0_i32_0 = arith.constant 0 : i32
    %c0_i32_1 = arith.constant 0 : i32
    return %c0_i32, %c0_i32_0 : i32, i32
  }
  func.func @transform_2(%arg0: i32) -> (i32, i32) {
    %c0_i32 = arith.constant 0 : i32
    %c0_i32_0 = arith.constant 0 : i32
    %c0_i32_1 = arith.constant 0 : i32
    return %c0_i32, %c0_i32_0 : i32, i32
  }
  func.func @transform_3(%arg0: i32) -> (i32, i32) {
    %c0_i32 = arith.constant 0 : i32
    %c0_i32_0 = arith.constant 0 : i32
    %c0_i32_1 = arith.constant 0 : i32
    return %c0_i32, %c0_i32_0 : i32, i32
  }
  func.func @transform_4(%arg0: i32) -> (i32, i32) {
    %c0_i32 = arith.constant 0 : i32
    %c0_i32_0 = arith.constant 0 : i32
    %c0_i32_1 = arith.constant 0 : i32
    return %c0_i32, %c0_i32_0 : i32, i32
  }
}

module attributes {stable_mosaic.version = 11 : i64} {
  func.func @kernel(%arg0: i32, %arg1: memref<2x768xbf16, #tpu.memory_space<vmem>>, %arg2: memref<768x1024xbf16, #tpu.memory_space<vmem>>, %arg3: memref<1x1024xf32, #tpu.memory_space<vmem>>, %arg4: memref<1x1024xf32, #tpu.memory_space<vmem>>, %arg5: memref<1024x32xbf16, #tpu.memory_space<vmem>>, %arg6: memref<1x32xf32, #tpu.memory_space<vmem>>, %arg7: memref<2x32xf32, #tpu.memory_space<vmem>>) attributes {dimension_semantics = [#tpu.dimension_semantics<arbitrary>], iteration_bounds = array<i64: 1>, scalar_prefetch = 0 : i64, scratch_operands = 0 : i64, tpu.core_type = #tpu.core_type<tc>, window_params = [{pipeline_mode = #tpu.pipeline_mode<synchronous>, transform_indices = @transform_0, window_bounds = array<i64: 2, 768>}, {pipeline_mode = #tpu.pipeline_mode<synchronous>, transform_indices = @transform_1, window_bounds = array<i64: 768, 1024>}, {pipeline_mode = #tpu.pipeline_mode<synchronous>, transform_indices = @transform_2, window_bounds = array<i64: 1, 1024>}, {pipeline_mode = #tpu.pipeline_mode<synchronous>, transform_indices = @transform_3, window_bounds = array<i64: 1, 1024>}, {pipeline_mode = #tpu.pipeline_mode<synchronous>, transform_indices = @transform_4, window_bounds = array<i64: 1024, 32>}, {pipeline_mode = #tpu.pipeline_mode<synchronous>, transform_indices = @transform_5, window_bounds = array<i64: 1, 32>}, {pipeline_mode = #tpu.pipeline_mode<synchronous>, transform_indices = @transform_6, window_bounds = array<i64: 2, 32>}]} {
    %c0 = arith.constant 0 : index
    %c0_0 = arith.constant 0 : index
    %0 = vector.load %arg1[%c0, %c0_0] : memref<2x768xbf16, #tpu.memory_space<vmem>>, vector<2x768xbf16>
    %c0_1 = arith.constant 0 : index
    %c0_2 = arith.constant 0 : index
    %1 = vector.load %arg2[%c0_1, %c0_2] : memref<768x1024xbf16, #tpu.memory_space<vmem>>, vector<768x1024xbf16>
    %cst = arith.constant dense<0.000000e+00> : vector<2x1024xf32>
    %2 = tpu.matmul %0, %1, %cst {dimension_numbers = #tpu.dot_dimension_numbers<[1], [0], [0], [1], [0, 0, 1, 1], [], []>} : vector<2x768xbf16>, vector<768x1024xbf16>, vector<2x1024xf32> -> vector<2x1024xf32>
    %cst_3 = arith.constant dense<0.000000e+00> : vector<1024xf32>
    %3 = vector.multi_reduction <add>, %2, %cst_3 [0] : vector<2x1024xf32> to vector<1024xf32>
    %4 = vector.shape_cast %3 : vector<1024xf32> to vector<1x1024xf32>
    %cst_4 = arith.constant 2.000000e+00 : f32
    %5 = vector.broadcast %cst_4 : f32 to vector<1x1024xf32>
    %6 = arith.divf %4, %5 : vector<1x1024xf32>
    %7 = vector.broadcast %6 : vector<1x1024xf32> to vector<2x1024xf32>
    %8 = arith.subf %2, %7 : vector<2x1024xf32>
    %9 = arith.mulf %8, %8 : vector<2x1024xf32>
    %cst_5 = arith.constant dense<0.000000e+00> : vector<1024xf32>
    %10 = vector.multi_reduction <add>, %9, %cst_5 [0] : vector<2x1024xf32> to vector<1024xf32>
    %11 = vector.shape_cast %10 : vector<1024xf32> to vector<1x1024xf32>
    %cst_6 = arith.constant 2.000000e+00 : f32
    %12 = vector.broadcast %cst_6 : f32 to vector<1x1024xf32>
    %13 = arith.divf %11, %12 : vector<1x1024xf32>
    %14 = vector.broadcast %6 : vector<1x1024xf32> to vector<2x1024xf32>
    %15 = arith.subf %2, %14 : vector<2x1024xf32>
    %cst_7 = arith.constant 9.99999974E-6 : f32
    %16 = vector.broadcast %cst_7 : f32 to vector<1x1024xf32>
    %17 = arith.addf %13, %16 : vector<1x1024xf32>
    %18 = math.rsqrt %17 : vector<1x1024xf32>
    %19 = vector.broadcast %18 : vector<1x1024xf32> to vector<2x1024xf32>
    %20 = arith.mulf %15, %19 : vector<2x1024xf32>
    %c0_8 = arith.constant 0 : index
    %c0_9 = arith.constant 0 : index
    %21 = vector.load %arg3[%c0_8, %c0_9] : memref<1x1024xf32, #tpu.memory_space<vmem>>, vector<1x1024xf32>
    %22 = vector.broadcast %21 : vector<1x1024xf32> to vector<2x1024xf32>
    %23 = arith.mulf %20, %22 : vector<2x1024xf32>
    %c0_10 = arith.constant 0 : index
    %c0_11 = arith.constant 0 : index
    %24 = vector.load %arg4[%c0_10, %c0_11] : memref<1x1024xf32, #tpu.memory_space<vmem>>, vector<1x1024xf32>
    %25 = vector.broadcast %24 : vector<1x1024xf32> to vector<2x1024xf32>
    %26 = arith.addf %23, %25 : vector<2x1024xf32>
    %cst_12 = arith.constant 0.000000e+00 : f32
    %27 = vector.broadcast %cst_12 : f32 to vector<2x1024xf32>
    %28 = arith.cmpf oge, %26, %27 : vector<2x1024xf32>
    %cst_13 = arith.constant 2.000000e-01 : f32
    %29 = vector.broadcast %cst_13 : f32 to vector<2x1024xf32>
    %30 = arith.mulf %29, %26 : vector<2x1024xf32>
    %31 = arith.select %28, %26, %30 : vector<2x1024xi1>, vector<2x1024xf32>
    %32 = arith.truncf %31 : vector<2x1024xf32> to vector<2x1024xbf16>
    %c0_14 = arith.constant 0 : index
    %c0_15 = arith.constant 0 : index
    %33 = vector.load %arg5[%c0_14, %c0_15] : memref<1024x32xbf16, #tpu.memory_space<vmem>>, vector<1024x32xbf16>
    %cst_16 = arith.constant dense<0.000000e+00> : vector<2x32xf32>
    %34 = tpu.matmul %32, %33, %cst_16 {dimension_numbers = #tpu.dot_dimension_numbers<[1], [0], [0], [1], [0, 0, 1, 1], [], []>} : vector<2x1024xbf16>, vector<1024x32xbf16>, vector<2x32xf32> -> vector<2x32xf32>
    %c0_17 = arith.constant 0 : index
    %c0_18 = arith.constant 0 : index
    %35 = vector.load %arg6[%c0_17, %c0_18] : memref<1x32xf32, #tpu.memory_space<vmem>>, vector<1x32xf32>
    %36 = vector.broadcast %35 : vector<1x32xf32> to vector<2x32xf32>
    %37 = arith.addf %34, %36 : vector<2x32xf32>
    %c0_19 = arith.constant 0 : index
    %c0_20 = arith.constant 0 : index
    %38 = vector.load %arg7[%c0_19, %c0_20] : memref<2x32xf32, #tpu.memory_space<vmem>>, vector<2x32xf32>
    tpu.vector_store %arg7[%c0_19, %c0_20], %37 {strides = array<i32>} : memref<2x32xf32, #tpu.memory_space<vmem>>, vector<2x32xf32>,
    return
  }
  func.func @transform_0(%arg0: i32) -> (i32, i32) {
    %c0_i32 = arith.constant 0 : i32
    %c0_i32_0 = arith.constant 0 : i32
    %c0_i32_1 = arith.constant 0 : i32
    return %c0_i32, %c0_i32_0 : i32, i32
  }
  func.func @transform_1(%arg0: i32) -> (i32, i32) {
    %c0_i32 = arith.constant 0 : i32
    %c0_i32_0 = arith.constant 0 : i32
    %c0_i32_1 = arith.constant 0 : i32
    return %c0_i32, %c0_i32_0 : i32, i32
  }
  func.func @transform_2(%arg0: i32) -> (i32, i32) {
    %c0_i32 = arith.constant 0 : i32
    %c0_i32_0 = arith.constant 0 : i32
    %c0_i32_1 = arith.constant 0 : i32
    return %c0_i32, %c0_i32_0 : i32, i32
  }
  func.func @transform_3(%arg0: i32) -> (i32, i32) {
    %c0_i32 = arith.constant 0 : i32
    %c0_i32_0 = arith.constant 0 : i32
    %c0_i32_1 = arith.constant 0 : i32
    return %c0_i32, %c0_i32_0 : i32, i32
  }
  func.func @transform_4(%arg0: i32) -> (i32, i32) {
    %c0_i32 = arith.constant 0 : i32
    %c0_i32_0 = arith.constant 0 : i32
    %c0_i32_1 = arith.constant 0 : i32
    return %c0_i32, %c0_i32_0 : i32, i32
  }
  func.func @transform_5(%arg0: i32) -> (i32, i32) {
    %c0_i32 = arith.constant 0 : i32
    %c0_i32_0 = arith.constant 0 : i32
    %c0_i32_1 = arith.constant 0 : i32
    return %c0_i32, %c0_i32_0 : i32, i32
  }
  func.func @transform_6(%arg0: i32) -> (i32, i32) {
    %c0_i32 = arith.constant 0 : i32
    %c0_i32_0 = arith.constant 0 : i32
    %c0_i32_1 = arith.constant 0 : i32
    return %c0_i32, %c0_i32_0 : i32, i32
  }
}

</mosaic_0001>

<llo_original>
// kernel: lidar_encoder_forward.5
$region0: #{lidar_encoder_forward.5}
  #allocation0 [shape = 'u32[]', space=smem, size = 0x4, offset = 0x4, fixed_abs, tag = 'smem constant byte address 0x4 - core index']
  #allocation1 [shape = 'u32[144,128]{1,0:T(1,128)}', space=vmem, size = 0x12000, scoped, tag = 'internal scratch']
  %s0 = inlined_call_operand.vmem [shape: bf16[2048,16], index: 0, kind: input, shape index: {}]
  %s1 = inlined_call_operand.vmem [shape: bf16[16,8], index: 1, kind: input, shape index: {}]
  %s2 = inlined_call_operand.vmem [shape: bf16[2048,8], index: 2, kind: output, shape index: {}]
  %s3 = sld [smem:[#allocation0]]
  $region41: #{lidar_encoder_forward.5} parent=0
    _
  %s5 = ssub.s32 1, %s3
  %s6 = scalar_select 0, %s5, %s3
  loop: start=0, step=1, limit=4
  $region2: #{lidar_encoder_forward.5} parent=0 // loop_pre_header
    _
  $region3: #{lidar_encoder_forward.5} parent=0 // loop_header
    %s8 = sphi 0, %s12
    %p9 = scmp.ge.s32.totalorder %s8, 4
    %s18 = sphi 0, %s20
    %s21 = sphi 0, %s18
    %s22 = sphi 0, %s21
    %s38 = sphi 0, %s22
    %s42 = sphi 0, %s42
    %s44 = sphi 0, %s42
    %s45 = sphi 0, %s44
    %s59 = sphi 0, %s45
    %s65 = sphi 0, %s67
    %s68 = sphi 0, %s65
    %s69 = sphi 0, %s68
    %s85 = sphi 0, %s69
  $region4: #{lidar_encoder_forward.5} parent=0 // loop_header_branch
    %11 = sbr.rel (%p9) target = $region8
  $region5: #{lidar_encoder_forward.5} parent=0 // loop_body
    %s13 = ssub.s32 %s8, 1
    %s14 = ssub.s32 %s8, 2
    %s15 = sadd.s32 %s8, 1
    %s16 = ssub.s32 %s8, %s15
    %p17 = scmp.eq.s32.totalorder %s16, 0
    %s19 = sadd.s32 %s18, 1
    %s20 = scalar_select %p17, %s18, %s19
    %p23 = pneg %p17
    %p24 = scmp.eq.s32.totalorder %s8, 1
    %p25 = por %p23, %p24
    %p26 = scmp.ne.s32.totalorder %s18, %s21
    %p27 = scmp.eq.s32.totalorder %s8, 0
    %p28 = por %p26, %p27
    %p29 = scmp.ne.s32.totalorder %s18, %s21
    %p30 = scmp.eq.s32.totalorder %s13, 1
    %p31 = por %p29, %p30
    %p32 = scmp.ne.s32.totalorder %s21, %s22
    %p33 = scmp.eq.s32.totalorder %s13, 0
    %p34 = por %p32, %p33
    %p35 = scmp.ne.s32.totalorder %s21, %s22
    %p36 = scmp.eq.s32.totalorder %s14, 1
    %p37 = por %p35, %p36
    %p39 = scmp.ne.s32.totalorder %s22, %s38
    %p40 = scmp.eq.s32.totalorder %s14, 0
    %p41 = por %p39, %p40
    %s43 = sadd.s32 %s42, 1
    %p46 = scmp.eq.s32.totalorder %s8, 1
    %p47 = scmp.ne.s32.totalorder %s42, %s44
    %p48 = scmp.eq.s32.totalorder %s8, 0
    %p49 = por %p47, %p48
    %p50 = scmp.ne.s32.totalorder %s42, %s44
    %p51 = scmp.eq.s32.totalorder %s13, 1
    %p52 = por %p50, %p51
    %p53 = scmp.ne.s32.totalorder %s44, %s45
    %p54 = scmp.eq.s32.totalorder %s13, 0
    %p55 = por %p53, %p54
    %p56 = scmp.ne.s32.totalorder %s44, %s45
    %p57 = scmp.eq.s32.totalorder %s14, 1
    %p58 = por %p56, %p57
    %p60 = scmp.ne.s32.totalorder %s45, %s59
    %p61 = scmp.eq.s32.totalorder %s14, 0
    %p62 = por %p60, %p61
    %s63 = ssub.s32 %s8, %s15
    %p64 = scmp.eq.s32.totalorder %s63, 0
    %s66 = sadd.s32 %s65, 1
    %s67 = scalar_select %p64, %s65, %s66
    %p70 = pneg %p64
    %p71 = scmp.eq.s32.totalorder %s8, 1
    %p72 = por %p70, %p71
    %p73 = scmp.ne.s32.totalorder %s65, %s68
    %p74 = scmp.eq.s32.totalorder %s8, 0
    %p75 = por %p73, %p74
    %p76 = scmp.ne.s32.totalorder %s65, %s68
    %p77 = scmp.eq.s32.totalorder %s13, 1
    %p78 = por %p76, %p77
    %p79 = scmp.ne.s32.totalorder %s68, %s69
    %p80 = scmp.eq.s32.totalorder %s13, 0
    %p81 = por %p79, %p80
    %p82 = scmp.ne.s32.totalorder %s68, %s69
    %p83 = scmp.eq.s32.totalorder %s14, 1
    %p84 = por %p82, %p83
    %p86 = scmp.ne.s32.totalorder %s69, %s85
    %p87 = scmp.eq.s32.totalorder %s14, 0
    %p88 = por %p86, %p87
    %p89 = scmp.le.s32.totalorder 1, %s8
    %p90 = scmp.lt.s32.totalorder %s8, 3
    %p91 = pnand %p89, %p90
    %p92 = pneg %p91
    // Predicated region
    $region9: #{lidar_encoder_forward.5} parent=5 // pred_check
      _
    $region10: #{lidar_encoder_forward.5} parent=5 // pred_check_branch
      %94 = sbr.rel (%p91) target = $region12
    $region11: #{lidar_encoder_forward.5} parent=5 // pred_region
      %s95 = ssub.s32 %s8, 1
      // Predicated region
      $region13: #{lidar_encoder_forward.5} parent=11 // pred_check
        %p96 = pneg %p55
      $region14: #{lidar_encoder_forward.5} parent=11 // pred_check_branch
        %98 = sbr.rel (%p96) target = $region16
      $region15: #{lidar_encoder_forward.5} parent=11 // pred_region
        _
      $region16: #{lidar_encoder_forward.5} parent=11 // pred_fallthru
        _
    $region12: #{lidar_encoder_forward.5} parent=5 // pred_fallthru
      _
    %p99 = scmp.lt.s32.totalorder %s8, 2
    // Predicated region
    $region17: #{lidar_encoder_forward.5} parent=5 // pred_check
      %p100 = pneg %p99
    $region18: #{lidar_encoder_forward.5} parent=5 // pred_check_branch
      %102 = sbr.rel (%p100) target = $region20
    $region19: #{lidar_encoder_forward.5} parent=5 // pred_region
      // Predicated region
      $region21: #{lidar_encoder_forward.5} parent=19 // pred_check
        %p103 = pneg %p28
      $region22: #{lidar_encoder_forward.5} parent=19 // pred_check_branch
        %105 = sbr.rel (%p103) target = $region24
      $region23: #{lidar_encoder_forward.5} parent=19 // pred_region
        %s106 = smul.u32 128, %s8
        %p107 = scmp.lt.s32.totalorder %s106, 255
        %s108 = scalar_select %p107, %s106, 255
        %s109 = smul.addr %s108, 4
        %s110 = scalar_lea.vmem %s0, %s109
        %s111 = smul.u32 128, %s8
      $region24: #{lidar_encoder_forward.5} parent=19 // pred_fallthru
        _
    $region20: #{lidar_encoder_forward.5} parent=5 // pred_fallthru
      _
    %p112 = scmp.le.s32.totalorder 1, %s8
    %p113 = scmp.lt.s32.totalorder %s8, 3
    %p114 = pnand %p112, %p113
    %p115 = pneg %p114
    // Predicated region
    $region25: #{lidar_encoder_forward.5} parent=5 // pred_check
      _
    $region26: #{lidar_encoder_forward.5} parent=5 // pred_check_branch
      %117 = sbr.rel (%p114) target = $region28
    $region27: #{lidar_encoder_forward.5} parent=5 // pred_region
      %s118 = ssub.s32 %s8, 1
      %s119 = smul.u32 128, %s13
      %p120 = scmp.lt.s32.totalorder %s119, 255
      %s121 = scalar_select %p120, %s119, 255
      %s122 = smul.addr %s121, 4
      %s123 = scalar_lea.vmem %s0, %s122
      %p124 = pneg %p34
      %p125 = pneg %p31
      %p126 = pneg %p55
      %p127 = pneg %p52
      %p128 = pneg %p81
      %p129 = pneg %p78
      %s130 = smul.u32 128, %s13
      %p131 = scmp.lt.s32.totalorder %s130, 255
      %s132 = scalar_select %p131, %s130, 255
      %s133 = smul.addr %s132, 4
      %s134 = scalar_lea.vmem %s2, %s133
      %s135 = smul.u32 128, %s13
      %p136 = scmp.lt.s32.totalorder %s135, 255
      %s137 = scalar_select %p136, %s135, 255
      %s138 = smul.addr %s137, 4
      %s139 = scalar_lea.vmem %s0, %s138
      %s140 = smul.u32 128, %s13
      %s141 = smul.u32 128, %s13
      %p142 = scmp.lt.s32.totalorder %s141, 255
      %s143 = scalar_select %p142, %s141, 255
      %s144 = smul.addr %s143, 4
      %s145 = scalar_lea.vmem %s2, %s144
      %s146 = smul.u32 128, %s13
      %v148 = vld [vmem:[%s139] sm:$0xf]
      %v149 = vld [vmem:[%s139 + $0x4] sm:$0xf]
      %v150 = vld [vmem:[%s139 + $0x8] sm:$0xf]
      %v151 = vld [vmem:[%s139 + $0xc] sm:$0xf]
      %v152 = vld [vmem:[%s139 + $0x10] sm:$0xf]
      %v153 = vld [vmem:[%s139 + $0x14] sm:$0xf]
      %v154 = vld [vmem:[%s139 + $0x18] sm:$0xf]
      %v155 = vld [vmem:[%s139 + $0x1c] sm:$0xf]
      %v156 = vld [vmem:[%s139 + $0x20] sm:$0xf]
      %v157 = vld [vmem:[%s139 + $0x24] sm:$0xf]
      %v158 = vld [vmem:[%s139 + $0x28] sm:$0xf]
      %v159 = vld [vmem:[%s139 + $0x2c] sm:$0xf]
      %v160 = vld [vmem:[%s139 + $0x30] sm:$0xf]
      %v161 = vld [vmem:[%s139 + $0x34] sm:$0xf]
      %v162 = vld [vmem:[%s139 + $0x38] sm:$0xf]
      %v163 = vld [vmem:[%s139 + $0x3c] sm:$0xf]
      %v164 = vld [vmem:[%s139 + $0x40] sm:$0xf]
      %v165 = vld [vmem:[%s139 + $0x44] sm:$0xf]
      %v166 = vld [vmem:[%s139 + $0x48] sm:$0xf]
      %v167 = vld [vmem:[%s139 + $0x4c] sm:$0xf]
      %v168 = vld [vmem:[%s139 + $0x50] sm:$0xf]
      %v169 = vld [vmem:[%s139 + $0x54] sm:$0xf]
      %v170 = vld [vmem:[%s139 + $0x58] sm:$0xf]
      %v171 = vld [vmem:[%s139 + $0x5c] sm:$0xf]
      %v172 = vld [vmem:[%s139 + $0x60] sm:$0xf]
      %v173 = vld [vmem:[%s139 + $0x64] sm:$0xf]
      %v174 = vld [vmem:[%s139 + $0x68] sm:$0xf]
      %v175 = vld [vmem:[%s139 + $0x6c] sm:$0xf]
      %v176 = vld [vmem:[%s139 + $0x70] sm:$0xf]
      %v177 = vld [vmem:[%s139 + $0x74] sm:$0xf]
      %v178 = vld [vmem:[%s139 + $0x78] sm:$0xf]
      %v179 = vld [vmem:[%s139 + $0x7c] sm:$0xf]
      %v180 = vld [vmem:[%s139 + $0x80] sm:$0xf]
      %v181 = vld [vmem:[%s139 + $0x84] sm:$0xf]
      %v182 = vld [vmem:[%s139 + $0x88] sm:$0xf]
      %v183 = vld [vmem:[%s139 + $0x8c] sm:$0xf]
      %v184 = vld [vmem:[%s139 + $0x90] sm:$0xf]
      %v185 = vld [vmem:[%s139 + $0x94] sm:$0xf]
      %v186 = vld [vmem:[%s139 + $0x98] sm:$0xf]
      %v187 = vld [vmem:[%s139 + $0x9c] sm:$0xf]
      %v188 = vld [vmem:[%s139 + $0xa0] sm:$0xf]
      %v189 = vld [vmem:[%s139 + $0xa4] sm:$0xf]
      %v190 = vld [vmem:[%s139 + $0xa8] sm:$0xf]
      %v191 = vld [vmem:[%s139 + $0xac] sm:$0xf]
      %v192 = vld [vmem:[%s139 + $0xb0] sm:$0xf]
      %v193 = vld [vmem:[%s139 + $0xb4] sm:$0xf]
      %v194 = vld [vmem:[%s139 + $0xb8] sm:$0xf]
      %v195 = vld [vmem:[%s139 + $0xbc] sm:$0xf]
      %v196 = vld [vmem:[%s139 + $0xc0] sm:$0xf]
      %v197 = vld [vmem:[%s139 + $0xc4] sm:$0xf]
      %v198 = vld [vmem:[%s139 + $0xc8] sm:$0xf]
      %v199 = vld [vmem:[%s139 + $0xcc] sm:$0xf]
      %v200 = vld [vmem:[%s139 + $0xd0] sm:$0xf]
      %v201 = vld [vmem:[%s139 + $0xd4] sm:$0xf]
      %v202 = vld [vmem:[%s139 + $0xd8] sm:$0xf]
      %v203 = vld [vmem:[%s139 + $0xdc] sm:$0xf]
      %v204 = vld [vmem:[%s139 + $0xe0] sm:$0xf]
      %v205 = vld [vmem:[%s139 + $0xe4] sm:$0xf]
      %v206 = vld [vmem:[%s139 + $0xe8] sm:$0xf]
      %v207 = vld [vmem:[%s139 + $0xec] sm:$0xf]
      %v208 = vld [vmem:[%s139 + $0xf0] sm:$0xf]
      %v209 = vld [vmem:[%s139 + $0xf4] sm:$0xf]
      %v210 = vld [vmem:[%s139 + $0xf8] sm:$0xf]
      %v211 = vld [vmem:[%s139 + $0xfc] sm:$0xf]
      %v212 = vld [vmem:[%s139 + $0x100] sm:$0xf]
      %v213 = vld [vmem:[%s139 + $0x104] sm:$0xf]
      %v214 = vld [vmem:[%s139 + $0x108] sm:$0xf]
      %v215 = vld [vmem:[%s139 + $0x10c] sm:$0xf]
      %v216 = vld [vmem:[%s139 + $0x110] sm:$0xf]
      %v217 = vld [vmem:[%s139 + $0x114] sm:$0xf]
      %v218 = vld [vmem:[%s139 + $0x118] sm:$0xf]
      %v219 = vld [vmem:[%s139 + $0x11c] sm:$0xf]
      %v220 = vld [vmem:[%s139 + $0x120] sm:$0xf]
      %v221 = vld [vmem:[%s139 + $0x124] sm:$0xf]
      %v222 = vld [vmem:[%s139 + $0x128] sm:$0xf]
      %v223 = vld [vmem:[%s139 + $0x12c] sm:$0xf]
      %v224 = vld [vmem:[%s139 + $0x130] sm:$0xf]
      %v225 = vld [vmem:[%s139 + $0x134] sm:$0xf]
      %v226 = vld [vmem:[%s139 + $0x138] sm:$0xf]
      %v227 = vld [vmem:[%s139 + $0x13c] sm:$0xf]
      %v228 = vld [vmem:[%s139 + $0x140] sm:$0xf]
      %v229 = vld [vmem:[%s139 + $0x144] sm:$0xf]
      %v230 = vld [vmem:[%s139 + $0x148] sm:$0xf]
      %v231 = vld [vmem:[%s139 + $0x14c] sm:$0xf]
      %v232 = vld [vmem:[%s139 + $0x150] sm:$0xf]
      %v233 = vld [vmem:[%s139 + $0x154] sm:$0xf]
      %v234 = vld [vmem:[%s139 + $0x158] sm:$0xf]
      %v235 = vld [vmem:[%s139 + $0x15c] sm:$0xf]
      %v236 = vld [vmem:[%s139 + $0x160] sm:$0xf]
      %v237 = vld [vmem:[%s139 + $0x164] sm:$0xf]
      %v238 = vld [vmem:[%s139 + $0x168] sm:$0xf]
      %v239 = vld [vmem:[%s139 + $0x16c] sm:$0xf]
      %v240 = vld [vmem:[%s139 + $0x170] sm:$0xf]
      %v241 = vld [vmem:[%s139 + $0x174] sm:$0xf]
      %v242 = vld [vmem:[%s139 + $0x178] sm:$0xf]
      %v243 = vld [vmem:[%s139 + $0x17c] sm:$0xf]
      %v244 = vld [vmem:[%s139 + $0x180] sm:$0xf]
      %v245 = vld [vmem:[%s139 + $0x184] sm:$0xf]
      %v246 = vld [vmem:[%s139 + $0x188] sm:$0xf]
      %v247 = vld [vmem:[%s139 + $0x18c] sm:$0xf]
      %v248 = vld [vmem:[%s139 + $0x190] sm:$0xf]
      %v249 = vld [vmem:[%s139 + $0x194] sm:$0xf]
      %v250 = vld [vmem:[%s139 + $0x198] sm:$0xf]
      %v251 = vld [vmem:[%s139 + $0x19c] sm:$0xf]
      %v252 = vld [vmem:[%s139 + $0x1a0] sm:$0xf]
      %v253 = vld [vmem:[%s139 + $0x1a4] sm:$0xf]
      %v254 = vld [vmem:[%s139 + $0x1a8] sm:$0xf]
      %v255 = vld [vmem:[%s139 + $0x1ac] sm:$0xf]
      %v256 = vld [vmem:[%s139 + $0x1b0] sm:$0xf]
      %v257 = vld [vmem:[%s139 + $0x1b4] sm:$0xf]
      %v258 = vld [vmem:[%s139 + $0x1b8] sm:$0xf]
      %v259 = vld [vmem:[%s139 + $0x1bc] sm:$0xf]
      %v260 = vld [vmem:[%s139 + $0x1c0] sm:$0xf]
      %v261 = vld [vmem:[%s139 + $0x1c4] sm:$0xf]
      %v262 = vld [vmem:[%s139 + $0x1c8] sm:$0xf]
      %v263 = vld [vmem:[%s139 + $0x1cc] sm:$0xf]
      %v264 = vld [vmem:[%s139 + $0x1d0] sm:$0xf]
      %v265 = vld [vmem:[%s139 + $0x1d4] sm:$0xf]
      %v266 = vld [vmem:[%s139 + $0x1d8] sm:$0xf]
      %v267 = vld [vmem:[%s139 + $0x1dc] sm:$0xf]
      %v268 = vld [vmem:[%s139 + $0x1e0] sm:$0xf]
      %v269 = vld [vmem:[%s139 + $0x1e4] sm:$0xf]
      %v270 = vld [vmem:[%s139 + $0x1e8] sm:$0xf]
      %v271 = vld [vmem:[%s139 + $0x1ec] sm:$0xf]
      %v272 = vld [vmem:[%s139 + $0x1f0] sm:$0xf]
      %v273 = vld [vmem:[%s139 + $0x1f4] sm:$0xf]
      %v274 = vld [vmem:[%s139 + $0x1f8] sm:$0xf]
      %v275 = vld [vmem:[%s139 + $0x1fc] sm:$0xf]
      %v276 = vld [vmem:[%s1] sm:$0xf]
      %v277 = vld [vmem:[%s1 + $0x4] sm:$0xf]
      %v406 = vunpack.c.l.b16 %v148
      %v407 = vunpack.c.l.b16 %v149
      %v408 = vunpack.c.l.b16 %v150
      %v409 = vunpack.c.l.b16 %v151
      %v410 = vunpack.c.l.b16 %v152
      %v411 = vunpack.c.l.b16 %v153
      %v412 = vunpack.c.l.b16 %v154
      %v413 = vunpack.c.l.b16 %v155
      %v414 = vunpack.c.l.b16 %v156
      %v415 = vunpack.c.l.b16 %v157
      %v416 = vunpack.c.l.b16 %v158
      %v417 = vunpack.c.l.b16 %v159
      %v418 = vunpack.c.l.b16 %v160
      %v419 = vunpack.c.l.b16 %v161
      %v420 = vunpack.c.l.b16 %v162
      %v421 = vunpack.c.l.b16 %v163
      %v422 = vunpack.c.l.b16 %v164
      %v423 = vunpack.c.l.b16 %v165
      %v424 = vunpack.c.l.b16 %v166
      %v425 = vunpack.c.l.b16 %v167
      %v426 = vunpack.c.l.b16 %v168
      %v427 = vunpack.c.l.b16 %v169
      %v428 = vunpack.c.l.b16 %v170
      %v429 = vunpack.c.l.b16 %v171
      %v430 = vunpack.c.l.b16 %v172
      %v431 = vunpack.c.l.b16 %v173
      %v432 = vunpack.c.l.b16 %v174
      %v433 = vunpack.c.l.b16 %v175
      %v434 = vunpack.c.l.b16 %v176
      %v435 = vunpack.c.l.b16 %v177
      %v436 = vunpack.c.l.b16 %v178
      %v437 = vunpack.c.l.b16 %v179
      %v438 = vunpack.c.l.b16 %v180
      %v439 = vunpack.c.l.b16 %v181
      %v440 = vunpack.c.l.b16 %v182
      %v441 = vunpack.c.l.b16 %v183
      %v442 = vunpack.c.l.b16 %v184
      %v443 = vunpack.c.l.b16 %v185
      %v444 = vunpack.c.l.b16 %v186
      %v445 = vunpack.c.l.b16 %v187
      %v446 = vunpack.c.l.b16 %v188
      %v447 = vunpack.c.l.b16 %v189
      %v448 = vunpack.c.l.b16 %v190
      %v449 = vunpack.c.l.b16 %v191
      %v450 = vunpack.c.l.b16 %v192
      %v451 = vunpack.c.l.b16 %v193
      %v452 = vunpack.c.l.b16 %v194
      %v453 = vunpack.c.l.b16 %v195
      %v454 = vunpack.c.l.b16 %v196
      %v455 = vunpack.c.l.b16 %v197
      %v456 = vunpack.c.l.b16 %v198
      %v457 = vunpack.c.l.b16 %v199
      %v458 = vunpack.c.l.b16 %v200
      %v459 = vunpack.c.l.b16 %v201
      %v460 = vunpack.c.l.b16 %v202
      %v461 = vunpack.c.l.b16 %v203
      %v462 = vunpack.c.l.b16 %v204
      %v463 = vunpack.c.l.b16 %v205
      %v464 = vunpack.c.l.b16 %v206
      %v465 = vunpack.c.l.b16 %v207
      %v466 = vunpack.c.l.b16 %v208
      %v467 = vunpack.c.l.b16 %v209
      %v468 = vunpack.c.l.b16 %v210
      %v469 = vunpack.c.l.b16 %v211
      %v470 = vunpack.c.l.b16 %v212
      %v471 = vunpack.c.l.b16 %v213
      %v472 = vunpack.c.l.b16 %v214
      %v473 = vunpack.c.l.b16 %v215
      %v474 = vunpack.c.l.b16 %v216
      %v475 = vunpack.c.l.b16 %v217
      %v476 = vunpack.c.l.b16 %v218
      %v477 = vunpack.c.l.b16 %v219
      %v478 = vunpack.c.l.b16 %v220
      %v479 = vunpack.c.l.b16 %v221
      %v480 = vunpack.c.l.b16 %v222
      %v481 = vunpack.c.l.b16 %v223
      %v482 = vunpack.c.l.b16 %v224
      %v483 = vunpack.c.l.b16 %v225
      %v484 = vunpack.c.l.b16 %v226
      %v485 = vunpack.c.l.b16 %v227
      %v486 = vunpack.c.l.b16 %v228
      %v487 = vunpack.c.l.b16 %v229
      %v488 = vunpack.c.l.b16 %v230
      %v489 = vunpack.c.l.b16 %v231
      %v490 = vunpack.c.l.b16 %v232
      %v491 = vunpack.c.l.b16 %v233
      %v492 = vunpack.c.l.b16 %v234
      %v493 = vunpack.c.l.b16 %v235
      %v494 = vunpack.c.l.b16 %v236
      %v495 = vunpack.c.l.b16 %v237
      %v496 = vunpack.c.l.b16 %v238
      %v497 = vunpack.c.l.b16 %v239
      %v498 = vunpack.c.l.b16 %v240
      %v499 = vunpack.c.l.b16 %v241
      %v500 = vunpack.c.l.b16 %v242
      %v501 = vunpack.c.l.b16 %v243
      %v502 = vunpack.c.l.b16 %v244
      %v503 = vunpack.c.l.b16 %v245
      %v504 = vunpack.c.l.b16 %v246
      %v505 = vunpack.c.l.b16 %v247
      %v506 = vunpack.c.l.b16 %v248
      %v507 = vunpack.c.l.b16 %v249
      %v508 = vunpack.c.l.b16 %v250
      %v509 = vunpack.c.l.b16 %v251
      %v510 = vunpack.c.l.b16 %v252
      %v511 = vunpack.c.l.b16 %v253
      %v512 = vunpack.c.l.b16 %v254
      %v513 = vunpack.c.l.b16 %v255
      %v514 = vunpack.c.l.b16 %v256
      %v515 = vunpack.c.l.b16 %v257
      %v516 = vunpack.c.l.b16 %v258
      %v517 = vunpack.c.l.b16 %v259
      %v518 = vunpack.c.l.b16 %v260
      %v519 = vunpack.c.l.b16 %v261
      %v520 = vunpack.c.l.b16 %v262
      %v521 = vunpack.c.l.b16 %v263
      %v522 = vunpack.c.l.b16 %v264
      %v523 = vunpack.c.l.b16 %v265
      %v524 = vunpack.c.l.b16 %v266
      %v525 = vunpack.c.l.b16 %v267
      %v526 = vunpack.c.l.b16 %v268
      %v527 = vunpack.c.l.b16 %v269
      %v528 = vunpack.c.l.b16 %v270
      %v529 = vunpack.c.l.b16 %v271
      %v530 = vunpack.c.l.b16 %v272
      %v531 = vunpack.c.l.b16 %v273
      %v532 = vunpack.c.l.b16 %v274
      %v533 = vunpack.c.l.b16 %v275
      %v534 = vpack.c.b16 %v407, %v406
      %v535 = vpack.c.b16 %v409, %v408
      %v536 = vpack.c.b16 %v411, %v410
      %v537 = vpack.c.b16 %v413, %v412
      %v538 = vpack.c.b16 %v415, %v414
      %v539 = vpack.c.b16 %v417, %v416
      %v540 = vpack.c.b16 %v419, %v418
      %v541 = vpack.c.b16 %v421, %v420
      %v542 = vpack.c.b16 %v423, %v422
      %v543 = vpack.c.b16 %v425, %v424
      %v544 = vpack.c.b16 %v427, %v426
      %v545 = vpack.c.b16 %v429, %v428
      %v546 = vpack.c.b16 %v431, %v430
      %v547 = vpack.c.b16 %v433, %v432
      %v548 = vpack.c.b16 %v435, %v434
      %v549 = vpack.c.b16 %v437, %v436
      %v550 = vpack.c.b16 %v439, %v438
      %v551 = vpack.c.b16 %v441, %v440
      %v552 = vpack.c.b16 %v443, %v442
      %v553 = vpack.c.b16 %v445, %v444
      %v554 = vpack.c.b16 %v447, %v446
      %v555 = vpack.c.b16 %v449, %v448
      %v556 = vpack.c.b16 %v451, %v450
      %v557 = vpack.c.b16 %v453, %v452
      %v558 = vpack.c.b16 %v455, %v454
      %v559 = vpack.c.b16 %v457, %v456
      %v560 = vpack.c.b16 %v459, %v458
      %v561 = vpack.c.b16 %v461, %v460
      %v562 = vpack.c.b16 %v463, %v462
      %v563 = vpack.c.b16 %v465, %v464
      %v564 = vpack.c.b16 %v467, %v466
      %v565 = vpack.c.b16 %v469, %v468
      %v566 = vpack.c.b16 %v471, %v470
      %v567 = vpack.c.b16 %v473, %v472
      %v568 = vpack.c.b16 %v475, %v474
      %v569 = vpack.c.b16 %v477, %v476
      %v570 = vpack.c.b16 %v479, %v478
      %v571 = vpack.c.b16 %v481, %v480
      %v572 = vpack.c.b16 %v483, %v482
      %v573 = vpack.c.b16 %v485, %v484
      %v574 = vpack.c.b16 %v487, %v486
      %v575 = vpack.c.b16 %v489, %v488
      %v576 = vpack.c.b16 %v491, %v490
      %v577 = vpack.c.b16 %v493, %v492
      %v578 = vpack.c.b16 %v495, %v494
      %v579 = vpack.c.b16 %v497, %v496
      %v580 = vpack.c.b16 %v499, %v498
      %v581 = vpack.c.b16 %v501, %v500
      %v582 = vpack.c.b16 %v503, %v502
      %v583 = vpack.c.b16 %v505, %v504
      %v584 = vpack.c.b16 %v507, %v506
      %v585 = vpack.c.b16 %v509, %v508
      %v586 = vpack.c.b16 %v511, %v510
      %v587 = vpack.c.b16 %v513, %v512
      %v588 = vpack.c.b16 %v515, %v514
      %v589 = vpack.c.b16 %v517, %v516
      %v590 = vpack.c.b16 %v519, %v518
      %v591 = vpack.c.b16 %v521, %v520
      %v592 = vpack.c.b16 %v523, %v522
      %v593 = vpack.c.b16 %v525, %v524
      %v594 = vpack.c.b16 %v527, %v526
      %v595 = vpack.c.b16 %v529, %v528
      %v596 = vpack.c.b16 %v531, %v530
      %v597 = vpack.c.b16 %v533, %v532
      %v600 = vunpack.c.l.b16 %v276
      %v601 = vunpack.c.l.b16 %v277
      %v602 = vpack.c.b16 %v601, %v600
      %vm604 = vcmask 130048
      %v606 = vsel %vm604, %v534, 0
      %v609 = vsel %vm604, %v535, 0
      %v612 = vsel %vm604, %v536, 0
      %v615 = vsel %vm604, %v537, 0
      %v618 = vsel %vm604, %v538, 0
      %v621 = vsel %vm604, %v539, 0
      %v624 = vsel %vm604, %v540, 0
      %v627 = vsel %vm604, %v541, 0
      %v630 = vsel %vm604, %v542, 0
      %v633 = vsel %vm604, %v543, 0
      %v636 = vsel %vm604, %v544, 0
      %v639 = vsel %vm604, %v545, 0
      %v642 = vsel %vm604, %v546, 0
      %v645 = vsel %vm604, %v547, 0
      %v648 = vsel %vm604, %v548, 0
      %v651 = vsel %vm604, %v549, 0
      %v654 = vsel %vm604, %v550, 0
      %v657 = vsel %vm604, %v551, 0
      %v660 = vsel %vm604, %v552, 0
      %v663 = vsel %vm604, %v553, 0
      %v666 = vsel %vm604, %v554, 0
      %v669 = vsel %vm604, %v555, 0
      %v672 = vsel %vm604, %v556, 0
      %v675 = vsel %vm604, %v557, 0
      %v678 = vsel %vm604, %v558, 0
      %v681 = vsel %vm604, %v559, 0
      %v684 = vsel %vm604, %v560, 0
      %v687 = vsel %vm604, %v561, 0
      %v690 = vsel %vm604, %v562, 0
      %v693 = vsel %vm604, %v563, 0
      %v696 = vsel %vm604, %v564, 0
      %v699 = vsel %vm604, %v565, 0
      %v702 = vsel %vm604, %v566, 0
      %v705 = vsel %vm604, %v567, 0
      %v708 = vsel %vm604, %v568, 0
      %v711 = vsel %vm604, %v569, 0
      %v714 = vsel %vm604, %v570, 0
      %v717 = vsel %vm604, %v571, 0
      %v720 = vsel %vm604, %v572, 0
      %v723 = vsel %vm604, %v573, 0
      %v726 = vsel %vm604, %v574, 0
      %v729 = vsel %vm604, %v575, 0
      %v732 = vsel %vm604, %v576, 0
      %v735 = vsel %vm604, %v577, 0
      %v738 = vsel %vm604, %v578, 0
      %v741 = vsel %vm604, %v579, 0
      %v744 = vsel %vm604, %v580, 0
      %v747 = vsel %vm604, %v581, 0
      %v750 = vsel %vm604, %v582, 0
      %v753 = vsel %vm604, %v583, 0
      %v756 = vsel %vm604, %v584, 0
      %v759 = vsel %vm604, %v585, 0
      %v762 = vsel %vm604, %v586, 0
      %v765 = vsel %vm604, %v587, 0
      %v768 = vsel %vm604, %v588, 0
      %v771 = vsel %vm604, %v589, 0
      %v774 = vsel %vm604, %v590, 0
      %v777 = vsel %vm604, %v591, 0
      %v780 = vsel %vm604, %v592, 0
      %v783 = vsel %vm604, %v593, 0
      %v786 = vsel %vm604, %v594, 0
      %v789 = vsel %vm604, %v595, 0
      %v792 = vsel %vm604, %v596, 0
      %v795 = vsel %vm604, %v597, 0
      %797 = vmatprep.subr.bf16.mxu0 0
      %798 = vmatpush1.bf16.msra.mxu0 0
      %799 = vmatprep.subr.bf16.mxu0 0
      %800 = vmatpush1.bf16.msra.mxu0 0
      %801 = vmatprep.subr.bf16.mxu0 0
      %802 = vmatpush1.bf16.msra.mxu0 0
      %803 = vmatprep.subr.bf16.mxu0 0
      %804 = vmatpush1.bf16.msra.mxu0 0
      %805 = vmatprep.subr.bf16.mxu0 0
      %806 = vmatpush1.bf16.msra.mxu0 0
      %807 = vmatprep.subr.bf16.mxu0 0
      %808 = vmatpush1.bf16.msra.mxu0 0
      %809 = vmatprep.subr.bf16.mxu0 0
      %810 = vmatpush1.bf16.msra.mxu0 0
      %811 = vmatprep.subr.bf16.mxu0 0
      %812 = vmatpush1.bf16.msra.mxu0 %v602
      %813 = vmatprep.subr.bf16.mxu0 0
      %814 = vmatpush2.bf16.msra.mxu0 0
      %815 = vmatprep.subr.bf16.mxu0 0
      %816 = vmatpush2.bf16.msra.mxu0 0
      %817 = vmatprep.subr.bf16.mxu0 0
      %818 = vmatpush2.bf16.msra.mxu0 0
      %819 = vmatprep.subr.bf16.mxu0 0
      %820 = vmatpush2.bf16.msra.mxu0 0
      %821 = vmatprep.subr.bf16.mxu0 0
      %822 = vmatpush2.bf16.msra.mxu0 0
      %823 = vmatprep.subr.bf16.mxu0 0
      %824 = vmatpush2.bf16.msra.mxu0 0
      %825 = vmatprep.subr.bf16.mxu0 0
      %826 = vmatpush2.bf16.msra.mxu0 0
      %827 = vmatprep.subr.bf16.mxu0 0
      %828 = vmatpush2.bf16.msra.mxu0 0
      %829 = vmatprep.mubr.bf16.mxu0 0
      %830 = vmatmul.mubr.bf16.gmra.mxu0 %v606
      %v831 = vpop.f32.mrf.mxu0
      %v832 = vadd.f32 0.0, %v831
      %v833 = vpop.f32.mrf.mxu0
      %v834 = vpop.f32.mrf.mxu0
      %v835 = vadd.f32 0.0, %v834
      %v836 = vpop.f32.mrf.mxu0
      %837 = vmatprep.mubr.bf16.mxu0 0
      %838 = vmatmul.mubr.bf16.gmra.mxu0 %v609
      %v839 = vpop.f32.mrf.mxu0
      %v840 = vadd.f32 0.0, %v839
      %v841 = vpop.f32.mrf.mxu0
      %v842 = vpop.f32.mrf.mxu0
      %v843 = vadd.f32 0.0, %v842
      %v844 = vpop.f32.mrf.mxu0
      %845 = vmatprep.mubr.bf16.mxu0 0
      %846 = vmatmul.mubr.bf16.gmra.mxu0 %v612
      %v847 = vpop.f32.mrf.mxu0
      %v848 = vadd.f32 0.0, %v847
      %v849 = vpop.f32.mrf.mxu0
      %v850 = vpop.f32.mrf.mxu0
      %v851 = vadd.f32 0.0, %v850
      %v852 = vpop.f32.mrf.mxu0
      %853 = vmatprep.mubr.bf16.mxu0 0
      %854 = vmatmul.mubr.bf16.gmra.mxu0 %v615
      %v855 = vpop.f32.mrf.mxu0
      %v856 = vadd.f32 0.0, %v855
      %v857 = vpop.f32.mrf.mxu0
      %v858 = vpop.f32.mrf.mxu0
      %v859 = vadd.f32 0.0, %v858
      %v860 = vpop.f32.mrf.mxu0
      %861 = vmatprep.mubr.bf16.mxu0 0
      %862 = vmatmul.mubr.bf16.gmra.mxu0 %v618
      %v863 = vpop.f32.mrf.mxu0
      %v864 = vadd.f32 0.0, %v863
      %v865 = vpop.f32.mrf.mxu0
      %v866 = vpop.f32.mrf.mxu0
      %v867 = vadd.f32 0.0, %v866
      %v868 = vpop.f32.mrf.mxu0
      %869 = vmatprep.mubr.bf16.mxu0 0
      %870 = vmatmul.mubr.bf16.gmra.mxu0 %v621
      %v871 = vpop.f32.mrf.mxu0
      %v872 = vadd.f32 0.0, %v871
      %v873 = vpop.f32.mrf.mxu0
      %v874 = vpop.f32.mrf.mxu0
      %v875 = vadd.f32 0.0, %v874
      %v876 = vpop.f32.mrf.mxu0
      %877 = vmatprep.mubr.bf16.mxu0 0
      %878 = vmatmul.mubr.bf16.gmra.mxu0 %v624
      %v879 = vpop.f32.mrf.mxu0
      %v880 = vadd.f32 0.0, %v879
      %v881 = vpop.f32.mrf.mxu0
      %v882 = vpop.f32.mrf.mxu0
      %v883 = vadd.f32 0.0, %v882
      %v884 = vpop.f32.mrf.mxu0
      %885 = vmatprep.mubr.bf16.mxu0 0
      %886 = vmatmul.mubr.bf16.gmra.mxu0 %v627
      %v887 = vpop.f32.mrf.mxu0
      %v888 = vadd.f32 0.0, %v887
      %v889 = vpop.f32.mrf.mxu0
      %v890 = vpop.f32.mrf.mxu0
      %v891 = vadd.f32 0.0, %v890
      %v892 = vpop.f32.mrf.mxu0
      %893 = vmatprep.mubr.bf16.mxu0 0
      %894 = vmatmul.mubr.bf16.gmra.mxu0 %v630
      %v895 = vpop.f32.mrf.mxu0
      %v896 = vadd.f32 0.0, %v895
      %v897 = vpop.f32.mrf.mxu0
      %v898 = vpop.f32.mrf.mxu0
      %v899 = vadd.f32 0.0, %v898
      %v900 = vpop.f32.mrf.mxu0
      %901 = vmatprep.mubr.bf16.mxu0 0
      %902 = vmatmul.mubr.bf16.gmra.mxu0 %v633
      %v903 = vpop.f32.mrf.mxu0
      %v904 = vadd.f32 0.0, %v903
      %v905 = vpop.f32.mrf.mxu0
      %v906 = vpop.f32.mrf.mxu0
      %v907 = vadd.f32 0.0, %v906
      %v908 = vpop.f32.mrf.mxu0
      %909 = vmatprep.mubr.bf16.mxu0 0
      %910 = vmatmul.mubr.bf16.gmra.mxu0 %v636
      %v911 = vpop.f32.mrf.mxu0
      %v912 = vadd.f32 0.0, %v911
      %v913 = vpop.f32.mrf.mxu0
      %v914 = vpop.f32.mrf.mxu0
      %v915 = vadd.f32 0.0, %v914
      %v916 = vpop.f32.mrf.mxu0
      %917 = vmatprep.mubr.bf16.mxu0 0
      %918 = vmatmul.mubr.bf16.gmra.mxu0 %v639
      %v919 = vpop.f32.mrf.mxu0
      %v920 = vadd.f32 0.0, %v919
      %v921 = vpop.f32.mrf.mxu0
      %v922 = vpop.f32.mrf.mxu0
      %v923 = vadd.f32 0.0, %v922
      %v924 = vpop.f32.mrf.mxu0
      %925 = vmatprep.mubr.bf16.mxu0 0
      %926 = vmatmul.mubr.bf16.gmra.mxu0 %v642
      %v927 = vpop.f32.mrf.mxu0
      %v928 = vadd.f32 0.0, %v927
      %v929 = vpop.f32.mrf.mxu0
      %v930 = vpop.f32.mrf.mxu0
      %v931 = vadd.f32 0.0, %v930
      %v932 = vpop.f32.mrf.mxu0
      %933 = vmatprep.mubr.bf16.mxu0 0
      %934 = vmatmul.mubr.bf16.gmra.mxu0 %v645
      %v935 = vpop.f32.mrf.mxu0
      %v936 = vadd.f32 0.0, %v935
      %v937 = vpop.f32.mrf.mxu0
      %v938 = vpop.f32.mrf.mxu0
      %v939 = vadd.f32 0.0, %v938
      %v940 = vpop.f32.mrf.mxu0
      %941 = vmatprep.mubr.bf16.mxu0 0
      %942 = vmatmul.mubr.bf16.gmra.mxu0 %v648
      %v943 = vpop.f32.mrf.mxu0
      %v944 = vadd.f32 0.0, %v943
      %v945 = vpop.f32.mrf.mxu0
      %v946 = vpop.f32.mrf.mxu0
      %v947 = vadd.f32 0.0, %v946
      %v948 = vpop.f32.mrf.mxu0
      %949 = vmatprep.mubr.bf16.mxu0 0
      %950 = vmatmul.mubr.bf16.gmra.mxu0 %v651
      %v951 = vpop.f32.mrf.mxu0
      %v952 = vadd.f32 0.0, %v951
      %v953 = vpop.f32.mrf.mxu0
      %v954 = vpop.f32.mrf.mxu0
      %v955 = vadd.f32 0.0, %v954
      %v956 = vpop.f32.mrf.mxu0
      %957 = vmatprep.mubr.bf16.mxu0 0
      %958 = vmatmul.mubr.bf16.gmra.mxu0 %v654
      %v959 = vpop.f32.mrf.mxu0
      %v960 = vadd.f32 0.0, %v959
      %v961 = vpop.f32.mrf.mxu0
      %v962 = vpop.f32.mrf.mxu0
      %v963 = vadd.f32 0.0, %v962
      %v964 = vpop.f32.mrf.mxu0
      %965 = vmatprep.mubr.bf16.mxu0 0
      %966 = vmatmul.mubr.bf16.gmra.mxu0 %v657
      %v967 = vpop.f32.mrf.mxu0
      %v968 = vadd.f32 0.0, %v967
      %v969 = vpop.f32.mrf.mxu0
      %v970 = vpop.f32.mrf.mxu0
      %v971 = vadd.f32 0.0, %v970
      %v972 = vpop.f32.mrf.mxu0
      %973 = vmatprep.mubr.bf16.mxu0 0
      %974 = vmatmul.mubr.bf16.gmra.mxu0 %v660
      %v975 = vpop.f32.mrf.mxu0
      %v976 = vadd.f32 0.0, %v975
      %v977 = vpop.f32.mrf.mxu0
      %v978 = vpop.f32.mrf.mxu0
      %v979 = vadd.f32 0.0, %v978
      %v980 = vpop.f32.mrf.mxu0
      %981 = vmatprep.mubr.bf16.mxu0 0
      %982 = vmatmul.mubr.bf16.gmra.mxu0 %v663
      %v983 = vpop.f32.mrf.mxu0
      %v984 = vadd.f32 0.0, %v983
      %v985 = vpop.f32.mrf.mxu0
      %v986 = vpop.f32.mrf.mxu0
      %v987 = vadd.f32 0.0, %v986
      %v988 = vpop.f32.mrf.mxu0
      %989 = vmatprep.mubr.bf16.mxu0 0
      %990 = vmatmul.mubr.bf16.gmra.mxu0 %v666
      %v991 = vpop.f32.mrf.mxu0
      %v992 = vadd.f32 0.0, %v991
      %v993 = vpop.f32.mrf.mxu0
      %v994 = vpop.f32.mrf.mxu0
      %v995 = vadd.f32 0.0, %v994
      %v996 = vpop.f32.mrf.mxu0
      %997 = vmatprep.mubr.bf16.mxu0 0
      %998 = vmatmul.mubr.bf16.gmra.mxu0 %v669
      %v999 = vpop.f32.mrf.mxu0
      %v1000 = vadd.f32 0.0, %v999
      %v1001 = vpop.f32.mrf.mxu0
      %v1002 = vpop.f32.mrf.mxu0
      %v1003 = vadd.f32 0.0, %v1002
      %v1004 = vpop.f32.mrf.mxu0
      %1005 = vmatprep.mubr.bf16.mxu0 0
      %1006 = vmatmul.mubr.bf16.gmra.mxu0 %v672
      %v1007 = vpop.f32.mrf.mxu0
      %v1008 = vadd.f32 0.0, %v1007
      %v1009 = vpop.f32.mrf.mxu0
      %v1010 = vpop.f32.mrf.mxu0
      %v1011 = vadd.f32 0.0, %v1010
      %v1012 = vpop.f32.mrf.mxu0
      %1013 = vmatprep.mubr.bf16.mxu0 0
      %1014 = vmatmul.mubr.bf16.gmra.mxu0 %v675
      %v1015 = vpop.f32.mrf.mxu0
      %v1016 = vadd.f32 0.0, %v1015
      %v1017 = vpop.f32.mrf.mxu0
      %v1018 = vpop.f32.mrf.mxu0
      %v1019 = vadd.f32 0.0, %v1018
      %v1020 = vpop.f32.mrf.mxu0
      %1021 = vmatprep.mubr.bf16.mxu0 0
      %1022 = vmatmul.mubr.bf16.gmra.mxu0 %v678
      %v1023 = vpop.f32.mrf.mxu0
      %v1024 = vadd.f32 0.0, %v1023
      %v1025 = vpop.f32.mrf.mxu0
      %v1026 = vpop.f32.mrf.mxu0
      %v1027 = vadd.f32 0.0, %v1026
      %v1028 = vpop.f32.mrf.mxu0
      %1029 = vmatprep.mubr.bf16.mxu0 0
      %1030 = vmatmul.mubr.bf16.gmra.mxu0 %v681
      %v1031 = vpop.f32.mrf.mxu0
      %v1032 = vadd.f32 0.0, %v1031
      %v1033 = vpop.f32.mrf.mxu0
      %v1034 = vpop.f32.mrf.mxu0
      %v1035 = vadd.f32 0.0, %v1034
      %v1036 = vpop.f32.mrf.mxu0
      %1037 = vmatprep.mubr.bf16.mxu0 0
      %1038 = vmatmul.mubr.bf16.gmra.mxu0 %v684
      %v1039 = vpop.f32.mrf.mxu0
      %v1040 = vadd.f32 0.0, %v1039
      %v1041 = vpop.f32.mrf.mxu0
      %v1042 = vpop.f32.mrf.mxu0
      %v1043 = vadd.f32 0.0, %v1042
      %v1044 = vpop.f32.mrf.mxu0
      %1045 = vmatprep.mubr.bf16.mxu0 0
      %1046 = vmatmul.mubr.bf16.gmra.mxu0 %v687
      %v1047 = vpop.f32.mrf.mxu0
      %v1048 = vadd.f32 0.0, %v1047
      %v1049 = vpop.f32.mrf.mxu0
      %v1050 = vpop.f32.mrf.mxu0
      %v1051 = vadd.f32 0.0, %v1050
      %v1052 = vpop.f32.mrf.mxu0
      %1053 = vmatprep.mubr.bf16.mxu0 0
      %1054 = vmatmul.mubr.bf16.gmra.mxu0 %v690
      %v1055 = vpop.f32.mrf.mxu0
      %v1056 = vadd.f32 0.0, %v1055
      %v1057 = vpop.f32.mrf.mxu0
      %v1058 = vpop.f32.mrf.mxu0
      %v1059 = vadd.f32 0.0, %v1058
      %v1060 = vpop.f32.mrf.mxu0
      %1061 = vmatprep.mubr.bf16.mxu0 0
      %1062 = vmatmul.mubr.bf16.gmra.mxu0 %v693
      %v1063 = vpop.f32.mrf.mxu0
      %v1064 = vadd.f32 0.0, %v1063
      %v1065 = vpop.f32.mrf.mxu0
      %v1066 = vpop.f32.mrf.mxu0
      %v1067 = vadd.f32 0.0, %v1066
      %v1068 = vpop.f32.mrf.mxu0
      %1069 = vmatprep.mubr.bf16.mxu0 0
      %1070 = vmatmul.mubr.bf16.gmra.mxu0 %v696
      %v1071 = vpop.f32.mrf.mxu0
      %v1072 = vadd.f32 0.0, %v1071
      %v1073 = vpop.f32.mrf.mxu0
      %v1074 = vpop.f32.mrf.mxu0
      %v1075 = vadd.f32 0.0, %v1074
      %v1076 = vpop.f32.mrf.mxu0
      %1077 = vmatprep.mubr.bf16.mxu0 0
      %1078 = vmatmul.mubr.bf16.gmra.mxu0 %v699
      %v1079 = vpop.f32.mrf.mxu0
      %v1080 = vadd.f32 0.0, %v1079
      %v1081 = vpop.f32.mrf.mxu0
      %v1082 = vpop.f32.mrf.mxu0
      %v1083 = vadd.f32 0.0, %v1082
      %v1084 = vpop.f32.mrf.mxu0
      %1085 = vmatprep.mubr.bf16.mxu0 0
      %1086 = vmatmul.mubr.bf16.gmra.mxu0 %v702
      %v1087 = vpop.f32.mrf.mxu0
      %v1088 = vadd.f32 0.0, %v1087
      %v1089 = vpop.f32.mrf.mxu0
      %v1090 = vpop.f32.mrf.mxu0
      %v1091 = vadd.f32 0.0, %v1090
      %v1092 = vpop.f32.mrf.mxu0
      %1093 = vmatprep.mubr.bf16.mxu0 0
      %1094 = vmatmul.mubr.bf16.gmra.mxu0 %v705
      %v1095 = vpop.f32.mrf.mxu0
      %v1096 = vadd.f32 0.0, %v1095
      %v1097 = vpop.f32.mrf.mxu0
      %v1098 = vpop.f32.mrf.mxu0
      %v1099 = vadd.f32 0.0, %v1098
      %v1100 = vpop.f32.mrf.mxu0
      %1101 = vmatprep.mubr.bf16.mxu0 0
      %1102 = vmatmul.mubr.bf16.gmra.mxu0 %v708
      %v1103 = vpop.f32.mrf.mxu0
      %v1104 = vadd.f32 0.0, %v1103
      %v1105 = vpop.f32.mrf.mxu0
      %v1106 = vpop.f32.mrf.mxu0
      %v1107 = vadd.f32 0.0, %v1106
      %v1108 = vpop.f32.mrf.mxu0
      %1109 = vmatprep.mubr.bf16.mxu0 0
      %1110 = vmatmul.mubr.bf16.gmra.mxu0 %v711
      %v1111 = vpop.f32.mrf.mxu0
      %v1112 = vadd.f32 0.0, %v1111
      %v1113 = vpop.f32.mrf.mxu0
      %v1114 = vpop.f32.mrf.mxu0
      %v1115 = vadd.f32 0.0, %v1114
      %v1116 = vpop.f32.mrf.mxu0
      %1117 = vmatprep.mubr.bf16.mxu0 0
      %1118 = vmatmul.mubr.bf16.gmra.mxu0 %v714
      %v1119 = vpop.f32.mrf.mxu0
      %v1120 = vadd.f32 0.0, %v1119
      %v1121 = vpop.f32.mrf.mxu0
      %v1122 = vpop.f32.mrf.mxu0
      %v1123 = vadd.f32 0.0, %v1122
      %v1124 = vpop.f32.mrf.mxu0
      %1125 = vmatprep.mubr.bf16.mxu0 0
      %1126 = vmatmul.mubr.bf16.gmra.mxu0 %v717
      %v1127 = vpop.f32.mrf.mxu0
      %v1128 = vadd.f32 0.0, %v1127
      %v1129 = vpop.f32.mrf.mxu0
      %v1130 = vpop.f32.mrf.mxu0
      %v1131 = vadd.f32 0.0, %v1130
      %v1132 = vpop.f32.mrf.mxu0
      %1133 = vmatprep.mubr.bf16.mxu0 0
      %1134 = vmatmul.mubr.bf16.gmra.mxu0 %v720
      %v1135 = vpop.f32.mrf.mxu0
      %v1136 = vadd.f32 0.0, %v1135
      %v1137 = vpop.f32.mrf.mxu0
      %v1138 = vpop.f32.mrf.mxu0
      %v1139 = vadd.f32 0.0, %v1138
      %v1140 = vpop.f32.mrf.mxu0
      %1141 = vmatprep.mubr.bf16.mxu0 0
      %1142 = vmatmul.mubr.bf16.gmra.mxu0 %v723
      %v1143 = vpop.f32.mrf.mxu0
      %v1144 = vadd.f32 0.0, %v1143
      %v1145 = vpop.f32.mrf.mxu0
      %v1146 = vpop.f32.mrf.mxu0
      %v1147 = vadd.f32 0.0, %v1146
      %v1148 = vpop.f32.mrf.mxu0
      %1149 = vmatprep.mubr.bf16.mxu0 0
      %1150 = vmatmul.mubr.bf16.gmra.mxu0 %v726
      %v1151 = vpop.f32.mrf.mxu0
      %v1152 = vadd.f32 0.0, %v1151
      %v1153 = vpop.f32.mrf.mxu0
      %v1154 = vpop.f32.mrf.mxu0
      %v1155 = vadd.f32 0.0, %v1154
      %v1156 = vpop.f32.mrf.mxu0
      %1157 = vmatprep.mubr.bf16.mxu0 0
      %1158 = vmatmul.mubr.bf16.gmra.mxu0 %v729
      %v1159 = vpop.f32.mrf.mxu0
      %v1160 = vadd.f32 0.0, %v1159
      %v1161 = vpop.f32.mrf.mxu0
      %v1162 = vpop.f32.mrf.mxu0
      %v1163 = vadd.f32 0.0, %v1162
      %v1164 = vpop.f32.mrf.mxu0
      %1165 = vmatprep.mubr.bf16.mxu0 0
      %1166 = vmatmul.mubr.bf16.gmra.mxu0 %v732
      %v1167 = vpop.f32.mrf.mxu0
      %v1168 = vadd.f32 0.0, %v1167
      %v1169 = vpop.f32.mrf.mxu0
      %v1170 = vpop.f32.mrf.mxu0
      %v1171 = vadd.f32 0.0, %v1170
      %v1172 = vpop.f32.mrf.mxu0
      %1173 = vmatprep.mubr.bf16.mxu0 0
      %1174 = vmatmul.mubr.bf16.gmra.mxu0 %v735
      %v1175 = vpop.f32.mrf.mxu0
      %v1176 = vadd.f32 0.0, %v1175
      %v1177 = vpop.f32.mrf.mxu0
      %v1178 = vpop.f32.mrf.mxu0
      %v1179 = vadd.f32 0.0, %v1178
      %v1180 = vpop.f32.mrf.mxu0
      %1181 = vmatprep.mubr.bf16.mxu0 0
      %1182 = vmatmul.mubr.bf16.gmra.mxu0 %v738
      %v1183 = vpop.f32.mrf.mxu0
      %v1184 = vadd.f32 0.0, %v1183
      %v1185 = vpop.f32.mrf.mxu0
      %v1186 = vpop.f32.mrf.mxu0
      %v1187 = vadd.f32 0.0, %v1186
      %v1188 = vpop.f32.mrf.mxu0
      %1189 = vmatprep.mubr.bf16.mxu0 0
      %1190 = vmatmul.mubr.bf16.gmra.mxu0 %v741
      %v1191 = vpop.f32.mrf.mxu0
      %v1192 = vadd.f32 0.0, %v1191
      %v1193 = vpop.f32.mrf.mxu0
      %v1194 = vpop.f32.mrf.mxu0
      %v1195 = vadd.f32 0.0, %v1194
      %v1196 = vpop.f32.mrf.mxu0
      %1197 = vmatprep.mubr.bf16.mxu0 0
      %1198 = vmatmul.mubr.bf16.gmra.mxu0 %v744
      %v1199 = vpop.f32.mrf.mxu0
      %v1200 = vadd.f32 0.0, %v1199
      %v1201 = vpop.f32.mrf.mxu0
      %v1202 = vpop.f32.mrf.mxu0
      %v1203 = vadd.f32 0.0, %v1202
      %v1204 = vpop.f32.mrf.mxu0
      %1205 = vmatprep.mubr.bf16.mxu0 0
      %1206 = vmatmul.mubr.bf16.gmra.mxu0 %v747
      %v1207 = vpop.f32.mrf.mxu0
      %v1208 = vadd.f32 0.0, %v1207
      %v1209 = vpop.f32.mrf.mxu0
      %v1210 = vpop.f32.mrf.mxu0
      %v1211 = vadd.f32 0.0, %v1210
      %v1212 = vpop.f32.mrf.mxu0
      %1213 = vmatprep.mubr.bf16.mxu0 0
      %1214 = vmatmul.mubr.bf16.gmra.mxu0 %v750
      %v1215 = vpop.f32.mrf.mxu0
      %v1216 = vadd.f32 0.0, %v1215
      %v1217 = vpop.f32.mrf.mxu0
      %v1218 = vpop.f32.mrf.mxu0
      %v1219 = vadd.f32 0.0, %v1218
      %v1220 = vpop.f32.mrf.mxu0
      %1221 = vmatprep.mubr.bf16.mxu0 0
      %1222 = vmatmul.mubr.bf16.gmra.mxu0 %v753
      %v1223 = vpop.f32.mrf.mxu0
      %v1224 = vadd.f32 0.0, %v1223
      %v1225 = vpop.f32.mrf.mxu0
      %v1226 = vpop.f32.mrf.mxu0
      %v1227 = vadd.f32 0.0, %v1226
      %v1228 = vpop.f32.mrf.mxu0
      %1229 = vmatprep.mubr.bf16.mxu0 0
      %1230 = vmatmul.mubr.bf16.gmra.mxu0 %v756
      %v1231 = vpop.f32.mrf.mxu0
      %v1232 = vadd.f32 0.0, %v1231
      %v1233 = vpop.f32.mrf.mxu0
      %v1234 = vpop.f32.mrf.mxu0
      %v1235 = vadd.f32 0.0, %v1234
      %v1236 = vpop.f32.mrf.mxu0
      %1237 = vmatprep.mubr.bf16.mxu0 0
      %1238 = vmatmul.mubr.bf16.gmra.mxu0 %v759
      %v1239 = vpop.f32.mrf.mxu0
      %v1240 = vadd.f32 0.0, %v1239
      %v1241 = vpop.f32.mrf.mxu0
      %v1242 = vpop.f32.mrf.mxu0
      %v1243 = vadd.f32 0.0, %v1242
      %v1244 = vpop.f32.mrf.mxu0
      %1245 = vmatprep.mubr.bf16.mxu0 0
      %1246 = vmatmul.mubr.bf16.gmra.mxu0 %v762
      %v1247 = vpop.f32.mrf.mxu0
      %v1248 = vadd.f32 0.0, %v1247
      %v1249 = vpop.f32.mrf.mxu0
      %v1250 = vpop.f32.mrf.mxu0
      %v1251 = vadd.f32 0.0, %v1250
      %v1252 = vpop.f32.mrf.mxu0
      %1253 = vmatprep.mubr.bf16.mxu0 0
      %1254 = vmatmul.mubr.bf16.gmra.mxu0 %v765
      %v1255 = vpop.f32.mrf.mxu0
      %v1256 = vadd.f32 0.0, %v1255
      %v1257 = vpop.f32.mrf.mxu0
      %v1258 = vpop.f32.mrf.mxu0
      %v1259 = vadd.f32 0.0, %v1258
      %v1260 = vpop.f32.mrf.mxu0
      %1261 = vmatprep.mubr.bf16.mxu0 0
      %1262 = vmatmul.mubr.bf16.gmra.mxu0 %v768
      %v1263 = vpop.f32.mrf.mxu0
      %v1264 = vadd.f32 0.0, %v1263
      %v1265 = vpop.f32.mrf.mxu0
      %v1266 = vpop.f32.mrf.mxu0
      %v1267 = vadd.f32 0.0, %v1266
      %v1268 = vpop.f32.mrf.mxu0
      %1269 = vmatprep.mubr.bf16.mxu0 0
      %1270 = vmatmul.mubr.bf16.gmra.mxu0 %v771
      %v1271 = vpop.f32.mrf.mxu0
      %v1272 = vadd.f32 0.0, %v1271
      %v1273 = vpop.f32.mrf.mxu0
      %v1274 = vpop.f32.mrf.mxu0
      %v1275 = vadd.f32 0.0, %v1274
      %v1276 = vpop.f32.mrf.mxu0
      %1277 = vmatprep.mubr.bf16.mxu0 0
      %1278 = vmatmul.mubr.bf16.gmra.mxu0 %v774
      %v1279 = vpop.f32.mrf.mxu0
      %v1280 = vadd.f32 0.0, %v1279
      %v1281 = vpop.f32.mrf.mxu0
      %v1282 = vpop.f32.mrf.mxu0
      %v1283 = vadd.f32 0.0, %v1282
      %v1284 = vpop.f32.mrf.mxu0
      %1285 = vmatprep.mubr.bf16.mxu0 0
      %1286 = vmatmul.mubr.bf16.gmra.mxu0 %v777
      %v1287 = vpop.f32.mrf.mxu0
      %v1288 = vadd.f32 0.0, %v1287
      %v1289 = vpop.f32.mrf.mxu0
      %v1290 = vpop.f32.mrf.mxu0
      %v1291 = vadd.f32 0.0, %v1290
      %v1292 = vpop.f32.mrf.mxu0
      %1293 = vmatprep.mubr.bf16.mxu0 0
      %1294 = vmatmul.mubr.bf16.gmra.mxu0 %v780
      %v1295 = vpop.f32.mrf.mxu0
      %v1296 = vadd.f32 0.0, %v1295
      %v1297 = vpop.f32.mrf.mxu0
      %v1298 = vpop.f32.mrf.mxu0
      %v1299 = vadd.f32 0.0, %v1298
      %v1300 = vpop.f32.mrf.mxu0
      %1301 = vmatprep.mubr.bf16.mxu0 0
      %1302 = vmatmul.mubr.bf16.gmra.mxu0 %v783
      %v1303 = vpop.f32.mrf.mxu0
      %v1304 = vadd.f32 0.0, %v1303
      %v1305 = vpop.f32.mrf.mxu0
      %v1306 = vpop.f32.mrf.mxu0
      %v1307 = vadd.f32 0.0, %v1306
      %v1308 = vpop.f32.mrf.mxu0
      %1309 = vmatprep.mubr.bf16.mxu0 0
      %1310 = vmatmul.mubr.bf16.gmra.mxu0 %v786
      %v1311 = vpop.f32.mrf.mxu0
      %v1312 = vadd.f32 0.0, %v1311
      %v1313 = vpop.f32.mrf.mxu0
      %v1314 = vpop.f32.mrf.mxu0
      %v1315 = vadd.f32 0.0, %v1314
      %v1316 = vpop.f32.mrf.mxu0
      %1317 = vmatprep.mubr.bf16.mxu0 0
      %1318 = vmatmul.mubr.bf16.gmra.mxu0 %v789
      %v1319 = vpop.f32.mrf.mxu0
      %v1320 = vadd.f32 0.0, %v1319
      %v1321 = vpop.f32.mrf.mxu0
      %v1322 = vpop.f32.mrf.mxu0
      %v1323 = vadd.f32 0.0, %v1322
      %v1324 = vpop.f32.mrf.mxu0
      %1325 = vmatprep.mubr.bf16.mxu0 0
      %1326 = vmatmul.mubr.bf16.gmra.mxu0 %v792
      %v1327 = vpop.f32.mrf.mxu0
      %v1328 = vadd.f32 0.0, %v1327
      %v1329 = vpop.f32.mrf.mxu0
      %v1330 = vpop.f32.mrf.mxu0
      %v1331 = vadd.f32 0.0, %v1330
      %v1332 = vpop.f32.mrf.mxu0
      %1333 = vmatprep.mubr.bf16.mxu0 0
      %1334 = vmatmul.mubr.bf16.gmra.mxu0 %v795
      %v1335 = vpop.f32.mrf.mxu0
      %v1336 = vadd.f32 0.0, %v1335
      %v1337 = vpop.f32.mrf.mxu0
      %v1338 = vpop.f32.mrf.mxu0
      %v1339 = vadd.f32 0.0, %v1338
      %v1340 = vpop.f32.mrf.mxu0
      %1341 = vdwg.mxu0
      %vm1342 = vcmp.ge.f32.partialorder %v832, 0.0
      %vm1343 = vcmp.ge.f32.partialorder %v835, 0.0
      %vm1344 = vcmp.ge.f32.partialorder %v840, 0.0
      %vm1345 = vcmp.ge.f32.partialorder %v843, 0.0
      %vm1346 = vcmp.ge.f32.partialorder %v848, 0.0
      %vm1347 = vcmp.ge.f32.partialorder %v851, 0.0
      %vm1348 = vcmp.ge.f32.partialorder %v856, 0.0
      %vm1349 = vcmp.ge.f32.partialorder %v859, 0.0
      %vm1350 = vcmp.ge.f32.partialorder %v864, 0.0
      %vm1351 = vcmp.ge.f32.partialorder %v867, 0.0
      %vm1352 = vcmp.ge.f32.partialorder %v872, 0.0
      %vm1353 = vcmp.ge.f32.partialorder %v875, 0.0
      %vm1354 = vcmp.ge.f32.partialorder %v880, 0.0
      %vm1355 = vcmp.ge.f32.partialorder %v883, 0.0
      %vm1356 = vcmp.ge.f32.partialorder %v888, 0.0
      %vm1357 = vcmp.ge.f32.partialorder %v891, 0.0
      %vm1358 = vcmp.ge.f32.partialorder %v896, 0.0
      %vm1359 = vcmp.ge.f32.partialorder %v899, 0.0
      %vm1360 = vcmp.ge.f32.partialorder %v904, 0.0
      %vm1361 = vcmp.ge.f32.partialorder %v907, 0.0
      %vm1362 = vcmp.ge.f32.partialorder %v912, 0.0
      %vm1363 = vcmp.ge.f32.partialorder %v915, 0.0
      %vm1364 = vcmp.ge.f32.partialorder %v920, 0.0
      %vm1365 = vcmp.ge.f32.partialorder %v923, 0.0
      %vm1366 = vcmp.ge.f32.partialorder %v928, 0.0
      %vm1367 = vcmp.ge.f32.partialorder %v931, 0.0
      %vm1368 = vcmp.ge.f32.partialorder %v936, 0.0
      %vm1369 = vcmp.ge.f32.partialorder %v939, 0.0
      %vm1370 = vcmp.ge.f32.partialorder %v944, 0.0
      %vm1371 = vcmp.ge.f32.partialorder %v947, 0.0
      %vm1372 = vcmp.ge.f32.partialorder %v952, 0.0
      %vm1373 = vcmp.ge.f32.partialorder %v955, 0.0
      %vm1374 = vcmp.ge.f32.partialorder %v960, 0.0
      %vm1375 = vcmp.ge.f32.partialorder %v963, 0.0
      %vm1376 = vcmp.ge.f32.partialorder %v968, 0.0
      %vm1377 = vcmp.ge.f32.partialorder %v971, 0.0
      %vm1378 = vcmp.ge.f32.partialorder %v976, 0.0
      %vm1379 = vcmp.ge.f32.partialorder %v979, 0.0
      %vm1380 = vcmp.ge.f32.partialorder %v984, 0.0
      %vm1381 = vcmp.ge.f32.partialorder %v987, 0.0
      %vm1382 = vcmp.ge.f32.partialorder %v992, 0.0
      %vm1383 = vcmp.ge.f32.partialorder %v995, 0.0
      %vm1384 = vcmp.ge.f32.partialorder %v1000, 0.0
      %vm1385 = vcmp.ge.f32.partialorder %v1003, 0.0
      %vm1386 = vcmp.ge.f32.partialorder %v1008, 0.0
      %vm1387 = vcmp.ge.f32.partialorder %v1011, 0.0
      %vm1388 = vcmp.ge.f32.partialorder %v1016, 0.0
      %vm1389 = vcmp.ge.f32.partialorder %v1019, 0.0
      %vm1390 = vcmp.ge.f32.partialorder %v1024, 0.0
      %vm1391 = vcmp.ge.f32.partialorder %v1027, 0.0
      %vm1392 = vcmp.ge.f32.partialorder %v1032, 0.0
      %vm1393 = vcmp.ge.f32.partialorder %v1035, 0.0
      %vm1394 = vcmp.ge.f32.partialorder %v1040, 0.0
      %vm1395 = vcmp.ge.f32.partialorder %v1043, 0.0
      %vm1396 = vcmp.ge.f32.partialorder %v1048, 0.0
      %vm1397 = vcmp.ge.f32.partialorder %v1051, 0.0
      %vm1398 = vcmp.ge.f32.partialorder %v1056, 0.0
      %vm1399 = vcmp.ge.f32.partialorder %v1059, 0.0
      %vm1400 = vcmp.ge.f32.partialorder %v1064, 0.0
      %vm1401 = vcmp.ge.f32.partialorder %v1067, 0.0
      %vm1402 = vcmp.ge.f32.partialorder %v1072, 0.0
      %vm1403 = vcmp.ge.f32.partialorder %v1075, 0.0
      %vm1404 = vcmp.ge.f32.partialorder %v1080, 0.0
      %vm1405 = vcmp.ge.f32.partialorder %v1083, 0.0
      %vm1406 = vcmp.ge.f32.partialorder %v1088, 0.0
      %vm1407 = vcmp.ge.f32.partialorder %v1091, 0.0
      %vm1408 = vcmp.ge.f32.partialorder %v1096, 0.0
      %vm1409 = vcmp.ge.f32.partialorder %v1099, 0.0
      %vm1410 = vcmp.ge.f32.partialorder %v1104, 0.0
      %vm1411 = vcmp.ge.f32.partialorder %v1107, 0.0
      %vm1412 = vcmp.ge.f32.partialorder %v1112, 0.0
      %vm1413 = vcmp.ge.f32.partialorder %v1115, 0.0
      %vm1414 = vcmp.ge.f32.partialorder %v1120, 0.0
      %vm1415 = vcmp.ge.f32.partialorder %v1123, 0.0
      %vm1416 = vcmp.ge.f32.partialorder %v1128, 0.0
      %vm1417 = vcmp.ge.f32.partialorder %v1131, 0.0
      %vm1418 = vcmp.ge.f32.partialorder %v1136, 0.0
      %vm1419 = vcmp.ge.f32.partialorder %v1139, 0.0
      %vm1420 = vcmp.ge.f32.partialorder %v1144, 0.0
      %vm1421 = vcmp.ge.f32.partialorder %v1147, 0.0
      %vm1422 = vcmp.ge.f32.partialorder %v1152, 0.0
      %vm1423 = vcmp.ge.f32.partialorder %v1155, 0.0
      %vm1424 = vcmp.ge.f32.partialorder %v1160, 0.0
      %vm1425 = vcmp.ge.f32.partialorder %v1163, 0.0
      %vm1426 = vcmp.ge.f32.partialorder %v1168, 0.0
      %vm1427 = vcmp.ge.f32.partialorder %v1171, 0.0
      %vm1428 = vcmp.ge.f32.partialorder %v1176, 0.0
      %vm1429 = vcmp.ge.f32.partialorder %v1179, 0.0
      %vm1430 = vcmp.ge.f32.partialorder %v1184, 0.0
      %vm1431 = vcmp.ge.f32.partialorder %v1187, 0.0
      %vm1432 = vcmp.ge.f32.partialorder %v1192, 0.0
      %vm1433 = vcmp.ge.f32.partialorder %v1195, 0.0
      %vm1434 = vcmp.ge.f32.partialorder %v1200, 0.0
      %vm1435 = vcmp.ge.f32.partialorder %v1203, 0.0
      %vm1436 = vcmp.ge.f32.partialorder %v1208, 0.0
      %vm1437 = vcmp.ge.f32.partialorder %v1211, 0.0
      %vm1438 = vcmp.ge.f32.partialorder %v1216, 0.0
      %vm1439 = vcmp.ge.f32.partialorder %v1219, 0.0
      %vm1440 = vcmp.ge.f32.partialorder %v1224, 0.0
      %vm1441 = vcmp.ge.f32.partialorder %v1227, 0.0
      %vm1442 = vcmp.ge.f32.partialorder %v1232, 0.0
      %vm1443 = vcmp.ge.f32.partialorder %v1235, 0.0
      %vm1444 = vcmp.ge.f32.partialorder %v1240, 0.0
      %vm1445 = vcmp.ge.f32.partialorder %v1243, 0.0
      %vm1446 = vcmp.ge.f32.partialorder %v1248, 0.0
      %vm1447 = vcmp.ge.f32.partialorder %v1251, 0.0
      %vm1448 = vcmp.ge.f32.partialorder %v1256, 0.0
      %vm1449 = vcmp.ge.f32.partialorder %v1259, 0.0
      %vm1450 = vcmp.ge.f32.partialorder %v1264, 0.0
      %vm1451 = vcmp.ge.f32.partialorder %v1267, 0.0
      %vm1452 = vcmp.ge.f32.partialorder %v1272, 0.0
      %vm1453 = vcmp.ge.f32.partialorder %v1275, 0.0
      %vm1454 = vcmp.ge.f32.partialorder %v1280, 0.0
      %vm1455 = vcmp.ge.f32.partialorder %v1283, 0.0
      %vm1456 = vcmp.ge.f32.partialorder %v1288, 0.0
      %vm1457 = vcmp.ge.f32.partialorder %v1291, 0.0
      %vm1458 = vcmp.ge.f32.partialorder %v1296, 0.0
      %vm1459 = vcmp.ge.f32.partialorder %v1299, 0.0
      %vm1460 = vcmp.ge.f32.partialorder %v1304, 0.0
      %vm1461 = vcmp.ge.f32.partialorder %v1307, 0.0
      %vm1462 = vcmp.ge.f32.partialorder %v1312, 0.0
      %vm1463 = vcmp.ge.f32.partialorder %v1315, 0.0
      %vm1464 = vcmp.ge.f32.partialorder %v1320, 0.0
      %vm1465 = vcmp.ge.f32.partialorder %v1323, 0.0
      %vm1466 = vcmp.ge.f32.partialorder %v1328, 0.0
      %vm1467 = vcmp.ge.f32.partialorder %v1331, 0.0
      %vm1468 = vcmp.ge.f32.partialorder %v1336, 0.0
      %vm1469 = vcmp.ge.f32.partialorder %v1339, 0.0
      %v1470 = vmul.f32 %v832, 0.2
      %v1471 = vmul.f32 %v835, 0.2
      %v1472 = vmul.f32 %v840, 0.2
      %v1473 = vmul.f32 %v843, 0.2
      %v1474 = vmul.f32 %v848, 0.2
      %v1475 = vmul.f32 %v851, 0.2
      %v1476 = vmul.f32 %v856, 0.2
      %v1477 = vmul.f32 %v859, 0.2
      %v1478 = vmul.f32 %v864, 0.2
      %v1479 = vmul.f32 %v867, 0.2
      %v1480 = vmul.f32 %v872, 0.2
      %v1481 = vmul.f32 %v875, 0.2
      %v1482 = vmul.f32 %v880, 0.2
      %v1483 = vmul.f32 %v883, 0.2
      %v1484 = vmul.f32 %v888, 0.2
      %v1485 = vmul.f32 %v891, 0.2
      %v1486 = vmul.f32 %v896, 0.2
      %v1487 = vmul.f32 %v899, 0.2
      %v1488 = vmul.f32 %v904, 0.2
      %v1489 = vmul.f32 %v907, 0.2
      %v1490 = vmul.f32 %v912, 0.2
      %v1491 = vmul.f32 %v915, 0.2
      %v1492 = vmul.f32 %v920, 0.2
      %v1493 = vmul.f32 %v923, 0.2
      %v1494 = vmul.f32 %v928, 0.2
      %v1495 = vmul.f32 %v931, 0.2
      %v1496 = vmul.f32 %v936, 0.2
      %v1497 = vmul.f32 %v939, 0.2
      %v1498 = vmul.f32 %v944, 0.2
      %v1499 = vmul.f32 %v947, 0.2
      %v1500 = vmul.f32 %v952, 0.2
      %v1501 = vmul.f32 %v955, 0.2
      %v1502 = vmul.f32 %v960, 0.2
      %v1503 = vmul.f32 %v963, 0.2
      %v1504 = vmul.f32 %v968, 0.2
      %v1505 = vmul.f32 %v971, 0.2
      %v1506 = vmul.f32 %v976, 0.2
      %v1507 = vmul.f32 %v979, 0.2
      %v1508 = vmul.f32 %v984, 0.2
      %v1509 = vmul.f32 %v987, 0.2
      %v1510 = vmul.f32 %v992, 0.2
      %v1511 = vmul.f32 %v995, 0.2
      %v1512 = vmul.f32 %v1000, 0.2
      %v1513 = vmul.f32 %v1003, 0.2
      %v1514 = vmul.f32 %v1008, 0.2
      %v1515 = vmul.f32 %v1011, 0.2
      %v1516 = vmul.f32 %v1016, 0.2
      %v1517 = vmul.f32 %v1019, 0.2
      %v1518 = vmul.f32 %v1024, 0.2
      %v1519 = vmul.f32 %v1027, 0.2
      %v1520 = vmul.f32 %v1032, 0.2
      %v1521 = vmul.f32 %v1035, 0.2
      %v1522 = vmul.f32 %v1040, 0.2
      %v1523 = vmul.f32 %v1043, 0.2
      %v1524 = vmul.f32 %v1048, 0.2
      %v1525 = vmul.f32 %v1051, 0.2
      %v1526 = vmul.f32 %v1056, 0.2
      %v1527 = vmul.f32 %v1059, 0.2
      %v1528 = vmul.f32 %v1064, 0.2
      %v1529 = vmul.f32 %v1067, 0.2
      %v1530 = vmul.f32 %v1072, 0.2
      %v1531 = vmul.f32 %v1075, 0.2
      %v1532 = vmul.f32 %v1080, 0.2
      %v1533 = vmul.f32 %v1083, 0.2
      %v1534 = vmul.f32 %v1088, 0.2
      %v1535 = vmul.f32 %v1091, 0.2
      %v1536 = vmul.f32 %v1096, 0.2
      %v1537 = vmul.f32 %v1099, 0.2
      %v1538 = vmul.f32 %v1104, 0.2
      %v1539 = vmul.f32 %v1107, 0.2
      %v1540 = vmul.f32 %v1112, 0.2
      %v1541 = vmul.f32 %v1115, 0.2
      %v1542 = vmul.f32 %v1120, 0.2
      %v1543 = vmul.f32 %v1123, 0.2
      %v1544 = vmul.f32 %v1128, 0.2
      %v1545 = vmul.f32 %v1131, 0.2
      %v1546 = vmul.f32 %v1136, 0.2
      %v1547 = vmul.f32 %v1139, 0.2
      %v1548 = vmul.f32 %v1144, 0.2
      %v1549 = vmul.f32 %v1147, 0.2
      %v1550 = vmul.f32 %v1152, 0.2
      %v1551 = vmul.f32 %v1155, 0.2
      %v1552 = vmul.f32 %v1160, 0.2
      %v1553 = vmul.f32 %v1163, 0.2
      %v1554 = vmul.f32 %v1168, 0.2
      %v1555 = vmul.f32 %v1171, 0.2
      %v1556 = vmul.f32 %v1176, 0.2
      %v1557 = vmul.f32 %v1179, 0.2
      %v1558 = vmul.f32 %v1184, 0.2
      %v1559 = vmul.f32 %v1187, 0.2
      %v1560 = vmul.f32 %v1192, 0.2
      %v1561 = vmul.f32 %v1195, 0.2
      %v1562 = vmul.f32 %v1200, 0.2
      %v1563 = vmul.f32 %v1203, 0.2
      %v1564 = vmul.f32 %v1208, 0.2
      %v1565 = vmul.f32 %v1211, 0.2
      %v1566 = vmul.f32 %v1216, 0.2
      %v1567 = vmul.f32 %v1219, 0.2
      %v1568 = vmul.f32 %v1224, 0.2
      %v1569 = vmul.f32 %v1227, 0.2
      %v1570 = vmul.f32 %v1232, 0.2
      %v1571 = vmul.f32 %v1235, 0.2
      %v1572 = vmul.f32 %v1240, 0.2
      %v1573 = vmul.f32 %v1243, 0.2
      %v1574 = vmul.f32 %v1248, 0.2
      %v1575 = vmul.f32 %v1251, 0.2
      %v1576 = vmul.f32 %v1256, 0.2
      %v1577 = vmul.f32 %v1259, 0.2
      %v1578 = vmul.f32 %v1264, 0.2
      %v1579 = vmul.f32 %v1267, 0.2
      %v1580 = vmul.f32 %v1272, 0.2
      %v1581 = vmul.f32 %v1275, 0.2
      %v1582 = vmul.f32 %v1280, 0.2
      %v1583 = vmul.f32 %v1283, 0.2
      %v1584 = vmul.f32 %v1288, 0.2
      %v1585 = vmul.f32 %v1291, 0.2
      %v1586 = vmul.f32 %v1296, 0.2
      %v1587 = vmul.f32 %v1299, 0.2
      %v1588 = vmul.f32 %v1304, 0.2
      %v1589 = vmul.f32 %v1307, 0.2
      %v1590 = vmul.f32 %v1312, 0.2
      %v1591 = vmul.f32 %v1315, 0.2
      %v1592 = vmul.f32 %v1320, 0.2
      %v1593 = vmul.f32 %v1323, 0.2
      %v1594 = vmul.f32 %v1328, 0.2
      %v1595 = vmul.f32 %v1331, 0.2
      %v1596 = vmul.f32 %v1336, 0.2
      %v1597 = vmul.f32 %v1339, 0.2
      %v1598 = vsel %vm1342, %v832, %v1470
      %v1599 = vsel %vm1343, %v835, %v1471
      %v1600 = vsel %vm1344, %v840, %v1472
      %v1601 = vsel %vm1345, %v843, %v1473
      %v1602 = vsel %vm1346, %v848, %v1474
      %v1603 = vsel %vm1347, %v851, %v1475
      %v1604 = vsel %vm1348, %v856, %v1476
      %v1605 = vsel %vm1349, %v859, %v1477
      %v1606 = vsel %vm1350, %v864, %v1478
      %v1607 = vsel %vm1351, %v867, %v1479
      %v1608 = vsel %vm1352, %v872, %v1480
      %v1609 = vsel %vm1353, %v875, %v1481
      %v1610 = vsel %vm1354, %v880, %v1482
      %v1611 = vsel %vm1355, %v883, %v1483
      %v1612 = vsel %vm1356, %v888, %v1484
      %v1613 = vsel %vm1357, %v891, %v1485
      %v1614 = vsel %vm1358, %v896, %v1486
      %v1615 = vsel %vm1359, %v899, %v1487
      %v1616 = vsel %vm1360, %v904, %v1488
      %v1617 = vsel %vm1361, %v907, %v1489
      %v1618 = vsel %vm1362, %v912, %v1490
      %v1619 = vsel %vm1363, %v915, %v1491
      %v1620 = vsel %vm1364, %v920, %v1492
      %v1621 = vsel %vm1365, %v923, %v1493
      %v1622 = vsel %vm1366, %v928, %v1494
      %v1623 = vsel %vm1367, %v931, %v1495
      %v1624 = vsel %vm1368, %v936, %v1496
      %v1625 = vsel %vm1369, %v939, %v1497
      %v1626 = vsel %vm1370, %v944, %v1498
      %v1627 = vsel %vm1371, %v947, %v1499
      %v1628 = vsel %vm1372, %v952, %v1500
      %v1629 = vsel %vm1373, %v955, %v1501
      %v1630 = vsel %vm1374, %v960, %v1502
      %v1631 = vsel %vm1375, %v963, %v1503
      %v1632 = vsel %vm1376, %v968, %v1504
      %v1633 = vsel %vm1377, %v971, %v1505
      %v1634 = vsel %vm1378, %v976, %v1506
      %v1635 = vsel %vm1379, %v979, %v1507
      %v1636 = vsel %vm1380, %v984, %v1508
      %v1637 = vsel %vm1381, %v987, %v1509
      %v1638 = vsel %vm1382, %v992, %v1510
      %v1639 = vsel %vm1383, %v995, %v1511
      %v1640 = vsel %vm1384, %v1000, %v1512
      %v1641 = vsel %vm1385, %v1003, %v1513
      %v1642 = vsel %vm1386, %v1008, %v1514
      %v1643 = vsel %vm1387, %v1011, %v1515
      %v1644 = vsel %vm1388, %v1016, %v1516
      %v1645 = vsel %vm1389, %v1019, %v1517
      %v1646 = vsel %vm1390, %v1024, %v1518
      %v1647 = vsel %vm1391, %v1027, %v1519
      %v1648 = vsel %vm1392, %v1032, %v1520
      %v1649 = vsel %vm1393, %v1035, %v1521
      %v1650 = vsel %vm1394, %v1040, %v1522
      %v1651 = vsel %vm1395, %v1043, %v1523
      %v1652 = vsel %vm1396, %v1048, %v1524
      %v1653 = vsel %vm1397, %v1051, %v1525
      %v1654 = vsel %vm1398, %v1056, %v1526
      %v1655 = vsel %vm1399, %v1059, %v1527
      %v1656 = vsel %vm1400, %v1064, %v1528
      %v1657 = vsel %vm1401, %v1067, %v1529
      %v1658 = vsel %vm1402, %v1072, %v1530
      %v1659 = vsel %vm1403, %v1075, %v1531
      %v1660 = vsel %vm1404, %v1080, %v1532
      %v1661 = vsel %vm1405, %v1083, %v1533
      %v1662 = vsel %vm1406, %v1088, %v1534
      %v1663 = vsel %vm1407, %v1091, %v1535
      %v1664 = vsel %vm1408, %v1096, %v1536
      %v1665 = vsel %vm1409, %v1099, %v1537
      %v1666 = vsel %vm1410, %v1104, %v1538
      %v1667 = vsel %vm1411, %v1107, %v1539
      %v1668 = vsel %vm1412, %v1112, %v1540
      %v1669 = vsel %vm1413, %v1115, %v1541
      %v1670 = vsel %vm1414, %v1120, %v1542
      %v1671 = vsel %vm1415, %v1123, %v1543
      %v1672 = vsel %vm1416, %v1128, %v1544
      %v1673 = vsel %vm1417, %v1131, %v1545
      %v1674 = vsel %vm1418, %v1136, %v1546
      %v1675 = vsel %vm1419, %v1139, %v1547
      %v1676 = vsel %vm1420, %v1144, %v1548
      %v1677 = vsel %vm1421, %v1147, %v1549
      %v1678 = vsel %vm1422, %v1152, %v1550
      %v1679 = vsel %vm1423, %v1155, %v1551
      %v1680 = vsel %vm1424, %v1160, %v1552
      %v1681 = vsel %vm1425, %v1163, %v1553
      %v1682 = vsel %vm1426, %v1168, %v1554
      %v1683 = vsel %vm1427, %v1171, %v1555
      %v1684 = vsel %vm1428, %v1176, %v1556
      %v1685 = vsel %vm1429, %v1179, %v1557
      %v1686 = vsel %vm1430, %v1184, %v1558
      %v1687 = vsel %vm1431, %v1187, %v1559
      %v1688 = vsel %vm1432, %v1192, %v1560
      %v1689 = vsel %vm1433, %v1195, %v1561
      %v1690 = vsel %vm1434, %v1200, %v1562
      %v1691 = vsel %vm1435, %v1203, %v1563
      %v1692 = vsel %vm1436, %v1208, %v1564
      %v1693 = vsel %vm1437, %v1211, %v1565
      %v1694 = vsel %vm1438, %v1216, %v1566
      %v1695 = vsel %vm1439, %v1219, %v1567
      %v1696 = vsel %vm1440, %v1224, %v1568
      %v1697 = vsel %vm1441, %v1227, %v1569
      %v1698 = vsel %vm1442, %v1232, %v1570
      %v1699 = vsel %vm1443, %v1235, %v1571
      %v1700 = vsel %vm1444, %v1240, %v1572
      %v1701 = vsel %vm1445, %v1243, %v1573
      %v1702 = vsel %vm1446, %v1248, %v1574
      %v1703 = vsel %vm1447, %v1251, %v1575
      %v1704 = vsel %vm1448, %v1256, %v1576
      %v1705 = vsel %vm1449, %v1259, %v1577
      %v1706 = vsel %vm1450, %v1264, %v1578
      %v1707 = vsel %vm1451, %v1267, %v1579
      %v1708 = vsel %vm1452, %v1272, %v1580
      %v1709 = vsel %vm1453, %v1275, %v1581
      %v1710 = vsel %vm1454, %v1280, %v1582
      %v1711 = vsel %vm1455, %v1283, %v1583
      %v1712 = vsel %vm1456, %v1288, %v1584
      %v1713 = vsel %vm1457, %v1291, %v1585
      %v1714 = vsel %vm1458, %v1296, %v1586
      %v1715 = vsel %vm1459, %v1299, %v1587
      %v1716 = vsel %vm1460, %v1304, %v1588
      %v1717 = vsel %vm1461, %v1307, %v1589
      %v1718 = vsel %vm1462, %v1312, %v1590
      %v1719 = vsel %vm1463, %v1315, %v1591
      %v1720 = vsel %vm1464, %v1320, %v1592
      %v1721 = vsel %vm1465, %v1323, %v1593
      %v1722 = vsel %vm1466, %v1328, %v1594
      %v1723 = vsel %vm1467, %v1331, %v1595
      %v1724 = vsel %vm1468, %v1336, %v1596
      %v1725 = vsel %vm1469, %v1339, %v1597
      %v1726 = vpack.c.bf16 %v1599, %v1598
      %v1727 = vpack.c.bf16 %v1601, %v1600
      %v1728 = vpack.c.bf16 %v1603, %v1602
      %v1729 = vpack.c.bf16 %v1605, %v1604
      %v1730 = vpack.c.bf16 %v1607, %v1606
      %v1731 = vpack.c.bf16 %v1609, %v1608
      %v1732 = vpack.c.bf16 %v1611, %v1610
      %v1733 = vpack.c.bf16 %v1613, %v1612
      %v1734 = vpack.c.bf16 %v1615, %v1614
      %v1735 = vpack.c.bf16 %v1617, %v1616
      %v1736 = vpack.c.bf16 %v1619, %v1618
      %v1737 = vpack.c.bf16 %v1621, %v1620
      %v1738 = vpack.c.bf16 %v1623, %v1622
      %v1739 = vpack.c.bf16 %v1625, %v1624
      %v1740 = vpack.c.bf16 %v1627, %v1626
      %v1741 = vpack.c.bf16 %v1629, %v1628
      %v1742 = vpack.c.bf16 %v1631, %v1630
      %v1743 = vpack.c.bf16 %v1633, %v1632
      %v1744 = vpack.c.bf16 %v1635, %v1634
      %v1745 = vpack.c.bf16 %v1637, %v1636
      %v1746 = vpack.c.bf16 %v1639, %v1638
      %v1747 = vpack.c.bf16 %v1641, %v1640
      %v1748 = vpack.c.bf16 %v1643, %v1642
      %v1749 = vpack.c.bf16 %v1645, %v1644
      %v1750 = vpack.c.bf16 %v1647, %v1646
      %v1751 = vpack.c.bf16 %v1649, %v1648
      %v1752 = vpack.c.bf16 %v1651, %v1650
      %v1753 = vpack.c.bf16 %v1653, %v1652
      %v1754 = vpack.c.bf16 %v1655, %v1654
      %v1755 = vpack.c.bf16 %v1657, %v1656
      %v1756 = vpack.c.bf16 %v1659, %v1658
      %v1757 = vpack.c.bf16 %v1661, %v1660
      %v1758 = vpack.c.bf16 %v1663, %v1662
      %v1759 = vpack.c.bf16 %v1665, %v1664
      %v1760 = vpack.c.bf16 %v1667, %v1666
      %v1761 = vpack.c.bf16 %v1669, %v1668
      %v1762 = vpack.c.bf16 %v1671, %v1670
      %v1763 = vpack.c.bf16 %v1673, %v1672
      %v1764 = vpack.c.bf16 %v1675, %v1674
      %v1765 = vpack.c.bf16 %v1677, %v1676
      %v1766 = vpack.c.bf16 %v1679, %v1678
      %v1767 = vpack.c.bf16 %v1681, %v1680
      %v1768 = vpack.c.bf16 %v1683, %v1682
      %v1769 = vpack.c.bf16 %v1685, %v1684
      %v1770 = vpack.c.bf16 %v1687, %v1686
      %v1771 = vpack.c.bf16 %v1689, %v1688
      %v1772 = vpack.c.bf16 %v1691, %v1690
      %v1773 = vpack.c.bf16 %v1693, %v1692
      %v1774 = vpack.c.bf16 %v1695, %v1694
      %v1775 = vpack.c.bf16 %v1697, %v1696
      %v1776 = vpack.c.bf16 %v1699, %v1698
      %v1777 = vpack.c.bf16 %v1701, %v1700
      %v1778 = vpack.c.bf16 %v1703, %v1702
      %v1779 = vpack.c.bf16 %v1705, %v1704
      %v1780 = vpack.c.bf16 %v1707, %v1706
      %v1781 = vpack.c.bf16 %v1709, %v1708
      %v1782 = vpack.c.bf16 %v1711, %v1710
      %v1783 = vpack.c.bf16 %v1713, %v1712
      %v1784 = vpack.c.bf16 %v1715, %v1714
      %v1785 = vpack.c.bf16 %v1717, %v1716
      %v1786 = vpack.c.bf16 %v1719, %v1718
      %v1787 = vpack.c.bf16 %v1721, %v1720
      %v1788 = vpack.c.bf16 %v1723, %v1722
      %v1789 = vpack.c.bf16 %v1725, %v1724
      %v1854 = vunpack.c.l.b16 %v1726
      %v1855 = vunpack.c.h.b16 %v1726
      %v1856 = vunpack.c.l.b16 %v1727
      %v1857 = vunpack.c.h.b16 %v1727
      %v1858 = vunpack.c.l.b16 %v1728
      %v1859 = vunpack.c.h.b16 %v1728
      %v1860 = vunpack.c.l.b16 %v1729
      %v1861 = vunpack.c.h.b16 %v1729
      %v1862 = vunpack.c.l.b16 %v1730
      %v1863 = vunpack.c.h.b16 %v1730
      %v1864 = vunpack.c.l.b16 %v1731
      %v1865 = vunpack.c.h.b16 %v1731
      %v1866 = vunpack.c.l.b16 %v1732
      %v1867 = vunpack.c.h.b16 %v1732
      %v1868 = vunpack.c.l.b16 %v1733
      %v1869 = vunpack.c.h.b16 %v1733
      %v1870 = vunpack.c.l.b16 %v1734
      %v1871 = vunpack.c.h.b16 %v1734
      %v1872 = vunpack.c.l.b16 %v1735
      %v1873 = vunpack.c.h.b16 %v1735
      %v1874 = vunpack.c.l.b16 %v1736
      %v1875 = vunpack.c.h.b16 %v1736
      %v1876 = vunpack.c.l.b16 %v1737
      %v1877 = vunpack.c.h.b16 %v1737
      %v1878 = vunpack.c.l.b16 %v1738
      %v1879 = vunpack.c.h.b16 %v1738
      %v1880 = vunpack.c.l.b16 %v1739
      %v1881 = vunpack.c.h.b16 %v1739
      %v1882 = vunpack.c.l.b16 %v1740
      %v1883 = vunpack.c.h.b16 %v1740
      %v1884 = vunpack.c.l.b16 %v1741
      %v1885 = vunpack.c.h.b16 %v1741
      %v1886 = vunpack.c.l.b16 %v1742
      %v1887 = vunpack.c.h.b16 %v1742
      %v1888 = vunpack.c.l.b16 %v1743
      %v1889 = vunpack.c.h.b16 %v1743
      %v1890 = vunpack.c.l.b16 %v1744
      %v1891 = vunpack.c.h.b16 %v1744
      %v1892 = vunpack.c.l.b16 %v1745
      %v1893 = vunpack.c.h.b16 %v1745
      %v1894 = vunpack.c.l.b16 %v1746
      %v1895 = vunpack.c.h.b16 %v1746
      %v1896 = vunpack.c.l.b16 %v1747
      %v1897 = vunpack.c.h.b16 %v1747
      %v1898 = vunpack.c.l.b16 %v1748
      %v1899 = vunpack.c.h.b16 %v1748
      %v1900 = vunpack.c.l.b16 %v1749
      %v1901 = vunpack.c.h.b16 %v1749
      %v1902 = vunpack.c.l.b16 %v1750
      %v1903 = vunpack.c.h.b16 %v1750
      %v1904 = vunpack.c.l.b16 %v1751
      %v1905 = vunpack.c.h.b16 %v1751
      %v1906 = vunpack.c.l.b16 %v1752
      %v1907 = vunpack.c.h.b16 %v1752
      %v1908 = vunpack.c.l.b16 %v1753
      %v1909 = vunpack.c.h.b16 %v1753
      %v1910 = vunpack.c.l.b16 %v1754
      %v1911 = vunpack.c.h.b16 %v1754
      %v1912 = vunpack.c.l.b16 %v1755
      %v1913 = vunpack.c.h.b16 %v1755
      %v1914 = vunpack.c.l.b16 %v1756
      %v1915 = vunpack.c.h.b16 %v1756
      %v1916 = vunpack.c.l.b16 %v1757
      %v1917 = vunpack.c.h.b16 %v1757
      %v1918 = vunpack.c.l.b16 %v1758
      %v1919 = vunpack.c.h.b16 %v1758
      %v1920 = vunpack.c.l.b16 %v1759
      %v1921 = vunpack.c.h.b16 %v1759
      %v1922 = vunpack.c.l.b16 %v1760
      %v1923 = vunpack.c.h.b16 %v1760
      %v1924 = vunpack.c.l.b16 %v1761
      %v1925 = vunpack.c.h.b16 %v1761
      %v1926 = vunpack.c.l.b16 %v1762
      %v1927 = vunpack.c.h.b16 %v1762
      %v1928 = vunpack.c.l.b16 %v1763
      %v1929 = vunpack.c.h.b16 %v1763
      %v1930 = vunpack.c.l.b16 %v1764
      %v1931 = vunpack.c.h.b16 %v1764
      %v1932 = vunpack.c.l.b16 %v1765
      %v1933 = vunpack.c.h.b16 %v1765
      %v1934 = vunpack.c.l.b16 %v1766
      %v1935 = vunpack.c.h.b16 %v1766
      %v1936 = vunpack.c.l.b16 %v1767
      %v1937 = vunpack.c.h.b16 %v1767
      %v1938 = vunpack.c.l.b16 %v1768
      %v1939 = vunpack.c.h.b16 %v1768
      %v1940 = vunpack.c.l.b16 %v1769
      %v1941 = vunpack.c.h.b16 %v1769
      %v1942 = vunpack.c.l.b16 %v1770
      %v1943 = vunpack.c.h.b16 %v1770
      %v1944 = vunpack.c.l.b16 %v1771
      %v1945 = vunpack.c.h.b16 %v1771
      %v1946 = vunpack.c.l.b16 %v1772
      %v1947 = vunpack.c.h.b16 %v1772
      %v1948 = vunpack.c.l.b16 %v1773
      %v1949 = vunpack.c.h.b16 %v1773
      %v1950 = vunpack.c.l.b16 %v1774
      %v1951 = vunpack.c.h.b16 %v1774
      %v1952 = vunpack.c.l.b16 %v1775
      %v1953 = vunpack.c.h.b16 %v1775
      %v1954 = vunpack.c.l.b16 %v1776
      %v1955 = vunpack.c.h.b16 %v1776
      %v1956 = vunpack.c.l.b16 %v1777
      %v1957 = vunpack.c.h.b16 %v1777
      %v1958 = vunpack.c.l.b16 %v1778
      %v1959 = vunpack.c.h.b16 %v1778
      %v1960 = vunpack.c.l.b16 %v1779
      %v1961 = vunpack.c.h.b16 %v1779
      %v1962 = vunpack.c.l.b16 %v1780
      %v1963 = vunpack.c.h.b16 %v1780
      %v1964 = vunpack.c.l.b16 %v1781
      %v1965 = vunpack.c.h.b16 %v1781
      %v1966 = vunpack.c.l.b16 %v1782
      %v1967 = vunpack.c.h.b16 %v1782
      %v1968 = vunpack.c.l.b16 %v1783
      %v1969 = vunpack.c.h.b16 %v1783
      %v1970 = vunpack.c.l.b16 %v1784
      %v1971 = vunpack.c.h.b16 %v1784
      %v1972 = vunpack.c.l.b16 %v1785
      %v1973 = vunpack.c.h.b16 %v1785
      %v1974 = vunpack.c.l.b16 %v1786
      %v1975 = vunpack.c.h.b16 %v1786
      %v1976 = vunpack.c.l.b16 %v1787
      %v1977 = vunpack.c.h.b16 %v1787
      %v1978 = vunpack.c.l.b16 %v1788
      %v1979 = vunpack.c.h.b16 %v1788
      %v1980 = vunpack.c.l.b16 %v1789
      %v1981 = vunpack.c.h.b16 %v1789
      %v1982 = vpack.c.b16 %v1854, %v1854
      %v1983 = vpack.c.b16 %v1855, %v1855
      %v1984 = vpack.c.b16 %v1856, %v1856
      %v1985 = vpack.c.b16 %v1857, %v1857
      %v1986 = vpack.c.b16 %v1858, %v1858
      %v1987 = vpack.c.b16 %v1859, %v1859
      %v1988 = vpack.c.b16 %v1860, %v1860
      %v1989 = vpack.c.b16 %v1861, %v1861
      %v1990 = vpack.c.b16 %v1862, %v1862
      %v1991 = vpack.c.b16 %v1863, %v1863
      %v1992 = vpack.c.b16 %v1864, %v1864
      %v1993 = vpack.c.b16 %v1865, %v1865
      %v1994 = vpack.c.b16 %v1866, %v1866
      %v1995 = vpack.c.b16 %v1867, %v1867
      %v1996 = vpack.c.b16 %v1868, %v1868
      %v1997 = vpack.c.b16 %v1869, %v1869
      %v1998 = vpack.c.b16 %v1870, %v1870
      %v1999 = vpack.c.b16 %v1871, %v1871
      %v2000 = vpack.c.b16 %v1872, %v1872
      %v2001 = vpack.c.b16 %v1873, %v1873
      %v2002 = vpack.c.b16 %v1874, %v1874
      %v2003 = vpack.c.b16 %v1875, %v1875
      %v2004 = vpack.c.b16 %v1876, %v1876
      %v2005 = vpack.c.b16 %v1877, %v1877
      %v2006 = vpack.c.b16 %v1878, %v1878
      %v2007 = vpack.c.b16 %v1879, %v1879
      %v2008 = vpack.c.b16 %v1880, %v1880
      %v2009 = vpack.c.b16 %v1881, %v1881
      %v2010 = vpack.c.b16 %v1882, %v1882
      %v2011 = vpack.c.b16 %v1883, %v1883
      %v2012 = vpack.c.b16 %v1884, %v1884
      %v2013 = vpack.c.b16 %v1885, %v1885
      %v2014 = vpack.c.b16 %v1886, %v1886
      %v2015 = vpack.c.b16 %v1887, %v1887
      %v2016 = vpack.c.b16 %v1888, %v1888
      %v2017 = vpack.c.b16 %v1889, %v1889
      %v2018 = vpack.c.b16 %v1890, %v1890
      %v2019 = vpack.c.b16 %v1891, %v1891
      %v2020 = vpack.c.b16 %v1892, %v1892
      %v2021 = vpack.c.b16 %v1893, %v1893
      %v2022 = vpack.c.b16 %v1894, %v1894
      %v2023 = vpack.c.b16 %v1895, %v1895
      %v2024 = vpack.c.b16 %v1896, %v1896
      %v2025 = vpack.c.b16 %v1897, %v1897
      %v2026 = vpack.c.b16 %v1898, %v1898
      %v2027 = vpack.c.b16 %v1899, %v1899
      %v2028 = vpack.c.b16 %v1900, %v1900
      %v2029 = vpack.c.b16 %v1901, %v1901
      %v2030 = vpack.c.b16 %v1902, %v1902
      %v2031 = vpack.c.b16 %v1903, %v1903
      %v2032 = vpack.c.b16 %v1904, %v1904
      %v2033 = vpack.c.b16 %v1905, %v1905
      %v2034 = vpack.c.b16 %v1906, %v1906
      %v2035 = vpack.c.b16 %v1907, %v1907
      %v2036 = vpack.c.b16 %v1908, %v1908
      %v2037 = vpack.c.b16 %v1909, %v1909
      %v2038 = vpack.c.b16 %v1910, %v1910
      %v2039 = vpack.c.b16 %v1911, %v1911
      %v2040 = vpack.c.b16 %v1912, %v1912
      %v2041 = vpack.c.b16 %v1913, %v1913
      %v2042 = vpack.c.b16 %v1914, %v1914
      %v2043 = vpack.c.b16 %v1915, %v1915
      %v2044 = vpack.c.b16 %v1916, %v1916
      %v2045 = vpack.c.b16 %v1917, %v1917
      %v2046 = vpack.c.b16 %v1918, %v1918
      %v2047 = vpack.c.b16 %v1919, %v1919
      %v2048 = vpack.c.b16 %v1920, %v1920
      %v2049 = vpack.c.b16 %v1921, %v1921
      %v2050 = vpack.c.b16 %v1922, %v1922
      %v2051 = vpack.c.b16 %v1923, %v1923
      %v2052 = vpack.c.b16 %v1924, %v1924
      %v2053 = vpack.c.b16 %v1925, %v1925
      %v2054 = vpack.c.b16 %v1926, %v1926
      %v2055 = vpack.c.b16 %v1927, %v1927
      %v2056 = vpack.c.b16 %v1928, %v1928
      %v2057 = vpack.c.b16 %v1929, %v1929
      %v2058 = vpack.c.b16 %v1930, %v1930
      %v2059 = vpack.c.b16 %v1931, %v1931
      %v2060 = vpack.c.b16 %v1932, %v1932
      %v2061 = vpack.c.b16 %v1933, %v1933
      %v2062 = vpack.c.b16 %v1934, %v1934
      %v2063 = vpack.c.b16 %v1935, %v1935
      %v2064 = vpack.c.b16 %v1936, %v1936
      %v2065 = vpack.c.b16 %v1937, %v1937
      %v2066 = vpack.c.b16 %v1938, %v1938
      %v2067 = vpack.c.b16 %v1939, %v1939
      %v2068 = vpack.c.b16 %v1940, %v1940
      %v2069 = vpack.c.b16 %v1941, %v1941
      %v2070 = vpack.c.b16 %v1942, %v1942
      %v2071 = vpack.c.b16 %v1943, %v1943
      %v2072 = vpack.c.b16 %v1944, %v1944
      %v2073 = vpack.c.b16 %v1945, %v1945
      %v2074 = vpack.c.b16 %v1946, %v1946
      %v2075 = vpack.c.b16 %v1947, %v1947
      %v2076 = vpack.c.b16 %v1948, %v1948
      %v2077 = vpack.c.b16 %v1949, %v1949
      %v2078 = vpack.c.b16 %v1950, %v1950
      %v2079 = vpack.c.b16 %v1951, %v1951
      %v2080 = vpack.c.b16 %v1952, %v1952
      %v2081 = vpack.c.b16 %v1953, %v1953
      %v2082 = vpack.c.b16 %v1954, %v1954
      %v2083 = vpack.c.b16 %v1955, %v1955
      %v2084 = vpack.c.b16 %v1956, %v1956
      %v2085 = vpack.c.b16 %v1957, %v1957
      %v2086 = vpack.c.b16 %v1958, %v1958
      %v2087 = vpack.c.b16 %v1959, %v1959
      %v2088 = vpack.c.b16 %v1960, %v1960
      %v2089 = vpack.c.b16 %v1961, %v1961
      %v2090 = vpack.c.b16 %v1962, %v1962
      %v2091 = vpack.c.b16 %v1963, %v1963
      %v2092 = vpack.c.b16 %v1964, %v1964
      %v2093 = vpack.c.b16 %v1965, %v1965
      %v2094 = vpack.c.b16 %v1966, %v1966
      %v2095 = vpack.c.b16 %v1967, %v1967
      %v2096 = vpack.c.b16 %v1968, %v1968
      %v2097 = vpack.c.b16 %v1969, %v1969
      %v2098 = vpack.c.b16 %v1970, %v1970
      %v2099 = vpack.c.b16 %v1971, %v1971
      %v2100 = vpack.c.b16 %v1972, %v1972
      %v2101 = vpack.c.b16 %v1973, %v1973
      %v2102 = vpack.c.b16 %v1974, %v1974
      %v2103 = vpack.c.b16 %v1975, %v1975
      %v2104 = vpack.c.b16 %v1976, %v1976
      %v2105 = vpack.c.b16 %v1977, %v1977
      %v2106 = vpack.c.b16 %v1978, %v1978
      %v2107 = vpack.c.b16 %v1979, %v1979
      %v2108 = vpack.c.b16 %v1980, %v1980
      %v2109 = vpack.c.b16 %v1981, %v1981
      %vm2238 = vcmask 60416
      %2239 = vst.msk [vmem:[%s145] sm:$0xf] %vm2238, %v1982
      %2240 = vst.msk [vmem:[%s145 + $0x4] sm:$0xf] %vm2238, %v1983
      %2241 = vst.msk [vmem:[%s145 + $0x8] sm:$0xf] %vm2238, %v1984
      %2242 = vst.msk [vmem:[%s145 + $0xc] sm:$0xf] %vm2238, %v1985
      %2243 = vst.msk [vmem:[%s145 + $0x10] sm:$0xf] %vm2238, %v1986
      %2244 = vst.msk [vmem:[%s145 + $0x14] sm:$0xf] %vm2238, %v1987
      %2245 = vst.msk [vmem:[%s145 + $0x18] sm:$0xf] %vm2238, %v1988
      %2246 = vst.msk [vmem:[%s145 + $0x1c] sm:$0xf] %vm2238, %v1989
      %2247 = vst.msk [vmem:[%s145 + $0x20] sm:$0xf] %vm2238, %v1990
      %2248 = vst.msk [vmem:[%s145 + $0x24] sm:$0xf] %vm2238, %v1991
      %2249 = vst.msk [vmem:[%s145 + $0x28] sm:$0xf] %vm2238, %v1992
      %2250 = vst.msk [vmem:[%s145 + $0x2c] sm:$0xf] %vm2238, %v1993
      %2251 = vst.msk [vmem:[%s145 + $0x30] sm:$0xf] %vm2238, %v1994
      %2252 = vst.msk [vmem:[%s145 + $0x34] sm:$0xf] %vm2238, %v1995
      %2253 = vst.msk [vmem:[%s145 + $0x38] sm:$0xf] %vm2238, %v1996
      %2254 = vst.msk [vmem:[%s145 + $0x3c] sm:$0xf] %vm2238, %v1997
      %2255 = vst.msk [vmem:[%s145 + $0x40] sm:$0xf] %vm2238, %v1998
      %2256 = vst.msk [vmem:[%s145 + $0x44] sm:$0xf] %vm2238, %v1999
      %2257 = vst.msk [vmem:[%s145 + $0x48] sm:$0xf] %vm2238, %v2000
      %2258 = vst.msk [vmem:[%s145 + $0x4c] sm:$0xf] %vm2238, %v2001
      %2259 = vst.msk [vmem:[%s145 + $0x50] sm:$0xf] %vm2238, %v2002
      %2260 = vst.msk [vmem:[%s145 + $0x54] sm:$0xf] %vm2238, %v2003
      %2261 = vst.msk [vmem:[%s145 + $0x58] sm:$0xf] %vm2238, %v2004
      %2262 = vst.msk [vmem:[%s145 + $0x5c] sm:$0xf] %vm2238, %v2005
      %2263 = vst.msk [vmem:[%s145 + $0x60] sm:$0xf] %vm2238, %v2006
      %2264 = vst.msk [vmem:[%s145 + $0x64] sm:$0xf] %vm2238, %v2007
      %2265 = vst.msk [vmem:[%s145 + $0x68] sm:$0xf] %vm2238, %v2008
      %2266 = vst.msk [vmem:[%s145 + $0x6c] sm:$0xf] %vm2238, %v2009
      %2267 = vst.msk [vmem:[%s145 + $0x70] sm:$0xf] %vm2238, %v2010
      %2268 = vst.msk [vmem:[%s145 + $0x74] sm:$0xf] %vm2238, %v2011
      %2269 = vst.msk [vmem:[%s145 + $0x78] sm:$0xf] %vm2238, %v2012
      %2270 = vst.msk [vmem:[%s145 + $0x7c] sm:$0xf] %vm2238, %v2013
      %2271 = vst.msk [vmem:[%s145 + $0x80] sm:$0xf] %vm2238, %v2014
      %2272 = vst.msk [vmem:[%s145 + $0x84] sm:$0xf] %vm2238, %v2015
      %2273 = vst.msk [vmem:[%s145 + $0x88] sm:$0xf] %vm2238, %v2016
      %2274 = vst.msk [vmem:[%s145 + $0x8c] sm:$0xf] %vm2238, %v2017
      %2275 = vst.msk [vmem:[%s145 + $0x90] sm:$0xf] %vm2238, %v2018
      %2276 = vst.msk [vmem:[%s145 + $0x94] sm:$0xf] %vm2238, %v2019
      %2277 = vst.msk [vmem:[%s145 + $0x98] sm:$0xf] %vm2238, %v2020
      %2278 = vst.msk [vmem:[%s145 + $0x9c] sm:$0xf] %vm2238, %v2021
      %2279 = vst.msk [vmem:[%s145 + $0xa0] sm:$0xf] %vm2238, %v2022
      %2280 = vst.msk [vmem:[%s145 + $0xa4] sm:$0xf] %vm2238, %v2023
      %2281 = vst.msk [vmem:[%s145 + $0xa8] sm:$0xf] %vm2238, %v2024
      %2282 = vst.msk [vmem:[%s145 + $0xac] sm:$0xf] %vm2238, %v2025
      %2283 = vst.msk [vmem:[%s145 + $0xb0] sm:$0xf] %vm2238, %v2026
      %2284 = vst.msk [vmem:[%s145 + $0xb4] sm:$0xf] %vm2238, %v2027
      %2285 = vst.msk [vmem:[%s145 + $0xb8] sm:$0xf] %vm2238, %v2028
      %2286 = vst.msk [vmem:[%s145 + $0xbc] sm:$0xf] %vm2238, %v2029
      %2287 = vst.msk [vmem:[%s145 + $0xc0] sm:$0xf] %vm2238, %v2030
      %2288 = vst.msk [vmem:[%s145 + $0xc4] sm:$0xf] %vm2238, %v2031
      %2289 = vst.msk [vmem:[%s145 + $0xc8] sm:$0xf] %vm2238, %v2032
      %2290 = vst.msk [vmem:[%s145 + $0xcc] sm:$0xf] %vm2238, %v2033
      %2291 = vst.msk [vmem:[%s145 + $0xd0] sm:$0xf] %vm2238, %v2034
      %2292 = vst.msk [vmem:[%s145 + $0xd4] sm:$0xf] %vm2238, %v2035
      %2293 = vst.msk [vmem:[%s145 + $0xd8] sm:$0xf] %vm2238, %v2036
      %2294 = vst.msk [vmem:[%s145 + $0xdc] sm:$0xf] %vm2238, %v2037
      %2295 = vst.msk [vmem:[%s145 + $0xe0] sm:$0xf] %vm2238, %v2038
      %2296 = vst.msk [vmem:[%s145 + $0xe4] sm:$0xf] %vm2238, %v2039
      %2297 = vst.msk [vmem:[%s145 + $0xe8] sm:$0xf] %vm2238, %v2040
      %2298 = vst.msk [vmem:[%s145 + $0xec] sm:$0xf] %vm2238, %v2041
      %2299 = vst.msk [vmem:[%s145 + $0xf0] sm:$0xf] %vm2238, %v2042
      %2300 = vst.msk [vmem:[%s145 + $0xf4] sm:$0xf] %vm2238, %v2043
      %2301 = vst.msk [vmem:[%s145 + $0xf8] sm:$0xf] %vm2238, %v2044
      %2302 = vst.msk [vmem:[%s145 + $0xfc] sm:$0xf] %vm2238, %v2045
      %2303 = vst.msk [vmem:[%s145 + $0x100] sm:$0xf] %vm2238, %v2046
      %2304 = vst.msk [vmem:[%s145 + $0x104] sm:$0xf] %vm2238, %v2047
      %2305 = vst.msk [vmem:[%s145 + $0x108] sm:$0xf] %vm2238, %v2048
      %2306 = vst.msk [vmem:[%s145 + $0x10c] sm:$0xf] %vm2238, %v2049
      %2307 = vst.msk [vmem:[%s145 + $0x110] sm:$0xf] %vm2238, %v2050
      %2308 = vst.msk [vmem:[%s145 + $0x114] sm:$0xf] %vm2238, %v2051
      %2309 = vst.msk [vmem:[%s145 + $0x118] sm:$0xf] %vm2238, %v2052
      %2310 = vst.msk [vmem:[%s145 + $0x11c] sm:$0xf] %vm2238, %v2053
      %2311 = vst.msk [vmem:[%s145 + $0x120] sm:$0xf] %vm2238, %v2054
      %2312 = vst.msk [vmem:[%s145 + $0x124] sm:$0xf] %vm2238, %v2055
      %2313 = vst.msk [vmem:[%s145 + $0x128] sm:$0xf] %vm2238, %v2056
      %2314 = vst.msk [vmem:[%s145 + $0x12c] sm:$0xf] %vm2238, %v2057
      %2315 = vst.msk [vmem:[%s145 + $0x130] sm:$0xf] %vm2238, %v2058
      %2316 = vst.msk [vmem:[%s145 + $0x134] sm:$0xf] %vm2238, %v2059
      %2317 = vst.msk [vmem:[%s145 + $0x138] sm:$0xf] %vm2238, %v2060
      %2318 = vst.msk [vmem:[%s145 + $0x13c] sm:$0xf] %vm2238, %v2061
      %2319 = vst.msk [vmem:[%s145 + $0x140] sm:$0xf] %vm2238, %v2062
      %2320 = vst.msk [vmem:[%s145 + $0x144] sm:$0xf] %vm2238, %v2063
      %2321 = vst.msk [vmem:[%s145 + $0x148] sm:$0xf] %vm2238, %v2064
      %2322 = vst.msk [vmem:[%s145 + $0x14c] sm:$0xf] %vm2238, %v2065
      %2323 = vst.msk [vmem:[%s145 + $0x150] sm:$0xf] %vm2238, %v2066
      %2324 = vst.msk [vmem:[%s145 + $0x154] sm:$0xf] %vm2238, %v2067
      %2325 = vst.msk [vmem:[%s145 + $0x158] sm:$0xf] %vm2238, %v2068
      %2326 = vst.msk [vmem:[%s145 + $0x15c] sm:$0xf] %vm2238, %v2069
      %2327 = vst.msk [vmem:[%s145 + $0x160] sm:$0xf] %vm2238, %v2070
      %2328 = vst.msk [vmem:[%s145 + $0x164] sm:$0xf] %vm2238, %v2071
      %2329 = vst.msk [vmem:[%s145 + $0x168] sm:$0xf] %vm2238, %v2072
      %2330 = vst.msk [vmem:[%s145 + $0x16c] sm:$0xf] %vm2238, %v2073
      %2331 = vst.msk [vmem:[%s145 + $0x170] sm:$0xf] %vm2238, %v2074
      %2332 = vst.msk [vmem:[%s145 + $0x174] sm:$0xf] %vm2238, %v2075
      %2333 = vst.msk [vmem:[%s145 + $0x178] sm:$0xf] %vm2238, %v2076
      %2334 = vst.msk [vmem:[%s145 + $0x17c] sm:$0xf] %vm2238, %v2077
      %2335 = vst.msk [vmem:[%s145 + $0x180] sm:$0xf] %vm2238, %v2078
      %2336 = vst.msk [vmem:[%s145 + $0x184] sm:$0xf] %vm2238, %v2079
      %2337 = vst.msk [vmem:[%s145 + $0x188] sm:$0xf] %vm2238, %v2080
      %2338 = vst.msk [vmem:[%s145 + $0x18c] sm:$0xf] %vm2238, %v2081
      %2339 = vst.msk [vmem:[%s145 + $0x190] sm:$0xf] %vm2238, %v2082
      %2340 = vst.msk [vmem:[%s145 + $0x194] sm:$0xf] %vm2238, %v2083
      %2341 = vst.msk [vmem:[%s145 + $0x198] sm:$0xf] %vm2238, %v2084
      %2342 = vst.msk [vmem:[%s145 + $0x19c] sm:$0xf] %vm2238, %v2085
      %2343 = vst.msk [vmem:[%s145 + $0x1a0] sm:$0xf] %vm2238, %v2086
      %2344 = vst.msk [vmem:[%s145 + $0x1a4] sm:$0xf] %vm2238, %v2087
      %2345 = vst.msk [vmem:[%s145 + $0x1a8] sm:$0xf] %vm2238, %v2088
      %2346 = vst.msk [vmem:[%s145 + $0x1ac] sm:$0xf] %vm2238, %v2089
      %2347 = vst.msk [vmem:[%s145 + $0x1b0] sm:$0xf] %vm2238, %v2090
      %2348 = vst.msk [vmem:[%s145 + $0x1b4] sm:$0xf] %vm2238, %v2091
      %2349 = vst.msk [vmem:[%s145 + $0x1b8] sm:$0xf] %vm2238, %v2092
      %2350 = vst.msk [vmem:[%s145 + $0x1bc] sm:$0xf] %vm2238, %v2093
      %2351 = vst.msk [vmem:[%s145 + $0x1c0] sm:$0xf] %vm2238, %v2094
      %2352 = vst.msk [vmem:[%s145 + $0x1c4] sm:$0xf] %vm2238, %v2095
      %2353 = vst.msk [vmem:[%s145 + $0x1c8] sm:$0xf] %vm2238, %v2096
      %2354 = vst.msk [vmem:[%s145 + $0x1cc] sm:$0xf] %vm2238, %v2097
      %2355 = vst.msk [vmem:[%s145 + $0x1d0] sm:$0xf] %vm2238, %v2098
      %2356 = vst.msk [vmem:[%s145 + $0x1d4] sm:$0xf] %vm2238, %v2099
      %2357 = vst.msk [vmem:[%s145 + $0x1d8] sm:$0xf] %vm2238, %v2100
      %2358 = vst.msk [vmem:[%s145 + $0x1dc] sm:$0xf] %vm2238, %v2101
      %2359 = vst.msk [vmem:[%s145 + $0x1e0] sm:$0xf] %vm2238, %v2102
      %2360 = vst.msk [vmem:[%s145 + $0x1e4] sm:$0xf] %vm2238, %v2103
      %2361 = vst.msk [vmem:[%s145 + $0x1e8] sm:$0xf] %vm2238, %v2104
      %2362 = vst.msk [vmem:[%s145 + $0x1ec] sm:$0xf] %vm2238, %v2105
      %2363 = vst.msk [vmem:[%s145 + $0x1f0] sm:$0xf] %vm2238, %v2106
      %2364 = vst.msk [vmem:[%s145 + $0x1f4] sm:$0xf] %vm2238, %v2107
      %2365 = vst.msk [vmem:[%s145 + $0x1f8] sm:$0xf] %vm2238, %v2108
      %2366 = vst.msk [vmem:[%s145 + $0x1fc] sm:$0xf] %vm2238, %v2109
      %s2367 = smul.u32 128, %s13
      %p2368 = scmp.lt.s32.totalorder %s2367, 255
      %s2369 = scalar_select %p2368, %s2367, 255
      %s2370 = smul.addr %s2369, 4
      %s2371 = scalar_lea.vmem %s2, %s2370
      // Predicated region
      $region29: #{lidar_encoder_forward.5} parent=27 // pred_check
        %p2372 = pneg %p78
      $region30: #{lidar_encoder_forward.5} parent=27 // pred_check_branch
        %2374 = sbr.rel (%p2372) target = $region32
      $region31: #{lidar_encoder_forward.5} parent=27 // pred_region
        %s2375 = smul.u32 128, %s13
      $region32: #{lidar_encoder_forward.5} parent=27 // pred_fallthru
        _
    $region28: #{lidar_encoder_forward.5} parent=5 // pred_fallthru
      _
    %p2376 = scmp.le.s32.totalorder 2, %s8
    // Predicated region
    $region33: #{lidar_encoder_forward.5} parent=5 // pred_check
      %p2377 = pneg %p2376
    $region34: #{lidar_encoder_forward.5} parent=5 // pred_check_branch
      %2379 = sbr.rel (%p2377) target = $region36
    $region35: #{lidar_encoder_forward.5} parent=5 // pred_region
      %s2380 = ssub.s32 %s8, 2
      // Predicated region
      $region37: #{lidar_encoder_forward.5} parent=35 // pred_check
        %p2381 = pneg %p84
      $region38: #{lidar_encoder_forward.5} parent=35 // pred_check_branch
        %2383 = sbr.rel (%p2381) target = $region40
      $region39: #{lidar_encoder_forward.5} parent=35 // pred_region
        %s2384 = smul.u32 128, %s14
        %p2385 = scmp.lt.s32.totalorder %s2384, 255
        %s2386 = scalar_select %p2385, %s2384, 255
        %s2387 = smul.addr %s2386, 4
        %s2388 = scalar_lea.vmem %s2, %s2387
      $region40: #{lidar_encoder_forward.5} parent=35 // pred_fallthru
        _
    $region36: #{lidar_encoder_forward.5} parent=5 // pred_fallthru
      _
  $region6: #{lidar_encoder_forward.5} parent=0 // loop_footer
    %s12 = sadd.s32 1, %s8
  $region7: #{lidar_encoder_forward.5} parent=0 // loop_footer_branch
    %7 = sbr.rel target = $region3
  $region8: #{lidar_encoder_forward.5} parent=0 // loop_exit
    _

// kernel: lidar_encoder_forward.6
$region0: #{lidar_encoder_forward.6}
  #allocation0 [shape = 'u32[]', space=smem, size = 0x4, offset = 0x4, fixed_abs, tag = 'smem constant byte address 0x4 - core index']
  #allocation1 [shape = 'u32[144,128]{1,0:T(1,128)}', space=vmem, size = 0x12000, scoped, tag = 'internal scratch']
  %s0 = inlined_call_operand.vmem [shape: bf16[512,128], index: 0, kind: input, shape index: {}]
  %s1 = inlined_call_operand.vmem [shape: bf16[128,16], index: 1, kind: input, shape index: {}]
  %s2 = inlined_call_operand.vmem [shape: f32[1,16], index: 2, kind: input, shape index: {}]
  %s3 = inlined_call_operand.vmem [shape: f32[1,16], index: 3, kind: input, shape index: {}]
  %s4 = inlined_call_operand.vmem [shape: bf16[512,16], index: 4, kind: output, shape index: {}]
  %s5 = sld [smem:[#allocation0]]
  $region26: #{lidar_encoder_forward.6} parent=0
    _
  %s7 = ssub.s32 1, %s5
  %s8 = scalar_select 0, %s7, %s5
  // Predicated region
  $region2: #{lidar_encoder_forward.6} parent=0 // pred_check
    _
  $region3: #{lidar_encoder_forward.6} parent=0 // pred_check_branch
    %10 = sbr.rel (0) target = $region5
  $region4: #{lidar_encoder_forward.6} parent=0 // pred_region
    _
  $region5: #{lidar_encoder_forward.6} parent=0 // pred_fallthru
    _
  // Predicated region
  $region6: #{lidar_encoder_forward.6} parent=0 // pred_check
    _
  $region7: #{lidar_encoder_forward.6} parent=0 // pred_check_branch
    %12 = sbr.rel (0) target = $region9
  $region8: #{lidar_encoder_forward.6} parent=0 // pred_region
    _
  $region9: #{lidar_encoder_forward.6} parent=0 // pred_fallthru
    _
  // Predicated region
  $region10: #{lidar_encoder_forward.6} parent=0 // pred_check
    _
  $region11: #{lidar_encoder_forward.6} parent=0 // pred_check_branch
    %14 = sbr.rel (0) target = $region13
  $region12: #{lidar_encoder_forward.6} parent=0 // pred_region
    _
  $region13: #{lidar_encoder_forward.6} parent=0 // pred_fallthru
    _
  // Predicated region
  $region14: #{lidar_encoder_forward.6} parent=0 // pred_check
    _
  $region15: #{lidar_encoder_forward.6} parent=0 // pred_check_branch
    %16 = sbr.rel (0) target = $region17
  $region16: #{lidar_encoder_forward.6} parent=0 // pred_region
    _
  $region17: #{lidar_encoder_forward.6} parent=0 // pred_fallthru
    _
  %v18 = vld [vmem:[%s0] sm:$0xf]
  %v19 = vld [vmem:[%s0 + $0x4] sm:$0xf]
  %v20 = vld [vmem:[%s0 + $0x8] sm:$0xf]
  %v21 = vld [vmem:[%s0 + $0xc] sm:$0xf]
  %v22 = vld [vmem:[%s0 + $0x10] sm:$0xf]
  %v23 = vld [vmem:[%s0 + $0x14] sm:$0xf]
  %v24 = vld [vmem:[%s0 + $0x18] sm:$0xf]
  %v25 = vld [vmem:[%s0 + $0x1c] sm:$0xf]
  %v26 = vld [vmem:[%s0 + $0x20] sm:$0xf]
  %v27 = vld [vmem:[%s0 + $0x24] sm:$0xf]
  %v28 = vld [vmem:[%s0 + $0x28] sm:$0xf]
  %v29 = vld [vmem:[%s0 + $0x2c] sm:$0xf]
  %v30 = vld [vmem:[%s0 + $0x30] sm:$0xf]
  %v31 = vld [vmem:[%s0 + $0x34] sm:$0xf]
  %v32 = vld [vmem:[%s0 + $0x38] sm:$0xf]
  %v33 = vld [vmem:[%s0 + $0x3c] sm:$0xf]
  %v34 = vld [vmem:[%s0 + $0x40] sm:$0xf]
  %v35 = vld [vmem:[%s0 + $0x44] sm:$0xf]
  %v36 = vld [vmem:[%s0 + $0x48] sm:$0xf]
  %v37 = vld [vmem:[%s0 + $0x4c] sm:$0xf]
  %v38 = vld [vmem:[%s0 + $0x50] sm:$0xf]
  %v39 = vld [vmem:[%s0 + $0x54] sm:$0xf]
  %v40 = vld [vmem:[%s0 + $0x58] sm:$0xf]
  %v41 = vld [vmem:[%s0 + $0x5c] sm:$0xf]
  %v42 = vld [vmem:[%s0 + $0x60] sm:$0xf]
  %v43 = vld [vmem:[%s0 + $0x64] sm:$0xf]
  %v44 = vld [vmem:[%s0 + $0x68] sm:$0xf]
  %v45 = vld [vmem:[%s0 + $0x6c] sm:$0xf]
  %v46 = vld [vmem:[%s0 + $0x70] sm:$0xf]
  %v47 = vld [vmem:[%s0 + $0x74] sm:$0xf]
  %v48 = vld [vmem:[%s0 + $0x78] sm:$0xf]
  %v49 = vld [vmem:[%s0 + $0x7c] sm:$0xf]
  %v50 = vld [vmem:[%s0 + $0x80] sm:$0xf]
  %v51 = vld [vmem:[%s0 + $0x84] sm:$0xf]
  %v52 = vld [vmem:[%s0 + $0x88] sm:$0xf]
  %v53 = vld [vmem:[%s0 + $0x8c] sm:$0xf]
  %v54 = vld [vmem:[%s0 + $0x90] sm:$0xf]
  %v55 = vld [vmem:[%s0 + $0x94] sm:$0xf]
  %v56 = vld [vmem:[%s0 + $0x98] sm:$0xf]
  %v57 = vld [vmem:[%s0 + $0x9c] sm:$0xf]
  %v58 = vld [vmem:[%s0 + $0xa0] sm:$0xf]
  %v59 = vld [vmem:[%s0 + $0xa4] sm:$0xf]
  %v60 = vld [vmem:[%s0 + $0xa8] sm:$0xf]
  %v61 = vld [vmem:[%s0 + $0xac] sm:$0xf]
  %v62 = vld [vmem:[%s0 + $0xb0] sm:$0xf]
  %v63 = vld [vmem:[%s0 + $0xb4] sm:$0xf]
  %v64 = vld [vmem:[%s0 + $0xb8] sm:$0xf]
  %v65 = vld [vmem:[%s0 + $0xbc] sm:$0xf]
  %v66 = vld [vmem:[%s0 + $0xc0] sm:$0xf]
  %v67 = vld [vmem:[%s0 + $0xc4] sm:$0xf]
  %v68 = vld [vmem:[%s0 + $0xc8] sm:$0xf]
  %v69 = vld [vmem:[%s0 + $0xcc] sm:$0xf]
  %v70 = vld [vmem:[%s0 + $0xd0] sm:$0xf]
  %v71 = vld [vmem:[%s0 + $0xd4] sm:$0xf]
  %v72 = vld [vmem:[%s0 + $0xd8] sm:$0xf]
  %v73 = vld [vmem:[%s0 + $0xdc] sm:$0xf]
  %v74 = vld [vmem:[%s0 + $0xe0] sm:$0xf]
  %v75 = vld [vmem:[%s0 + $0xe4] sm:$0xf]
  %v76 = vld [vmem:[%s0 + $0xe8] sm:$0xf]
  %v77 = vld [vmem:[%s0 + $0xec] sm:$0xf]
  %v78 = vld [vmem:[%s0 + $0xf0] sm:$0xf]
  %v79 = vld [vmem:[%s0 + $0xf4] sm:$0xf]
  %v80 = vld [vmem:[%s0 + $0xf8] sm:$0xf]
  %v81 = vld [vmem:[%s0 + $0xfc] sm:$0xf]
  %v82 = vld [vmem:[%s1] sm:$0xf]
  %v83 = vld [vmem:[%s1 + $0x4] sm:$0xf]
  %v84 = vld [vmem:[%s1 + $0x8] sm:$0xf]
  %v85 = vld [vmem:[%s1 + $0xc] sm:$0xf]
  %v86 = vld [vmem:[%s1 + $0x10] sm:$0xf]
  %v87 = vld [vmem:[%s1 + $0x14] sm:$0xf]
  %v88 = vld [vmem:[%s1 + $0x18] sm:$0xf]
  %v89 = vld [vmem:[%s1 + $0x1c] sm:$0xf]
  %v90 = vld [vmem:[%s1 + $0x20] sm:$0xf]
  %v91 = vld [vmem:[%s1 + $0x24] sm:$0xf]
  %v92 = vld [vmem:[%s1 + $0x28] sm:$0xf]
  %v93 = vld [vmem:[%s1 + $0x2c] sm:$0xf]
  %v94 = vld [vmem:[%s1 + $0x30] sm:$0xf]
  %v95 = vld [vmem:[%s1 + $0x34] sm:$0xf]
  %v96 = vld [vmem:[%s1 + $0x38] sm:$0xf]
  %v97 = vld [vmem:[%s1 + $0x3c] sm:$0xf]
  %v162 = vunpack.c.l.b16 %v18
  %v163 = vunpack.c.l.b16 %v19
  %v164 = vunpack.c.l.b16 %v20
  %v165 = vunpack.c.l.b16 %v21
  %v166 = vunpack.c.l.b16 %v22
  %v167 = vunpack.c.l.b16 %v23
  %v168 = vunpack.c.l.b16 %v24
  %v169 = vunpack.c.l.b16 %v25
  %v170 = vunpack.c.l.b16 %v26
  %v171 = vunpack.c.l.b16 %v27
  %v172 = vunpack.c.l.b16 %v28
  %v173 = vunpack.c.l.b16 %v29
  %v174 = vunpack.c.l.b16 %v30
  %v175 = vunpack.c.l.b16 %v31
  %v176 = vunpack.c.l.b16 %v32
  %v177 = vunpack.c.l.b16 %v33
  %v178 = vunpack.c.l.b16 %v34
  %v179 = vunpack.c.l.b16 %v35
  %v180 = vunpack.c.l.b16 %v36
  %v181 = vunpack.c.l.b16 %v37
  %v182 = vunpack.c.l.b16 %v38
  %v183 = vunpack.c.l.b16 %v39
  %v184 = vunpack.c.l.b16 %v40
  %v185 = vunpack.c.l.b16 %v41
  %v186 = vunpack.c.l.b16 %v42
  %v187 = vunpack.c.l.b16 %v43
  %v188 = vunpack.c.l.b16 %v44
  %v189 = vunpack.c.l.b16 %v45
  %v190 = vunpack.c.l.b16 %v46
  %v191 = vunpack.c.l.b16 %v47
  %v192 = vunpack.c.l.b16 %v48
  %v193 = vunpack.c.l.b16 %v49
  %v194 = vunpack.c.l.b16 %v50
  %v195 = vunpack.c.l.b16 %v51
  %v196 = vunpack.c.l.b16 %v52
  %v197 = vunpack.c.l.b16 %v53
  %v198 = vunpack.c.l.b16 %v54
  %v199 = vunpack.c.l.b16 %v55
  %v200 = vunpack.c.l.b16 %v56
  %v201 = vunpack.c.l.b16 %v57
  %v202 = vunpack.c.l.b16 %v58
  %v203 = vunpack.c.l.b16 %v59
  %v204 = vunpack.c.l.b16 %v60
  %v205 = vunpack.c.l.b16 %v61
  %v206 = vunpack.c.l.b16 %v62
  %v207 = vunpack.c.l.b16 %v63
  %v208 = vunpack.c.l.b16 %v64
  %v209 = vunpack.c.l.b16 %v65
  %v210 = vunpack.c.l.b16 %v66
  %v211 = vunpack.c.l.b16 %v67
  %v212 = vunpack.c.l.b16 %v68
  %v213 = vunpack.c.l.b16 %v69
  %v214 = vunpack.c.l.b16 %v70
  %v215 = vunpack.c.l.b16 %v71
  %v216 = vunpack.c.l.b16 %v72
  %v217 = vunpack.c.l.b16 %v73
  %v218 = vunpack.c.l.b16 %v74
  %v219 = vunpack.c.l.b16 %v75
  %v220 = vunpack.c.l.b16 %v76
  %v221 = vunpack.c.l.b16 %v77
  %v222 = vunpack.c.l.b16 %v78
  %v223 = vunpack.c.l.b16 %v79
  %v224 = vunpack.c.l.b16 %v80
  %v225 = vunpack.c.l.b16 %v81
  %v226 = vpack.c.b16 %v163, %v162
  %v227 = vpack.c.b16 %v165, %v164
  %v228 = vpack.c.b16 %v167, %v166
  %v229 = vpack.c.b16 %v169, %v168
  %v230 = vpack.c.b16 %v171, %v170
  %v231 = vpack.c.b16 %v173, %v172
  %v232 = vpack.c.b16 %v175, %v174
  %v233 = vpack.c.b16 %v177, %v176
  %v234 = vpack.c.b16 %v179, %v178
  %v235 = vpack.c.b16 %v181, %v180
  %v236 = vpack.c.b16 %v183, %v182
  %v237 = vpack.c.b16 %v185, %v184
  %v238 = vpack.c.b16 %v187, %v186
  %v239 = vpack.c.b16 %v189, %v188
  %v240 = vpack.c.b16 %v191, %v190
  %v241 = vpack.c.b16 %v193, %v192
  %v242 = vpack.c.b16 %v195, %v194
  %v243 = vpack.c.b16 %v197, %v196
  %v244 = vpack.c.b16 %v199, %v198
  %v245 = vpack.c.b16 %v201, %v200
  %v246 = vpack.c.b16 %v203, %v202
  %v247 = vpack.c.b16 %v205, %v204
  %v248 = vpack.c.b16 %v207, %v206
  %v249 = vpack.c.b16 %v209, %v208
  %v250 = vpack.c.b16 %v211, %v210
  %v251 = vpack.c.b16 %v213, %v212
  %v252 = vpack.c.b16 %v215, %v214
  %v253 = vpack.c.b16 %v217, %v216
  %v254 = vpack.c.b16 %v219, %v218
  %v255 = vpack.c.b16 %v221, %v220
  %v256 = vpack.c.b16 %v223, %v222
  %v257 = vpack.c.b16 %v225, %v224
  %v306 = vunpack.c.l.b16 %v82
  %v307 = vunpack.c.l.b16 %v83
  %v308 = vunpack.c.l.b16 %v84
  %v309 = vunpack.c.l.b16 %v85
  %v310 = vunpack.c.l.b16 %v86
  %v311 = vunpack.c.l.b16 %v87
  %v312 = vunpack.c.l.b16 %v88
  %v313 = vunpack.c.l.b16 %v89
  %v314 = vunpack.c.l.b16 %v90
  %v315 = vunpack.c.l.b16 %v91
  %v316 = vunpack.c.l.b16 %v92
  %v317 = vunpack.c.l.b16 %v93
  %v318 = vunpack.c.l.b16 %v94
  %v319 = vunpack.c.l.b16 %v95
  %v320 = vunpack.c.l.b16 %v96
  %v321 = vunpack.c.l.b16 %v97
  %v322 = vpack.c.b16 %v307, %v306
  %v323 = vpack.c.b16 %v309, %v308
  %v324 = vpack.c.b16 %v311, %v310
  %v325 = vpack.c.b16 %v313, %v312
  %v326 = vpack.c.b16 %v315, %v314
  %v327 = vpack.c.b16 %v317, %v316
  %v328 = vpack.c.b16 %v319, %v318
  %v329 = vpack.c.b16 %v321, %v320
  %338 = vmatprep.subr.bf16.mxu0 0
  %339 = vmatpush1.bf16.msra.mxu0 %v329
  %340 = vmatprep.subr.bf16.mxu0 0
  %341 = vmatpush1.bf16.msra.mxu0 %v328
  %342 = vmatprep.subr.bf16.mxu0 0
  %343 = vmatpush1.bf16.msra.mxu0 %v327
  %344 = vmatprep.subr.bf16.mxu0 0
  %345 = vmatpush1.bf16.msra.mxu0 %v326
  %346 = vmatprep.subr.bf16.mxu0 0
  %347 = vmatpush1.bf16.msra.mxu0 %v325
  %348 = vmatprep.subr.bf16.mxu0 0
  %349 = vmatpush1.bf16.msra.mxu0 %v324
  %350 = vmatprep.subr.bf16.mxu0 0
  %351 = vmatpush1.bf16.msra.mxu0 %v323
  %352 = vmatprep.subr.bf16.mxu0 0
  %353 = vmatpush1.bf16.msra.mxu0 %v322
  %354 = vmatprep.subr.bf16.mxu0 0
  %355 = vmatpush2.bf16.msra.mxu0 0
  %356 = vmatprep.subr.bf16.mxu0 0
  %357 = vmatpush2.bf16.msra.mxu0 0
  %358 = vmatprep.subr.bf16.mxu0 0
  %359 = vmatpush2.bf16.msra.mxu0 0
  %360 = vmatprep.subr.bf16.mxu0 0
  %361 = vmatpush2.bf16.msra.mxu0 0
  %362 = vmatprep.subr.bf16.mxu0 0
  %363 = vmatpush2.bf16.msra.mxu0 0
  %364 = vmatprep.subr.bf16.mxu0 0
  %365 = vmatpush2.bf16.msra.mxu0 0
  %366 = vmatprep.subr.bf16.mxu0 0
  %367 = vmatpush2.bf16.msra.mxu0 0
  %368 = vmatprep.subr.bf16.mxu0 0
  %369 = vmatpush2.bf16.msra.mxu0 0
  %370 = vmatprep.mubr.bf16.mxu0 0
  %371 = vmatmul.mubr.bf16.gmra.mxu0 %v226
  %v372 = vpop.f32.mrf.mxu0
  %v373 = vadd.f32 0.0, %v372
  %v374 = vpop.f32.mrf.mxu0
  %v375 = vpop.f32.mrf.mxu0
  %v376 = vadd.f32 0.0, %v375
  %v377 = vpop.f32.mrf.mxu0
  %378 = vmatprep.mubr.bf16.mxu0 0
  %379 = vmatmul.mubr.bf16.gmra.mxu0 %v227
  %v380 = vpop.f32.mrf.mxu0
  %v381 = vadd.f32 0.0, %v380
  %v382 = vpop.f32.mrf.mxu0
  %v383 = vpop.f32.mrf.mxu0
  %v384 = vadd.f32 0.0, %v383
  %v385 = vpop.f32.mrf.mxu0
  %386 = vmatprep.mubr.bf16.mxu0 0
  %387 = vmatmul.mubr.bf16.gmra.mxu0 %v228
  %v388 = vpop.f32.mrf.mxu0
  %v389 = vadd.f32 0.0, %v388
  %v390 = vpop.f32.mrf.mxu0
  %v391 = vpop.f32.mrf.mxu0
  %v392 = vadd.f32 0.0, %v391
  %v393 = vpop.f32.mrf.mxu0
  %394 = vmatprep.mubr.bf16.mxu0 0
  %395 = vmatmul.mubr.bf16.gmra.mxu0 %v229
  %v396 = vpop.f32.mrf.mxu0
  %v397 = vadd.f32 0.0, %v396
  %v398 = vpop.f32.mrf.mxu0
  %v399 = vpop.f32.mrf.mxu0
  %v400 = vadd.f32 0.0, %v399
  %v401 = vpop.f32.mrf.mxu0
  %402 = vmatprep.mubr.bf16.mxu0 0
  %403 = vmatmul.mubr.bf16.gmra.mxu0 %v230
  %v404 = vpop.f32.mrf.mxu0
  %v405 = vadd.f32 0.0, %v404
  %v406 = vpop.f32.mrf.mxu0
  %v407 = vpop.f32.mrf.mxu0
  %v408 = vadd.f32 0.0, %v407
  %v409 = vpop.f32.mrf.mxu0
  %410 = vmatprep.mubr.bf16.mxu0 0
  %411 = vmatmul.mubr.bf16.gmra.mxu0 %v231
  %v412 = vpop.f32.mrf.mxu0
  %v413 = vadd.f32 0.0, %v412
  %v414 = vpop.f32.mrf.mxu0
  %v415 = vpop.f32.mrf.mxu0
  %v416 = vadd.f32 0.0, %v415
  %v417 = vpop.f32.mrf.mxu0
  %418 = vmatprep.mubr.bf16.mxu0 0
  %419 = vmatmul.mubr.bf16.gmra.mxu0 %v232
  %v420 = vpop.f32.mrf.mxu0
  %v421 = vadd.f32 0.0, %v420
  %v422 = vpop.f32.mrf.mxu0
  %v423 = vpop.f32.mrf.mxu0
  %v424 = vadd.f32 0.0, %v423
  %v425 = vpop.f32.mrf.mxu0
  %426 = vmatprep.mubr.bf16.mxu0 0
  %427 = vmatmul.mubr.bf16.gmra.mxu0 %v233
  %v428 = vpop.f32.mrf.mxu0
  %v429 = vadd.f32 0.0, %v428
  %v430 = vpop.f32.mrf.mxu0
  %v431 = vpop.f32.mrf.mxu0
  %v432 = vadd.f32 0.0, %v431
  %v433 = vpop.f32.mrf.mxu0
  %434 = vmatprep.mubr.bf16.mxu0 0
  %435 = vmatmul.mubr.bf16.gmra.mxu0 %v234
  %v436 = vpop.f32.mrf.mxu0
  %v437 = vadd.f32 0.0, %v436
  %v438 = vpop.f32.mrf.mxu0
  %v439 = vpop.f32.mrf.mxu0
  %v440 = vadd.f32 0.0, %v439
  %v441 = vpop.f32.mrf.mxu0
  %442 = vmatprep.mubr.bf16.mxu0 0
  %443 = vmatmul.mubr.bf16.gmra.mxu0 %v235
  %v444 = vpop.f32.mrf.mxu0
  %v445 = vadd.f32 0.0, %v444
  %v446 = vpop.f32.mrf.mxu0
  %v447 = vpop.f32.mrf.mxu0
  %v448 = vadd.f32 0.0, %v447
  %v449 = vpop.f32.mrf.mxu0
  %450 = vmatprep.mubr.bf16.mxu0 0
  %451 = vmatmul.mubr.bf16.gmra.mxu0 %v236
  %v452 = vpop.f32.mrf.mxu0
  %v453 = vadd.f32 0.0, %v452
  %v454 = vpop.f32.mrf.mxu0
  %v455 = vpop.f32.mrf.mxu0
  %v456 = vadd.f32 0.0, %v455
  %v457 = vpop.f32.mrf.mxu0
  %458 = vmatprep.mubr.bf16.mxu0 0
  %459 = vmatmul.mubr.bf16.gmra.mxu0 %v237
  %v460 = vpop.f32.mrf.mxu0
  %v461 = vadd.f32 0.0, %v460
  %v462 = vpop.f32.mrf.mxu0
  %v463 = vpop.f32.mrf.mxu0
  %v464 = vadd.f32 0.0, %v463
  %v465 = vpop.f32.mrf.mxu0
  %466 = vmatprep.mubr.bf16.mxu0 0
  %467 = vmatmul.mubr.bf16.gmra.mxu0 %v238
  %v468 = vpop.f32.mrf.mxu0
  %v469 = vadd.f32 0.0, %v468
  %v470 = vpop.f32.mrf.mxu0
  %v471 = vpop.f32.mrf.mxu0
  %v472 = vadd.f32 0.0, %v471
  %v473 = vpop.f32.mrf.mxu0
  %474 = vmatprep.mubr.bf16.mxu0 0
  %475 = vmatmul.mubr.bf16.gmra.mxu0 %v239
  %v476 = vpop.f32.mrf.mxu0
  %v477 = vadd.f32 0.0, %v476
  %v478 = vpop.f32.mrf.mxu0
  %v479 = vpop.f32.mrf.mxu0
  %v480 = vadd.f32 0.0, %v479
  %v481 = vpop.f32.mrf.mxu0
  %482 = vmatprep.mubr.bf16.mxu0 0
  %483 = vmatmul.mubr.bf16.gmra.mxu0 %v240
  %v484 = vpop.f32.mrf.mxu0
  %v485 = vadd.f32 0.0, %v484
  %v486 = vpop.f32.mrf.mxu0
  %v487 = vpop.f32.mrf.mxu0
  %v488 = vadd.f32 0.0, %v487
  %v489 = vpop.f32.mrf.mxu0
  %490 = vmatprep.mubr.bf16.mxu0 0
  %491 = vmatmul.mubr.bf16.gmra.mxu0 %v241
  %v492 = vpop.f32.mrf.mxu0
  %v493 = vadd.f32 0.0, %v492
  %v494 = vpop.f32.mrf.mxu0
  %v495 = vpop.f32.mrf.mxu0
  %v496 = vadd.f32 0.0, %v495
  %v497 = vpop.f32.mrf.mxu0
  %498 = vmatprep.mubr.bf16.mxu0 0
  %499 = vmatmul.mubr.bf16.gmra.mxu0 %v242
  %v500 = vpop.f32.mrf.mxu0
  %v501 = vadd.f32 0.0, %v500
  %v502 = vpop.f32.mrf.mxu0
  %v503 = vpop.f32.mrf.mxu0
  %v504 = vadd.f32 0.0, %v503
  %v505 = vpop.f32.mrf.mxu0
  %506 = vmatprep.mubr.bf16.mxu0 0
  %507 = vmatmul.mubr.bf16.gmra.mxu0 %v243
  %v508 = vpop.f32.mrf.mxu0
  %v509 = vadd.f32 0.0, %v508
  %v510 = vpop.f32.mrf.mxu0
  %v511 = vpop.f32.mrf.mxu0
  %v512 = vadd.f32 0.0, %v511
  %v513 = vpop.f32.mrf.mxu0
  %514 = vmatprep.mubr.bf16.mxu0 0
  %515 = vmatmul.mubr.bf16.gmra.mxu0 %v244
  %v516 = vpop.f32.mrf.mxu0
  %v517 = vadd.f32 0.0, %v516
  %v518 = vpop.f32.mrf.mxu0
  %v519 = vpop.f32.mrf.mxu0
  %v520 = vadd.f32 0.0, %v519
  %v521 = vpop.f32.mrf.mxu0
  %522 = vmatprep.mubr.bf16.mxu0 0
  %523 = vmatmul.mubr.bf16.gmra.mxu0 %v245
  %v524 = vpop.f32.mrf.mxu0
  %v525 = vadd.f32 0.0, %v524
  %v526 = vpop.f32.mrf.mxu0
  %v527 = vpop.f32.mrf.mxu0
  %v528 = vadd.f32 0.0, %v527
  %v529 = vpop.f32.mrf.mxu0
  %530 = vmatprep.mubr.bf16.mxu0 0
  %531 = vmatmul.mubr.bf16.gmra.mxu0 %v246
  %v532 = vpop.f32.mrf.mxu0
  %v533 = vadd.f32 0.0, %v532
  %v534 = vpop.f32.mrf.mxu0
  %v535 = vpop.f32.mrf.mxu0
  %v536 = vadd.f32 0.0, %v535
  %v537 = vpop.f32.mrf.mxu0
  %538 = vmatprep.mubr.bf16.mxu0 0
  %539 = vmatmul.mubr.bf16.gmra.mxu0 %v247
  %v540 = vpop.f32.mrf.mxu0
  %v541 = vadd.f32 0.0, %v540
  %v542 = vpop.f32.mrf.mxu0
  %v543 = vpop.f32.mrf.mxu0
  %v544 = vadd.f32 0.0, %v543
  %v545 = vpop.f32.mrf.mxu0
  %546 = vmatprep.mubr.bf16.mxu0 0
  %547 = vmatmul.mubr.bf16.gmra.mxu0 %v248
  %v548 = vpop.f32.mrf.mxu0
  %v549 = vadd.f32 0.0, %v548
  %v550 = vpop.f32.mrf.mxu0
  %v551 = vpop.f32.mrf.mxu0
  %v552 = vadd.f32 0.0, %v551
  %v553 = vpop.f32.mrf.mxu0
  %554 = vmatprep.mubr.bf16.mxu0 0
  %555 = vmatmul.mubr.bf16.gmra.mxu0 %v249
  %v556 = vpop.f32.mrf.mxu0
  %v557 = vadd.f32 0.0, %v556
  %v558 = vpop.f32.mrf.mxu0
  %v559 = vpop.f32.mrf.mxu0
  %v560 = vadd.f32 0.0, %v559
  %v561 = vpop.f32.mrf.mxu0
  %562 = vmatprep.mubr.bf16.mxu0 0
  %563 = vmatmul.mubr.bf16.gmra.mxu0 %v250
  %v564 = vpop.f32.mrf.mxu0
  %v565 = vadd.f32 0.0, %v564
  %v566 = vpop.f32.mrf.mxu0
  %v567 = vpop.f32.mrf.mxu0
  %v568 = vadd.f32 0.0, %v567
  %v569 = vpop.f32.mrf.mxu0
  %570 = vmatprep.mubr.bf16.mxu0 0
  %571 = vmatmul.mubr.bf16.gmra.mxu0 %v251
  %v572 = vpop.f32.mrf.mxu0
  %v573 = vadd.f32 0.0, %v572
  %v574 = vpop.f32.mrf.mxu0
  %v575 = vpop.f32.mrf.mxu0
  %v576 = vadd.f32 0.0, %v575
  %v577 = vpop.f32.mrf.mxu0
  %578 = vmatprep.mubr.bf16.mxu0 0
  %579 = vmatmul.mubr.bf16.gmra.mxu0 %v252
  %v580 = vpop.f32.mrf.mxu0
  %v581 = vadd.f32 0.0, %v580
  %v582 = vpop.f32.mrf.mxu0
  %v583 = vpop.f32.mrf.mxu0
  %v584 = vadd.f32 0.0, %v583
  %v585 = vpop.f32.mrf.mxu0
  %586 = vmatprep.mubr.bf16.mxu0 0
  %587 = vmatmul.mubr.bf16.gmra.mxu0 %v253
  %v588 = vpop.f32.mrf.mxu0
  %v589 = vadd.f32 0.0, %v588
  %v590 = vpop.f32.mrf.mxu0
  %v591 = vpop.f32.mrf.mxu0
  %v592 = vadd.f32 0.0, %v591
  %v593 = vpop.f32.mrf.mxu0
  %594 = vmatprep.mubr.bf16.mxu0 0
  %595 = vmatmul.mubr.bf16.gmra.mxu0 %v254
  %v596 = vpop.f32.mrf.mxu0
  %v597 = vadd.f32 0.0, %v596
  %v598 = vpop.f32.mrf.mxu0
  %v599 = vpop.f32.mrf.mxu0
  %v600 = vadd.f32 0.0, %v599
  %v601 = vpop.f32.mrf.mxu0
  %602 = vmatprep.mubr.bf16.mxu0 0
  %603 = vmatmul.mubr.bf16.gmra.mxu0 %v255
  %v604 = vpop.f32.mrf.mxu0
  %v605 = vadd.f32 0.0, %v604
  %v606 = vpop.f32.mrf.mxu0
  %v607 = vpop.f32.mrf.mxu0
  %v608 = vadd.f32 0.0, %v607
  %v609 = vpop.f32.mrf.mxu0
  %610 = vmatprep.mubr.bf16.mxu0 0
  %611 = vmatmul.mubr.bf16.gmra.mxu0 %v256
  %v612 = vpop.f32.mrf.mxu0
  %v613 = vadd.f32 0.0, %v612
  %v614 = vpop.f32.mrf.mxu0
  %v615 = vpop.f32.mrf.mxu0
  %v616 = vadd.f32 0.0, %v615
  %v617 = vpop.f32.mrf.mxu0
  %618 = vmatprep.mubr.bf16.mxu0 0
  %619 = vmatmul.mubr.bf16.gmra.mxu0 %v257
  %v620 = vpop.f32.mrf.mxu0
  %v621 = vadd.f32 0.0, %v620
  %v622 = vpop.f32.mrf.mxu0
  %v623 = vpop.f32.mrf.mxu0
  %v624 = vadd.f32 0.0, %v623
  %v625 = vpop.f32.mrf.mxu0
  %626 = vdwg.mxu0
  %vm627 = vcmask 130048
  %v628 = vsel %vm627, %v373, 0.0
  %v629 = vsel %vm627, %v376, 0.0
  %v630 = vadd.f32 %v628, %v629
  %v631 = vsel %vm627, %v381, 0.0
  %v632 = vadd.f32 %v630, %v631
  %v633 = vsel %vm627, %v384, 0.0
  %v634 = vadd.f32 %v632, %v633
  %v635 = vsel %vm627, %v389, 0.0
  %v636 = vadd.f32 %v634, %v635
  %v637 = vsel %vm627, %v392, 0.0
  %v638 = vadd.f32 %v636, %v637
  %v639 = vsel %vm627, %v397, 0.0
  %v640 = vadd.f32 %v638, %v639
  %v641 = vsel %vm627, %v400, 0.0
  %v642 = vadd.f32 %v640, %v641
  %v643 = vsel %vm627, %v405, 0.0
  %v644 = vadd.f32 %v642, %v643
  %v645 = vsel %vm627, %v408, 0.0
  %v646 = vadd.f32 %v644, %v645
  %v647 = vsel %vm627, %v413, 0.0
  %v648 = vadd.f32 %v646, %v647
  %v649 = vsel %vm627, %v416, 0.0
  %v650 = vadd.f32 %v648, %v649
  %v651 = vsel %vm627, %v421, 0.0
  %v652 = vadd.f32 %v650, %v651
  %v653 = vsel %vm627, %v424, 0.0
  %v654 = vadd.f32 %v652, %v653
  %v655 = vsel %vm627, %v429, 0.0
  %v656 = vadd.f32 %v654, %v655
  %v657 = vsel %vm627, %v432, 0.0
  %v658 = vadd.f32 %v656, %v657
  %v659 = vsel %vm627, %v437, 0.0
  %v660 = vadd.f32 %v658, %v659
  %v661 = vsel %vm627, %v440, 0.0
  %v662 = vadd.f32 %v660, %v661
  %v663 = vsel %vm627, %v445, 0.0
  %v664 = vadd.f32 %v662, %v663
  %v665 = vsel %vm627, %v448, 0.0
  %v666 = vadd.f32 %v664, %v665
  %v667 = vsel %vm627, %v453, 0.0
  %v668 = vadd.f32 %v666, %v667
  %v669 = vsel %vm627, %v456, 0.0
  %v670 = vadd.f32 %v668, %v669
  %v671 = vsel %vm627, %v461, 0.0
  %v672 = vadd.f32 %v670, %v671
  %v673 = vsel %vm627, %v464, 0.0
  %v674 = vadd.f32 %v672, %v673
  %v675 = vsel %vm627, %v469, 0.0
  %v676 = vadd.f32 %v674, %v675
  %v677 = vsel %vm627, %v472, 0.0
  %v678 = vadd.f32 %v676, %v677
  %v679 = vsel %vm627, %v477, 0.0
  %v680 = vadd.f32 %v678, %v679
  %v681 = vsel %vm627, %v480, 0.0
  %v682 = vadd.f32 %v680, %v681
  %v683 = vsel %vm627, %v485, 0.0
  %v684 = vadd.f32 %v682, %v683
  %v685 = vsel %vm627, %v488, 0.0
  %v686 = vadd.f32 %v684, %v685
  %v687 = vsel %vm627, %v493, 0.0
  %v688 = vadd.f32 %v686, %v687
  %v689 = vsel %vm627, %v496, 0.0
  %v690 = vadd.f32 %v688, %v689
  %v691 = vsel %vm627, %v501, 0.0
  %v692 = vadd.f32 %v690, %v691
  %v693 = vsel %vm627, %v504, 0.0
  %v694 = vadd.f32 %v692, %v693
  %v695 = vsel %vm627, %v509, 0.0
  %v696 = vadd.f32 %v694, %v695
  %v697 = vsel %vm627, %v512, 0.0
  %v698 = vadd.f32 %v696, %v697
  %v699 = vsel %vm627, %v517, 0.0
  %v700 = vadd.f32 %v698, %v699
  %v701 = vsel %vm627, %v520, 0.0
  %v702 = vadd.f32 %v700, %v701
  %v703 = vsel %vm627, %v525, 0.0
  %v704 = vadd.f32 %v702, %v703
  %v705 = vsel %vm627, %v528, 0.0
  %v706 = vadd.f32 %v704, %v705
  %v707 = vsel %vm627, %v533, 0.0
  %v708 = vadd.f32 %v706, %v707
  %v709 = vsel %vm627, %v536, 0.0
  %v710 = vadd.f32 %v708, %v709
  %v711 = vsel %vm627, %v541, 0.0
  %v712 = vadd.f32 %v710, %v711
  %v713 = vsel %vm627, %v544, 0.0
  %v714 = vadd.f32 %v712, %v713
  %v715 = vsel %vm627, %v549, 0.0
  %v716 = vadd.f32 %v714, %v715
  %v717 = vsel %vm627, %v552, 0.0
  %v718 = vadd.f32 %v716, %v717
  %v719 = vsel %vm627, %v557, 0.0
  %v720 = vadd.f32 %v718, %v719
  %v721 = vsel %vm627, %v560, 0.0
  %v722 = vadd.f32 %v720, %v721
  %v723 = vsel %vm627, %v565, 0.0
  %v724 = vadd.f32 %v722, %v723
  %v725 = vsel %vm627, %v568, 0.0
  %v726 = vadd.f32 %v724, %v725
  %v727 = vsel %vm627, %v573, 0.0
  %v728 = vadd.f32 %v726, %v727
  %v729 = vsel %vm627, %v576, 0.0
  %v730 = vadd.f32 %v728, %v729
  %v731 = vsel %vm627, %v581, 0.0
  %v732 = vadd.f32 %v730, %v731
  %v733 = vsel %vm627, %v584, 0.0
  %v734 = vadd.f32 %v732, %v733
  %v735 = vsel %vm627, %v589, 0.0
  %v736 = vadd.f32 %v734, %v735
  %v737 = vsel %vm627, %v592, 0.0
  %v738 = vadd.f32 %v736, %v737
  %v739 = vsel %vm627, %v597, 0.0
  %v740 = vadd.f32 %v738, %v739
  %v741 = vsel %vm627, %v600, 0.0
  %v742 = vadd.f32 %v740, %v741
  %v743 = vsel %vm627, %v605, 0.0
  %v744 = vadd.f32 %v742, %v743
  %v745 = vsel %vm627, %v608, 0.0
  %v746 = vadd.f32 %v744, %v745
  %v747 = vsel %vm627, %v613, 0.0
  %v748 = vadd.f32 %v746, %v747
  %v749 = vsel %vm627, %v616, 0.0
  %v750 = vadd.f32 %v748, %v749
  %v751 = vsel %vm627, %v621, 0.0
  %v752 = vadd.f32 %v750, %v751
  %v753 = vsel %vm627, %v624, 0.0
  %v754 = vadd.f32 %v752, %v753
  %v755 = vrot.slane %v754, 4
  %v756 = vadd.f32 %v754, %v755
  %v757 = vrot.slane %v756, 2
  %v758 = vadd.f32 %v756, %v757
  %v759 = vrot.slane %v758, 1
  %v760 = vadd.f32 %v758, %v759
  %v761 = vrcp.pop 512.0
  %v762 = vmul.f32 %v760, %v761
  %v763 = vsub.f32 %v373, %v762
  %v764 = vsub.f32 %v376, %v762
  %v765 = vsub.f32 %v381, %v762
  %v766 = vsub.f32 %v384, %v762
  %v767 = vsub.f32 %v389, %v762
  %v768 = vsub.f32 %v392, %v762
  %v769 = vsub.f32 %v397, %v762
  %v770 = vsub.f32 %v400, %v762
  %v771 = vsub.f32 %v405, %v762
  %v772 = vsub.f32 %v408, %v762
  %v773 = vsub.f32 %v413, %v762
  %v774 = vsub.f32 %v416, %v762
  %v775 = vsub.f32 %v421, %v762
  %v776 = vsub.f32 %v424, %v762
  %v777 = vsub.f32 %v429, %v762
  %v778 = vsub.f32 %v432, %v762
  %v779 = vsub.f32 %v437, %v762
  %v780 = vsub.f32 %v440, %v762
  %v781 = vsub.f32 %v445, %v762
  %v782 = vsub.f32 %v448, %v762
  %v783 = vsub.f32 %v453, %v762
  %v784 = vsub.f32 %v456, %v762
  %v785 = vsub.f32 %v461, %v762
  %v786 = vsub.f32 %v464, %v762
  %v787 = vsub.f32 %v469, %v762
  %v788 = vsub.f32 %v472, %v762
  %v789 = vsub.f32 %v477, %v762
  %v790 = vsub.f32 %v480, %v762
  %v791 = vsub.f32 %v485, %v762
  %v792 = vsub.f32 %v488, %v762
  %v793 = vsub.f32 %v493, %v762
  %v794 = vsub.f32 %v496, %v762
  %v795 = vsub.f32 %v501, %v762
  %v796 = vsub.f32 %v504, %v762
  %v797 = vsub.f32 %v509, %v762
  %v798 = vsub.f32 %v512, %v762
  %v799 = vsub.f32 %v517, %v762
  %v800 = vsub.f32 %v520, %v762
  %v801 = vsub.f32 %v525, %v762
  %v802 = vsub.f32 %v528, %v762
  %v803 = vsub.f32 %v533, %v762
  %v804 = vsub.f32 %v536, %v762
  %v805 = vsub.f32 %v541, %v762
  %v806 = vsub.f32 %v544, %v762
  %v807 = vsub.f32 %v549, %v762
  %v808 = vsub.f32 %v552, %v762
  %v809 = vsub.f32 %v557, %v762
  %v810 = vsub.f32 %v560, %v762
  %v811 = vsub.f32 %v565, %v762
  %v812 = vsub.f32 %v568, %v762
  %v813 = vsub.f32 %v573, %v762
  %v814 = vsub.f32 %v576, %v762
  %v815 = vsub.f32 %v581, %v762
  %v816 = vsub.f32 %v584, %v762
  %v817 = vsub.f32 %v589, %v762
  %v818 = vsub.f32 %v592, %v762
  %v819 = vsub.f32 %v597, %v762
  %v820 = vsub.f32 %v600, %v762
  %v821 = vsub.f32 %v605, %v762
  %v822 = vsub.f32 %v608, %v762
  %v823 = vsub.f32 %v613, %v762
  %v824 = vsub.f32 %v616, %v762
  %v825 = vsub.f32 %v621, %v762
  %v826 = vsub.f32 %v624, %v762
  %v827 = vmul.f32 %v763, %v763
  %v828 = vmul.f32 %v764, %v764
  %v829 = vmul.f32 %v765, %v765
  %v830 = vmul.f32 %v766, %v766
  %v831 = vmul.f32 %v767, %v767
  %v832 = vmul.f32 %v768, %v768
  %v833 = vmul.f32 %v769, %v769
  %v834 = vmul.f32 %v770, %v770
  %v835 = vmul.f32 %v771, %v771
  %v836 = vmul.f32 %v772, %v772
  %v837 = vmul.f32 %v773, %v773
  %v838 = vmul.f32 %v774, %v774
  %v839 = vmul.f32 %v775, %v775
  %v840 = vmul.f32 %v776, %v776
  %v841 = vmul.f32 %v777, %v777
  %v842 = vmul.f32 %v778, %v778
  %v843 = vmul.f32 %v779, %v779
  %v844 = vmul.f32 %v780, %v780
  %v845 = vmul.f32 %v781, %v781
  %v846 = vmul.f32 %v782, %v782
  %v847 = vmul.f32 %v783, %v783
  %v848 = vmul.f32 %v784, %v784
  %v849 = vmul.f32 %v785, %v785
  %v850 = vmul.f32 %v786, %v786
  %v851 = vmul.f32 %v787, %v787
  %v852 = vmul.f32 %v788, %v788
  %v853 = vmul.f32 %v789, %v789
  %v854 = vmul.f32 %v790, %v790
  %v855 = vmul.f32 %v791, %v791
  %v856 = vmul.f32 %v792, %v792
  %v857 = vmul.f32 %v793, %v793
  %v858 = vmul.f32 %v794, %v794
  %v859 = vmul.f32 %v795, %v795
  %v860 = vmul.f32 %v796, %v796
  %v861 = vmul.f32 %v797, %v797
  %v862 = vmul.f32 %v798, %v798
  %v863 = vmul.f32 %v799, %v799
  %v864 = vmul.f32 %v800, %v800
  %v865 = vmul.f32 %v801, %v801
  %v866 = vmul.f32 %v802, %v802
  %v867 = vmul.f32 %v803, %v803
  %v868 = vmul.f32 %v804, %v804
  %v869 = vmul.f32 %v805, %v805
  %v870 = vmul.f32 %v806, %v806
  %v871 = vmul.f32 %v807, %v807
  %v872 = vmul.f32 %v808, %v808
  %v873 = vmul.f32 %v809, %v809
  %v874 = vmul.f32 %v810, %v810
  %v875 = vmul.f32 %v811, %v811
  %v876 = vmul.f32 %v812, %v812
  %v877 = vmul.f32 %v813, %v813
  %v878 = vmul.f32 %v814, %v814
  %v879 = vmul.f32 %v815, %v815
  %v880 = vmul.f32 %v816, %v816
  %v881 = vmul.f32 %v817, %v817
  %v882 = vmul.f32 %v818, %v818
  %v883 = vmul.f32 %v819, %v819
  %v884 = vmul.f32 %v820, %v820
  %v885 = vmul.f32 %v821, %v821
  %v886 = vmul.f32 %v822, %v822
  %v887 = vmul.f32 %v823, %v823
  %v888 = vmul.f32 %v824, %v824
  %v889 = vmul.f32 %v825, %v825
  %v890 = vmul.f32 %v826, %v826
  %v891 = vsel %vm627, %v827, 0.0
  %v892 = vsel %vm627, %v828, 0.0
  %v893 = vadd.f32 %v891, %v892
  %v894 = vsel %vm627, %v829, 0.0
  %v895 = vadd.f32 %v893, %v894
  %v896 = vsel %vm627, %v830, 0.0
  %v897 = vadd.f32 %v895, %v896
  %v898 = vsel %vm627, %v831, 0.0
  %v899 = vadd.f32 %v897, %v898
  %v900 = vsel %vm627, %v832, 0.0
  %v901 = vadd.f32 %v899, %v900
  %v902 = vsel %vm627, %v833, 0.0
  %v903 = vadd.f32 %v901, %v902
  %v904 = vsel %vm627, %v834, 0.0
  %v905 = vadd.f32 %v903, %v904
  %v906 = vsel %vm627, %v835, 0.0
  %v907 = vadd.f32 %v905, %v906
  %v908 = vsel %vm627, %v836, 0.0
  %v909 = vadd.f32 %v907, %v908
  %v910 = vsel %vm627, %v837, 0.0
  %v911 = vadd.f32 %v909, %v910
  %v912 = vsel %vm627, %v838, 0.0
  %v913 = vadd.f32 %v911, %v912
  %v914 = vsel %vm627, %v839, 0.0
  %v915 = vadd.f32 %v913, %v914
  %v916 = vsel %vm627, %v840, 0.0
  %v917 = vadd.f32 %v915, %v916
  %v918 = vsel %vm627, %v841, 0.0
  %v919 = vadd.f32 %v917, %v918
  %v920 = vsel %vm627, %v842, 0.0
  %v921 = vadd.f32 %v919, %v920
  %v922 = vsel %vm627, %v843, 0.0
  %v923 = vadd.f32 %v921, %v922
  %v924 = vsel %vm627, %v844, 0.0
  %v925 = vadd.f32 %v923, %v924
  %v926 = vsel %vm627, %v845, 0.0
  %v927 = vadd.f32 %v925, %v926
  %v928 = vsel %vm627, %v846, 0.0
  %v929 = vadd.f32 %v927, %v928
  %v930 = vsel %vm627, %v847, 0.0
  %v931 = vadd.f32 %v929, %v930
  %v932 = vsel %vm627, %v848, 0.0
  %v933 = vadd.f32 %v931, %v932
  %v934 = vsel %vm627, %v849, 0.0
  %v935 = vadd.f32 %v933, %v934
  %v936 = vsel %vm627, %v850, 0.0
  %v937 = vadd.f32 %v935, %v936
  %v938 = vsel %vm627, %v851, 0.0
  %v939 = vadd.f32 %v937, %v938
  %v940 = vsel %vm627, %v852, 0.0
  %v941 = vadd.f32 %v939, %v940
  %v942 = vsel %vm627, %v853, 0.0
  %v943 = vadd.f32 %v941, %v942
  %v944 = vsel %vm627, %v854, 0.0
  %v945 = vadd.f32 %v943, %v944
  %v946 = vsel %vm627, %v855, 0.0
  %v947 = vadd.f32 %v945, %v946
  %v948 = vsel %vm627, %v856, 0.0
  %v949 = vadd.f32 %v947, %v948
  %v950 = vsel %vm627, %v857, 0.0
  %v951 = vadd.f32 %v949, %v950
  %v952 = vsel %vm627, %v858, 0.0
  %v953 = vadd.f32 %v951, %v952
  %v954 = vsel %vm627, %v859, 0.0
  %v955 = vadd.f32 %v953, %v954
  %v956 = vsel %vm627, %v860, 0.0
  %v957 = vadd.f32 %v955, %v956
  %v958 = vsel %vm627, %v861, 0.0
  %v959 = vadd.f32 %v957, %v958
  %v960 = vsel %vm627, %v862, 0.0
  %v961 = vadd.f32 %v959, %v960
  %v962 = vsel %vm627, %v863, 0.0
  %v963 = vadd.f32 %v961, %v962
  %v964 = vsel %vm627, %v864, 0.0
  %v965 = vadd.f32 %v963, %v964
  %v966 = vsel %vm627, %v865, 0.0
  %v967 = vadd.f32 %v965, %v966
  %v968 = vsel %vm627, %v866, 0.0
  %v969 = vadd.f32 %v967, %v968
  %v970 = vsel %vm627, %v867, 0.0
  %v971 = vadd.f32 %v969, %v970
  %v972 = vsel %vm627, %v868, 0.0
  %v973 = vadd.f32 %v971, %v972
  %v974 = vsel %vm627, %v869, 0.0
  %v975 = vadd.f32 %v973, %v974
  %v976 = vsel %vm627, %v870, 0.0
  %v977 = vadd.f32 %v975, %v976
  %v978 = vsel %vm627, %v871, 0.0
  %v979 = vadd.f32 %v977, %v978
  %v980 = vsel %vm627, %v872, 0.0
  %v981 = vadd.f32 %v979, %v980
  %v982 = vsel %vm627, %v873, 0.0
  %v983 = vadd.f32 %v981, %v982
  %v984 = vsel %vm627, %v874, 0.0
  %v985 = vadd.f32 %v983, %v984
  %v986 = vsel %vm627, %v875, 0.0
  %v987 = vadd.f32 %v985, %v986
  %v988 = vsel %vm627, %v876, 0.0
  %v989 = vadd.f32 %v987, %v988
  %v990 = vsel %vm627, %v877, 0.0
  %v991 = vadd.f32 %v989, %v990
  %v992 = vsel %vm627, %v878, 0.0
  %v993 = vadd.f32 %v991, %v992
  %v994 = vsel %vm627, %v879, 0.0
  %v995 = vadd.f32 %v993, %v994
  %v996 = vsel %vm627, %v880, 0.0
  %v997 = vadd.f32 %v995, %v996
  %v998 = vsel %vm627, %v881, 0.0
  %v999 = vadd.f32 %v997, %v998
  %v1000 = vsel %vm627, %v882, 0.0
  %v1001 = vadd.f32 %v999, %v1000
  %v1002 = vsel %vm627, %v883, 0.0
  %v1003 = vadd.f32 %v1001, %v1002
  %v1004 = vsel %vm627, %v884, 0.0
  %v1005 = vadd.f32 %v1003, %v1004
  %v1006 = vsel %vm627, %v885, 0.0
  %v1007 = vadd.f32 %v1005, %v1006
  %v1008 = vsel %vm627, %v886, 0.0
  %v1009 = vadd.f32 %v1007, %v1008
  %v1010 = vsel %vm627, %v887, 0.0
  %v1011 = vadd.f32 %v1009, %v1010
  %v1012 = vsel %vm627, %v888, 0.0
  %v1013 = vadd.f32 %v1011, %v1012
  %v1014 = vsel %vm627, %v889, 0.0
  %v1015 = vadd.f32 %v1013, %v1014
  %v1016 = vsel %vm627, %v890, 0.0
  %v1017 = vadd.f32 %v1015, %v1016
  %v1018 = vrot.slane %v1017, 4
  %v1019 = vadd.f32 %v1017, %v1018
  %v1020 = vrot.slane %v1019, 2
  %v1021 = vadd.f32 %v1019, %v1020
  %v1022 = vrot.slane %v1021, 1
  %v1023 = vadd.f32 %v1021, %v1022
  %v1024 = vmul.f32 %v1023, %v761
  %v1025 = vadd.f32 %v1024, 1e-05
  %v1026 = vrsqrt.pop %v1025
  %v1027 = vmul.f32 %v763, %v1026
  %v1028 = vmul.f32 %v764, %v1026
  %v1029 = vmul.f32 %v765, %v1026
  %v1030 = vmul.f32 %v766, %v1026
  %v1031 = vmul.f32 %v767, %v1026
  %v1032 = vmul.f32 %v768, %v1026
  %v1033 = vmul.f32 %v769, %v1026
  %v1034 = vmul.f32 %v770, %v1026
  %v1035 = vmul.f32 %v771, %v1026
  %v1036 = vmul.f32 %v772, %v1026
  %v1037 = vmul.f32 %v773, %v1026
  %v1038 = vmul.f32 %v774, %v1026
  %v1039 = vmul.f32 %v775, %v1026
  %v1040 = vmul.f32 %v776, %v1026
  %v1041 = vmul.f32 %v777, %v1026
  %v1042 = vmul.f32 %v778, %v1026
  %v1043 = vmul.f32 %v779, %v1026
  %v1044 = vmul.f32 %v780, %v1026
  %v1045 = vmul.f32 %v781, %v1026
  %v1046 = vmul.f32 %v782, %v1026
  %v1047 = vmul.f32 %v783, %v1026
  %v1048 = vmul.f32 %v784, %v1026
  %v1049 = vmul.f32 %v785, %v1026
  %v1050 = vmul.f32 %v786, %v1026
  %v1051 = vmul.f32 %v787, %v1026
  %v1052 = vmul.f32 %v788, %v1026
  %v1053 = vmul.f32 %v789, %v1026
  %v1054 = vmul.f32 %v790, %v1026
  %v1055 = vmul.f32 %v791, %v1026
  %v1056 = vmul.f32 %v792, %v1026
  %v1057 = vmul.f32 %v793, %v1026
  %v1058 = vmul.f32 %v794, %v1026
  %v1059 = vmul.f32 %v795, %v1026
  %v1060 = vmul.f32 %v796, %v1026
  %v1061 = vmul.f32 %v797, %v1026
  %v1062 = vmul.f32 %v798, %v1026
  %v1063 = vmul.f32 %v799, %v1026
  %v1064 = vmul.f32 %v800, %v1026
  %v1065 = vmul.f32 %v801, %v1026
  %v1066 = vmul.f32 %v802, %v1026
  %v1067 = vmul.f32 %v803, %v1026
  %v1068 = vmul.f32 %v804, %v1026
  %v1069 = vmul.f32 %v805, %v1026
  %v1070 = vmul.f32 %v806, %v1026
  %v1071 = vmul.f32 %v807, %v1026
  %v1072 = vmul.f32 %v808, %v1026
  %v1073 = vmul.f32 %v809, %v1026
  %v1074 = vmul.f32 %v810, %v1026
  %v1075 = vmul.f32 %v811, %v1026
  %v1076 = vmul.f32 %v812, %v1026
  %v1077 = vmul.f32 %v813, %v1026
  %v1078 = vmul.f32 %v814, %v1026
  %v1079 = vmul.f32 %v815, %v1026
  %v1080 = vmul.f32 %v816, %v1026
  %v1081 = vmul.f32 %v817, %v1026
  %v1082 = vmul.f32 %v818, %v1026
  %v1083 = vmul.f32 %v819, %v1026
  %v1084 = vmul.f32 %v820, %v1026
  %v1085 = vmul.f32 %v821, %v1026
  %v1086 = vmul.f32 %v822, %v1026
  %v1087 = vmul.f32 %v823, %v1026
  %v1088 = vmul.f32 %v824, %v1026
  %v1089 = vmul.f32 %v825, %v1026
  %v1090 = vmul.f32 %v826, %v1026
  %v1091 = vld [vmem:[%s2] sm:$0x1]
  %v1093 = vlaneseq
  %v1094 = vshrl.u32 %v1093, 7
  %v1095 = vsub.s32 0, %v1094
  %v1096 = vrot.slane %v1091, %v1095
  %v1098 = vmul.f32 %v1027, %v1096
  %v1099 = vmul.f32 %v1028, %v1096
  %v1100 = vmul.f32 %v1029, %v1096
  %v1101 = vmul.f32 %v1030, %v1096
  %v1102 = vmul.f32 %v1031, %v1096
  %v1103 = vmul.f32 %v1032, %v1096
  %v1104 = vmul.f32 %v1033, %v1096
  %v1105 = vmul.f32 %v1034, %v1096
  %v1106 = vmul.f32 %v1035, %v1096
  %v1107 = vmul.f32 %v1036, %v1096
  %v1108 = vmul.f32 %v1037, %v1096
  %v1109 = vmul.f32 %v1038, %v1096
  %v1110 = vmul.f32 %v1039, %v1096
  %v1111 = vmul.f32 %v1040, %v1096
  %v1112 = vmul.f32 %v1041, %v1096
  %v1113 = vmul.f32 %v1042, %v1096
  %v1114 = vmul.f32 %v1043, %v1096
  %v1115 = vmul.f32 %v1044, %v1096
  %v1116 = vmul.f32 %v1045, %v1096
  %v1117 = vmul.f32 %v1046, %v1096
  %v1118 = vmul.f32 %v1047, %v1096
  %v1119 = vmul.f32 %v1048, %v1096
  %v1120 = vmul.f32 %v1049, %v1096
  %v1121 = vmul.f32 %v1050, %v1096
  %v1122 = vmul.f32 %v1051, %v1096
  %v1123 = vmul.f32 %v1052, %v1096
  %v1124 = vmul.f32 %v1053, %v1096
  %v1125 = vmul.f32 %v1054, %v1096
  %v1126 = vmul.f32 %v1055, %v1096
  %v1127 = vmul.f32 %v1056, %v1096
  %v1128 = vmul.f32 %v1057, %v1096
  %v1129 = vmul.f32 %v1058, %v1096
  %v1130 = vmul.f32 %v1059, %v1096
  %v1131 = vmul.f32 %v1060, %v1096
  %v1132 = vmul.f32 %v1061, %v1096
  %v1133 = vmul.f32 %v1062, %v1096
  %v1134 = vmul.f32 %v1063, %v1096
  %v1135 = vmul.f32 %v1064, %v1096
  %v1136 = vmul.f32 %v1065, %v1096
  %v1137 = vmul.f32 %v1066, %v1096
  %v1138 = vmul.f32 %v1067, %v1096
  %v1139 = vmul.f32 %v1068, %v1096
  %v1140 = vmul.f32 %v1069, %v1096
  %v1141 = vmul.f32 %v1070, %v1096
  %v1142 = vmul.f32 %v1071, %v1096
  %v1143 = vmul.f32 %v1072, %v1096
  %v1144 = vmul.f32 %v1073, %v1096
  %v1145 = vmul.f32 %v1074, %v1096
  %v1146 = vmul.f32 %v1075, %v1096
  %v1147 = vmul.f32 %v1076, %v1096
  %v1148 = vmul.f32 %v1077, %v1096
  %v1149 = vmul.f32 %v1078, %v1096
  %v1150 = vmul.f32 %v1079, %v1096
  %v1151 = vmul.f32 %v1080, %v1096
  %v1152 = vmul.f32 %v1081, %v1096
  %v1153 = vmul.f32 %v1082, %v1096
  %v1154 = vmul.f32 %v1083, %v1096
  %v1155 = vmul.f32 %v1084, %v1096
  %v1156 = vmul.f32 %v1085, %v1096
  %v1157 = vmul.f32 %v1086, %v1096
  %v1158 = vmul.f32 %v1087, %v1096
  %v1159 = vmul.f32 %v1088, %v1096
  %v1160 = vmul.f32 %v1089, %v1096
  %v1161 = vmul.f32 %v1090, %v1096
  %v1162 = vld [vmem:[%s3] sm:$0x1]
  %v1164 = vlaneseq
  %v1165 = vshrl.u32 %v1164, 7
  %v1166 = vsub.s32 0, %v1165
  %v1167 = vrot.slane %v1162, %v1166
  %v1169 = vadd.f32 %v1098, %v1167
  %v1170 = vadd.f32 %v1099, %v1167
  %v1171 = vadd.f32 %v1100, %v1167
  %v1172 = vadd.f32 %v1101, %v1167
  %v1173 = vadd.f32 %v1102, %v1167
  %v1174 = vadd.f32 %v1103, %v1167
  %v1175 = vadd.f32 %v1104, %v1167
  %v1176 = vadd.f32 %v1105, %v1167
  %v1177 = vadd.f32 %v1106, %v1167
  %v1178 = vadd.f32 %v1107, %v1167
  %v1179 = vadd.f32 %v1108, %v1167
  %v1180 = vadd.f32 %v1109, %v1167
  %v1181 = vadd.f32 %v1110, %v1167
  %v1182 = vadd.f32 %v1111, %v1167
  %v1183 = vadd.f32 %v1112, %v1167
  %v1184 = vadd.f32 %v1113, %v1167
  %v1185 = vadd.f32 %v1114, %v1167
  %v1186 = vadd.f32 %v1115, %v1167
  %v1187 = vadd.f32 %v1116, %v1167
  %v1188 = vadd.f32 %v1117, %v1167
  %v1189 = vadd.f32 %v1118, %v1167
  %v1190 = vadd.f32 %v1119, %v1167
  %v1191 = vadd.f32 %v1120, %v1167
  %v1192 = vadd.f32 %v1121, %v1167
  %v1193 = vadd.f32 %v1122, %v1167
  %v1194 = vadd.f32 %v1123, %v1167
  %v1195 = vadd.f32 %v1124, %v1167
  %v1196 = vadd.f32 %v1125, %v1167
  %v1197 = vadd.f32 %v1126, %v1167
  %v1198 = vadd.f32 %v1127, %v1167
  %v1199 = vadd.f32 %v1128, %v1167
  %v1200 = vadd.f32 %v1129, %v1167
  %v1201 = vadd.f32 %v1130, %v1167
  %v1202 = vadd.f32 %v1131, %v1167
  %v1203 = vadd.f32 %v1132, %v1167
  %v1204 = vadd.f32 %v1133, %v1167
  %v1205 = vadd.f32 %v1134, %v1167
  %v1206 = vadd.f32 %v1135, %v1167
  %v1207 = vadd.f32 %v1136, %v1167
  %v1208 = vadd.f32 %v1137, %v1167
  %v1209 = vadd.f32 %v1138, %v1167
  %v1210 = vadd.f32 %v1139, %v1167
  %v1211 = vadd.f32 %v1140, %v1167
  %v1212 = vadd.f32 %v1141, %v1167
  %v1213 = vadd.f32 %v1142, %v1167
  %v1214 = vadd.f32 %v1143, %v1167
  %v1215 = vadd.f32 %v1144, %v1167
  %v1216 = vadd.f32 %v1145, %v1167
  %v1217 = vadd.f32 %v1146, %v1167
  %v1218 = vadd.f32 %v1147, %v1167
  %v1219 = vadd.f32 %v1148, %v1167
  %v1220 = vadd.f32 %v1149, %v1167
  %v1221 = vadd.f32 %v1150, %v1167
  %v1222 = vadd.f32 %v1151, %v1167
  %v1223 = vadd.f32 %v1152, %v1167
  %v1224 = vadd.f32 %v1153, %v1167
  %v1225 = vadd.f32 %v1154, %v1167
  %v1226 = vadd.f32 %v1155, %v1167
  %v1227 = vadd.f32 %v1156, %v1167
  %v1228 = vadd.f32 %v1157, %v1167
  %v1229 = vadd.f32 %v1158, %v1167
  %v1230 = vadd.f32 %v1159, %v1167
  %v1231 = vadd.f32 %v1160, %v1167
  %v1232 = vadd.f32 %v1161, %v1167
  %vm1233 = vcmp.ge.f32.partialorder %v1169, 0.0
  %vm1234 = vcmp.ge.f32.partialorder %v1170, 0.0
  %vm1235 = vcmp.ge.f32.partialorder %v1171, 0.0
  %vm1236 = vcmp.ge.f32.partialorder %v1172, 0.0
  %vm1237 = vcmp.ge.f32.partialorder %v1173, 0.0
  %vm1238 = vcmp.ge.f32.partialorder %v1174, 0.0
  %vm1239 = vcmp.ge.f32.partialorder %v1175, 0.0
  %vm1240 = vcmp.ge.f32.partialorder %v1176, 0.0
  %vm1241 = vcmp.ge.f32.partialorder %v1177, 0.0
  %vm1242 = vcmp.ge.f32.partialorder %v1178, 0.0
  %vm1243 = vcmp.ge.f32.partialorder %v1179, 0.0
  %vm1244 = vcmp.ge.f32.partialorder %v1180, 0.0
  %vm1245 = vcmp.ge.f32.partialorder %v1181, 0.0
  %vm1246 = vcmp.ge.f32.partialorder %v1182, 0.0
  %vm1247 = vcmp.ge.f32.partialorder %v1183, 0.0
  %vm1248 = vcmp.ge.f32.partialorder %v1184, 0.0
  %vm1249 = vcmp.ge.f32.partialorder %v1185, 0.0
  %vm1250 = vcmp.ge.f32.partialorder %v1186, 0.0
  %vm1251 = vcmp.ge.f32.partialorder %v1187, 0.0
  %vm1252 = vcmp.ge.f32.partialorder %v1188, 0.0
  %vm1253 = vcmp.ge.f32.partialorder %v1189, 0.0
  %vm1254 = vcmp.ge.f32.partialorder %v1190, 0.0
  %vm1255 = vcmp.ge.f32.partialorder %v1191, 0.0
  %vm1256 = vcmp.ge.f32.partialorder %v1192, 0.0
  %vm1257 = vcmp.ge.f32.partialorder %v1193, 0.0
  %vm1258 = vcmp.ge.f32.partialorder %v1194, 0.0
  %vm1259 = vcmp.ge.f32.partialorder %v1195, 0.0
  %vm1260 = vcmp.ge.f32.partialorder %v1196, 0.0
  %vm1261 = vcmp.ge.f32.partialorder %v1197, 0.0
  %vm1262 = vcmp.ge.f32.partialorder %v1198, 0.0
  %vm1263 = vcmp.ge.f32.partialorder %v1199, 0.0
  %vm1264 = vcmp.ge.f32.partialorder %v1200, 0.0
  %vm1265 = vcmp.ge.f32.partialorder %v1201, 0.0
  %vm1266 = vcmp.ge.f32.partialorder %v1202, 0.0
  %vm1267 = vcmp.ge.f32.partialorder %v1203, 0.0
  %vm1268 = vcmp.ge.f32.partialorder %v1204, 0.0
  %vm1269 = vcmp.ge.f32.partialorder %v1205, 0.0
  %vm1270 = vcmp.ge.f32.partialorder %v1206, 0.0
  %vm1271 = vcmp.ge.f32.partialorder %v1207, 0.0
  %vm1272 = vcmp.ge.f32.partialorder %v1208, 0.0
  %vm1273 = vcmp.ge.f32.partialorder %v1209, 0.0
  %vm1274 = vcmp.ge.f32.partialorder %v1210, 0.0
  %vm1275 = vcmp.ge.f32.partialorder %v1211, 0.0
  %vm1276 = vcmp.ge.f32.partialorder %v1212, 0.0
  %vm1277 = vcmp.ge.f32.partialorder %v1213, 0.0
  %vm1278 = vcmp.ge.f32.partialorder %v1214, 0.0
  %vm1279 = vcmp.ge.f32.partialorder %v1215, 0.0
  %vm1280 = vcmp.ge.f32.partialorder %v1216, 0.0
  %vm1281 = vcmp.ge.f32.partialorder %v1217, 0.0
  %vm1282 = vcmp.ge.f32.partialorder %v1218, 0.0
  %vm1283 = vcmp.ge.f32.partialorder %v1219, 0.0
  %vm1284 = vcmp.ge.f32.partialorder %v1220, 0.0
  %vm1285 = vcmp.ge.f32.partialorder %v1221, 0.0
  %vm1286 = vcmp.ge.f32.partialorder %v1222, 0.0
  %vm1287 = vcmp.ge.f32.partialorder %v1223, 0.0
  %vm1288 = vcmp.ge.f32.partialorder %v1224, 0.0
  %vm1289 = vcmp.ge.f32.partialorder %v1225, 0.0
  %vm1290 = vcmp.ge.f32.partialorder %v1226, 0.0
  %vm1291 = vcmp.ge.f32.partialorder %v1227, 0.0
  %vm1292 = vcmp.ge.f32.partialorder %v1228, 0.0
  %vm1293 = vcmp.ge.f32.partialorder %v1229, 0.0
  %vm1294 = vcmp.ge.f32.partialorder %v1230, 0.0
  %vm1295 = vcmp.ge.f32.partialorder %v1231, 0.0
  %vm1296 = vcmp.ge.f32.partialorder %v1232, 0.0
  %v1297 = vmul.f32 %v1169, 0.2
  %v1298 = vmul.f32 %v1170, 0.2
  %v1299 = vmul.f32 %v1171, 0.2
  %v1300 = vmul.f32 %v1172, 0.2
  %v1301 = vmul.f32 %v1173, 0.2
  %v1302 = vmul.f32 %v1174, 0.2
  %v1303 = vmul.f32 %v1175, 0.2
  %v1304 = vmul.f32 %v1176, 0.2
  %v1305 = vmul.f32 %v1177, 0.2
  %v1306 = vmul.f32 %v1178, 0.2
  %v1307 = vmul.f32 %v1179, 0.2
  %v1308 = vmul.f32 %v1180, 0.2
  %v1309 = vmul.f32 %v1181, 0.2
  %v1310 = vmul.f32 %v1182, 0.2
  %v1311 = vmul.f32 %v1183, 0.2
  %v1312 = vmul.f32 %v1184, 0.2
  %v1313 = vmul.f32 %v1185, 0.2
  %v1314 = vmul.f32 %v1186, 0.2
  %v1315 = vmul.f32 %v1187, 0.2
  %v1316 = vmul.f32 %v1188, 0.2
  %v1317 = vmul.f32 %v1189, 0.2
  %v1318 = vmul.f32 %v1190, 0.2
  %v1319 = vmul.f32 %v1191, 0.2
  %v1320 = vmul.f32 %v1192, 0.2
  %v1321 = vmul.f32 %v1193, 0.2
  %v1322 = vmul.f32 %v1194, 0.2
  %v1323 = vmul.f32 %v1195, 0.2
  %v1324 = vmul.f32 %v1196, 0.2
  %v1325 = vmul.f32 %v1197, 0.2
  %v1326 = vmul.f32 %v1198, 0.2
  %v1327 = vmul.f32 %v1199, 0.2
  %v1328 = vmul.f32 %v1200, 0.2
  %v1329 = vmul.f32 %v1201, 0.2
  %v1330 = vmul.f32 %v1202, 0.2
  %v1331 = vmul.f32 %v1203, 0.2
  %v1332 = vmul.f32 %v1204, 0.2
  %v1333 = vmul.f32 %v1205, 0.2
  %v1334 = vmul.f32 %v1206, 0.2
  %v1335 = vmul.f32 %v1207, 0.2
  %v1336 = vmul.f32 %v1208, 0.2
  %v1337 = vmul.f32 %v1209, 0.2
  %v1338 = vmul.f32 %v1210, 0.2
  %v1339 = vmul.f32 %v1211, 0.2
  %v1340 = vmul.f32 %v1212, 0.2
  %v1341 = vmul.f32 %v1213, 0.2
  %v1342 = vmul.f32 %v1214, 0.2
  %v1343 = vmul.f32 %v1215, 0.2
  %v1344 = vmul.f32 %v1216, 0.2
  %v1345 = vmul.f32 %v1217, 0.2
  %v1346 = vmul.f32 %v1218, 0.2
  %v1347 = vmul.f32 %v1219, 0.2
  %v1348 = vmul.f32 %v1220, 0.2
  %v1349 = vmul.f32 %v1221, 0.2
  %v1350 = vmul.f32 %v1222, 0.2
  %v1351 = vmul.f32 %v1223, 0.2
  %v1352 = vmul.f32 %v1224, 0.2
  %v1353 = vmul.f32 %v1225, 0.2
  %v1354 = vmul.f32 %v1226, 0.2
  %v1355 = vmul.f32 %v1227, 0.2
  %v1356 = vmul.f32 %v1228, 0.2
  %v1357 = vmul.f32 %v1229, 0.2
  %v1358 = vmul.f32 %v1230, 0.2
  %v1359 = vmul.f32 %v1231, 0.2
  %v1360 = vmul.f32 %v1232, 0.2
  %v1361 = vsel %vm1233, %v1169, %v1297
  %v1362 = vsel %vm1234, %v1170, %v1298
  %v1363 = vsel %vm1235, %v1171, %v1299
  %v1364 = vsel %vm1236, %v1172, %v1300
  %v1365 = vsel %vm1237, %v1173, %v1301
  %v1366 = vsel %vm1238, %v1174, %v1302
  %v1367 = vsel %vm1239, %v1175, %v1303
  %v1368 = vsel %vm1240, %v1176, %v1304
  %v1369 = vsel %vm1241, %v1177, %v1305
  %v1370 = vsel %vm1242, %v1178, %v1306
  %v1371 = vsel %vm1243, %v1179, %v1307
  %v1372 = vsel %vm1244, %v1180, %v1308
  %v1373 = vsel %vm1245, %v1181, %v1309
  %v1374 = vsel %vm1246, %v1182, %v1310
  %v1375 = vsel %vm1247, %v1183, %v1311
  %v1376 = vsel %vm1248, %v1184, %v1312
  %v1377 = vsel %vm1249, %v1185, %v1313
  %v1378 = vsel %vm1250, %v1186, %v1314
  %v1379 = vsel %vm1251, %v1187, %v1315
  %v1380 = vsel %vm1252, %v1188, %v1316
  %v1381 = vsel %vm1253, %v1189, %v1317
  %v1382 = vsel %vm1254, %v1190, %v1318
  %v1383 = vsel %vm1255, %v1191, %v1319
  %v1384 = vsel %vm1256, %v1192, %v1320
  %v1385 = vsel %vm1257, %v1193, %v1321
  %v1386 = vsel %vm1258, %v1194, %v1322
  %v1387 = vsel %vm1259, %v1195, %v1323
  %v1388 = vsel %vm1260, %v1196, %v1324
  %v1389 = vsel %vm1261, %v1197, %v1325
  %v1390 = vsel %vm1262, %v1198, %v1326
  %v1391 = vsel %vm1263, %v1199, %v1327
  %v1392 = vsel %vm1264, %v1200, %v1328
  %v1393 = vsel %vm1265, %v1201, %v1329
  %v1394 = vsel %vm1266, %v1202, %v1330
  %v1395 = vsel %vm1267, %v1203, %v1331
  %v1396 = vsel %vm1268, %v1204, %v1332
  %v1397 = vsel %vm1269, %v1205, %v1333
  %v1398 = vsel %vm1270, %v1206, %v1334
  %v1399 = vsel %vm1271, %v1207, %v1335
  %v1400 = vsel %vm1272, %v1208, %v1336
  %v1401 = vsel %vm1273, %v1209, %v1337
  %v1402 = vsel %vm1274, %v1210, %v1338
  %v1403 = vsel %vm1275, %v1211, %v1339
  %v1404 = vsel %vm1276, %v1212, %v1340
  %v1405 = vsel %vm1277, %v1213, %v1341
  %v1406 = vsel %vm1278, %v1214, %v1342
  %v1407 = vsel %vm1279, %v1215, %v1343
  %v1408 = vsel %vm1280, %v1216, %v1344
  %v1409 = vsel %vm1281, %v1217, %v1345
  %v1410 = vsel %vm1282, %v1218, %v1346
  %v1411 = vsel %vm1283, %v1219, %v1347
  %v1412 = vsel %vm1284, %v1220, %v1348
  %v1413 = vsel %vm1285, %v1221, %v1349
  %v1414 = vsel %vm1286, %v1222, %v1350
  %v1415 = vsel %vm1287, %v1223, %v1351
  %v1416 = vsel %vm1288, %v1224, %v1352
  %v1417 = vsel %vm1289, %v1225, %v1353
  %v1418 = vsel %vm1290, %v1226, %v1354
  %v1419 = vsel %vm1291, %v1227, %v1355
  %v1420 = vsel %vm1292, %v1228, %v1356
  %v1421 = vsel %vm1293, %v1229, %v1357
  %v1422 = vsel %vm1294, %v1230, %v1358
  %v1423 = vsel %vm1295, %v1231, %v1359
  %v1424 = vsel %vm1296, %v1232, %v1360
  %v1425 = vpack.c.bf16 %v1362, %v1361
  %v1426 = vpack.c.bf16 %v1364, %v1363
  %v1427 = vpack.c.bf16 %v1366, %v1365
  %v1428 = vpack.c.bf16 %v1368, %v1367
  %v1429 = vpack.c.bf16 %v1370, %v1369
  %v1430 = vpack.c.bf16 %v1372, %v1371
  %v1431 = vpack.c.bf16 %v1374, %v1373
  %v1432 = vpack.c.bf16 %v1376, %v1375
  %v1433 = vpack.c.bf16 %v1378, %v1377
  %v1434 = vpack.c.bf16 %v1380, %v1379
  %v1435 = vpack.c.bf16 %v1382, %v1381
  %v1436 = vpack.c.bf16 %v1384, %v1383
  %v1437 = vpack.c.bf16 %v1386, %v1385
  %v1438 = vpack.c.bf16 %v1388, %v1387
  %v1439 = vpack.c.bf16 %v1390, %v1389
  %v1440 = vpack.c.bf16 %v1392, %v1391
  %v1441 = vpack.c.bf16 %v1394, %v1393
  %v1442 = vpack.c.bf16 %v1396, %v1395
  %v1443 = vpack.c.bf16 %v1398, %v1397
  %v1444 = vpack.c.bf16 %v1400, %v1399
  %v1445 = vpack.c.bf16 %v1402, %v1401
  %v1446 = vpack.c.bf16 %v1404, %v1403
  %v1447 = vpack.c.bf16 %v1406, %v1405
  %v1448 = vpack.c.bf16 %v1408, %v1407
  %v1449 = vpack.c.bf16 %v1410, %v1409
  %v1450 = vpack.c.bf16 %v1412, %v1411
  %v1451 = vpack.c.bf16 %v1414, %v1413
  %v1452 = vpack.c.bf16 %v1416, %v1415
  %v1453 = vpack.c.bf16 %v1418, %v1417
  %v1454 = vpack.c.bf16 %v1420, %v1419
  %v1455 = vpack.c.bf16 %v1422, %v1421
  %v1456 = vpack.c.bf16 %v1424, %v1423
  %v1489 = vunpack.c.l.b16 %v1425
  %v1490 = vunpack.c.h.b16 %v1425
  %v1491 = vunpack.c.l.b16 %v1426
  %v1492 = vunpack.c.h.b16 %v1426
  %v1493 = vunpack.c.l.b16 %v1427
  %v1494 = vunpack.c.h.b16 %v1427
  %v1495 = vunpack.c.l.b16 %v1428
  %v1496 = vunpack.c.h.b16 %v1428
  %v1497 = vunpack.c.l.b16 %v1429
  %v1498 = vunpack.c.h.b16 %v1429
  %v1499 = vunpack.c.l.b16 %v1430
  %v1500 = vunpack.c.h.b16 %v1430
  %v1501 = vunpack.c.l.b16 %v1431
  %v1502 = vunpack.c.h.b16 %v1431
  %v1503 = vunpack.c.l.b16 %v1432
  %v1504 = vunpack.c.h.b16 %v1432
  %v1505 = vunpack.c.l.b16 %v1433
  %v1506 = vunpack.c.h.b16 %v1433
  %v1507 = vunpack.c.l.b16 %v1434
  %v1508 = vunpack.c.h.b16 %v1434
  %v1509 = vunpack.c.l.b16 %v1435
  %v1510 = vunpack.c.h.b16 %v1435
  %v1511 = vunpack.c.l.b16 %v1436
  %v1512 = vunpack.c.h.b16 %v1436
  %v1513 = vunpack.c.l.b16 %v1437
  %v1514 = vunpack.c.h.b16 %v1437
  %v1515 = vunpack.c.l.b16 %v1438
  %v1516 = vunpack.c.h.b16 %v1438
  %v1517 = vunpack.c.l.b16 %v1439
  %v1518 = vunpack.c.h.b16 %v1439
  %v1519 = vunpack.c.l.b16 %v1440
  %v1520 = vunpack.c.h.b16 %v1440
  %v1521 = vunpack.c.l.b16 %v1441
  %v1522 = vunpack.c.h.b16 %v1441
  %v1523 = vunpack.c.l.b16 %v1442
  %v1524 = vunpack.c.h.b16 %v1442
  %v1525 = vunpack.c.l.b16 %v1443
  %v1526 = vunpack.c.h.b16 %v1443
  %v1527 = vunpack.c.l.b16 %v1444
  %v1528 = vunpack.c.h.b16 %v1444
  %v1529 = vunpack.c.l.b16 %v1445
  %v1530 = vunpack.c.h.b16 %v1445
  %v1531 = vunpack.c.l.b16 %v1446
  %v1532 = vunpack.c.h.b16 %v1446
  %v1533 = vunpack.c.l.b16 %v1447
  %v1534 = vunpack.c.h.b16 %v1447
  %v1535 = vunpack.c.l.b16 %v1448
  %v1536 = vunpack.c.h.b16 %v1448
  %v1537 = vunpack.c.l.b16 %v1449
  %v1538 = vunpack.c.h.b16 %v1449
  %v1539 = vunpack.c.l.b16 %v1450
  %v1540 = vunpack.c.h.b16 %v1450
  %v1541 = vunpack.c.l.b16 %v1451
  %v1542 = vunpack.c.h.b16 %v1451
  %v1543 = vunpack.c.l.b16 %v1452
  %v1544 = vunpack.c.h.b16 %v1452
  %v1545 = vunpack.c.l.b16 %v1453
  %v1546 = vunpack.c.h.b16 %v1453
  %v1547 = vunpack.c.l.b16 %v1454
  %v1548 = vunpack.c.h.b16 %v1454
  %v1549 = vunpack.c.l.b16 %v1455
  %v1550 = vunpack.c.h.b16 %v1455
  %v1551 = vunpack.c.l.b16 %v1456
  %v1552 = vunpack.c.h.b16 %v1456
  %v1553 = vpack.c.b16 %v1489, %v1489
  %v1554 = vpack.c.b16 %v1490, %v1490
  %v1555 = vpack.c.b16 %v1491, %v1491
  %v1556 = vpack.c.b16 %v1492, %v1492
  %v1557 = vpack.c.b16 %v1493, %v1493
  %v1558 = vpack.c.b16 %v1494, %v1494
  %v1559 = vpack.c.b16 %v1495, %v1495
  %v1560 = vpack.c.b16 %v1496, %v1496
  %v1561 = vpack.c.b16 %v1497, %v1497
  %v1562 = vpack.c.b16 %v1498, %v1498
  %v1563 = vpack.c.b16 %v1499, %v1499
  %v1564 = vpack.c.b16 %v1500, %v1500
  %v1565 = vpack.c.b16 %v1501, %v1501
  %v1566 = vpack.c.b16 %v1502, %v1502
  %v1567 = vpack.c.b16 %v1503, %v1503
  %v1568 = vpack.c.b16 %v1504, %v1504
  %v1569 = vpack.c.b16 %v1505, %v1505
  %v1570 = vpack.c.b16 %v1506, %v1506
  %v1571 = vpack.c.b16 %v1507, %v1507
  %v1572 = vpack.c.b16 %v1508, %v1508
  %v1573 = vpack.c.b16 %v1509, %v1509
  %v1574 = vpack.c.b16 %v1510, %v1510
  %v1575 = vpack.c.b16 %v1511, %v1511
  %v1576 = vpack.c.b16 %v1512, %v1512
  %v1577 = vpack.c.b16 %v1513, %v1513
  %v1578 = vpack.c.b16 %v1514, %v1514
  %v1579 = vpack.c.b16 %v1515, %v1515
  %v1580 = vpack.c.b16 %v1516, %v1516
  %v1581 = vpack.c.b16 %v1517, %v1517
  %v1582 = vpack.c.b16 %v1518, %v1518
  %v1583 = vpack.c.b16 %v1519, %v1519
  %v1584 = vpack.c.b16 %v1520, %v1520
  %v1585 = vpack.c.b16 %v1521, %v1521
  %v1586 = vpack.c.b16 %v1522, %v1522
  %v1587 = vpack.c.b16 %v1523, %v1523
  %v1588 = vpack.c.b16 %v1524, %v1524
  %v1589 = vpack.c.b16 %v1525, %v1525
  %v1590 = vpack.c.b16 %v1526, %v1526
  %v1591 = vpack.c.b16 %v1527, %v1527
  %v1592 = vpack.c.b16 %v1528, %v1528
  %v1593 = vpack.c.b16 %v1529, %v1529
  %v1594 = vpack.c.b16 %v1530, %v1530
  %v1595 = vpack.c.b16 %v1531, %v1531
  %v1596 = vpack.c.b16 %v1532, %v1532
  %v1597 = vpack.c.b16 %v1533, %v1533
  %v1598 = vpack.c.b16 %v1534, %v1534
  %v1599 = vpack.c.b16 %v1535, %v1535
  %v1600 = vpack.c.b16 %v1536, %v1536
  %v1601 = vpack.c.b16 %v1537, %v1537
  %v1602 = vpack.c.b16 %v1538, %v1538
  %v1603 = vpack.c.b16 %v1539, %v1539
  %v1604 = vpack.c.b16 %v1540, %v1540
  %v1605 = vpack.c.b16 %v1541, %v1541
  %v1606 = vpack.c.b16 %v1542, %v1542
  %v1607 = vpack.c.b16 %v1543, %v1543
  %v1608 = vpack.c.b16 %v1544, %v1544
  %v1609 = vpack.c.b16 %v1545, %v1545
  %v1610 = vpack.c.b16 %v1546, %v1546
  %v1611 = vpack.c.b16 %v1547, %v1547
  %v1612 = vpack.c.b16 %v1548, %v1548
  %v1613 = vpack.c.b16 %v1549, %v1549
  %v1614 = vpack.c.b16 %v1550, %v1550
  %v1615 = vpack.c.b16 %v1551, %v1551
  %v1616 = vpack.c.b16 %v1552, %v1552
  %vm1681 = vcmask 125952
  %1682 = vst.msk [vmem:[%s4] sm:$0xf] %vm1681, %v1553
  %1683 = vst.msk [vmem:[%s4 + $0x4] sm:$0xf] %vm1681, %v1554
  %1684 = vst.msk [vmem:[%s4 + $0x8] sm:$0xf] %vm1681, %v1555
  %1685 = vst.msk [vmem:[%s4 + $0xc] sm:$0xf] %vm1681, %v1556
  %1686 = vst.msk [vmem:[%s4 + $0x10] sm:$0xf] %vm1681, %v1557
  %1687 = vst.msk [vmem:[%s4 + $0x14] sm:$0xf] %vm1681, %v1558
  %1688 = vst.msk [vmem:[%s4 + $0x18] sm:$0xf] %vm1681, %v1559
  %1689 = vst.msk [vmem:[%s4 + $0x1c] sm:$0xf] %vm1681, %v1560
  %1690 = vst.msk [vmem:[%s4 + $0x20] sm:$0xf] %vm1681, %v1561
  %1691 = vst.msk [vmem:[%s4 + $0x24] sm:$0xf] %vm1681, %v1562
  %1692 = vst.msk [vmem:[%s4 + $0x28] sm:$0xf] %vm1681, %v1563
  %1693 = vst.msk [vmem:[%s4 + $0x2c] sm:$0xf] %vm1681, %v1564
  %1694 = vst.msk [vmem:[%s4 + $0x30] sm:$0xf] %vm1681, %v1565
  %1695 = vst.msk [vmem:[%s4 + $0x34] sm:$0xf] %vm1681, %v1566
  %1696 = vst.msk [vmem:[%s4 + $0x38] sm:$0xf] %vm1681, %v1567
  %1697 = vst.msk [vmem:[%s4 + $0x3c] sm:$0xf] %vm1681, %v1568
  %1698 = vst.msk [vmem:[%s4 + $0x40] sm:$0xf] %vm1681, %v1569
  %1699 = vst.msk [vmem:[%s4 + $0x44] sm:$0xf] %vm1681, %v1570
  %1700 = vst.msk [vmem:[%s4 + $0x48] sm:$0xf] %vm1681, %v1571
  %1701 = vst.msk [vmem:[%s4 + $0x4c] sm:$0xf] %vm1681, %v1572
  %1702 = vst.msk [vmem:[%s4 + $0x50] sm:$0xf] %vm1681, %v1573
  %1703 = vst.msk [vmem:[%s4 + $0x54] sm:$0xf] %vm1681, %v1574
  %1704 = vst.msk [vmem:[%s4 + $0x58] sm:$0xf] %vm1681, %v1575
  %1705 = vst.msk [vmem:[%s4 + $0x5c] sm:$0xf] %vm1681, %v1576
  %1706 = vst.msk [vmem:[%s4 + $0x60] sm:$0xf] %vm1681, %v1577
  %1707 = vst.msk [vmem:[%s4 + $0x64] sm:$0xf] %vm1681, %v1578
  %1708 = vst.msk [vmem:[%s4 + $0x68] sm:$0xf] %vm1681, %v1579
  %1709 = vst.msk [vmem:[%s4 + $0x6c] sm:$0xf] %vm1681, %v1580
  %1710 = vst.msk [vmem:[%s4 + $0x70] sm:$0xf] %vm1681, %v1581
  %1711 = vst.msk [vmem:[%s4 + $0x74] sm:$0xf] %vm1681, %v1582
  %1712 = vst.msk [vmem:[%s4 + $0x78] sm:$0xf] %vm1681, %v1583
  %1713 = vst.msk [vmem:[%s4 + $0x7c] sm:$0xf] %vm1681, %v1584
  %1714 = vst.msk [vmem:[%s4 + $0x80] sm:$0xf] %vm1681, %v1585
  %1715 = vst.msk [vmem:[%s4 + $0x84] sm:$0xf] %vm1681, %v1586
  %1716 = vst.msk [vmem:[%s4 + $0x88] sm:$0xf] %vm1681, %v1587
  %1717 = vst.msk [vmem:[%s4 + $0x8c] sm:$0xf] %vm1681, %v1588
  %1718 = vst.msk [vmem:[%s4 + $0x90] sm:$0xf] %vm1681, %v1589
  %1719 = vst.msk [vmem:[%s4 + $0x94] sm:$0xf] %vm1681, %v1590
  %1720 = vst.msk [vmem:[%s4 + $0x98] sm:$0xf] %vm1681, %v1591
  %1721 = vst.msk [vmem:[%s4 + $0x9c] sm:$0xf] %vm1681, %v1592
  %1722 = vst.msk [vmem:[%s4 + $0xa0] sm:$0xf] %vm1681, %v1593
  %1723 = vst.msk [vmem:[%s4 + $0xa4] sm:$0xf] %vm1681, %v1594
  %1724 = vst.msk [vmem:[%s4 + $0xa8] sm:$0xf] %vm1681, %v1595
  %1725 = vst.msk [vmem:[%s4 + $0xac] sm:$0xf] %vm1681, %v1596
  %1726 = vst.msk [vmem:[%s4 + $0xb0] sm:$0xf] %vm1681, %v1597
  %1727 = vst.msk [vmem:[%s4 + $0xb4] sm:$0xf] %vm1681, %v1598
  %1728 = vst.msk [vmem:[%s4 + $0xb8] sm:$0xf] %vm1681, %v1599
  %1729 = vst.msk [vmem:[%s4 + $0xbc] sm:$0xf] %vm1681, %v1600
  %1730 = vst.msk [vmem:[%s4 + $0xc0] sm:$0xf] %vm1681, %v1601
  %1731 = vst.msk [vmem:[%s4 + $0xc4] sm:$0xf] %vm1681, %v1602
  %1732 = vst.msk [vmem:[%s4 + $0xc8] sm:$0xf] %vm1681, %v1603
  %1733 = vst.msk [vmem:[%s4 + $0xcc] sm:$0xf] %vm1681, %v1604
  %1734 = vst.msk [vmem:[%s4 + $0xd0] sm:$0xf] %vm1681, %v1605
  %1735 = vst.msk [vmem:[%s4 + $0xd4] sm:$0xf] %vm1681, %v1606
  %1736 = vst.msk [vmem:[%s4 + $0xd8] sm:$0xf] %vm1681, %v1607
  %1737 = vst.msk [vmem:[%s4 + $0xdc] sm:$0xf] %vm1681, %v1608
  %1738 = vst.msk [vmem:[%s4 + $0xe0] sm:$0xf] %vm1681, %v1609
  %1739 = vst.msk [vmem:[%s4 + $0xe4] sm:$0xf] %vm1681, %v1610
  %1740 = vst.msk [vmem:[%s4 + $0xe8] sm:$0xf] %vm1681, %v1611
  %1741 = vst.msk [vmem:[%s4 + $0xec] sm:$0xf] %vm1681, %v1612
  %1742 = vst.msk [vmem:[%s4 + $0xf0] sm:$0xf] %vm1681, %v1613
  %1743 = vst.msk [vmem:[%s4 + $0xf4] sm:$0xf] %vm1681, %v1614
  %1744 = vst.msk [vmem:[%s4 + $0xf8] sm:$0xf] %vm1681, %v1615
  %1745 = vst.msk [vmem:[%s4 + $0xfc] sm:$0xf] %vm1681, %v1616
  // Predicated region
  $region18: #{lidar_encoder_forward.6} parent=0 // pred_check
    _
  $region19: #{lidar_encoder_forward.6} parent=0 // pred_check_branch
    %1747 = sbr.rel (0) target = $region21
  $region20: #{lidar_encoder_forward.6} parent=0 // pred_region
    _
  $region21: #{lidar_encoder_forward.6} parent=0 // pred_fallthru
    _
  // Predicated region
  $region22: #{lidar_encoder_forward.6} parent=0 // pred_check
    _
  $region23: #{lidar_encoder_forward.6} parent=0 // pred_check_branch
    %1749 = sbr.rel (0) target = $region25
  $region24: #{lidar_encoder_forward.6} parent=0 // pred_region
    _
  $region25: #{lidar_encoder_forward.6} parent=0 // pred_fallthru
    _

// kernel: lidar_encoder_forward.7
$region0: #{lidar_encoder_forward.7}
  #allocation0 [shape = 'u32[]', space=smem, size = 0x4, offset = 0x4, fixed_abs, tag = 'smem constant byte address 0x4 - core index']
  #allocation1 [shape = 'u32[144,128]{1,0:T(1,128)}', space=vmem, size = 0x12000, scoped, tag = 'internal scratch']
  %s0 = inlined_call_operand.vmem [shape: bf16[128,256], index: 0, kind: input, shape index: {}]
  %s1 = inlined_call_operand.vmem [shape: bf16[256,32], index: 1, kind: input, shape index: {}]
  %s2 = inlined_call_operand.vmem [shape: f32[1,32], index: 2, kind: input, shape index: {}]
  %s3 = inlined_call_operand.vmem [shape: f32[1,32], index: 3, kind: input, shape index: {}]
  %s4 = inlined_call_operand.vmem [shape: bf16[128,32], index: 4, kind: output, shape index: {}]
  %s5 = sld [smem:[#allocation0]]
  $region26: #{lidar_encoder_forward.7} parent=0
    _
  %s7 = ssub.s32 1, %s5
  %s8 = scalar_select 0, %s7, %s5
  // Predicated region
  $region2: #{lidar_encoder_forward.7} parent=0 // pred_check
    _
  $region3: #{lidar_encoder_forward.7} parent=0 // pred_check_branch
    %10 = sbr.rel (0) target = $region5
  $region4: #{lidar_encoder_forward.7} parent=0 // pred_region
    _
  $region5: #{lidar_encoder_forward.7} parent=0 // pred_fallthru
    _
  // Predicated region
  $region6: #{lidar_encoder_forward.7} parent=0 // pred_check
    _
  $region7: #{lidar_encoder_forward.7} parent=0 // pred_check_branch
    %12 = sbr.rel (0) target = $region9
  $region8: #{lidar_encoder_forward.7} parent=0 // pred_region
    _
  $region9: #{lidar_encoder_forward.7} parent=0 // pred_fallthru
    _
  // Predicated region
  $region10: #{lidar_encoder_forward.7} parent=0 // pred_check
    _
  $region11: #{lidar_encoder_forward.7} parent=0 // pred_check_branch
    %14 = sbr.rel (0) target = $region13
  $region12: #{lidar_encoder_forward.7} parent=0 // pred_region
    _
  $region13: #{lidar_encoder_forward.7} parent=0 // pred_fallthru
    _
  // Predicated region
  $region14: #{lidar_encoder_forward.7} parent=0 // pred_check
    _
  $region15: #{lidar_encoder_forward.7} parent=0 // pred_check_branch
    %16 = sbr.rel (0) target = $region17
  $region16: #{lidar_encoder_forward.7} parent=0 // pred_region
    _
  $region17: #{lidar_encoder_forward.7} parent=0 // pred_fallthru
    _
  %v18 = vld [vmem:[%s0] sm:$0xff]
  %v19 = vld [vmem:[%s0 + $0x8] sm:$0xff]
  %v20 = vld [vmem:[%s0 + $0x10] sm:$0xff]
  %v21 = vld [vmem:[%s0 + $0x18] sm:$0xff]
  %v22 = vld [vmem:[%s0 + $0x20] sm:$0xff]
  %v23 = vld [vmem:[%s0 + $0x28] sm:$0xff]
  %v24 = vld [vmem:[%s0 + $0x30] sm:$0xff]
  %v25 = vld [vmem:[%s0 + $0x38] sm:$0xff]
  %v26 = vld [vmem:[%s0 + $0x40] sm:$0xff]
  %v27 = vld [vmem:[%s0 + $0x48] sm:$0xff]
  %v28 = vld [vmem:[%s0 + $0x50] sm:$0xff]
  %v29 = vld [vmem:[%s0 + $0x58] sm:$0xff]
  %v30 = vld [vmem:[%s0 + $0x60] sm:$0xff]
  %v31 = vld [vmem:[%s0 + $0x68] sm:$0xff]
  %v32 = vld [vmem:[%s0 + $0x70] sm:$0xff]
  %v33 = vld [vmem:[%s0 + $0x78] sm:$0xff]
  %v34 = vld [vmem:[%s1] sm:$0xf]
  %v35 = vld [vmem:[%s1 + $0x4] sm:$0xf]
  %v36 = vld [vmem:[%s1 + $0x8] sm:$0xf]
  %v37 = vld [vmem:[%s1 + $0xc] sm:$0xf]
  %v38 = vld [vmem:[%s1 + $0x10] sm:$0xf]
  %v39 = vld [vmem:[%s1 + $0x14] sm:$0xf]
  %v40 = vld [vmem:[%s1 + $0x18] sm:$0xf]
  %v41 = vld [vmem:[%s1 + $0x1c] sm:$0xf]
  %v42 = vld [vmem:[%s1 + $0x20] sm:$0xf]
  %v43 = vld [vmem:[%s1 + $0x24] sm:$0xf]
  %v44 = vld [vmem:[%s1 + $0x28] sm:$0xf]
  %v45 = vld [vmem:[%s1 + $0x2c] sm:$0xf]
  %v46 = vld [vmem:[%s1 + $0x30] sm:$0xf]
  %v47 = vld [vmem:[%s1 + $0x34] sm:$0xf]
  %v48 = vld [vmem:[%s1 + $0x38] sm:$0xf]
  %v49 = vld [vmem:[%s1 + $0x3c] sm:$0xf]
  %v50 = vld [vmem:[%s1 + $0x40] sm:$0xf]
  %v51 = vld [vmem:[%s1 + $0x44] sm:$0xf]
  %v52 = vld [vmem:[%s1 + $0x48] sm:$0xf]
  %v53 = vld [vmem:[%s1 + $0x4c] sm:$0xf]
  %v54 = vld [vmem:[%s1 + $0x50] sm:$0xf]
  %v55 = vld [vmem:[%s1 + $0x54] sm:$0xf]
  %v56 = vld [vmem:[%s1 + $0x58] sm:$0xf]
  %v57 = vld [vmem:[%s1 + $0x5c] sm:$0xf]
  %v58 = vld [vmem:[%s1 + $0x60] sm:$0xf]
  %v59 = vld [vmem:[%s1 + $0x64] sm:$0xf]
  %v60 = vld [vmem:[%s1 + $0x68] sm:$0xf]
  %v61 = vld [vmem:[%s1 + $0x6c] sm:$0xf]
  %v62 = vld [vmem:[%s1 + $0x70] sm:$0xf]
  %v63 = vld [vmem:[%s1 + $0x74] sm:$0xf]
  %v64 = vld [vmem:[%s1 + $0x78] sm:$0xf]
  %v65 = vld [vmem:[%s1 + $0x7c] sm:$0xf]
  %v82 = vunpack.c.l.b16 %v18
  %v83 = vunpack.c.h.b16 %v18
  %v84 = vunpack.c.l.b16 %v19
  %v85 = vunpack.c.h.b16 %v19
  %v86 = vunpack.c.l.b16 %v20
  %v87 = vunpack.c.h.b16 %v20
  %v88 = vunpack.c.l.b16 %v21
  %v89 = vunpack.c.h.b16 %v21
  %v90 = vunpack.c.l.b16 %v22
  %v91 = vunpack.c.h.b16 %v22
  %v92 = vunpack.c.l.b16 %v23
  %v93 = vunpack.c.h.b16 %v23
  %v94 = vunpack.c.l.b16 %v24
  %v95 = vunpack.c.h.b16 %v24
  %v96 = vunpack.c.l.b16 %v25
  %v97 = vunpack.c.h.b16 %v25
  %v98 = vunpack.c.l.b16 %v26
  %v99 = vunpack.c.h.b16 %v26
  %v100 = vunpack.c.l.b16 %v27
  %v101 = vunpack.c.h.b16 %v27
  %v102 = vunpack.c.l.b16 %v28
  %v103 = vunpack.c.h.b16 %v28
  %v104 = vunpack.c.l.b16 %v29
  %v105 = vunpack.c.h.b16 %v29
  %v106 = vunpack.c.l.b16 %v30
  %v107 = vunpack.c.h.b16 %v30
  %v108 = vunpack.c.l.b16 %v31
  %v109 = vunpack.c.h.b16 %v31
  %v110 = vunpack.c.l.b16 %v32
  %v111 = vunpack.c.h.b16 %v32
  %v112 = vunpack.c.l.b16 %v33
  %v113 = vunpack.c.h.b16 %v33
  %v114 = vpack.c.b16 %v84, %v82
  %v115 = vpack.c.b16 %v85, %v83
  %v116 = vpack.c.b16 %v88, %v86
  %v117 = vpack.c.b16 %v89, %v87
  %v118 = vpack.c.b16 %v92, %v90
  %v119 = vpack.c.b16 %v93, %v91
  %v120 = vpack.c.b16 %v96, %v94
  %v121 = vpack.c.b16 %v97, %v95
  %v122 = vpack.c.b16 %v100, %v98
  %v123 = vpack.c.b16 %v101, %v99
  %v124 = vpack.c.b16 %v104, %v102
  %v125 = vpack.c.b16 %v105, %v103
  %v126 = vpack.c.b16 %v108, %v106
  %v127 = vpack.c.b16 %v109, %v107
  %v128 = vpack.c.b16 %v112, %v110
  %v129 = vpack.c.b16 %v113, %v111
  %v178 = vunpack.c.l.b16 %v34
  %v179 = vunpack.c.l.b16 %v35
  %v180 = vunpack.c.l.b16 %v36
  %v181 = vunpack.c.l.b16 %v37
  %v182 = vunpack.c.l.b16 %v38
  %v183 = vunpack.c.l.b16 %v39
  %v184 = vunpack.c.l.b16 %v40
  %v185 = vunpack.c.l.b16 %v41
  %v186 = vunpack.c.l.b16 %v42
  %v187 = vunpack.c.l.b16 %v43
  %v188 = vunpack.c.l.b16 %v44
  %v189 = vunpack.c.l.b16 %v45
  %v190 = vunpack.c.l.b16 %v46
  %v191 = vunpack.c.l.b16 %v47
  %v192 = vunpack.c.l.b16 %v48
  %v193 = vunpack.c.l.b16 %v49
  %v194 = vunpack.c.l.b16 %v50
  %v195 = vunpack.c.l.b16 %v51
  %v196 = vunpack.c.l.b16 %v52
  %v197 = vunpack.c.l.b16 %v53
  %v198 = vunpack.c.l.b16 %v54
  %v199 = vunpack.c.l.b16 %v55
  %v200 = vunpack.c.l.b16 %v56
  %v201 = vunpack.c.l.b16 %v57
  %v202 = vunpack.c.l.b16 %v58
  %v203 = vunpack.c.l.b16 %v59
  %v204 = vunpack.c.l.b16 %v60
  %v205 = vunpack.c.l.b16 %v61
  %v206 = vunpack.c.l.b16 %v62
  %v207 = vunpack.c.l.b16 %v63
  %v208 = vunpack.c.l.b16 %v64
  %v209 = vunpack.c.l.b16 %v65
  %v210 = vpack.c.b16 %v179, %v178
  %v211 = vpack.c.b16 %v181, %v180
  %v212 = vpack.c.b16 %v183, %v182
  %v213 = vpack.c.b16 %v185, %v184
  %v214 = vpack.c.b16 %v187, %v186
  %v215 = vpack.c.b16 %v189, %v188
  %v216 = vpack.c.b16 %v191, %v190
  %v217 = vpack.c.b16 %v193, %v192
  %v218 = vpack.c.b16 %v195, %v194
  %v219 = vpack.c.b16 %v197, %v196
  %v220 = vpack.c.b16 %v199, %v198
  %v221 = vpack.c.b16 %v201, %v200
  %v222 = vpack.c.b16 %v203, %v202
  %v223 = vpack.c.b16 %v205, %v204
  %v224 = vpack.c.b16 %v207, %v206
  %v225 = vpack.c.b16 %v209, %v208
  %242 = vmatprep.subr.bf16.mxu0 0
  %243 = vmatpush1.bf16.msra.mxu0 %v217
  %244 = vmatprep.subr.bf16.mxu0 0
  %245 = vmatpush1.bf16.msra.mxu0 %v216
  %246 = vmatprep.subr.bf16.mxu0 0
  %247 = vmatpush1.bf16.msra.mxu0 %v215
  %248 = vmatprep.subr.bf16.mxu0 0
  %249 = vmatpush1.bf16.msra.mxu0 %v214
  %250 = vmatprep.subr.bf16.mxu0 0
  %251 = vmatpush1.bf16.msra.mxu0 %v213
  %252 = vmatprep.subr.bf16.mxu0 0
  %253 = vmatpush1.bf16.msra.mxu0 %v212
  %254 = vmatprep.subr.bf16.mxu0 0
  %255 = vmatpush1.bf16.msra.mxu0 %v211
  %256 = vmatprep.subr.bf16.mxu0 0
  %257 = vmatpush1.bf16.msra.mxu0 %v210
  %258 = vmatprep.subr.bf16.mxu0 0
  %259 = vmatpush2.bf16.msra.mxu0 %v225
  %260 = vmatprep.subr.bf16.mxu0 0
  %261 = vmatpush2.bf16.msra.mxu0 %v224
  %262 = vmatprep.subr.bf16.mxu0 0
  %263 = vmatpush2.bf16.msra.mxu0 %v223
  %264 = vmatprep.subr.bf16.mxu0 0
  %265 = vmatpush2.bf16.msra.mxu0 %v222
  %266 = vmatprep.subr.bf16.mxu0 0
  %267 = vmatpush2.bf16.msra.mxu0 %v221
  %268 = vmatprep.subr.bf16.mxu0 0
  %269 = vmatpush2.bf16.msra.mxu0 %v220
  %270 = vmatprep.subr.bf16.mxu0 0
  %271 = vmatpush2.bf16.msra.mxu0 %v219
  %272 = vmatprep.subr.bf16.mxu0 0
  %273 = vmatpush2.bf16.msra.mxu0 %v218
  %274 = vmatprep.mubr.bf16.mxu0 %v115
  %275 = vmatmul.mubr.bf16.gmra.mxu0 %v114
  %v276 = vpop.f32.mrf.mxu0
  %v277 = vadd.f32 0.0, %v276
  %v278 = vpop.f32.mrf.mxu0
  %v279 = vpop.f32.mrf.mxu0
  %v280 = vadd.f32 0.0, %v279
  %v281 = vpop.f32.mrf.mxu0
  %282 = vmatprep.mubr.bf16.mxu0 %v117
  %283 = vmatmul.mubr.bf16.gmra.mxu0 %v116
  %v284 = vpop.f32.mrf.mxu0
  %v285 = vadd.f32 0.0, %v284
  %v286 = vpop.f32.mrf.mxu0
  %v287 = vpop.f32.mrf.mxu0
  %v288 = vadd.f32 0.0, %v287
  %v289 = vpop.f32.mrf.mxu0
  %290 = vmatprep.mubr.bf16.mxu0 %v119
  %291 = vmatmul.mubr.bf16.gmra.mxu0 %v118
  %v292 = vpop.f32.mrf.mxu0
  %v293 = vadd.f32 0.0, %v292
  %v294 = vpop.f32.mrf.mxu0
  %v295 = vpop.f32.mrf.mxu0
  %v296 = vadd.f32 0.0, %v295
  %v297 = vpop.f32.mrf.mxu0
  %298 = vmatprep.mubr.bf16.mxu0 %v121
  %299 = vmatmul.mubr.bf16.gmra.mxu0 %v120
  %v300 = vpop.f32.mrf.mxu0
  %v301 = vadd.f32 0.0, %v300
  %v302 = vpop.f32.mrf.mxu0
  %v303 = vpop.f32.mrf.mxu0
  %v304 = vadd.f32 0.0, %v303
  %v305 = vpop.f32.mrf.mxu0
  %306 = vmatprep.mubr.bf16.mxu0 %v123
  %307 = vmatmul.mubr.bf16.gmra.mxu0 %v122
  %v308 = vpop.f32.mrf.mxu0
  %v309 = vadd.f32 0.0, %v308
  %v310 = vpop.f32.mrf.mxu0
  %v311 = vpop.f32.mrf.mxu0
  %v312 = vadd.f32 0.0, %v311
  %v313 = vpop.f32.mrf.mxu0
  %314 = vmatprep.mubr.bf16.mxu0 %v125
  %315 = vmatmul.mubr.bf16.gmra.mxu0 %v124
  %v316 = vpop.f32.mrf.mxu0
  %v317 = vadd.f32 0.0, %v316
  %v318 = vpop.f32.mrf.mxu0
  %v319 = vpop.f32.mrf.mxu0
  %v320 = vadd.f32 0.0, %v319
  %v321 = vpop.f32.mrf.mxu0
  %322 = vmatprep.mubr.bf16.mxu0 %v127
  %323 = vmatmul.mubr.bf16.gmra.mxu0 %v126
  %v324 = vpop.f32.mrf.mxu0
  %v325 = vadd.f32 0.0, %v324
  %v326 = vpop.f32.mrf.mxu0
  %v327 = vpop.f32.mrf.mxu0
  %v328 = vadd.f32 0.0, %v327
  %v329 = vpop.f32.mrf.mxu0
  %330 = vmatprep.mubr.bf16.mxu0 %v129
  %331 = vmatmul.mubr.bf16.gmra.mxu0 %v128
  %v332 = vpop.f32.mrf.mxu0
  %v333 = vadd.f32 0.0, %v332
  %v334 = vpop.f32.mrf.mxu0
  %v335 = vpop.f32.mrf.mxu0
  %v336 = vadd.f32 0.0, %v335
  %v337 = vpop.f32.mrf.mxu0
  %338 = vdwg.mxu0
  %vm339 = vcmask 261120
  %v340 = vsel %vm339, %v277, 0.0
  %v341 = vsel %vm339, %v280, 0.0
  %v342 = vadd.f32 %v340, %v341
  %v343 = vsel %vm339, %v285, 0.0
  %v344 = vadd.f32 %v342, %v343
  %v345 = vsel %vm339, %v288, 0.0
  %v346 = vadd.f32 %v344, %v345
  %v347 = vsel %vm339, %v293, 0.0
  %v348 = vadd.f32 %v346, %v347
  %v349 = vsel %vm339, %v296, 0.0
  %v350 = vadd.f32 %v348, %v349
  %v351 = vsel %vm339, %v301, 0.0
  %v352 = vadd.f32 %v350, %v351
  %v353 = vsel %vm339, %v304, 0.0
  %v354 = vadd.f32 %v352, %v353
  %v355 = vsel %vm339, %v309, 0.0
  %v356 = vadd.f32 %v354, %v355
  %v357 = vsel %vm339, %v312, 0.0
  %v358 = vadd.f32 %v356, %v357
  %v359 = vsel %vm339, %v317, 0.0
  %v360 = vadd.f32 %v358, %v359
  %v361 = vsel %vm339, %v320, 0.0
  %v362 = vadd.f32 %v360, %v361
  %v363 = vsel %vm339, %v325, 0.0
  %v364 = vadd.f32 %v362, %v363
  %v365 = vsel %vm339, %v328, 0.0
  %v366 = vadd.f32 %v364, %v365
  %v367 = vsel %vm339, %v333, 0.0
  %v368 = vadd.f32 %v366, %v367
  %v369 = vsel %vm339, %v336, 0.0
  %v370 = vadd.f32 %v368, %v369
  %v371 = vrot.slane %v370, 4
  %v372 = vadd.f32 %v370, %v371
  %v373 = vrot.slane %v372, 2
  %v374 = vadd.f32 %v372, %v373
  %v375 = vrot.slane %v374, 1
  %v376 = vadd.f32 %v374, %v375
  %v377 = vrcp.pop 128.0
  %v378 = vmul.f32 %v376, %v377
  %v379 = vsub.f32 %v277, %v378
  %v380 = vsub.f32 %v280, %v378
  %v381 = vsub.f32 %v285, %v378
  %v382 = vsub.f32 %v288, %v378
  %v383 = vsub.f32 %v293, %v378
  %v384 = vsub.f32 %v296, %v378
  %v385 = vsub.f32 %v301, %v378
  %v386 = vsub.f32 %v304, %v378
  %v387 = vsub.f32 %v309, %v378
  %v388 = vsub.f32 %v312, %v378
  %v389 = vsub.f32 %v317, %v378
  %v390 = vsub.f32 %v320, %v378
  %v391 = vsub.f32 %v325, %v378
  %v392 = vsub.f32 %v328, %v378
  %v393 = vsub.f32 %v333, %v378
  %v394 = vsub.f32 %v336, %v378
  %v395 = vmul.f32 %v379, %v379
  %v396 = vmul.f32 %v380, %v380
  %v397 = vmul.f32 %v381, %v381
  %v398 = vmul.f32 %v382, %v382
  %v399 = vmul.f32 %v383, %v383
  %v400 = vmul.f32 %v384, %v384
  %v401 = vmul.f32 %v385, %v385
  %v402 = vmul.f32 %v386, %v386
  %v403 = vmul.f32 %v387, %v387
  %v404 = vmul.f32 %v388, %v388
  %v405 = vmul.f32 %v389, %v389
  %v406 = vmul.f32 %v390, %v390
  %v407 = vmul.f32 %v391, %v391
  %v408 = vmul.f32 %v392, %v392
  %v409 = vmul.f32 %v393, %v393
  %v410 = vmul.f32 %v394, %v394
  %v411 = vsel %vm339, %v395, 0.0
  %v412 = vsel %vm339, %v396, 0.0
  %v413 = vadd.f32 %v411, %v412
  %v414 = vsel %vm339, %v397, 0.0
  %v415 = vadd.f32 %v413, %v414
  %v416 = vsel %vm339, %v398, 0.0
  %v417 = vadd.f32 %v415, %v416
  %v418 = vsel %vm339, %v399, 0.0
  %v419 = vadd.f32 %v417, %v418
  %v420 = vsel %vm339, %v400, 0.0
  %v421 = vadd.f32 %v419, %v420
  %v422 = vsel %vm339, %v401, 0.0
  %v423 = vadd.f32 %v421, %v422
  %v424 = vsel %vm339, %v402, 0.0
  %v425 = vadd.f32 %v423, %v424
  %v426 = vsel %vm339, %v403, 0.0
  %v427 = vadd.f32 %v425, %v426
  %v428 = vsel %vm339, %v404, 0.0
  %v429 = vadd.f32 %v427, %v428
  %v430 = vsel %vm339, %v405, 0.0
  %v431 = vadd.f32 %v429, %v430
  %v432 = vsel %vm339, %v406, 0.0
  %v433 = vadd.f32 %v431, %v432
  %v434 = vsel %vm339, %v407, 0.0
  %v435 = vadd.f32 %v433, %v434
  %v436 = vsel %vm339, %v408, 0.0
  %v437 = vadd.f32 %v435, %v436
  %v438 = vsel %vm339, %v409, 0.0
  %v439 = vadd.f32 %v437, %v438
  %v440 = vsel %vm339, %v410, 0.0
  %v441 = vadd.f32 %v439, %v440
  %v442 = vrot.slane %v441, 4
  %v443 = vadd.f32 %v441, %v442
  %v444 = vrot.slane %v443, 2
  %v445 = vadd.f32 %v443, %v444
  %v446 = vrot.slane %v445, 1
  %v447 = vadd.f32 %v445, %v446
  %v448 = vmul.f32 %v447, %v377
  %v449 = vadd.f32 %v448, 1e-05
  %v450 = vrsqrt.pop %v449
  %v451 = vmul.f32 %v379, %v450
  %v452 = vmul.f32 %v380, %v450
  %v453 = vmul.f32 %v381, %v450
  %v454 = vmul.f32 %v382, %v450
  %v455 = vmul.f32 %v383, %v450
  %v456 = vmul.f32 %v384, %v450
  %v457 = vmul.f32 %v385, %v450
  %v458 = vmul.f32 %v386, %v450
  %v459 = vmul.f32 %v387, %v450
  %v460 = vmul.f32 %v388, %v450
  %v461 = vmul.f32 %v389, %v450
  %v462 = vmul.f32 %v390, %v450
  %v463 = vmul.f32 %v391, %v450
  %v464 = vmul.f32 %v392, %v450
  %v465 = vmul.f32 %v393, %v450
  %v466 = vmul.f32 %v394, %v450
  %v467 = vld [vmem:[%s2] sm:$0x1]
  %v469 = vlaneseq
  %v470 = vshrl.u32 %v469, 7
  %v471 = vsub.s32 0, %v470
  %v472 = vrot.slane %v467, %v471
  %v474 = vmul.f32 %v451, %v472
  %v475 = vmul.f32 %v452, %v472
  %v476 = vmul.f32 %v453, %v472
  %v477 = vmul.f32 %v454, %v472
  %v478 = vmul.f32 %v455, %v472
  %v479 = vmul.f32 %v456, %v472
  %v480 = vmul.f32 %v457, %v472
  %v481 = vmul.f32 %v458, %v472
  %v482 = vmul.f32 %v459, %v472
  %v483 = vmul.f32 %v460, %v472
  %v484 = vmul.f32 %v461, %v472
  %v485 = vmul.f32 %v462, %v472
  %v486 = vmul.f32 %v463, %v472
  %v487 = vmul.f32 %v464, %v472
  %v488 = vmul.f32 %v465, %v472
  %v489 = vmul.f32 %v466, %v472
  %v490 = vld [vmem:[%s3] sm:$0x1]
  %v492 = vlaneseq
  %v493 = vshrl.u32 %v492, 7
  %v494 = vsub.s32 0, %v493
  %v495 = vrot.slane %v490, %v494
  %v497 = vadd.f32 %v474, %v495
  %v498 = vadd.f32 %v475, %v495
  %v499 = vadd.f32 %v476, %v495
  %v500 = vadd.f32 %v477, %v495
  %v501 = vadd.f32 %v478, %v495
  %v502 = vadd.f32 %v479, %v495
  %v503 = vadd.f32 %v480, %v495
  %v504 = vadd.f32 %v481, %v495
  %v505 = vadd.f32 %v482, %v495
  %v506 = vadd.f32 %v483, %v495
  %v507 = vadd.f32 %v484, %v495
  %v508 = vadd.f32 %v485, %v495
  %v509 = vadd.f32 %v486, %v495
  %v510 = vadd.f32 %v487, %v495
  %v511 = vadd.f32 %v488, %v495
  %v512 = vadd.f32 %v489, %v495
  %vm513 = vcmp.ge.f32.partialorder %v497, 0.0
  %vm514 = vcmp.ge.f32.partialorder %v498, 0.0
  %vm515 = vcmp.ge.f32.partialorder %v499, 0.0
  %vm516 = vcmp.ge.f32.partialorder %v500, 0.0
  %vm517 = vcmp.ge.f32.partialorder %v501, 0.0
  %vm518 = vcmp.ge.f32.partialorder %v502, 0.0
  %vm519 = vcmp.ge.f32.partialorder %v503, 0.0
  %vm520 = vcmp.ge.f32.partialorder %v504, 0.0
  %vm521 = vcmp.ge.f32.partialorder %v505, 0.0
  %vm522 = vcmp.ge.f32.partialorder %v506, 0.0
  %vm523 = vcmp.ge.f32.partialorder %v507, 0.0
  %vm524 = vcmp.ge.f32.partialorder %v508, 0.0
  %vm525 = vcmp.ge.f32.partialorder %v509, 0.0
  %vm526 = vcmp.ge.f32.partialorder %v510, 0.0
  %vm527 = vcmp.ge.f32.partialorder %v511, 0.0
  %vm528 = vcmp.ge.f32.partialorder %v512, 0.0
  %v529 = vmul.f32 %v497, 0.2
  %v530 = vmul.f32 %v498, 0.2
  %v531 = vmul.f32 %v499, 0.2
  %v532 = vmul.f32 %v500, 0.2
  %v533 = vmul.f32 %v501, 0.2
  %v534 = vmul.f32 %v502, 0.2
  %v535 = vmul.f32 %v503, 0.2
  %v536 = vmul.f32 %v504, 0.2
  %v537 = vmul.f32 %v505, 0.2
  %v538 = vmul.f32 %v506, 0.2
  %v539 = vmul.f32 %v507, 0.2
  %v540 = vmul.f32 %v508, 0.2
  %v541 = vmul.f32 %v509, 0.2
  %v542 = vmul.f32 %v510, 0.2
  %v543 = vmul.f32 %v511, 0.2
  %v544 = vmul.f32 %v512, 0.2
  %v545 = vsel %vm513, %v497, %v529
  %v546 = vsel %vm514, %v498, %v530
  %v547 = vsel %vm515, %v499, %v531
  %v548 = vsel %vm516, %v500, %v532
  %v549 = vsel %vm517, %v501, %v533
  %v550 = vsel %vm518, %v502, %v534
  %v551 = vsel %vm519, %v503, %v535
  %v552 = vsel %vm520, %v504, %v536
  %v553 = vsel %vm521, %v505, %v537
  %v554 = vsel %vm522, %v506, %v538
  %v555 = vsel %vm523, %v507, %v539
  %v556 = vsel %vm524, %v508, %v540
  %v557 = vsel %vm525, %v509, %v541
  %v558 = vsel %vm526, %v510, %v542
  %v559 = vsel %vm527, %v511, %v543
  %v560 = vsel %vm528, %v512, %v544
  %v561 = vpack.c.bf16 %v546, %v545
  %v562 = vpack.c.bf16 %v548, %v547
  %v563 = vpack.c.bf16 %v550, %v549
  %v564 = vpack.c.bf16 %v552, %v551
  %v565 = vpack.c.bf16 %v554, %v553
  %v566 = vpack.c.bf16 %v556, %v555
  %v567 = vpack.c.bf16 %v558, %v557
  %v568 = vpack.c.bf16 %v560, %v559
  %v577 = vunpack.c.l.b16 %v561
  %v578 = vunpack.c.h.b16 %v561
  %v579 = vunpack.c.l.b16 %v562
  %v580 = vunpack.c.h.b16 %v562
  %v581 = vunpack.c.l.b16 %v563
  %v582 = vunpack.c.h.b16 %v563
  %v583 = vunpack.c.l.b16 %v564
  %v584 = vunpack.c.h.b16 %v564
  %v585 = vunpack.c.l.b16 %v565
  %v586 = vunpack.c.h.b16 %v565
  %v587 = vunpack.c.l.b16 %v566
  %v588 = vunpack.c.h.b16 %v566
  %v589 = vunpack.c.l.b16 %v567
  %v590 = vunpack.c.h.b16 %v567
  %v591 = vunpack.c.l.b16 %v568
  %v592 = vunpack.c.h.b16 %v568
  %v593 = vpack.c.b16 %v577, %v577
  %v594 = vpack.c.b16 %v578, %v578
  %v595 = vpack.c.b16 %v579, %v579
  %v596 = vpack.c.b16 %v580, %v580
  %v597 = vpack.c.b16 %v581, %v581
  %v598 = vpack.c.b16 %v582, %v582
  %v599 = vpack.c.b16 %v583, %v583
  %v600 = vpack.c.b16 %v584, %v584
  %v601 = vpack.c.b16 %v585, %v585
  %v602 = vpack.c.b16 %v586, %v586
  %v603 = vpack.c.b16 %v587, %v587
  %v604 = vpack.c.b16 %v588, %v588
  %v605 = vpack.c.b16 %v589, %v589
  %v606 = vpack.c.b16 %v590, %v590
  %v607 = vpack.c.b16 %v591, %v591
  %v608 = vpack.c.b16 %v592, %v592
  %vm625 = vcmask 257024
  %626 = vst.msk [vmem:[%s4] sm:$0xf] %vm625, %v593
  %627 = vst.msk [vmem:[%s4 + $0x4] sm:$0xf] %vm625, %v594
  %628 = vst.msk [vmem:[%s4 + $0x8] sm:$0xf] %vm625, %v595
  %629 = vst.msk [vmem:[%s4 + $0xc] sm:$0xf] %vm625, %v596
  %630 = vst.msk [vmem:[%s4 + $0x10] sm:$0xf] %vm625, %v597
  %631 = vst.msk [vmem:[%s4 + $0x14] sm:$0xf] %vm625, %v598
  %632 = vst.msk [vmem:[%s4 + $0x18] sm:$0xf] %vm625, %v599
  %633 = vst.msk [vmem:[%s4 + $0x1c] sm:$0xf] %vm625, %v600
  %634 = vst.msk [vmem:[%s4 + $0x20] sm:$0xf] %vm625, %v601
  %635 = vst.msk [vmem:[%s4 + $0x24] sm:$0xf] %vm625, %v602
  %636 = vst.msk [vmem:[%s4 + $0x28] sm:$0xf] %vm625, %v603
  %637 = vst.msk [vmem:[%s4 + $0x2c] sm:$0xf] %vm625, %v604
  %638 = vst.msk [vmem:[%s4 + $0x30] sm:$0xf] %vm625, %v605
  %639 = vst.msk [vmem:[%s4 + $0x34] sm:$0xf] %vm625, %v606
  %640 = vst.msk [vmem:[%s4 + $0x38] sm:$0xf] %vm625, %v607
  %641 = vst.msk [vmem:[%s4 + $0x3c] sm:$0xf] %vm625, %v608
  // Predicated region
  $region18: #{lidar_encoder_forward.7} parent=0 // pred_check
    _
  $region19: #{lidar_encoder_forward.7} parent=0 // pred_check_branch
    %643 = sbr.rel (0) target = $region21
  $region20: #{lidar_encoder_forward.7} parent=0 // pred_region
    _
  $region21: #{lidar_encoder_forward.7} parent=0 // pred_fallthru
    _
  // Predicated region
  $region22: #{lidar_encoder_forward.7} parent=0 // pred_check
    _
  $region23: #{lidar_encoder_forward.7} parent=0 // pred_check_branch
    %645 = sbr.rel (0) target = $region25
  $region24: #{lidar_encoder_forward.7} parent=0 // pred_region
    _
  $region25: #{lidar_encoder_forward.7} parent=0 // pred_fallthru
    _

// kernel: lidar_encoder_forward.8
$region0: #{lidar_encoder_forward.8}
  #allocation0 [shape = 'u32[]', space=smem, size = 0x4, offset = 0x4, fixed_abs, tag = 'smem constant byte address 0x4 - core index']
  #allocation1 [shape = 'u32[144,128]{1,0:T(1,128)}', space=vmem, size = 0x12000, scoped, tag = 'internal scratch']
  %s0 = inlined_call_operand.vmem [shape: bf16[24,384], index: 0, kind: input, shape index: {}]
  %s1 = inlined_call_operand.vmem [shape: bf16[384,64], index: 1, kind: input, shape index: {}]
  %s2 = inlined_call_operand.vmem [shape: f32[1,64], index: 2, kind: input, shape index: {}]
  %s3 = inlined_call_operand.vmem [shape: f32[1,64], index: 3, kind: input, shape index: {}]
  %s4 = inlined_call_operand.vmem [shape: bf16[24,64], index: 4, kind: output, shape index: {}]
  %s5 = sld [smem:[#allocation0]]
  $region26: #{lidar_encoder_forward.8} parent=0
    _
  %s7 = ssub.s32 1, %s5
  %s8 = scalar_select 0, %s7, %s5
  // Predicated region
  $region2: #{lidar_encoder_forward.8} parent=0 // pred_check
    _
  $region3: #{lidar_encoder_forward.8} parent=0 // pred_check_branch
    %10 = sbr.rel (0) target = $region5
  $region4: #{lidar_encoder_forward.8} parent=0 // pred_region
    _
  $region5: #{lidar_encoder_forward.8} parent=0 // pred_fallthru
    _
  // Predicated region
  $region6: #{lidar_encoder_forward.8} parent=0 // pred_check
    _
  $region7: #{lidar_encoder_forward.8} parent=0 // pred_check_branch
    %12 = sbr.rel (0) target = $region9
  $region8: #{lidar_encoder_forward.8} parent=0 // pred_region
    _
  $region9: #{lidar_encoder_forward.8} parent=0 // pred_fallthru
    _
  // Predicated region
  $region10: #{lidar_encoder_forward.8} parent=0 // pred_check
    _
  $region11: #{lidar_encoder_forward.8} parent=0 // pred_check_branch
    %14 = sbr.rel (0) target = $region13
  $region12: #{lidar_encoder_forward.8} parent=0 // pred_region
    _
  $region13: #{lidar_encoder_forward.8} parent=0 // pred_fallthru
    _
  // Predicated region
  $region14: #{lidar_encoder_forward.8} parent=0 // pred_check
    _
  $region15: #{lidar_encoder_forward.8} parent=0 // pred_check_branch
    %16 = sbr.rel (0) target = $region17
  $region16: #{lidar_encoder_forward.8} parent=0 // pred_region
    _
  $region17: #{lidar_encoder_forward.8} parent=0 // pred_fallthru
    _
  %v18 = vld [vmem:[%s0] sm:$0xff]
  %v19 = vld [vmem:[%s0 + $0x8] sm:$0xf]
  %v20 = vld [vmem:[%s0 + $0xc] sm:$0xff]
  %v21 = vld [vmem:[%s0 + $0x14] sm:$0xf]
  %v22 = vld [vmem:[%s0 + $0x18] sm:$0xff]
  %v23 = vld [vmem:[%s0 + $0x20] sm:$0xf]
  %v24 = vld [vmem:[%s1] sm:$0xf]
  %v25 = vld [vmem:[%s1 + $0x4] sm:$0xf]
  %v26 = vld [vmem:[%s1 + $0x8] sm:$0xf]
  %v27 = vld [vmem:[%s1 + $0xc] sm:$0xf]
  %v28 = vld [vmem:[%s1 + $0x10] sm:$0xf]
  %v29 = vld [vmem:[%s1 + $0x14] sm:$0xf]
  %v30 = vld [vmem:[%s1 + $0x18] sm:$0xf]
  %v31 = vld [vmem:[%s1 + $0x1c] sm:$0xf]
  %v32 = vld [vmem:[%s1 + $0x20] sm:$0xf]
  %v33 = vld [vmem:[%s1 + $0x24] sm:$0xf]
  %v34 = vld [vmem:[%s1 + $0x28] sm:$0xf]
  %v35 = vld [vmem:[%s1 + $0x2c] sm:$0xf]
  %v36 = vld [vmem:[%s1 + $0x30] sm:$0xf]
  %v37 = vld [vmem:[%s1 + $0x34] sm:$0xf]
  %v38 = vld [vmem:[%s1 + $0x38] sm:$0xf]
  %v39 = vld [vmem:[%s1 + $0x3c] sm:$0xf]
  %v40 = vld [vmem:[%s1 + $0x40] sm:$0xf]
  %v41 = vld [vmem:[%s1 + $0x44] sm:$0xf]
  %v42 = vld [vmem:[%s1 + $0x48] sm:$0xf]
  %v43 = vld [vmem:[%s1 + $0x4c] sm:$0xf]
  %v44 = vld [vmem:[%s1 + $0x50] sm:$0xf]
  %v45 = vld [vmem:[%s1 + $0x54] sm:$0xf]
  %v46 = vld [vmem:[%s1 + $0x58] sm:$0xf]
  %v47 = vld [vmem:[%s1 + $0x5c] sm:$0xf]
  %v48 = vld [vmem:[%s1 + $0x60] sm:$0xf]
  %v49 = vld [vmem:[%s1 + $0x64] sm:$0xf]
  %v50 = vld [vmem:[%s1 + $0x68] sm:$0xf]
  %v51 = vld [vmem:[%s1 + $0x6c] sm:$0xf]
  %v52 = vld [vmem:[%s1 + $0x70] sm:$0xf]
  %v53 = vld [vmem:[%s1 + $0x74] sm:$0xf]
  %v54 = vld [vmem:[%s1 + $0x78] sm:$0xf]
  %v55 = vld [vmem:[%s1 + $0x7c] sm:$0xf]
  %v56 = vld [vmem:[%s1 + $0x80] sm:$0xf]
  %v57 = vld [vmem:[%s1 + $0x84] sm:$0xf]
  %v58 = vld [vmem:[%s1 + $0x88] sm:$0xf]
  %v59 = vld [vmem:[%s1 + $0x8c] sm:$0xf]
  %v60 = vld [vmem:[%s1 + $0x90] sm:$0xf]
  %v61 = vld [vmem:[%s1 + $0x94] sm:$0xf]
  %v62 = vld [vmem:[%s1 + $0x98] sm:$0xf]
  %v63 = vld [vmem:[%s1 + $0x9c] sm:$0xf]
  %v64 = vld [vmem:[%s1 + $0xa0] sm:$0xf]
  %v65 = vld [vmem:[%s1 + $0xa4] sm:$0xf]
  %v66 = vld [vmem:[%s1 + $0xa8] sm:$0xf]
  %v67 = vld [vmem:[%s1 + $0xac] sm:$0xf]
  %v68 = vld [vmem:[%s1 + $0xb0] sm:$0xf]
  %v69 = vld [vmem:[%s1 + $0xb4] sm:$0xf]
  %v70 = vld [vmem:[%s1 + $0xb8] sm:$0xf]
  %v71 = vld [vmem:[%s1 + $0xbc] sm:$0xf]
  %v78 = vunpack.c.l.b16 %v18
  %v79 = vunpack.c.h.b16 %v18
  %v80 = vunpack.c.l.b16 %v19
  %v81 = vunpack.c.l.b16 %v20
  %v82 = vunpack.c.h.b16 %v20
  %v83 = vunpack.c.l.b16 %v21
  %v84 = vunpack.c.l.b16 %v22
  %v85 = vunpack.c.h.b16 %v22
  %v86 = vunpack.c.l.b16 %v23
  %v87 = vpack.c.b16 %v81, %v78
  %v88 = vpack.c.b16 %v82, %v79
  %v89 = vpack.c.b16 %v83, %v80
  %v90 = vpack.c.b16 %v84, %v84
  %v91 = vpack.c.b16 %v85, %v85
  %v92 = vpack.c.b16 %v86, %v86
  %v147 = vunpack.c.l.b16 %v24
  %v148 = vunpack.c.l.b16 %v25
  %v149 = vunpack.c.l.b16 %v26
  %v150 = vunpack.c.l.b16 %v27
  %v151 = vunpack.c.l.b16 %v28
  %v152 = vunpack.c.l.b16 %v29
  %v153 = vunpack.c.l.b16 %v30
  %v154 = vunpack.c.l.b16 %v31
  %v155 = vunpack.c.l.b16 %v32
  %v156 = vunpack.c.l.b16 %v33
  %v157 = vunpack.c.l.b16 %v34
  %v158 = vunpack.c.l.b16 %v35
  %v159 = vunpack.c.l.b16 %v36
  %v160 = vunpack.c.l.b16 %v37
  %v161 = vunpack.c.l.b16 %v38
  %v162 = vunpack.c.l.b16 %v39
  %v163 = vunpack.c.l.b16 %v40
  %v164 = vunpack.c.l.b16 %v41
  %v165 = vunpack.c.l.b16 %v42
  %v166 = vunpack.c.l.b16 %v43
  %v167 = vunpack.c.l.b16 %v44
  %v168 = vunpack.c.l.b16 %v45
  %v169 = vunpack.c.l.b16 %v46
  %v170 = vunpack.c.l.b16 %v47
  %v171 = vunpack.c.l.b16 %v48
  %v172 = vunpack.c.l.b16 %v49
  %v173 = vunpack.c.l.b16 %v50
  %v174 = vunpack.c.l.b16 %v51
  %v175 = vunpack.c.l.b16 %v52
  %v176 = vunpack.c.l.b16 %v53
  %v177 = vunpack.c.l.b16 %v54
  %v178 = vunpack.c.l.b16 %v55
  %v179 = vunpack.c.l.b16 %v56
  %v180 = vunpack.c.l.b16 %v57
  %v181 = vunpack.c.l.b16 %v58
  %v182 = vunpack.c.l.b16 %v59
  %v183 = vunpack.c.l.b16 %v60
  %v184 = vunpack.c.l.b16 %v61
  %v185 = vunpack.c.l.b16 %v62
  %v186 = vunpack.c.l.b16 %v63
  %v187 = vunpack.c.l.b16 %v64
  %v188 = vunpack.c.l.b16 %v65
  %v189 = vunpack.c.l.b16 %v66
  %v190 = vunpack.c.l.b16 %v67
  %v191 = vunpack.c.l.b16 %v68
  %v192 = vunpack.c.l.b16 %v69
  %v193 = vunpack.c.l.b16 %v70
  %v194 = vunpack.c.l.b16 %v71
  %v195 = vpack.c.b16 %v148, %v147
  %v196 = vpack.c.b16 %v150, %v149
  %v197 = vpack.c.b16 %v152, %v151
  %v198 = vpack.c.b16 %v154, %v153
  %v199 = vpack.c.b16 %v156, %v155
  %v200 = vpack.c.b16 %v158, %v157
  %v201 = vpack.c.b16 %v160, %v159
  %v202 = vpack.c.b16 %v162, %v161
  %v203 = vpack.c.b16 %v164, %v163
  %v204 = vpack.c.b16 %v166, %v165
  %v205 = vpack.c.b16 %v168, %v167
  %v206 = vpack.c.b16 %v170, %v169
  %v207 = vpack.c.b16 %v172, %v171
  %v208 = vpack.c.b16 %v174, %v173
  %v209 = vpack.c.b16 %v176, %v175
  %v210 = vpack.c.b16 %v178, %v177
  %v211 = vpack.c.b16 %v180, %v179
  %v212 = vpack.c.b16 %v182, %v181
  %v213 = vpack.c.b16 %v184, %v183
  %v214 = vpack.c.b16 %v186, %v185
  %v215 = vpack.c.b16 %v188, %v187
  %v216 = vpack.c.b16 %v190, %v189
  %v217 = vpack.c.b16 %v192, %v191
  %v218 = vpack.c.b16 %v194, %v193
  %243 = vmatprep.subr.bf16.mxu0 0
  %244 = vmatpush1.bf16.msra.mxu0 %v202
  %245 = vmatprep.subr.bf16.mxu0 0
  %246 = vmatpush1.bf16.msra.mxu0 %v201
  %247 = vmatprep.subr.bf16.mxu0 0
  %248 = vmatpush1.bf16.msra.mxu0 %v200
  %249 = vmatprep.subr.bf16.mxu0 0
  %250 = vmatpush1.bf16.msra.mxu0 %v199
  %251 = vmatprep.subr.bf16.mxu0 0
  %252 = vmatpush1.bf16.msra.mxu0 %v198
  %253 = vmatprep.subr.bf16.mxu0 0
  %254 = vmatpush1.bf16.msra.mxu0 %v197
  %255 = vmatprep.subr.bf16.mxu0 0
  %256 = vmatpush1.bf16.msra.mxu0 %v196
  %257 = vmatprep.subr.bf16.mxu0 0
  %258 = vmatpush1.bf16.msra.mxu0 %v195
  %259 = vmatprep.subr.bf16.mxu0 0
  %260 = vmatpush2.bf16.msra.mxu0 %v210
  %261 = vmatprep.subr.bf16.mxu0 0
  %262 = vmatpush2.bf16.msra.mxu0 %v209
  %263 = vmatprep.subr.bf16.mxu0 0
  %264 = vmatpush2.bf16.msra.mxu0 %v208
  %265 = vmatprep.subr.bf16.mxu0 0
  %266 = vmatpush2.bf16.msra.mxu0 %v207
  %267 = vmatprep.subr.bf16.mxu0 0
  %268 = vmatpush2.bf16.msra.mxu0 %v206
  %269 = vmatprep.subr.bf16.mxu0 0
  %270 = vmatpush2.bf16.msra.mxu0 %v205
  %271 = vmatprep.subr.bf16.mxu0 0
  %272 = vmatpush2.bf16.msra.mxu0 %v204
  %273 = vmatprep.subr.bf16.mxu0 0
  %274 = vmatpush2.bf16.msra.mxu0 %v203
  %275 = vmatprep.mubr.bf16.mxu0 %v88
  %276 = vmatmul.mubr.bf16.gmra.mxu0 %v87
  %v277 = vpop.f32.mrf.mxu0
  %v278 = vadd.f32 0.0, %v277
  %v279 = vpop.f32.mrf.mxu0
  %v280 = vpop.f32.mrf.mxu0
  %v281 = vadd.f32 0.0, %v280
  %v282 = vpop.f32.mrf.mxu0
  %283 = vmatprep.mubr.bf16.mxu0 %v91
  %284 = vmatmul.mubr.bf16.gmra.mxu0 %v90
  %v285 = vpop.f32.mrf.mxu0
  %v286 = vadd.f32 0.0, %v285
  %v287 = vpop.f32.mrf.mxu0
  %v288 = vpop.f32.mrf.mxu0
  %v289 = vpop.f32.mrf.mxu0
  %290 = vdwg.mxu0
  %291 = vmatprep.subr.bf16.mxu0 0
  %292 = vmatpush1.bf16.msra.mxu0 %v218
  %293 = vmatprep.subr.bf16.mxu0 0
  %294 = vmatpush1.bf16.msra.mxu0 %v217
  %295 = vmatprep.subr.bf16.mxu0 0
  %296 = vmatpush1.bf16.msra.mxu0 %v216
  %297 = vmatprep.subr.bf16.mxu0 0
  %298 = vmatpush1.bf16.msra.mxu0 %v215
  %299 = vmatprep.subr.bf16.mxu0 0
  %300 = vmatpush1.bf16.msra.mxu0 %v214
  %301 = vmatprep.subr.bf16.mxu0 0
  %302 = vmatpush1.bf16.msra.mxu0 %v213
  %303 = vmatprep.subr.bf16.mxu0 0
  %304 = vmatpush1.bf16.msra.mxu0 %v212
  %305 = vmatprep.subr.bf16.mxu0 0
  %306 = vmatpush1.bf16.msra.mxu0 %v211
  %307 = vmatprep.subr.bf16.mxu0 0
  %308 = vmatpush2.bf16.msra.mxu0 0
  %309 = vmatprep.subr.bf16.mxu0 0
  %310 = vmatpush2.bf16.msra.mxu0 0
  %311 = vmatprep.subr.bf16.mxu0 0
  %312 = vmatpush2.bf16.msra.mxu0 0
  %313 = vmatprep.subr.bf16.mxu0 0
  %314 = vmatpush2.bf16.msra.mxu0 0
  %315 = vmatprep.subr.bf16.mxu0 0
  %316 = vmatpush2.bf16.msra.mxu0 0
  %317 = vmatprep.subr.bf16.mxu0 0
  %318 = vmatpush2.bf16.msra.mxu0 0
  %319 = vmatprep.subr.bf16.mxu0 0
  %320 = vmatpush2.bf16.msra.mxu0 0
  %321 = vmatprep.subr.bf16.mxu0 0
  %322 = vmatpush2.bf16.msra.mxu0 0
  %323 = vmatprep.mubr.bf16.mxu0 0
  %324 = vmatmul.mubr.bf16.gmra.mxu0 %v89
  %v325 = vpop.f32.mrf.mxu0
  %v326 = vadd.f32 %v278, %v325
  %v327 = vpop.f32.mrf.mxu0
  %v328 = vpop.f32.mrf.mxu0
  %v329 = vadd.f32 %v281, %v328
  %v330 = vpop.f32.mrf.mxu0
  %331 = vmatprep.mubr.bf16.mxu0 0
  %332 = vmatmul.mubr.bf16.gmra.mxu0 %v92
  %v333 = vpop.f32.mrf.mxu0
  %v334 = vadd.f32 %v286, %v333
  %v335 = vpop.f32.mrf.mxu0
  %v336 = vpop.f32.mrf.mxu0
  %v337 = vpop.f32.mrf.mxu0
  %338 = vdwg.mxu0
  %vm339 = vcmask 523264
  %v340 = vsel %vm339, %v326, 0.0
  %v341 = vsel %vm339, %v329, 0.0
  %v342 = vadd.f32 %v340, %v341
  %v343 = vsel %vm339, %v334, 0.0
  %v344 = vadd.f32 %v342, %v343
  %v345 = vrot.slane %v344, 4
  %v346 = vadd.f32 %v344, %v345
  %v347 = vrot.slane %v346, 2
  %v348 = vadd.f32 %v346, %v347
  %v349 = vrot.slane %v348, 1
  %v350 = vadd.f32 %v348, %v349
  %v351 = vrcp.pop 24.0
  %v352 = vmul.f32 %v350, %v351
  %v353 = vsub.f32 %v326, %v352
  %v354 = vsub.f32 %v329, %v352
  %v355 = vsub.f32 %v334, %v352
  %v356 = vmul.f32 %v353, %v353
  %v357 = vmul.f32 %v354, %v354
  %v358 = vmul.f32 %v355, %v355
  %v359 = vsel %vm339, %v356, 0.0
  %v360 = vsel %vm339, %v357, 0.0
  %v361 = vadd.f32 %v359, %v360
  %v362 = vsel %vm339, %v358, 0.0
  %v363 = vadd.f32 %v361, %v362
  %v364 = vrot.slane %v363, 4
  %v365 = vadd.f32 %v363, %v364
  %v366 = vrot.slane %v365, 2
  %v367 = vadd.f32 %v365, %v366
  %v368 = vrot.slane %v367, 1
  %v369 = vadd.f32 %v367, %v368
  %v370 = vmul.f32 %v369, %v351
  %v371 = vadd.f32 %v370, 1e-05
  %v372 = vrsqrt.pop %v371
  %v373 = vmul.f32 %v353, %v372
  %v374 = vmul.f32 %v354, %v372
  %v375 = vmul.f32 %v355, %v372
  %v376 = vld [vmem:[%s2] sm:$0x1]
  %v378 = vlaneseq
  %v379 = vshrl.u32 %v378, 7
  %v380 = vsub.s32 0, %v379
  %v381 = vrot.slane %v376, %v380
  %v383 = vmul.f32 %v373, %v381
  %v384 = vmul.f32 %v374, %v381
  %v385 = vmul.f32 %v375, %v381
  %v386 = vld [vmem:[%s3] sm:$0x1]
  %v388 = vlaneseq
  %v389 = vshrl.u32 %v388, 7
  %v390 = vsub.s32 0, %v389
  %v391 = vrot.slane %v386, %v390
  %v393 = vadd.f32 %v383, %v391
  %v394 = vadd.f32 %v384, %v391
  %v395 = vadd.f32 %v385, %v391
  %vm396 = vcmp.ge.f32.partialorder %v393, 0.0
  %vm397 = vcmp.ge.f32.partialorder %v394, 0.0
  %vm398 = vcmp.ge.f32.partialorder %v395, 0.0
  %v399 = vmul.f32 %v393, 0.2
  %v400 = vmul.f32 %v394, 0.2
  %v401 = vmul.f32 %v395, 0.2
  %v402 = vsel %vm396, %v393, %v399
  %v403 = vsel %vm397, %v394, %v400
  %v404 = vsel %vm398, %v395, %v401
  %v405 = vpack.c.bf16 %v403, %v402
  %v406 = vpack.c.bf16 %v404, %v404
  %v409 = vunpack.c.l.b16 %v405
  %v410 = vunpack.c.h.b16 %v405
  %v411 = vunpack.c.l.b16 %v406
  %v412 = vpack.c.b16 %v409, %v409
  %v413 = vpack.c.b16 %v410, %v410
  %v414 = vpack.c.b16 %v411, %v411
  %vm418 = vcmask 519168
  %419 = vst.msk [vmem:[%s4] sm:$0xf] %vm418, %v412
  %420 = vst.msk [vmem:[%s4 + $0x4] sm:$0xf] %vm418, %v413
  %421 = vst.msk [vmem:[%s4 + $0x8] sm:$0xf] %vm418, %v414
  // Predicated region
  $region18: #{lidar_encoder_forward.8} parent=0 // pred_check
    _
  $region19: #{lidar_encoder_forward.8} parent=0 // pred_check_branch
    %423 = sbr.rel (0) target = $region21
  $region20: #{lidar_encoder_forward.8} parent=0 // pred_region
    _
  $region21: #{lidar_encoder_forward.8} parent=0 // pred_fallthru
    _
  // Predicated region
  $region22: #{lidar_encoder_forward.8} parent=0 // pred_check
    _
  $region23: #{lidar_encoder_forward.8} parent=0 // pred_check_branch
    %425 = sbr.rel (0) target = $region25
  $region24: #{lidar_encoder_forward.8} parent=0 // pred_region
    _
  $region25: #{lidar_encoder_forward.8} parent=0 // pred_fallthru
    _

// kernel: lidar_encoder_forward.9
$region0: #{lidar_encoder_forward.9}
  #allocation0 [shape = 'u32[]', space=smem, size = 0x4, offset = 0x4, fixed_abs, tag = 'smem constant byte address 0x4 - core index']
  #allocation1 [shape = 'u32[144,128]{1,0:T(1,128)}', space=vmem, size = 0x12000, scoped, tag = 'internal scratch']
  %s0 = inlined_call_operand.vmem [shape: bf16[2,768], index: 0, kind: input, shape index: {}]
  %s1 = inlined_call_operand.vmem [shape: bf16[768,1024], index: 1, kind: input, shape index: {}]
  %s2 = inlined_call_operand.vmem [shape: f32[1,1024], index: 2, kind: input, shape index: {}]
  %s3 = inlined_call_operand.vmem [shape: f32[1,1024], index: 3, kind: input, shape index: {}]
  %s4 = inlined_call_operand.vmem [shape: bf16[1024,32], index: 4, kind: input, shape index: {}]
  %s5 = inlined_call_operand.vmem [shape: f32[1,32], index: 5, kind: input, shape index: {}]
  %s6 = inlined_call_operand.vmem [shape: f32[2,32], index: 6, kind: output, shape index: {}]
  %s7 = sld [smem:[#allocation0]]
  $region34: #{lidar_encoder_forward.9} parent=0
    _
  %s9 = ssub.s32 1, %s7
  %s10 = scalar_select 0, %s9, %s7
  // Predicated region
  $region2: #{lidar_encoder_forward.9} parent=0 // pred_check
    _
  $region3: #{lidar_encoder_forward.9} parent=0 // pred_check_branch
    %12 = sbr.rel (0) target = $region5
  $region4: #{lidar_encoder_forward.9} parent=0 // pred_region
    _
  $region5: #{lidar_encoder_forward.9} parent=0 // pred_fallthru
    _
  // Predicated region
  $region6: #{lidar_encoder_forward.9} parent=0 // pred_check
    _
  $region7: #{lidar_encoder_forward.9} parent=0 // pred_check_branch
    %14 = sbr.rel (0) target = $region9
  $region8: #{lidar_encoder_forward.9} parent=0 // pred_region
    _
  $region9: #{lidar_encoder_forward.9} parent=0 // pred_fallthru
    _
  // Predicated region
  $region10: #{lidar_encoder_forward.9} parent=0 // pred_check
    _
  $region11: #{lidar_encoder_forward.9} parent=0 // pred_check_branch
    %16 = sbr.rel (0) target = $region13
  $region12: #{lidar_encoder_forward.9} parent=0 // pred_region
    _
  $region13: #{lidar_encoder_forward.9} parent=0 // pred_fallthru
    _
  // Predicated region
  $region14: #{lidar_encoder_forward.9} parent=0 // pred_check
    _
  $region15: #{lidar_encoder_forward.9} parent=0 // pred_check_branch
    %18 = sbr.rel (0) target = $region17
  $region16: #{lidar_encoder_forward.9} parent=0 // pred_region
    _
  $region17: #{lidar_encoder_forward.9} parent=0 // pred_fallthru
    _
  // Predicated region
  $region18: #{lidar_encoder_forward.9} parent=0 // pred_check
    _
  $region19: #{lidar_encoder_forward.9} parent=0 // pred_check_branch
    %20 = sbr.rel (0) target = $region21
  $region20: #{lidar_encoder_forward.9} parent=0 // pred_region
    _
  $region21: #{lidar_encoder_forward.9} parent=0 // pred_fallthru
    _
  // Predicated region
  $region22: #{lidar_encoder_forward.9} parent=0 // pred_check
    _
  $region23: #{lidar_encoder_forward.9} parent=0 // pred_check_branch
    %22 = sbr.rel (0) target = $region25
  $region24: #{lidar_encoder_forward.9} parent=0 // pred_region
    _
  $region25: #{lidar_encoder_forward.9} parent=0 // pred_fallthru
    _
  %v24 = vld [vmem:[%s0] sm:$0x3f]
  %v25 = vld [vmem:[%s1] sm:$0xff]
  %v26 = vld [vmem:[%s1 + $0x8] sm:$0xff]
  %v27 = vld [vmem:[%s1 + $0x10] sm:$0xff]
  %v28 = vld [vmem:[%s1 + $0x18] sm:$0xff]
  %v29 = vld [vmem:[%s1 + $0x20] sm:$0xff]
  %v30 = vld [vmem:[%s1 + $0x28] sm:$0xff]
  %v31 = vld [vmem:[%s1 + $0x30] sm:$0xff]
  %v32 = vld [vmem:[%s1 + $0x38] sm:$0xff]
  %v33 = vld [vmem:[%s1 + $0x40] sm:$0xff]
  %v34 = vld [vmem:[%s1 + $0x48] sm:$0xff]
  %v35 = vld [vmem:[%s1 + $0x50] sm:$0xff]
  %v36 = vld [vmem:[%s1 + $0x58] sm:$0xff]
  %v37 = vld [vmem:[%s1 + $0x60] sm:$0xff]
  %v38 = vld [vmem:[%s1 + $0x68] sm:$0xff]
  %v39 = vld [vmem:[%s1 + $0x70] sm:$0xff]
  %v40 = vld [vmem:[%s1 + $0x78] sm:$0xff]
  %v41 = vld [vmem:[%s1 + $0x80] sm:$0xff]
  %v42 = vld [vmem:[%s1 + $0x88] sm:$0xff]
  %v43 = vld [vmem:[%s1 + $0x90] sm:$0xff]
  %v44 = vld [vmem:[%s1 + $0x98] sm:$0xff]
  %v45 = vld [vmem:[%s1 + $0xa0] sm:$0xff]
  %v46 = vld [vmem:[%s1 + $0xa8] sm:$0xff]
  %v47 = vld [vmem:[%s1 + $0xb0] sm:$0xff]
  %v48 = vld [vmem:[%s1 + $0xb8] sm:$0xff]
  %v49 = vld [vmem:[%s1 + $0xc0] sm:$0xff]
  %v50 = vld [vmem:[%s1 + $0xc8] sm:$0xff]
  %v51 = vld [vmem:[%s1 + $0xd0] sm:$0xff]
  %v52 = vld [vmem:[%s1 + $0xd8] sm:$0xff]
  %v53 = vld [vmem:[%s1 + $0xe0] sm:$0xff]
  %v54 = vld [vmem:[%s1 + $0xe8] sm:$0xff]
  %v55 = vld [vmem:[%s1 + $0xf0] sm:$0xff]
  %v56 = vld [vmem:[%s1 + $0xf8] sm:$0xff]
  %v57 = vld [vmem:[%s1 + $0x100] sm:$0xff]
  %v58 = vld [vmem:[%s1 + $0x108] sm:$0xff]
  %v59 = vld [vmem:[%s1 + $0x110] sm:$0xff]
  %v60 = vld [vmem:[%s1 + $0x118] sm:$0xff]
  %v61 = vld [vmem:[%s1 + $0x120] sm:$0xff]
  %v62 = vld [vmem:[%s1 + $0x128] sm:$0xff]
  %v63 = vld [vmem:[%s1 + $0x130] sm:$0xff]
  %v64 = vld [vmem:[%s1 + $0x138] sm:$0xff]
  %v65 = vld [vmem:[%s1 + $0x140] sm:$0xff]
  %v66 = vld [vmem:[%s1 + $0x148] sm:$0xff]
  %v67 = vld [vmem:[%s1 + $0x150] sm:$0xff]
  %v68 = vld [vmem:[%s1 + $0x158] sm:$0xff]
  %v69 = vld [vmem:[%s1 + $0x160] sm:$0xff]
  %v70 = vld [vmem:[%s1 + $0x168] sm:$0xff]
  %v71 = vld [vmem:[%s1 + $0x170] sm:$0xff]
  %v72 = vld [vmem:[%s1 + $0x178] sm:$0xff]
  %v73 = vld [vmem:[%s1 + $0x180] sm:$0xff]
  %v74 = vld [vmem:[%s1 + $0x188] sm:$0xff]
  %v75 = vld [vmem:[%s1 + $0x190] sm:$0xff]
  %v76 = vld [vmem:[%s1 + $0x198] sm:$0xff]
  %v77 = vld [vmem:[%s1 + $0x1a0] sm:$0xff]
  %v78 = vld [vmem:[%s1 + $0x1a8] sm:$0xff]
  %v79 = vld [vmem:[%s1 + $0x1b0] sm:$0xff]
  %v80 = vld [vmem:[%s1 + $0x1b8] sm:$0xff]
  %v81 = vld [vmem:[%s1 + $0x1c0] sm:$0xff]
  %v82 = vld [vmem:[%s1 + $0x1c8] sm:$0xff]
  %v83 = vld [vmem:[%s1 + $0x1d0] sm:$0xff]
  %v84 = vld [vmem:[%s1 + $0x1d8] sm:$0xff]
  %v85 = vld [vmem:[%s1 + $0x1e0] sm:$0xff]
  %v86 = vld [vmem:[%s1 + $0x1e8] sm:$0xff]
  %v87 = vld [vmem:[%s1 + $0x1f0] sm:$0xff]
  %v88 = vld [vmem:[%s1 + $0x1f8] sm:$0xff]
  %v89 = vld [vmem:[%s1 + $0x200] sm:$0xff]
  %v90 = vld [vmem:[%s1 + $0x208] sm:$0xff]
  %v91 = vld [vmem:[%s1 + $0x210] sm:$0xff]
  %v92 = vld [vmem:[%s1 + $0x218] sm:$0xff]
  %v93 = vld [vmem:[%s1 + $0x220] sm:$0xff]
  %v94 = vld [vmem:[%s1 + $0x228] sm:$0xff]
  %v95 = vld [vmem:[%s1 + $0x230] sm:$0xff]
  %v96 = vld [vmem:[%s1 + $0x238] sm:$0xff]
  %v97 = vld [vmem:[%s1 + $0x240] sm:$0xff]
  %v98 = vld [vmem:[%s1 + $0x248] sm:$0xff]
  %v99 = vld [vmem:[%s1 + $0x250] sm:$0xff]
  %v100 = vld [vmem:[%s1 + $0x258] sm:$0xff]
  %v101 = vld [vmem:[%s1 + $0x260] sm:$0xff]
  %v102 = vld [vmem:[%s1 + $0x268] sm:$0xff]
  %v103 = vld [vmem:[%s1 + $0x270] sm:$0xff]
  %v104 = vld [vmem:[%s1 + $0x278] sm:$0xff]
  %v105 = vld [vmem:[%s1 + $0x280] sm:$0xff]
  %v106 = vld [vmem:[%s1 + $0x288] sm:$0xff]
  %v107 = vld [vmem:[%s1 + $0x290] sm:$0xff]
  %v108 = vld [vmem:[%s1 + $0x298] sm:$0xff]
  %v109 = vld [vmem:[%s1 + $0x2a0] sm:$0xff]
  %v110 = vld [vmem:[%s1 + $0x2a8] sm:$0xff]
  %v111 = vld [vmem:[%s1 + $0x2b0] sm:$0xff]
  %v112 = vld [vmem:[%s1 + $0x2b8] sm:$0xff]
  %v113 = vld [vmem:[%s1 + $0x2c0] sm:$0xff]
  %v114 = vld [vmem:[%s1 + $0x2c8] sm:$0xff]
  %v115 = vld [vmem:[%s1 + $0x2d0] sm:$0xff]
  %v116 = vld [vmem:[%s1 + $0x2d8] sm:$0xff]
  %v117 = vld [vmem:[%s1 + $0x2e0] sm:$0xff]
  %v118 = vld [vmem:[%s1 + $0x2e8] sm:$0xff]
  %v119 = vld [vmem:[%s1 + $0x2f0] sm:$0xff]
  %v120 = vld [vmem:[%s1 + $0x2f8] sm:$0xff]
  %v121 = vld [vmem:[%s1 + $0x300] sm:$0xff]
  %v122 = vld [vmem:[%s1 + $0x308] sm:$0xff]
  %v123 = vld [vmem:[%s1 + $0x310] sm:$0xff]
  %v124 = vld [vmem:[%s1 + $0x318] sm:$0xff]
  %v125 = vld [vmem:[%s1 + $0x320] sm:$0xff]
  %v126 = vld [vmem:[%s1 + $0x328] sm:$0xff]
  %v127 = vld [vmem:[%s1 + $0x330] sm:$0xff]
  %v128 = vld [vmem:[%s1 + $0x338] sm:$0xff]
  %v129 = vld [vmem:[%s1 + $0x340] sm:$0xff]
  %v130 = vld [vmem:[%s1 + $0x348] sm:$0xff]
  %v131 = vld [vmem:[%s1 + $0x350] sm:$0xff]
  %v132 = vld [vmem:[%s1 + $0x358] sm:$0xff]
  %v133 = vld [vmem:[%s1 + $0x360] sm:$0xff]
  %v134 = vld [vmem:[%s1 + $0x368] sm:$0xff]
  %v135 = vld [vmem:[%s1 + $0x370] sm:$0xff]
  %v136 = vld [vmem:[%s1 + $0x378] sm:$0xff]
  %v137 = vld [vmem:[%s1 + $0x380] sm:$0xff]
  %v138 = vld [vmem:[%s1 + $0x388] sm:$0xff]
  %v139 = vld [vmem:[%s1 + $0x390] sm:$0xff]
  %v140 = vld [vmem:[%s1 + $0x398] sm:$0xff]
  %v141 = vld [vmem:[%s1 + $0x3a0] sm:$0xff]
  %v142 = vld [vmem:[%s1 + $0x3a8] sm:$0xff]
  %v143 = vld [vmem:[%s1 + $0x3b0] sm:$0xff]
  %v144 = vld [vmem:[%s1 + $0x3b8] sm:$0xff]
  %v145 = vld [vmem:[%s1 + $0x3c0] sm:$0xff]
  %v146 = vld [vmem:[%s1 + $0x3c8] sm:$0xff]
  %v147 = vld [vmem:[%s1 + $0x3d0] sm:$0xff]
  %v148 = vld [vmem:[%s1 + $0x3d8] sm:$0xff]
  %v149 = vld [vmem:[%s1 + $0x3e0] sm:$0xff]
  %v150 = vld [vmem:[%s1 + $0x3e8] sm:$0xff]
  %v151 = vld [vmem:[%s1 + $0x3f0] sm:$0xff]
  %v152 = vld [vmem:[%s1 + $0x3f8] sm:$0xff]
  %v153 = vld [vmem:[%s1 + $0x400] sm:$0xff]
  %v154 = vld [vmem:[%s1 + $0x408] sm:$0xff]
  %v155 = vld [vmem:[%s1 + $0x410] sm:$0xff]
  %v156 = vld [vmem:[%s1 + $0x418] sm:$0xff]
  %v157 = vld [vmem:[%s1 + $0x420] sm:$0xff]
  %v158 = vld [vmem:[%s1 + $0x428] sm:$0xff]
  %v159 = vld [vmem:[%s1 + $0x430] sm:$0xff]
  %v160 = vld [vmem:[%s1 + $0x438] sm:$0xff]
  %v161 = vld [vmem:[%s1 + $0x440] sm:$0xff]
  %v162 = vld [vmem:[%s1 + $0x448] sm:$0xff]
  %v163 = vld [vmem:[%s1 + $0x450] sm:$0xff]
  %v164 = vld [vmem:[%s1 + $0x458] sm:$0xff]
  %v165 = vld [vmem:[%s1 + $0x460] sm:$0xff]
  %v166 = vld [vmem:[%s1 + $0x468] sm:$0xff]
  %v167 = vld [vmem:[%s1 + $0x470] sm:$0xff]
  %v168 = vld [vmem:[%s1 + $0x478] sm:$0xff]
  %v169 = vld [vmem:[%s1 + $0x480] sm:$0xff]
  %v170 = vld [vmem:[%s1 + $0x488] sm:$0xff]
  %v171 = vld [vmem:[%s1 + $0x490] sm:$0xff]
  %v172 = vld [vmem:[%s1 + $0x498] sm:$0xff]
  %v173 = vld [vmem:[%s1 + $0x4a0] sm:$0xff]
  %v174 = vld [vmem:[%s1 + $0x4a8] sm:$0xff]
  %v175 = vld [vmem:[%s1 + $0x4b0] sm:$0xff]
  %v176 = vld [vmem:[%s1 + $0x4b8] sm:$0xff]
  %v177 = vld [vmem:[%s1 + $0x4c0] sm:$0xff]
  %v178 = vld [vmem:[%s1 + $0x4c8] sm:$0xff]
  %v179 = vld [vmem:[%s1 + $0x4d0] sm:$0xff]
  %v180 = vld [vmem:[%s1 + $0x4d8] sm:$0xff]
  %v181 = vld [vmem:[%s1 + $0x4e0] sm:$0xff]
  %v182 = vld [vmem:[%s1 + $0x4e8] sm:$0xff]
  %v183 = vld [vmem:[%s1 + $0x4f0] sm:$0xff]
  %v184 = vld [vmem:[%s1 + $0x4f8] sm:$0xff]
  %v185 = vld [vmem:[%s1 + $0x500] sm:$0xff]
  %v186 = vld [vmem:[%s1 + $0x508] sm:$0xff]
  %v187 = vld [vmem:[%s1 + $0x510] sm:$0xff]
  %v188 = vld [vmem:[%s1 + $0x518] sm:$0xff]
  %v189 = vld [vmem:[%s1 + $0x520] sm:$0xff]
  %v190 = vld [vmem:[%s1 + $0x528] sm:$0xff]
  %v191 = vld [vmem:[%s1 + $0x530] sm:$0xff]
  %v192 = vld [vmem:[%s1 + $0x538] sm:$0xff]
  %v193 = vld [vmem:[%s1 + $0x540] sm:$0xff]
  %v194 = vld [vmem:[%s1 + $0x548] sm:$0xff]
  %v195 = vld [vmem:[%s1 + $0x550] sm:$0xff]
  %v196 = vld [vmem:[%s1 + $0x558] sm:$0xff]
  %v197 = vld [vmem:[%s1 + $0x560] sm:$0xff]
  %v198 = vld [vmem:[%s1 + $0x568] sm:$0xff]
  %v199 = vld [vmem:[%s1 + $0x570] sm:$0xff]
  %v200 = vld [vmem:[%s1 + $0x578] sm:$0xff]
  %v201 = vld [vmem:[%s1 + $0x580] sm:$0xff]
  %v202 = vld [vmem:[%s1 + $0x588] sm:$0xff]
  %v203 = vld [vmem:[%s1 + $0x590] sm:$0xff]
  %v204 = vld [vmem:[%s1 + $0x598] sm:$0xff]
  %v205 = vld [vmem:[%s1 + $0x5a0] sm:$0xff]
  %v206 = vld [vmem:[%s1 + $0x5a8] sm:$0xff]
  %v207 = vld [vmem:[%s1 + $0x5b0] sm:$0xff]
  %v208 = vld [vmem:[%s1 + $0x5b8] sm:$0xff]
  %v209 = vld [vmem:[%s1 + $0x5c0] sm:$0xff]
  %v210 = vld [vmem:[%s1 + $0x5c8] sm:$0xff]
  %v211 = vld [vmem:[%s1 + $0x5d0] sm:$0xff]
  %v212 = vld [vmem:[%s1 + $0x5d8] sm:$0xff]
  %v213 = vld [vmem:[%s1 + $0x5e0] sm:$0xff]
  %v214 = vld [vmem:[%s1 + $0x5e8] sm:$0xff]
  %v215 = vld [vmem:[%s1 + $0x5f0] sm:$0xff]
  %v216 = vld [vmem:[%s1 + $0x5f8] sm:$0xff]
  %v217 = vld [vmem:[%s1 + $0x600] sm:$0xff]
  %v218 = vld [vmem:[%s1 + $0x608] sm:$0xff]
  %v219 = vld [vmem:[%s1 + $0x610] sm:$0xff]
  %v220 = vld [vmem:[%s1 + $0x618] sm:$0xff]
  %v221 = vld [vmem:[%s1 + $0x620] sm:$0xff]
  %v222 = vld [vmem:[%s1 + $0x628] sm:$0xff]
  %v223 = vld [vmem:[%s1 + $0x630] sm:$0xff]
  %v224 = vld [vmem:[%s1 + $0x638] sm:$0xff]
  %v225 = vld [vmem:[%s1 + $0x640] sm:$0xff]
  %v226 = vld [vmem:[%s1 + $0x648] sm:$0xff]
  %v227 = vld [vmem:[%s1 + $0x650] sm:$0xff]
  %v228 = vld [vmem:[%s1 + $0x658] sm:$0xff]
  %v229 = vld [vmem:[%s1 + $0x660] sm:$0xff]
  %v230 = vld [vmem:[%s1 + $0x668] sm:$0xff]
  %v231 = vld [vmem:[%s1 + $0x670] sm:$0xff]
  %v232 = vld [vmem:[%s1 + $0x678] sm:$0xff]
  %v233 = vld [vmem:[%s1 + $0x680] sm:$0xff]
  %v234 = vld [vmem:[%s1 + $0x688] sm:$0xff]
  %v235 = vld [vmem:[%s1 + $0x690] sm:$0xff]
  %v236 = vld [vmem:[%s1 + $0x698] sm:$0xff]
  %v237 = vld [vmem:[%s1 + $0x6a0] sm:$0xff]
  %v238 = vld [vmem:[%s1 + $0x6a8] sm:$0xff]
  %v239 = vld [vmem:[%s1 + $0x6b0] sm:$0xff]
  %v240 = vld [vmem:[%s1 + $0x6b8] sm:$0xff]
  %v241 = vld [vmem:[%s1 + $0x6c0] sm:$0xff]
  %v242 = vld [vmem:[%s1 + $0x6c8] sm:$0xff]
  %v243 = vld [vmem:[%s1 + $0x6d0] sm:$0xff]
  %v244 = vld [vmem:[%s1 + $0x6d8] sm:$0xff]
  %v245 = vld [vmem:[%s1 + $0x6e0] sm:$0xff]
  %v246 = vld [vmem:[%s1 + $0x6e8] sm:$0xff]
  %v247 = vld [vmem:[%s1 + $0x6f0] sm:$0xff]
  %v248 = vld [vmem:[%s1 + $0x6f8] sm:$0xff]
  %v249 = vld [vmem:[%s1 + $0x700] sm:$0xff]
  %v250 = vld [vmem:[%s1 + $0x708] sm:$0xff]
  %v251 = vld [vmem:[%s1 + $0x710] sm:$0xff]
  %v252 = vld [vmem:[%s1 + $0x718] sm:$0xff]
  %v253 = vld [vmem:[%s1 + $0x720] sm:$0xff]
  %v254 = vld [vmem:[%s1 + $0x728] sm:$0xff]
  %v255 = vld [vmem:[%s1 + $0x730] sm:$0xff]
  %v256 = vld [vmem:[%s1 + $0x738] sm:$0xff]
  %v257 = vld [vmem:[%s1 + $0x740] sm:$0xff]
  %v258 = vld [vmem:[%s1 + $0x748] sm:$0xff]
  %v259 = vld [vmem:[%s1 + $0x750] sm:$0xff]
  %v260 = vld [vmem:[%s1 + $0x758] sm:$0xff]
  %v261 = vld [vmem:[%s1 + $0x760] sm:$0xff]
  %v262 = vld [vmem:[%s1 + $0x768] sm:$0xff]
  %v263 = vld [vmem:[%s1 + $0x770] sm:$0xff]
  %v264 = vld [vmem:[%s1 + $0x778] sm:$0xff]
  %v265 = vld [vmem:[%s1 + $0x780] sm:$0xff]
  %v266 = vld [vmem:[%s1 + $0x788] sm:$0xff]
  %v267 = vld [vmem:[%s1 + $0x790] sm:$0xff]
  %v268 = vld [vmem:[%s1 + $0x798] sm:$0xff]
  %v269 = vld [vmem:[%s1 + $0x7a0] sm:$0xff]
  %v270 = vld [vmem:[%s1 + $0x7a8] sm:$0xff]
  %v271 = vld [vmem:[%s1 + $0x7b0] sm:$0xff]
  %v272 = vld [vmem:[%s1 + $0x7b8] sm:$0xff]
  %v273 = vld [vmem:[%s1 + $0x7c0] sm:$0xff]
  %v274 = vld [vmem:[%s1 + $0x7c8] sm:$0xff]
  %v275 = vld [vmem:[%s1 + $0x7d0] sm:$0xff]
  %v276 = vld [vmem:[%s1 + $0x7d8] sm:$0xff]
  %v277 = vld [vmem:[%s1 + $0x7e0] sm:$0xff]
  %v278 = vld [vmem:[%s1 + $0x7e8] sm:$0xff]
  %v279 = vld [vmem:[%s1 + $0x7f0] sm:$0xff]
  %v280 = vld [vmem:[%s1 + $0x7f8] sm:$0xff]
  %v281 = vld [vmem:[%s1 + $0x800] sm:$0xff]
  %v282 = vld [vmem:[%s1 + $0x808] sm:$0xff]
  %v283 = vld [vmem:[%s1 + $0x810] sm:$0xff]
  %v284 = vld [vmem:[%s1 + $0x818] sm:$0xff]
  %v285 = vld [vmem:[%s1 + $0x820] sm:$0xff]
  %v286 = vld [vmem:[%s1 + $0x828] sm:$0xff]
  %v287 = vld [vmem:[%s1 + $0x830] sm:$0xff]
  %v288 = vld [vmem:[%s1 + $0x838] sm:$0xff]
  %v289 = vld [vmem:[%s1 + $0x840] sm:$0xff]
  %v290 = vld [vmem:[%s1 + $0x848] sm:$0xff]
  %v291 = vld [vmem:[%s1 + $0x850] sm:$0xff]
  %v292 = vld [vmem:[%s1 + $0x858] sm:$0xff]
  %v293 = vld [vmem:[%s1 + $0x860] sm:$0xff]
  %v294 = vld [vmem:[%s1 + $0x868] sm:$0xff]
  %v295 = vld [vmem:[%s1 + $0x870] sm:$0xff]
  %v296 = vld [vmem:[%s1 + $0x878] sm:$0xff]
  %v297 = vld [vmem:[%s1 + $0x880] sm:$0xff]
  %v298 = vld [vmem:[%s1 + $0x888] sm:$0xff]
  %v299 = vld [vmem:[%s1 + $0x890] sm:$0xff]
  %v300 = vld [vmem:[%s1 + $0x898] sm:$0xff]
  %v301 = vld [vmem:[%s1 + $0x8a0] sm:$0xff]
  %v302 = vld [vmem:[%s1 + $0x8a8] sm:$0xff]
  %v303 = vld [vmem:[%s1 + $0x8b0] sm:$0xff]
  %v304 = vld [vmem:[%s1 + $0x8b8] sm:$0xff]
  %v305 = vld [vmem:[%s1 + $0x8c0] sm:$0xff]
  %v306 = vld [vmem:[%s1 + $0x8c8] sm:$0xff]
  %v307 = vld [vmem:[%s1 + $0x8d0] sm:$0xff]
  %v308 = vld [vmem:[%s1 + $0x8d8] sm:$0xff]
  %v309 = vld [vmem:[%s1 + $0x8e0] sm:$0xff]
  %v310 = vld [vmem:[%s1 + $0x8e8] sm:$0xff]
  %v311 = vld [vmem:[%s1 + $0x8f0] sm:$0xff]
  %v312 = vld [vmem:[%s1 + $0x8f8] sm:$0xff]
  %v313 = vld [vmem:[%s1 + $0x900] sm:$0xff]
  %v314 = vld [vmem:[%s1 + $0x908] sm:$0xff]
  %v315 = vld [vmem:[%s1 + $0x910] sm:$0xff]
  %v316 = vld [vmem:[%s1 + $0x918] sm:$0xff]
  %v317 = vld [vmem:[%s1 + $0x920] sm:$0xff]
  %v318 = vld [vmem:[%s1 + $0x928] sm:$0xff]
  %v319 = vld [vmem:[%s1 + $0x930] sm:$0xff]
  %v320 = vld [vmem:[%s1 + $0x938] sm:$0xff]
  %v321 = vld [vmem:[%s1 + $0x940] sm:$0xff]
  %v322 = vld [vmem:[%s1 + $0x948] sm:$0xff]
  %v323 = vld [vmem:[%s1 + $0x950] sm:$0xff]
  %v324 = vld [vmem:[%s1 + $0x958] sm:$0xff]
  %v325 = vld [vmem:[%s1 + $0x960] sm:$0xff]
  %v326 = vld [vmem:[%s1 + $0x968] sm:$0xff]
  %v327 = vld [vmem:[%s1 + $0x970] sm:$0xff]
  %v328 = vld [vmem:[%s1 + $0x978] sm:$0xff]
  %v329 = vld [vmem:[%s1 + $0x980] sm:$0xff]
  %v330 = vld [vmem:[%s1 + $0x988] sm:$0xff]
  %v331 = vld [vmem:[%s1 + $0x990] sm:$0xff]
  %v332 = vld [vmem:[%s1 + $0x998] sm:$0xff]
  %v333 = vld [vmem:[%s1 + $0x9a0] sm:$0xff]
  %v334 = vld [vmem:[%s1 + $0x9a8] sm:$0xff]
  %v335 = vld [vmem:[%s1 + $0x9b0] sm:$0xff]
  %v336 = vld [vmem:[%s1 + $0x9b8] sm:$0xff]
  %v337 = vld [vmem:[%s1 + $0x9c0] sm:$0xff]
  %v338 = vld [vmem:[%s1 + $0x9c8] sm:$0xff]
  %v339 = vld [vmem:[%s1 + $0x9d0] sm:$0xff]
  %v340 = vld [vmem:[%s1 + $0x9d8] sm:$0xff]
  %v341 = vld [vmem:[%s1 + $0x9e0] sm:$0xff]
  %v342 = vld [vmem:[%s1 + $0x9e8] sm:$0xff]
  %v343 = vld [vmem:[%s1 + $0x9f0] sm:$0xff]
  %v344 = vld [vmem:[%s1 + $0x9f8] sm:$0xff]
  %v345 = vld [vmem:[%s1 + $0xa00] sm:$0xff]
  %v346 = vld [vmem:[%s1 + $0xa08] sm:$0xff]
  %v347 = vld [vmem:[%s1 + $0xa10] sm:$0xff]
  %v348 = vld [vmem:[%s1 + $0xa18] sm:$0xff]
  %v349 = vld [vmem:[%s1 + $0xa20] sm:$0xff]
  %v350 = vld [vmem:[%s1 + $0xa28] sm:$0xff]
  %v351 = vld [vmem:[%s1 + $0xa30] sm:$0xff]
  %v352 = vld [vmem:[%s1 + $0xa38] sm:$0xff]
  %v353 = vld [vmem:[%s1 + $0xa40] sm:$0xff]
  %v354 = vld [vmem:[%s1 + $0xa48] sm:$0xff]
  %v355 = vld [vmem:[%s1 + $0xa50] sm:$0xff]
  %v356 = vld [vmem:[%s1 + $0xa58] sm:$0xff]
  %v357 = vld [vmem:[%s1 + $0xa60] sm:$0xff]
  %v358 = vld [vmem:[%s1 + $0xa68] sm:$0xff]
  %v359 = vld [vmem:[%s1 + $0xa70] sm:$0xff]
  %v360 = vld [vmem:[%s1 + $0xa78] sm:$0xff]
  %v361 = vld [vmem:[%s1 + $0xa80] sm:$0xff]
  %v362 = vld [vmem:[%s1 + $0xa88] sm:$0xff]
  %v363 = vld [vmem:[%s1 + $0xa90] sm:$0xff]
  %v364 = vld [vmem:[%s1 + $0xa98] sm:$0xff]
  %v365 = vld [vmem:[%s1 + $0xaa0] sm:$0xff]
  %v366 = vld [vmem:[%s1 + $0xaa8] sm:$0xff]
  %v367 = vld [vmem:[%s1 + $0xab0] sm:$0xff]
  %v368 = vld [vmem:[%s1 + $0xab8] sm:$0xff]
  %v369 = vld [vmem:[%s1 + $0xac0] sm:$0xff]
  %v370 = vld [vmem:[%s1 + $0xac8] sm:$0xff]
  %v371 = vld [vmem:[%s1 + $0xad0] sm:$0xff]
  %v372 = vld [vmem:[%s1 + $0xad8] sm:$0xff]
  %v373 = vld [vmem:[%s1 + $0xae0] sm:$0xff]
  %v374 = vld [vmem:[%s1 + $0xae8] sm:$0xff]
  %v375 = vld [vmem:[%s1 + $0xaf0] sm:$0xff]
  %v376 = vld [vmem:[%s1 + $0xaf8] sm:$0xff]
  %v377 = vld [vmem:[%s1 + $0xb00] sm:$0xff]
  %v378 = vld [vmem:[%s1 + $0xb08] sm:$0xff]
  %v379 = vld [vmem:[%s1 + $0xb10] sm:$0xff]
  %v380 = vld [vmem:[%s1 + $0xb18] sm:$0xff]
  %v381 = vld [vmem:[%s1 + $0xb20] sm:$0xff]
  %v382 = vld [vmem:[%s1 + $0xb28] sm:$0xff]
  %v383 = vld [vmem:[%s1 + $0xb30] sm:$0xff]
  %v384 = vld [vmem:[%s1 + $0xb38] sm:$0xff]
  %v385 = vld [vmem:[%s1 + $0xb40] sm:$0xff]
  %v386 = vld [vmem:[%s1 + $0xb48] sm:$0xff]
  %v387 = vld [vmem:[%s1 + $0xb50] sm:$0xff]
  %v388 = vld [vmem:[%s1 + $0xb58] sm:$0xff]
  %v389 = vld [vmem:[%s1 + $0xb60] sm:$0xff]
  %v390 = vld [vmem:[%s1 + $0xb68] sm:$0xff]
  %v391 = vld [vmem:[%s1 + $0xb70] sm:$0xff]
  %v392 = vld [vmem:[%s1 + $0xb78] sm:$0xff]
  %v393 = vld [vmem:[%s1 + $0xb80] sm:$0xff]
  %v394 = vld [vmem:[%s1 + $0xb88] sm:$0xff]
  %v395 = vld [vmem:[%s1 + $0xb90] sm:$0xff]
  %v396 = vld [vmem:[%s1 + $0xb98] sm:$0xff]
  %v397 = vld [vmem:[%s1 + $0xba0] sm:$0xff]
  %v398 = vld [vmem:[%s1 + $0xba8] sm:$0xff]
  %v399 = vld [vmem:[%s1 + $0xbb0] sm:$0xff]
  %v400 = vld [vmem:[%s1 + $0xbb8] sm:$0xff]
  %v401 = vld [vmem:[%s1 + $0xbc0] sm:$0xff]
  %v402 = vld [vmem:[%s1 + $0xbc8] sm:$0xff]
  %v403 = vld [vmem:[%s1 + $0xbd0] sm:$0xff]
  %v404 = vld [vmem:[%s1 + $0xbd8] sm:$0xff]
  %v405 = vld [vmem:[%s1 + $0xbe0] sm:$0xff]
  %v406 = vld [vmem:[%s1 + $0xbe8] sm:$0xff]
  %v407 = vld [vmem:[%s1 + $0xbf0] sm:$0xff]
  %v408 = vld [vmem:[%s1 + $0xbf8] sm:$0xff]
  %v410 = vcombine.high %v24, %v24
  %v412 = vunpack.c.l.s4 1966171168
  %v413 = vunpack.c.0.s8 %v412
  %v414 = vlaneseq
  %v415 = vshrl.u32 %v414, 7
  %v416 = vsub.s32 %v413, %v415
  %v417 = vrot.slane %v24, %v416
  %v419 = vunpack.c.l.s4 1966171168
  %v420 = vunpack.c.0.s8 %v419
  %v421 = vlaneseq
  %v422 = vshrl.u32 %v421, 7
  %v423 = vsub.s32 %v420, %v422
  %v424 = vrot.slane %v410, %v423
  %v425 = vcombine.high %v417, %v417
  %v426 = vcombine.high %v424, %v424
  %v428 = vunpack.c.l.s4 1966171168
  %v429 = vunpack.c.0.s8 %v428
  %v430 = vlaneseq
  %v431 = vshrl.u32 %v430, 7
  %v432 = vsub.s32 %v429, %v431
  %v433 = vrot.slane %v417, %v432
  %v435 = vunpack.c.l.s4 1966171168
  %v436 = vunpack.c.0.s8 %v435
  %v437 = vlaneseq
  %v438 = vshrl.u32 %v437, 7
  %v439 = vsub.s32 %v436, %v438
  %v440 = vrot.slane %v424, %v439
  %v442 = vunpack.c.l.s4 1966171168
  %v443 = vunpack.c.0.s8 %v442
  %v444 = vlaneseq
  %v445 = vshrl.u32 %v444, 7
  %v446 = vsub.s32 %v443, %v445
  %v447 = vrot.slane %v425, %v446
  %v449 = vunpack.c.l.s4 1966171168
  %v450 = vunpack.c.0.s8 %v449
  %v451 = vlaneseq
  %v452 = vshrl.u32 %v451, 7
  %v453 = vsub.s32 %v450, %v452
  %v454 = vrot.slane %v426, %v453
  %v455 = vcombine.high %v433, %v433
  %v456 = vcombine.high %v447, %v447
  %v847 = vunpack.c.l.b16 %v25
  %v848 = vunpack.c.h.b16 %v25
  %v849 = vunpack.c.l.b16 %v26
  %v850 = vunpack.c.h.b16 %v26
  %v851 = vunpack.c.l.b16 %v27
  %v852 = vunpack.c.h.b16 %v27
  %v853 = vunpack.c.l.b16 %v28
  %v854 = vunpack.c.h.b16 %v28
  %v855 = vunpack.c.l.b16 %v29
  %v856 = vunpack.c.h.b16 %v29
  %v857 = vunpack.c.l.b16 %v30
  %v858 = vunpack.c.h.b16 %v30
  %v859 = vunpack.c.l.b16 %v31
  %v860 = vunpack.c.h.b16 %v31
  %v861 = vunpack.c.l.b16 %v32
  %v862 = vunpack.c.h.b16 %v32
  %v863 = vunpack.c.l.b16 %v33
  %v864 = vunpack.c.h.b16 %v33
  %v865 = vunpack.c.l.b16 %v34
  %v866 = vunpack.c.h.b16 %v34
  %v867 = vunpack.c.l.b16 %v35
  %v868 = vunpack.c.h.b16 %v35
  %v869 = vunpack.c.l.b16 %v36
  %v870 = vunpack.c.h.b16 %v36
  %v871 = vunpack.c.l.b16 %v37
  %v872 = vunpack.c.h.b16 %v37
  %v873 = vunpack.c.l.b16 %v38
  %v874 = vunpack.c.h.b16 %v38
  %v875 = vunpack.c.l.b16 %v39
  %v876 = vunpack.c.h.b16 %v39
  %v877 = vunpack.c.l.b16 %v40
  %v878 = vunpack.c.h.b16 %v40
  %v879 = vunpack.c.l.b16 %v41
  %v880 = vunpack.c.h.b16 %v41
  %v881 = vunpack.c.l.b16 %v42
  %v882 = vunpack.c.h.b16 %v42
  %v883 = vunpack.c.l.b16 %v43
  %v884 = vunpack.c.h.b16 %v43
  %v885 = vunpack.c.l.b16 %v44
  %v886 = vunpack.c.h.b16 %v44
  %v887 = vunpack.c.l.b16 %v45
  %v888 = vunpack.c.h.b16 %v45
  %v889 = vunpack.c.l.b16 %v46
  %v890 = vunpack.c.h.b16 %v46
  %v891 = vunpack.c.l.b16 %v47
  %v892 = vunpack.c.h.b16 %v47
  %v893 = vunpack.c.l.b16 %v48
  %v894 = vunpack.c.h.b16 %v48
  %v895 = vunpack.c.l.b16 %v49
  %v896 = vunpack.c.h.b16 %v49
  %v897 = vunpack.c.l.b16 %v50
  %v898 = vunpack.c.h.b16 %v50
  %v899 = vunpack.c.l.b16 %v51
  %v900 = vunpack.c.h.b16 %v51
  %v901 = vunpack.c.l.b16 %v52
  %v902 = vunpack.c.h.b16 %v52
  %v903 = vunpack.c.l.b16 %v53
  %v904 = vunpack.c.h.b16 %v53
  %v905 = vunpack.c.l.b16 %v54
  %v906 = vunpack.c.h.b16 %v54
  %v907 = vunpack.c.l.b16 %v55
  %v908 = vunpack.c.h.b16 %v55
  %v909 = vunpack.c.l.b16 %v56
  %v910 = vunpack.c.h.b16 %v56
  %v911 = vunpack.c.l.b16 %v57
  %v912 = vunpack.c.h.b16 %v57
  %v913 = vunpack.c.l.b16 %v58
  %v914 = vunpack.c.h.b16 %v58
  %v915 = vunpack.c.l.b16 %v59
  %v916 = vunpack.c.h.b16 %v59
  %v917 = vunpack.c.l.b16 %v60
  %v918 = vunpack.c.h.b16 %v60
  %v919 = vunpack.c.l.b16 %v61
  %v920 = vunpack.c.h.b16 %v61
  %v921 = vunpack.c.l.b16 %v62
  %v922 = vunpack.c.h.b16 %v62
  %v923 = vunpack.c.l.b16 %v63
  %v924 = vunpack.c.h.b16 %v63
  %v925 = vunpack.c.l.b16 %v64
  %v926 = vunpack.c.h.b16 %v64
  %v927 = vunpack.c.l.b16 %v65
  %v928 = vunpack.c.h.b16 %v65
  %v929 = vunpack.c.l.b16 %v66
  %v930 = vunpack.c.h.b16 %v66
  %v931 = vunpack.c.l.b16 %v67
  %v932 = vunpack.c.h.b16 %v67
  %v933 = vunpack.c.l.b16 %v68
  %v934 = vunpack.c.h.b16 %v68
  %v935 = vunpack.c.l.b16 %v69
  %v936 = vunpack.c.h.b16 %v69
  %v937 = vunpack.c.l.b16 %v70
  %v938 = vunpack.c.h.b16 %v70
  %v939 = vunpack.c.l.b16 %v71
  %v940 = vunpack.c.h.b16 %v71
  %v941 = vunpack.c.l.b16 %v72
  %v942 = vunpack.c.h.b16 %v72
  %v943 = vunpack.c.l.b16 %v73
  %v944 = vunpack.c.h.b16 %v73
  %v945 = vunpack.c.l.b16 %v74
  %v946 = vunpack.c.h.b16 %v74
  %v947 = vunpack.c.l.b16 %v75
  %v948 = vunpack.c.h.b16 %v75
  %v949 = vunpack.c.l.b16 %v76
  %v950 = vunpack.c.h.b16 %v76
  %v951 = vunpack.c.l.b16 %v77
  %v952 = vunpack.c.h.b16 %v77
  %v953 = vunpack.c.l.b16 %v78
  %v954 = vunpack.c.h.b16 %v78
  %v955 = vunpack.c.l.b16 %v79
  %v956 = vunpack.c.h.b16 %v79
  %v957 = vunpack.c.l.b16 %v80
  %v958 = vunpack.c.h.b16 %v80
  %v959 = vunpack.c.l.b16 %v81
  %v960 = vunpack.c.h.b16 %v81
  %v961 = vunpack.c.l.b16 %v82
  %v962 = vunpack.c.h.b16 %v82
  %v963 = vunpack.c.l.b16 %v83
  %v964 = vunpack.c.h.b16 %v83
  %v965 = vunpack.c.l.b16 %v84
  %v966 = vunpack.c.h.b16 %v84
  %v967 = vunpack.c.l.b16 %v85
  %v968 = vunpack.c.h.b16 %v85
  %v969 = vunpack.c.l.b16 %v86
  %v970 = vunpack.c.h.b16 %v86
  %v971 = vunpack.c.l.b16 %v87
  %v972 = vunpack.c.h.b16 %v87
  %v973 = vunpack.c.l.b16 %v88
  %v974 = vunpack.c.h.b16 %v88
  %v975 = vunpack.c.l.b16 %v89
  %v976 = vunpack.c.h.b16 %v89
  %v977 = vunpack.c.l.b16 %v90
  %v978 = vunpack.c.h.b16 %v90
  %v979 = vunpack.c.l.b16 %v91
  %v980 = vunpack.c.h.b16 %v91
  %v981 = vunpack.c.l.b16 %v92
  %v982 = vunpack.c.h.b16 %v92
  %v983 = vunpack.c.l.b16 %v93
  %v984 = vunpack.c.h.b16 %v93
  %v985 = vunpack.c.l.b16 %v94
  %v986 = vunpack.c.h.b16 %v94
  %v987 = vunpack.c.l.b16 %v95
  %v988 = vunpack.c.h.b16 %v95
  %v989 = vunpack.c.l.b16 %v96
  %v990 = vunpack.c.h.b16 %v96
  %v991 = vunpack.c.l.b16 %v97
  %v992 = vunpack.c.h.b16 %v97
  %v993 = vunpack.c.l.b16 %v98
  %v994 = vunpack.c.h.b16 %v98
  %v995 = vunpack.c.l.b16 %v99
  %v996 = vunpack.c.h.b16 %v99
  %v997 = vunpack.c.l.b16 %v100
  %v998 = vunpack.c.h.b16 %v100
  %v999 = vunpack.c.l.b16 %v101
  %v1000 = vunpack.c.h.b16 %v101
  %v1001 = vunpack.c.l.b16 %v102
  %v1002 = vunpack.c.h.b16 %v102
  %v1003 = vunpack.c.l.b16 %v103
  %v1004 = vunpack.c.h.b16 %v103
  %v1005 = vunpack.c.l.b16 %v104
  %v1006 = vunpack.c.h.b16 %v104
  %v1007 = vunpack.c.l.b16 %v105
  %v1008 = vunpack.c.h.b16 %v105
  %v1009 = vunpack.c.l.b16 %v106
  %v1010 = vunpack.c.h.b16 %v106
  %v1011 = vunpack.c.l.b16 %v107
  %v1012 = vunpack.c.h.b16 %v107
  %v1013 = vunpack.c.l.b16 %v108
  %v1014 = vunpack.c.h.b16 %v108
  %v1015 = vunpack.c.l.b16 %v109
  %v1016 = vunpack.c.h.b16 %v109
  %v1017 = vunpack.c.l.b16 %v110
  %v1018 = vunpack.c.h.b16 %v110
  %v1019 = vunpack.c.l.b16 %v111
  %v1020 = vunpack.c.h.b16 %v111
  %v1021 = vunpack.c.l.b16 %v112
  %v1022 = vunpack.c.h.b16 %v112
  %v1023 = vunpack.c.l.b16 %v113
  %v1024 = vunpack.c.h.b16 %v113
  %v1025 = vunpack.c.l.b16 %v114
  %v1026 = vunpack.c.h.b16 %v114
  %v1027 = vunpack.c.l.b16 %v115
  %v1028 = vunpack.c.h.b16 %v115
  %v1029 = vunpack.c.l.b16 %v116
  %v1030 = vunpack.c.h.b16 %v116
  %v1031 = vunpack.c.l.b16 %v117
  %v1032 = vunpack.c.h.b16 %v117
  %v1033 = vunpack.c.l.b16 %v118
  %v1034 = vunpack.c.h.b16 %v118
  %v1035 = vunpack.c.l.b16 %v119
  %v1036 = vunpack.c.h.b16 %v119
  %v1037 = vunpack.c.l.b16 %v120
  %v1038 = vunpack.c.h.b16 %v120
  %v1039 = vunpack.c.l.b16 %v121
  %v1040 = vunpack.c.h.b16 %v121
  %v1041 = vunpack.c.l.b16 %v122
  %v1042 = vunpack.c.h.b16 %v122
  %v1043 = vunpack.c.l.b16 %v123
  %v1044 = vunpack.c.h.b16 %v123
  %v1045 = vunpack.c.l.b16 %v124
  %v1046 = vunpack.c.h.b16 %v124
  %v1047 = vunpack.c.l.b16 %v125
  %v1048 = vunpack.c.h.b16 %v125
  %v1049 = vunpack.c.l.b16 %v126
  %v1050 = vunpack.c.h.b16 %v126
  %v1051 = vunpack.c.l.b16 %v127
  %v1052 = vunpack.c.h.b16 %v127
  %v1053 = vunpack.c.l.b16 %v128
  %v1054 = vunpack.c.h.b16 %v128
  %v1055 = vunpack.c.l.b16 %v129
  %v1056 = vunpack.c.h.b16 %v129
  %v1057 = vunpack.c.l.b16 %v130
  %v1058 = vunpack.c.h.b16 %v130
  %v1059 = vunpack.c.l.b16 %v131
  %v1060 = vunpack.c.h.b16 %v131
  %v1061 = vunpack.c.l.b16 %v132
  %v1062 = vunpack.c.h.b16 %v132
  %v1063 = vunpack.c.l.b16 %v133
  %v1064 = vunpack.c.h.b16 %v133
  %v1065 = vunpack.c.l.b16 %v134
  %v1066 = vunpack.c.h.b16 %v134
  %v1067 = vunpack.c.l.b16 %v135
  %v1068 = vunpack.c.h.b16 %v135
  %v1069 = vunpack.c.l.b16 %v136
  %v1070 = vunpack.c.h.b16 %v136
  %v1071 = vunpack.c.l.b16 %v137
  %v1072 = vunpack.c.h.b16 %v137
  %v1073 = vunpack.c.l.b16 %v138
  %v1074 = vunpack.c.h.b16 %v138
  %v1075 = vunpack.c.l.b16 %v139
  %v1076 = vunpack.c.h.b16 %v139
  %v1077 = vunpack.c.l.b16 %v140
  %v1078 = vunpack.c.h.b16 %v140
  %v1079 = vunpack.c.l.b16 %v141
  %v1080 = vunpack.c.h.b16 %v141
  %v1081 = vunpack.c.l.b16 %v142
  %v1082 = vunpack.c.h.b16 %v142
  %v1083 = vunpack.c.l.b16 %v143
  %v1084 = vunpack.c.h.b16 %v143
  %v1085 = vunpack.c.l.b16 %v144
  %v1086 = vunpack.c.h.b16 %v144
  %v1087 = vunpack.c.l.b16 %v145
  %v1088 = vunpack.c.h.b16 %v145
  %v1089 = vunpack.c.l.b16 %v146
  %v1090 = vunpack.c.h.b16 %v146
  %v1091 = vunpack.c.l.b16 %v147
  %v1092 = vunpack.c.h.b16 %v147
  %v1093 = vunpack.c.l.b16 %v148
  %v1094 = vunpack.c.h.b16 %v148
  %v1095 = vunpack.c.l.b16 %v149
  %v1096 = vunpack.c.h.b16 %v149
  %v1097 = vunpack.c.l.b16 %v150
  %v1098 = vunpack.c.h.b16 %v150
  %v1099 = vunpack.c.l.b16 %v151
  %v1100 = vunpack.c.h.b16 %v151
  %v1101 = vunpack.c.l.b16 %v152
  %v1102 = vunpack.c.h.b16 %v152
  %v1103 = vunpack.c.l.b16 %v153
  %v1104 = vunpack.c.h.b16 %v153
  %v1105 = vunpack.c.l.b16 %v154
  %v1106 = vunpack.c.h.b16 %v154
  %v1107 = vunpack.c.l.b16 %v155
  %v1108 = vunpack.c.h.b16 %v155
  %v1109 = vunpack.c.l.b16 %v156
  %v1110 = vunpack.c.h.b16 %v156
  %v1111 = vunpack.c.l.b16 %v157
  %v1112 = vunpack.c.h.b16 %v157
  %v1113 = vunpack.c.l.b16 %v158
  %v1114 = vunpack.c.h.b16 %v158
  %v1115 = vunpack.c.l.b16 %v159
  %v1116 = vunpack.c.h.b16 %v159
  %v1117 = vunpack.c.l.b16 %v160
  %v1118 = vunpack.c.h.b16 %v160
  %v1119 = vunpack.c.l.b16 %v161
  %v1120 = vunpack.c.h.b16 %v161
  %v1121 = vunpack.c.l.b16 %v162
  %v1122 = vunpack.c.h.b16 %v162
  %v1123 = vunpack.c.l.b16 %v163
  %v1124 = vunpack.c.h.b16 %v163
  %v1125 = vunpack.c.l.b16 %v164
  %v1126 = vunpack.c.h.b16 %v164
  %v1127 = vunpack.c.l.b16 %v165
  %v1128 = vunpack.c.h.b16 %v165
  %v1129 = vunpack.c.l.b16 %v166
  %v1130 = vunpack.c.h.b16 %v166
  %v1131 = vunpack.c.l.b16 %v167
  %v1132 = vunpack.c.h.b16 %v167
  %v1133 = vunpack.c.l.b16 %v168
  %v1134 = vunpack.c.h.b16 %v168
  %v1135 = vunpack.c.l.b16 %v169
  %v1136 = vunpack.c.h.b16 %v169
  %v1137 = vunpack.c.l.b16 %v170
  %v1138 = vunpack.c.h.b16 %v170
  %v1139 = vunpack.c.l.b16 %v171
  %v1140 = vunpack.c.h.b16 %v171
  %v1141 = vunpack.c.l.b16 %v172
  %v1142 = vunpack.c.h.b16 %v172
  %v1143 = vunpack.c.l.b16 %v173
  %v1144 = vunpack.c.h.b16 %v173
  %v1145 = vunpack.c.l.b16 %v174
  %v1146 = vunpack.c.h.b16 %v174
  %v1147 = vunpack.c.l.b16 %v175
  %v1148 = vunpack.c.h.b16 %v175
  %v1149 = vunpack.c.l.b16 %v176
  %v1150 = vunpack.c.h.b16 %v176
  %v1151 = vunpack.c.l.b16 %v177
  %v1152 = vunpack.c.h.b16 %v177
  %v1153 = vunpack.c.l.b16 %v178
  %v1154 = vunpack.c.h.b16 %v178
  %v1155 = vunpack.c.l.b16 %v179
  %v1156 = vunpack.c.h.b16 %v179
  %v1157 = vunpack.c.l.b16 %v180
  %v1158 = vunpack.c.h.b16 %v180
  %v1159 = vunpack.c.l.b16 %v181
  %v1160 = vunpack.c.h.b16 %v181
  %v1161 = vunpack.c.l.b16 %v182
  %v1162 = vunpack.c.h.b16 %v182
  %v1163 = vunpack.c.l.b16 %v183
  %v1164 = vunpack.c.h.b16 %v183
  %v1165 = vunpack.c.l.b16 %v184
  %v1166 = vunpack.c.h.b16 %v184
  %v1167 = vunpack.c.l.b16 %v185
  %v1168 = vunpack.c.h.b16 %v185
  %v1169 = vunpack.c.l.b16 %v186
  %v1170 = vunpack.c.h.b16 %v186
  %v1171 = vunpack.c.l.b16 %v187
  %v1172 = vunpack.c.h.b16 %v187
  %v1173 = vunpack.c.l.b16 %v188
  %v1174 = vunpack.c.h.b16 %v188
  %v1175 = vunpack.c.l.b16 %v189
  %v1176 = vunpack.c.h.b16 %v189
  %v1177 = vunpack.c.l.b16 %v190
  %v1178 = vunpack.c.h.b16 %v190
  %v1179 = vunpack.c.l.b16 %v191
  %v1180 = vunpack.c.h.b16 %v191
  %v1181 = vunpack.c.l.b16 %v192
  %v1182 = vunpack.c.h.b16 %v192
  %v1183 = vunpack.c.l.b16 %v193
  %v1184 = vunpack.c.h.b16 %v193
  %v1185 = vunpack.c.l.b16 %v194
  %v1186 = vunpack.c.h.b16 %v194
  %v1187 = vunpack.c.l.b16 %v195
  %v1188 = vunpack.c.h.b16 %v195
  %v1189 = vunpack.c.l.b16 %v196
  %v1190 = vunpack.c.h.b16 %v196
  %v1191 = vunpack.c.l.b16 %v197
  %v1192 = vunpack.c.h.b16 %v197
  %v1193 = vunpack.c.l.b16 %v198
  %v1194 = vunpack.c.h.b16 %v198
  %v1195 = vunpack.c.l.b16 %v199
  %v1196 = vunpack.c.h.b16 %v199
  %v1197 = vunpack.c.l.b16 %v200
  %v1198 = vunpack.c.h.b16 %v200
  %v1199 = vunpack.c.l.b16 %v201
  %v1200 = vunpack.c.h.b16 %v201
  %v1201 = vunpack.c.l.b16 %v202
  %v1202 = vunpack.c.h.b16 %v202
  %v1203 = vunpack.c.l.b16 %v203
  %v1204 = vunpack.c.h.b16 %v203
  %v1205 = vunpack.c.l.b16 %v204
  %v1206 = vunpack.c.h.b16 %v204
  %v1207 = vunpack.c.l.b16 %v205
  %v1208 = vunpack.c.h.b16 %v205
  %v1209 = vunpack.c.l.b16 %v206
  %v1210 = vunpack.c.h.b16 %v206
  %v1211 = vunpack.c.l.b16 %v207
  %v1212 = vunpack.c.h.b16 %v207
  %v1213 = vunpack.c.l.b16 %v208
  %v1214 = vunpack.c.h.b16 %v208
  %v1215 = vunpack.c.l.b16 %v209
  %v1216 = vunpack.c.h.b16 %v209
  %v1217 = vunpack.c.l.b16 %v210
  %v1218 = vunpack.c.h.b16 %v210
  %v1219 = vunpack.c.l.b16 %v211
  %v1220 = vunpack.c.h.b16 %v211
  %v1221 = vunpack.c.l.b16 %v212
  %v1222 = vunpack.c.h.b16 %v212
  %v1223 = vunpack.c.l.b16 %v213
  %v1224 = vunpack.c.h.b16 %v213
  %v1225 = vunpack.c.l.b16 %v214
  %v1226 = vunpack.c.h.b16 %v214
  %v1227 = vunpack.c.l.b16 %v215
  %v1228 = vunpack.c.h.b16 %v215
  %v1229 = vunpack.c.l.b16 %v216
  %v1230 = vunpack.c.h.b16 %v216
  %v1231 = vunpack.c.l.b16 %v217
  %v1232 = vunpack.c.h.b16 %v217
  %v1233 = vunpack.c.l.b16 %v218
  %v1234 = vunpack.c.h.b16 %v218
  %v1235 = vunpack.c.l.b16 %v219
  %v1236 = vunpack.c.h.b16 %v219
  %v1237 = vunpack.c.l.b16 %v220
  %v1238 = vunpack.c.h.b16 %v220
  %v1239 = vunpack.c.l.b16 %v221
  %v1240 = vunpack.c.h.b16 %v221
  %v1241 = vunpack.c.l.b16 %v222
  %v1242 = vunpack.c.h.b16 %v222
  %v1243 = vunpack.c.l.b16 %v223
  %v1244 = vunpack.c.h.b16 %v223
  %v1245 = vunpack.c.l.b16 %v224
  %v1246 = vunpack.c.h.b16 %v224
  %v1247 = vunpack.c.l.b16 %v225
  %v1248 = vunpack.c.h.b16 %v225
  %v1249 = vunpack.c.l.b16 %v226
  %v1250 = vunpack.c.h.b16 %v226
  %v1251 = vunpack.c.l.b16 %v227
  %v1252 = vunpack.c.h.b16 %v227
  %v1253 = vunpack.c.l.b16 %v228
  %v1254 = vunpack.c.h.b16 %v228
  %v1255 = vunpack.c.l.b16 %v229
  %v1256 = vunpack.c.h.b16 %v229
  %v1257 = vunpack.c.l.b16 %v230
  %v1258 = vunpack.c.h.b16 %v230
  %v1259 = vunpack.c.l.b16 %v231
  %v1260 = vunpack.c.h.b16 %v231
  %v1261 = vunpack.c.l.b16 %v232
  %v1262 = vunpack.c.h.b16 %v232
  %v1263 = vunpack.c.l.b16 %v233
  %v1264 = vunpack.c.h.b16 %v233
  %v1265 = vunpack.c.l.b16 %v234
  %v1266 = vunpack.c.h.b16 %v234
  %v1267 = vunpack.c.l.b16 %v235
  %v1268 = vunpack.c.h.b16 %v235
  %v1269 = vunpack.c.l.b16 %v236
  %v1270 = vunpack.c.h.b16 %v236
  %v1271 = vunpack.c.l.b16 %v237
  %v1272 = vunpack.c.h.b16 %v237
  %v1273 = vunpack.c.l.b16 %v238
  %v1274 = vunpack.c.h.b16 %v238
  %v1275 = vunpack.c.l.b16 %v239
  %v1276 = vunpack.c.h.b16 %v239
  %v1277 = vunpack.c.l.b16 %v240
  %v1278 = vunpack.c.h.b16 %v240
  %v1279 = vunpack.c.l.b16 %v241
  %v1280 = vunpack.c.h.b16 %v241
  %v1281 = vunpack.c.l.b16 %v242
  %v1282 = vunpack.c.h.b16 %v242
  %v1283 = vunpack.c.l.b16 %v243
  %v1284 = vunpack.c.h.b16 %v243
  %v1285 = vunpack.c.l.b16 %v244
  %v1286 = vunpack.c.h.b16 %v244
  %v1287 = vunpack.c.l.b16 %v245
  %v1288 = vunpack.c.h.b16 %v245
  %v1289 = vunpack.c.l.b16 %v246
  %v1290 = vunpack.c.h.b16 %v246
  %v1291 = vunpack.c.l.b16 %v247
  %v1292 = vunpack.c.h.b16 %v247
  %v1293 = vunpack.c.l.b16 %v248
  %v1294 = vunpack.c.h.b16 %v248
  %v1295 = vunpack.c.l.b16 %v249
  %v1296 = vunpack.c.h.b16 %v249
  %v1297 = vunpack.c.l.b16 %v250
  %v1298 = vunpack.c.h.b16 %v250
  %v1299 = vunpack.c.l.b16 %v251
  %v1300 = vunpack.c.h.b16 %v251
  %v1301 = vunpack.c.l.b16 %v252
  %v1302 = vunpack.c.h.b16 %v252
  %v1303 = vunpack.c.l.b16 %v253
  %v1304 = vunpack.c.h.b16 %v253
  %v1305 = vunpack.c.l.b16 %v254
  %v1306 = vunpack.c.h.b16 %v254
  %v1307 = vunpack.c.l.b16 %v255
  %v1308 = vunpack.c.h.b16 %v255
  %v1309 = vunpack.c.l.b16 %v256
  %v1310 = vunpack.c.h.b16 %v256
  %v1311 = vunpack.c.l.b16 %v257
  %v1312 = vunpack.c.h.b16 %v257
  %v1313 = vunpack.c.l.b16 %v258
  %v1314 = vunpack.c.h.b16 %v258
  %v1315 = vunpack.c.l.b16 %v259
  %v1316 = vunpack.c.h.b16 %v259
  %v1317 = vunpack.c.l.b16 %v260
  %v1318 = vunpack.c.h.b16 %v260
  %v1319 = vunpack.c.l.b16 %v261
  %v1320 = vunpack.c.h.b16 %v261
  %v1321 = vunpack.c.l.b16 %v262
  %v1322 = vunpack.c.h.b16 %v262
  %v1323 = vunpack.c.l.b16 %v263
  %v1324 = vunpack.c.h.b16 %v263
  %v1325 = vunpack.c.l.b16 %v264
  %v1326 = vunpack.c.h.b16 %v264
  %v1327 = vunpack.c.l.b16 %v265
  %v1328 = vunpack.c.h.b16 %v265
  %v1329 = vunpack.c.l.b16 %v266
  %v1330 = vunpack.c.h.b16 %v266
  %v1331 = vunpack.c.l.b16 %v267
  %v1332 = vunpack.c.h.b16 %v267
  %v1333 = vunpack.c.l.b16 %v268
  %v1334 = vunpack.c.h.b16 %v268
  %v1335 = vunpack.c.l.b16 %v269
  %v1336 = vunpack.c.h.b16 %v269
  %v1337 = vunpack.c.l.b16 %v270
  %v1338 = vunpack.c.h.b16 %v270
  %v1339 = vunpack.c.l.b16 %v271
  %v1340 = vunpack.c.h.b16 %v271
  %v1341 = vunpack.c.l.b16 %v272
  %v1342 = vunpack.c.h.b16 %v272
  %v1343 = vunpack.c.l.b16 %v273
  %v1344 = vunpack.c.h.b16 %v273
  %v1345 = vunpack.c.l.b16 %v274
  %v1346 = vunpack.c.h.b16 %v274
  %v1347 = vunpack.c.l.b16 %v275
  %v1348 = vunpack.c.h.b16 %v275
  %v1349 = vunpack.c.l.b16 %v276
  %v1350 = vunpack.c.h.b16 %v276
  %v1351 = vunpack.c.l.b16 %v277
  %v1352 = vunpack.c.h.b16 %v277
  %v1353 = vunpack.c.l.b16 %v278
  %v1354 = vunpack.c.h.b16 %v278
  %v1355 = vunpack.c.l.b16 %v279
  %v1356 = vunpack.c.h.b16 %v279
  %v1357 = vunpack.c.l.b16 %v280
  %v1358 = vunpack.c.h.b16 %v280
  %v1359 = vunpack.c.l.b16 %v281
  %v1360 = vunpack.c.h.b16 %v281
  %v1361 = vunpack.c.l.b16 %v282
  %v1362 = vunpack.c.h.b16 %v282
  %v1363 = vunpack.c.l.b16 %v283
  %v1364 = vunpack.c.h.b16 %v283
  %v1365 = vunpack.c.l.b16 %v284
  %v1366 = vunpack.c.h.b16 %v284
  %v1367 = vunpack.c.l.b16 %v285
  %v1368 = vunpack.c.h.b16 %v285
  %v1369 = vunpack.c.l.b16 %v286
  %v1370 = vunpack.c.h.b16 %v286
  %v1371 = vunpack.c.l.b16 %v287
  %v1372 = vunpack.c.h.b16 %v287
  %v1373 = vunpack.c.l.b16 %v288
  %v1374 = vunpack.c.h.b16 %v288
  %v1375 = vunpack.c.l.b16 %v289
  %v1376 = vunpack.c.h.b16 %v289
  %v1377 = vunpack.c.l.b16 %v290
  %v1378 = vunpack.c.h.b16 %v290
  %v1379 = vunpack.c.l.b16 %v291
  %v1380 = vunpack.c.h.b16 %v291
  %v1381 = vunpack.c.l.b16 %v292
  %v1382 = vunpack.c.h.b16 %v292
  %v1383 = vunpack.c.l.b16 %v293
  %v1384 = vunpack.c.h.b16 %v293
  %v1385 = vunpack.c.l.b16 %v294
  %v1386 = vunpack.c.h.b16 %v294
  %v1387 = vunpack.c.l.b16 %v295
  %v1388 = vunpack.c.h.b16 %v295
  %v1389 = vunpack.c.l.b16 %v296
  %v1390 = vunpack.c.h.b16 %v296
  %v1391 = vunpack.c.l.b16 %v297
  %v1392 = vunpack.c.h.b16 %v297
  %v1393 = vunpack.c.l.b16 %v298
  %v1394 = vunpack.c.h.b16 %v298
  %v1395 = vunpack.c.l.b16 %v299
  %v1396 = vunpack.c.h.b16 %v299
  %v1397 = vunpack.c.l.b16 %v300
  %v1398 = vunpack.c.h.b16 %v300
  %v1399 = vunpack.c.l.b16 %v301
  %v1400 = vunpack.c.h.b16 %v301
  %v1401 = vunpack.c.l.b16 %v302
  %v1402 = vunpack.c.h.b16 %v302
  %v1403 = vunpack.c.l.b16 %v303
  %v1404 = vunpack.c.h.b16 %v303
  %v1405 = vunpack.c.l.b16 %v304
  %v1406 = vunpack.c.h.b16 %v304
  %v1407 = vunpack.c.l.b16 %v305
  %v1408 = vunpack.c.h.b16 %v305
  %v1409 = vunpack.c.l.b16 %v306
  %v1410 = vunpack.c.h.b16 %v306
  %v1411 = vunpack.c.l.b16 %v307
  %v1412 = vunpack.c.h.b16 %v307
  %v1413 = vunpack.c.l.b16 %v308
  %v1414 = vunpack.c.h.b16 %v308
  %v1415 = vunpack.c.l.b16 %v309
  %v1416 = vunpack.c.h.b16 %v309
  %v1417 = vunpack.c.l.b16 %v310
  %v1418 = vunpack.c.h.b16 %v310
  %v1419 = vunpack.c.l.b16 %v311
  %v1420 = vunpack.c.h.b16 %v311
  %v1421 = vunpack.c.l.b16 %v312
  %v1422 = vunpack.c.h.b16 %v312
  %v1423 = vunpack.c.l.b16 %v313
  %v1424 = vunpack.c.h.b16 %v313
  %v1425 = vunpack.c.l.b16 %v314
  %v1426 = vunpack.c.h.b16 %v314
  %v1427 = vunpack.c.l.b16 %v315
  %v1428 = vunpack.c.h.b16 %v315
  %v1429 = vunpack.c.l.b16 %v316
  %v1430 = vunpack.c.h.b16 %v316
  %v1431 = vunpack.c.l.b16 %v317
  %v1432 = vunpack.c.h.b16 %v317
  %v1433 = vunpack.c.l.b16 %v318
  %v1434 = vunpack.c.h.b16 %v318
  %v1435 = vunpack.c.l.b16 %v319
  %v1436 = vunpack.c.h.b16 %v319
  %v1437 = vunpack.c.l.b16 %v320
  %v1438 = vunpack.c.h.b16 %v320
  %v1439 = vunpack.c.l.b16 %v321
  %v1440 = vunpack.c.h.b16 %v321
  %v1441 = vunpack.c.l.b16 %v322
  %v1442 = vunpack.c.h.b16 %v322
  %v1443 = vunpack.c.l.b16 %v323
  %v1444 = vunpack.c.h.b16 %v323
  %v1445 = vunpack.c.l.b16 %v324
  %v1446 = vunpack.c.h.b16 %v324
  %v1447 = vunpack.c.l.b16 %v325
  %v1448 = vunpack.c.h.b16 %v325
  %v1449 = vunpack.c.l.b16 %v326
  %v1450 = vunpack.c.h.b16 %v326
  %v1451 = vunpack.c.l.b16 %v327
  %v1452 = vunpack.c.h.b16 %v327
  %v1453 = vunpack.c.l.b16 %v328
  %v1454 = vunpack.c.h.b16 %v328
  %v1455 = vunpack.c.l.b16 %v329
  %v1456 = vunpack.c.h.b16 %v329
  %v1457 = vunpack.c.l.b16 %v330
  %v1458 = vunpack.c.h.b16 %v330
  %v1459 = vunpack.c.l.b16 %v331
  %v1460 = vunpack.c.h.b16 %v331
  %v1461 = vunpack.c.l.b16 %v332
  %v1462 = vunpack.c.h.b16 %v332
  %v1463 = vunpack.c.l.b16 %v333
  %v1464 = vunpack.c.h.b16 %v333
  %v1465 = vunpack.c.l.b16 %v334
  %v1466 = vunpack.c.h.b16 %v334
  %v1467 = vunpack.c.l.b16 %v335
  %v1468 = vunpack.c.h.b16 %v335
  %v1469 = vunpack.c.l.b16 %v336
  %v1470 = vunpack.c.h.b16 %v336
  %v1471 = vunpack.c.l.b16 %v337
  %v1472 = vunpack.c.h.b16 %v337
  %v1473 = vunpack.c.l.b16 %v338
  %v1474 = vunpack.c.h.b16 %v338
  %v1475 = vunpack.c.l.b16 %v339
  %v1476 = vunpack.c.h.b16 %v339
  %v1477 = vunpack.c.l.b16 %v340
  %v1478 = vunpack.c.h.b16 %v340
  %v1479 = vunpack.c.l.b16 %v341
  %v1480 = vunpack.c.h.b16 %v341
  %v1481 = vunpack.c.l.b16 %v342
  %v1482 = vunpack.c.h.b16 %v342
  %v1483 = vunpack.c.l.b16 %v343
  %v1484 = vunpack.c.h.b16 %v343
  %v1485 = vunpack.c.l.b16 %v344
  %v1486 = vunpack.c.h.b16 %v344
  %v1487 = vunpack.c.l.b16 %v345
  %v1488 = vunpack.c.h.b16 %v345
  %v1489 = vunpack.c.l.b16 %v346
  %v1490 = vunpack.c.h.b16 %v346
  %v1491 = vunpack.c.l.b16 %v347
  %v1492 = vunpack.c.h.b16 %v347
  %v1493 = vunpack.c.l.b16 %v348
  %v1494 = vunpack.c.h.b16 %v348
  %v1495 = vunpack.c.l.b16 %v349
  %v1496 = vunpack.c.h.b16 %v349
  %v1497 = vunpack.c.l.b16 %v350
  %v1498 = vunpack.c.h.b16 %v350
  %v1499 = vunpack.c.l.b16 %v351
  %v1500 = vunpack.c.h.b16 %v351
  %v1501 = vunpack.c.l.b16 %v352
  %v1502 = vunpack.c.h.b16 %v352
  %v1503 = vunpack.c.l.b16 %v353
  %v1504 = vunpack.c.h.b16 %v353
  %v1505 = vunpack.c.l.b16 %v354
  %v1506 = vunpack.c.h.b16 %v354
  %v1507 = vunpack.c.l.b16 %v355
  %v1508 = vunpack.c.h.b16 %v355
  %v1509 = vunpack.c.l.b16 %v356
  %v1510 = vunpack.c.h.b16 %v356
  %v1511 = vunpack.c.l.b16 %v357
  %v1512 = vunpack.c.h.b16 %v357
  %v1513 = vunpack.c.l.b16 %v358
  %v1514 = vunpack.c.h.b16 %v358
  %v1515 = vunpack.c.l.b16 %v359
  %v1516 = vunpack.c.h.b16 %v359
  %v1517 = vunpack.c.l.b16 %v360
  %v1518 = vunpack.c.h.b16 %v360
  %v1519 = vunpack.c.l.b16 %v361
  %v1520 = vunpack.c.h.b16 %v361
  %v1521 = vunpack.c.l.b16 %v362
  %v1522 = vunpack.c.h.b16 %v362
  %v1523 = vunpack.c.l.b16 %v363
  %v1524 = vunpack.c.h.b16 %v363
  %v1525 = vunpack.c.l.b16 %v364
  %v1526 = vunpack.c.h.b16 %v364
  %v1527 = vunpack.c.l.b16 %v365
  %v1528 = vunpack.c.h.b16 %v365
  %v1529 = vunpack.c.l.b16 %v366
  %v1530 = vunpack.c.h.b16 %v366
  %v1531 = vunpack.c.l.b16 %v367
  %v1532 = vunpack.c.h.b16 %v367
  %v1533 = vunpack.c.l.b16 %v368
  %v1534 = vunpack.c.h.b16 %v368
  %v1535 = vunpack.c.l.b16 %v369
  %v1536 = vunpack.c.h.b16 %v369
  %v1537 = vunpack.c.l.b16 %v370
  %v1538 = vunpack.c.h.b16 %v370
  %v1539 = vunpack.c.l.b16 %v371
  %v1540 = vunpack.c.h.b16 %v371
  %v1541 = vunpack.c.l.b16 %v372
  %v1542 = vunpack.c.h.b16 %v372
  %v1543 = vunpack.c.l.b16 %v373
  %v1544 = vunpack.c.h.b16 %v373
  %v1545 = vunpack.c.l.b16 %v374
  %v1546 = vunpack.c.h.b16 %v374
  %v1547 = vunpack.c.l.b16 %v375
  %v1548 = vunpack.c.h.b16 %v375
  %v1549 = vunpack.c.l.b16 %v376
  %v1550 = vunpack.c.h.b16 %v376
  %v1551 = vunpack.c.l.b16 %v377
  %v1552 = vunpack.c.h.b16 %v377
  %v1553 = vunpack.c.l.b16 %v378
  %v1554 = vunpack.c.h.b16 %v378
  %v1555 = vunpack.c.l.b16 %v379
  %v1556 = vunpack.c.h.b16 %v379
  %v1557 = vunpack.c.l.b16 %v380
  %v1558 = vunpack.c.h.b16 %v380
  %v1559 = vunpack.c.l.b16 %v381
  %v1560 = vunpack.c.h.b16 %v381
  %v1561 = vunpack.c.l.b16 %v382
  %v1562 = vunpack.c.h.b16 %v382
  %v1563 = vunpack.c.l.b16 %v383
  %v1564 = vunpack.c.h.b16 %v383
  %v1565 = vunpack.c.l.b16 %v384
  %v1566 = vunpack.c.h.b16 %v384
  %v1567 = vunpack.c.l.b16 %v385
  %v1568 = vunpack.c.h.b16 %v385
  %v1569 = vunpack.c.l.b16 %v386
  %v1570 = vunpack.c.h.b16 %v386
  %v1571 = vunpack.c.l.b16 %v387
  %v1572 = vunpack.c.h.b16 %v387
  %v1573 = vunpack.c.l.b16 %v388
  %v1574 = vunpack.c.h.b16 %v388
  %v1575 = vunpack.c.l.b16 %v389
  %v1576 = vunpack.c.h.b16 %v389
  %v1577 = vunpack.c.l.b16 %v390
  %v1578 = vunpack.c.h.b16 %v390
  %v1579 = vunpack.c.l.b16 %v391
  %v1580 = vunpack.c.h.b16 %v391
  %v1581 = vunpack.c.l.b16 %v392
  %v1582 = vunpack.c.h.b16 %v392
  %v1583 = vunpack.c.l.b16 %v393
  %v1584 = vunpack.c.h.b16 %v393
  %v1585 = vunpack.c.l.b16 %v394
  %v1586 = vunpack.c.h.b16 %v394
  %v1587 = vunpack.c.l.b16 %v395
  %v1588 = vunpack.c.h.b16 %v395
  %v1589 = vunpack.c.l.b16 %v396
  %v1590 = vunpack.c.h.b16 %v396
  %v1591 = vunpack.c.l.b16 %v397
  %v1592 = vunpack.c.h.b16 %v397
  %v1593 = vunpack.c.l.b16 %v398
  %v1594 = vunpack.c.h.b16 %v398
  %v1595 = vunpack.c.l.b16 %v399
  %v1596 = vunpack.c.h.b16 %v399
  %v1597 = vunpack.c.l.b16 %v400
  %v1598 = vunpack.c.h.b16 %v400
  %v1599 = vunpack.c.l.b16 %v401
  %v1600 = vunpack.c.h.b16 %v401
  %v1601 = vunpack.c.l.b16 %v402
  %v1602 = vunpack.c.h.b16 %v402
  %v1603 = vunpack.c.l.b16 %v403
  %v1604 = vunpack.c.h.b16 %v403
  %v1605 = vunpack.c.l.b16 %v404
  %v1606 = vunpack.c.h.b16 %v404
  %v1607 = vunpack.c.l.b16 %v405
  %v1608 = vunpack.c.h.b16 %v405
  %v1609 = vunpack.c.l.b16 %v406
  %v1610 = vunpack.c.h.b16 %v406
  %v1611 = vunpack.c.l.b16 %v407
  %v1612 = vunpack.c.h.b16 %v407
  %v1613 = vunpack.c.l.b16 %v408
  %v1614 = vunpack.c.h.b16 %v408
  %v1615 = vpack.c.b16 %v855, %v847
  %v1616 = vpack.c.b16 %v856, %v848
  %v1617 = vpack.c.b16 %v857, %v849
  %v1618 = vpack.c.b16 %v858, %v850
  %v1619 = vpack.c.b16 %v859, %v851
  %v1620 = vpack.c.b16 %v860, %v852
  %v1621 = vpack.c.b16 %v861, %v853
  %v1622 = vpack.c.b16 %v862, %v854
  %v1623 = vpack.c.b16 %v871, %v863
  %v1624 = vpack.c.b16 %v872, %v864
  %v1625 = vpack.c.b16 %v873, %v865
  %v1626 = vpack.c.b16 %v874, %v866
  %v1627 = vpack.c.b16 %v875, %v867
  %v1628 = vpack.c.b16 %v876, %v868
  %v1629 = vpack.c.b16 %v877, %v869
  %v1630 = vpack.c.b16 %v878, %v870
  %v1631 = vpack.c.b16 %v887, %v879
  %v1632 = vpack.c.b16 %v888, %v880
  %v1633 = vpack.c.b16 %v889, %v881
  %v1634 = vpack.c.b16 %v890, %v882
  %v1635 = vpack.c.b16 %v891, %v883
  %v1636 = vpack.c.b16 %v892, %v884
  %v1637 = vpack.c.b16 %v893, %v885
  %v1638 = vpack.c.b16 %v894, %v886
  %v1639 = vpack.c.b16 %v903, %v895
  %v1640 = vpack.c.b16 %v904, %v896
  %v1641 = vpack.c.b16 %v905, %v897
  %v1642 = vpack.c.b16 %v906, %v898
  %v1643 = vpack.c.b16 %v907, %v899
  %v1644 = vpack.c.b16 %v908, %v900
  %v1645 = vpack.c.b16 %v909, %v901
  %v1646 = vpack.c.b16 %v910, %v902
  %v1647 = vpack.c.b16 %v919, %v911
  %v1648 = vpack.c.b16 %v920, %v912
  %v1649 = vpack.c.b16 %v921, %v913
  %v1650 = vpack.c.b16 %v922, %v914
  %v1651 = vpack.c.b16 %v923, %v915
  %v1652 = vpack.c.b16 %v924, %v916
  %v1653 = vpack.c.b16 %v925, %v917
  %v1654 = vpack.c.b16 %v926, %v918
  %v1655 = vpack.c.b16 %v935, %v927
  %v1656 = vpack.c.b16 %v936, %v928
  %v1657 = vpack.c.b16 %v937, %v929
  %v1658 = vpack.c.b16 %v938, %v930
  %v1659 = vpack.c.b16 %v939, %v931
  %v1660 = vpack.c.b16 %v940, %v932
  %v1661 = vpack.c.b16 %v941, %v933
  %v1662 = vpack.c.b16 %v942, %v934
  %v1663 = vpack.c.b16 %v951, %v943
  %v1664 = vpack.c.b16 %v952, %v944
  %v1665 = vpack.c.b16 %v953, %v945
  %v1666 = vpack.c.b16 %v954, %v946
  %v1667 = vpack.c.b16 %v955, %v947
  %v1668 = vpack.c.b16 %v956, %v948
  %v1669 = vpack.c.b16 %v957, %v949
  %v1670 = vpack.c.b16 %v958, %v950
  %v1671 = vpack.c.b16 %v967, %v959
  %v1672 = vpack.c.b16 %v968, %v960
  %v1673 = vpack.c.b16 %v969, %v961
  %v1674 = vpack.c.b16 %v970, %v962
  %v1675 = vpack.c.b16 %v971, %v963
  %v1676 = vpack.c.b16 %v972, %v964
  %v1677 = vpack.c.b16 %v973, %v965
  %v1678 = vpack.c.b16 %v974, %v966
  %v1679 = vpack.c.b16 %v983, %v975
  %v1680 = vpack.c.b16 %v984, %v976
  %v1681 = vpack.c.b16 %v985, %v977
  %v1682 = vpack.c.b16 %v986, %v978
  %v1683 = vpack.c.b16 %v987, %v979
  %v1684 = vpack.c.b16 %v988, %v980
  %v1685 = vpack.c.b16 %v989, %v981
  %v1686 = vpack.c.b16 %v990, %v982
  %v1687 = vpack.c.b16 %v999, %v991
  %v1688 = vpack.c.b16 %v1000, %v992
  %v1689 = vpack.c.b16 %v1001, %v993
  %v1690 = vpack.c.b16 %v1002, %v994
  %v1691 = vpack.c.b16 %v1003, %v995
  %v1692 = vpack.c.b16 %v1004, %v996
  %v1693 = vpack.c.b16 %v1005, %v997
  %v1694 = vpack.c.b16 %v1006, %v998
  %v1695 = vpack.c.b16 %v1015, %v1007
  %v1696 = vpack.c.b16 %v1016, %v1008
  %v1697 = vpack.c.b16 %v1017, %v1009
  %v1698 = vpack.c.b16 %v1018, %v1010
  %v1699 = vpack.c.b16 %v1019, %v1011
  %v1700 = vpack.c.b16 %v1020, %v1012
  %v1701 = vpack.c.b16 %v1021, %v1013
  %v1702 = vpack.c.b16 %v1022, %v1014
  %v1703 = vpack.c.b16 %v1031, %v1023
  %v1704 = vpack.c.b16 %v1032, %v1024
  %v1705 = vpack.c.b16 %v1033, %v1025
  %v1706 = vpack.c.b16 %v1034, %v1026
  %v1707 = vpack.c.b16 %v1035, %v1027
  %v1708 = vpack.c.b16 %v1036, %v1028
  %v1709 = vpack.c.b16 %v1037, %v1029
  %v1710 = vpack.c.b16 %v1038, %v1030
  %v1711 = vpack.c.b16 %v1047, %v1039
  %v1712 = vpack.c.b16 %v1048, %v1040
  %v1713 = vpack.c.b16 %v1049, %v1041
  %v1714 = vpack.c.b16 %v1050, %v1042
  %v1715 = vpack.c.b16 %v1051, %v1043
  %v1716 = vpack.c.b16 %v1052, %v1044
  %v1717 = vpack.c.b16 %v1053, %v1045
  %v1718 = vpack.c.b16 %v1054, %v1046
  %v1719 = vpack.c.b16 %v1063, %v1055
  %v1720 = vpack.c.b16 %v1064, %v1056
  %v1721 = vpack.c.b16 %v1065, %v1057
  %v1722 = vpack.c.b16 %v1066, %v1058
  %v1723 = vpack.c.b16 %v1067, %v1059
  %v1724 = vpack.c.b16 %v1068, %v1060
  %v1725 = vpack.c.b16 %v1069, %v1061
  %v1726 = vpack.c.b16 %v1070, %v1062
  %v1727 = vpack.c.b16 %v1079, %v1071
  %v1728 = vpack.c.b16 %v1080, %v1072
  %v1729 = vpack.c.b16 %v1081, %v1073
  %v1730 = vpack.c.b16 %v1082, %v1074
  %v1731 = vpack.c.b16 %v1083, %v1075
  %v1732 = vpack.c.b16 %v1084, %v1076
  %v1733 = vpack.c.b16 %v1085, %v1077
  %v1734 = vpack.c.b16 %v1086, %v1078
  %v1735 = vpack.c.b16 %v1095, %v1087
  %v1736 = vpack.c.b16 %v1096, %v1088
  %v1737 = vpack.c.b16 %v1097, %v1089
  %v1738 = vpack.c.b16 %v1098, %v1090
  %v1739 = vpack.c.b16 %v1099, %v1091
  %v1740 = vpack.c.b16 %v1100, %v1092
  %v1741 = vpack.c.b16 %v1101, %v1093
  %v1742 = vpack.c.b16 %v1102, %v1094
  %v1743 = vpack.c.b16 %v1111, %v1103
  %v1744 = vpack.c.b16 %v1112, %v1104
  %v1745 = vpack.c.b16 %v1113, %v1105
  %v1746 = vpack.c.b16 %v1114, %v1106
  %v1747 = vpack.c.b16 %v1115, %v1107
  %v1748 = vpack.c.b16 %v1116, %v1108
  %v1749 = vpack.c.b16 %v1117, %v1109
  %v1750 = vpack.c.b16 %v1118, %v1110
  %v1751 = vpack.c.b16 %v1127, %v1119
  %v1752 = vpack.c.b16 %v1128, %v1120
  %v1753 = vpack.c.b16 %v1129, %v1121
  %v1754 = vpack.c.b16 %v1130, %v1122
  %v1755 = vpack.c.b16 %v1131, %v1123
  %v1756 = vpack.c.b16 %v1132, %v1124
  %v1757 = vpack.c.b16 %v1133, %v1125
  %v1758 = vpack.c.b16 %v1134, %v1126
  %v1759 = vpack.c.b16 %v1143, %v1135
  %v1760 = vpack.c.b16 %v1144, %v1136
  %v1761 = vpack.c.b16 %v1145, %v1137
  %v1762 = vpack.c.b16 %v1146, %v1138
  %v1763 = vpack.c.b16 %v1147, %v1139
  %v1764 = vpack.c.b16 %v1148, %v1140
  %v1765 = vpack.c.b16 %v1149, %v1141
  %v1766 = vpack.c.b16 %v1150, %v1142
  %v1767 = vpack.c.b16 %v1159, %v1151
  %v1768 = vpack.c.b16 %v1160, %v1152
  %v1769 = vpack.c.b16 %v1161, %v1153
  %v1770 = vpack.c.b16 %v1162, %v1154
  %v1771 = vpack.c.b16 %v1163, %v1155
  %v1772 = vpack.c.b16 %v1164, %v1156
  %v1773 = vpack.c.b16 %v1165, %v1157
  %v1774 = vpack.c.b16 %v1166, %v1158
  %v1775 = vpack.c.b16 %v1175, %v1167
  %v1776 = vpack.c.b16 %v1176, %v1168
  %v1777 = vpack.c.b16 %v1177, %v1169
  %v1778 = vpack.c.b16 %v1178, %v1170
  %v1779 = vpack.c.b16 %v1179, %v1171
  %v1780 = vpack.c.b16 %v1180, %v1172
  %v1781 = vpack.c.b16 %v1181, %v1173
  %v1782 = vpack.c.b16 %v1182, %v1174
  %v1783 = vpack.c.b16 %v1191, %v1183
  %v1784 = vpack.c.b16 %v1192, %v1184
  %v1785 = vpack.c.b16 %v1193, %v1185
  %v1786 = vpack.c.b16 %v1194, %v1186
  %v1787 = vpack.c.b16 %v1195, %v1187
  %v1788 = vpack.c.b16 %v1196, %v1188
  %v1789 = vpack.c.b16 %v1197, %v1189
  %v1790 = vpack.c.b16 %v1198, %v1190
  %v1791 = vpack.c.b16 %v1207, %v1199
  %v1792 = vpack.c.b16 %v1208, %v1200
  %v1793 = vpack.c.b16 %v1209, %v1201
  %v1794 = vpack.c.b16 %v1210, %v1202
  %v1795 = vpack.c.b16 %v1211, %v1203
  %v1796 = vpack.c.b16 %v1212, %v1204
  %v1797 = vpack.c.b16 %v1213, %v1205
  %v1798 = vpack.c.b16 %v1214, %v1206
  %v1799 = vpack.c.b16 %v1223, %v1215
  %v1800 = vpack.c.b16 %v1224, %v1216
  %v1801 = vpack.c.b16 %v1225, %v1217
  %v1802 = vpack.c.b16 %v1226, %v1218
  %v1803 = vpack.c.b16 %v1227, %v1219
  %v1804 = vpack.c.b16 %v1228, %v1220
  %v1805 = vpack.c.b16 %v1229, %v1221
  %v1806 = vpack.c.b16 %v1230, %v1222
  %v1807 = vpack.c.b16 %v1239, %v1231
  %v1808 = vpack.c.b16 %v1240, %v1232
  %v1809 = vpack.c.b16 %v1241, %v1233
  %v1810 = vpack.c.b16 %v1242, %v1234
  %v1811 = vpack.c.b16 %v1243, %v1235
  %v1812 = vpack.c.b16 %v1244, %v1236
  %v1813 = vpack.c.b16 %v1245, %v1237
  %v1814 = vpack.c.b16 %v1246, %v1238
  %v1815 = vpack.c.b16 %v1255, %v1247
  %v1816 = vpack.c.b16 %v1256, %v1248
  %v1817 = vpack.c.b16 %v1257, %v1249
  %v1818 = vpack.c.b16 %v1258, %v1250
  %v1819 = vpack.c.b16 %v1259, %v1251
  %v1820 = vpack.c.b16 %v1260, %v1252
  %v1821 = vpack.c.b16 %v1261, %v1253
  %v1822 = vpack.c.b16 %v1262, %v1254
  %v1823 = vpack.c.b16 %v1271, %v1263
  %v1824 = vpack.c.b16 %v1272, %v1264
  %v1825 = vpack.c.b16 %v1273, %v1265
  %v1826 = vpack.c.b16 %v1274, %v1266
  %v1827 = vpack.c.b16 %v1275, %v1267
  %v1828 = vpack.c.b16 %v1276, %v1268
  %v1829 = vpack.c.b16 %v1277, %v1269
  %v1830 = vpack.c.b16 %v1278, %v1270
  %v1831 = vpack.c.b16 %v1287, %v1279
  %v1832 = vpack.c.b16 %v1288, %v1280
  %v1833 = vpack.c.b16 %v1289, %v1281
  %v1834 = vpack.c.b16 %v1290, %v1282
  %v1835 = vpack.c.b16 %v1291, %v1283
  %v1836 = vpack.c.b16 %v1292, %v1284
  %v1837 = vpack.c.b16 %v1293, %v1285
  %v1838 = vpack.c.b16 %v1294, %v1286
  %v1839 = vpack.c.b16 %v1303, %v1295
  %v1840 = vpack.c.b16 %v1304, %v1296
  %v1841 = vpack.c.b16 %v1305, %v1297
  %v1842 = vpack.c.b16 %v1306, %v1298
  %v1843 = vpack.c.b16 %v1307, %v1299
  %v1844 = vpack.c.b16 %v1308, %v1300
  %v1845 = vpack.c.b16 %v1309, %v1301
  %v1846 = vpack.c.b16 %v1310, %v1302
  %v1847 = vpack.c.b16 %v1319, %v1311
  %v1848 = vpack.c.b16 %v1320, %v1312
  %v1849 = vpack.c.b16 %v1321, %v1313
  %v1850 = vpack.c.b16 %v1322, %v1314
  %v1851 = vpack.c.b16 %v1323, %v1315
  %v1852 = vpack.c.b16 %v1324, %v1316
  %v1853 = vpack.c.b16 %v1325, %v1317
  %v1854 = vpack.c.b16 %v1326, %v1318
  %v1855 = vpack.c.b16 %v1335, %v1327
  %v1856 = vpack.c.b16 %v1336, %v1328
  %v1857 = vpack.c.b16 %v1337, %v1329
  %v1858 = vpack.c.b16 %v1338, %v1330
  %v1859 = vpack.c.b16 %v1339, %v1331
  %v1860 = vpack.c.b16 %v1340, %v1332
  %v1861 = vpack.c.b16 %v1341, %v1333
  %v1862 = vpack.c.b16 %v1342, %v1334
  %v1863 = vpack.c.b16 %v1351, %v1343
  %v1864 = vpack.c.b16 %v1352, %v1344
  %v1865 = vpack.c.b16 %v1353, %v1345
  %v1866 = vpack.c.b16 %v1354, %v1346
  %v1867 = vpack.c.b16 %v1355, %v1347
  %v1868 = vpack.c.b16 %v1356, %v1348
  %v1869 = vpack.c.b16 %v1357, %v1349
  %v1870 = vpack.c.b16 %v1358, %v1350
  %v1871 = vpack.c.b16 %v1367, %v1359
  %v1872 = vpack.c.b16 %v1368, %v1360
  %v1873 = vpack.c.b16 %v1369, %v1361
  %v1874 = vpack.c.b16 %v1370, %v1362
  %v1875 = vpack.c.b16 %v1371, %v1363
  %v1876 = vpack.c.b16 %v1372, %v1364
  %v1877 = vpack.c.b16 %v1373, %v1365
  %v1878 = vpack.c.b16 %v1374, %v1366
  %v1879 = vpack.c.b16 %v1383, %v1375
  %v1880 = vpack.c.b16 %v1384, %v1376
  %v1881 = vpack.c.b16 %v1385, %v1377
  %v1882 = vpack.c.b16 %v1386, %v1378
  %v1883 = vpack.c.b16 %v1387, %v1379
  %v1884 = vpack.c.b16 %v1388, %v1380
  %v1885 = vpack.c.b16 %v1389, %v1381
  %v1886 = vpack.c.b16 %v1390, %v1382
  %v1887 = vpack.c.b16 %v1399, %v1391
  %v1888 = vpack.c.b16 %v1400, %v1392
  %v1889 = vpack.c.b16 %v1401, %v1393
  %v1890 = vpack.c.b16 %v1402, %v1394
  %v1891 = vpack.c.b16 %v1403, %v1395
  %v1892 = vpack.c.b16 %v1404, %v1396
  %v1893 = vpack.c.b16 %v1405, %v1397
  %v1894 = vpack.c.b16 %v1406, %v1398
  %v1895 = vpack.c.b16 %v1415, %v1407
  %v1896 = vpack.c.b16 %v1416, %v1408
  %v1897 = vpack.c.b16 %v1417, %v1409
  %v1898 = vpack.c.b16 %v1418, %v1410
  %v1899 = vpack.c.b16 %v1419, %v1411
  %v1900 = vpack.c.b16 %v1420, %v1412
  %v1901 = vpack.c.b16 %v1421, %v1413
  %v1902 = vpack.c.b16 %v1422, %v1414
  %v1903 = vpack.c.b16 %v1431, %v1423
  %v1904 = vpack.c.b16 %v1432, %v1424
  %v1905 = vpack.c.b16 %v1433, %v1425
  %v1906 = vpack.c.b16 %v1434, %v1426
  %v1907 = vpack.c.b16 %v1435, %v1427
  %v1908 = vpack.c.b16 %v1436, %v1428
  %v1909 = vpack.c.b16 %v1437, %v1429
  %v1910 = vpack.c.b16 %v1438, %v1430
  %v1911 = vpack.c.b16 %v1447, %v1439
  %v1912 = vpack.c.b16 %v1448, %v1440
  %v1913 = vpack.c.b16 %v1449, %v1441
  %v1914 = vpack.c.b16 %v1450, %v1442
  %v1915 = vpack.c.b16 %v1451, %v1443
  %v1916 = vpack.c.b16 %v1452, %v1444
  %v1917 = vpack.c.b16 %v1453, %v1445
  %v1918 = vpack.c.b16 %v1454, %v1446
  %v1919 = vpack.c.b16 %v1463, %v1455
  %v1920 = vpack.c.b16 %v1464, %v1456
  %v1921 = vpack.c.b16 %v1465, %v1457
  %v1922 = vpack.c.b16 %v1466, %v1458
  %v1923 = vpack.c.b16 %v1467, %v1459
  %v1924 = vpack.c.b16 %v1468, %v1460
  %v1925 = vpack.c.b16 %v1469, %v1461
  %v1926 = vpack.c.b16 %v1470, %v1462
  %v1927 = vpack.c.b16 %v1479, %v1471
  %v1928 = vpack.c.b16 %v1480, %v1472
  %v1929 = vpack.c.b16 %v1481, %v1473
  %v1930 = vpack.c.b16 %v1482, %v1474
  %v1931 = vpack.c.b16 %v1483, %v1475
  %v1932 = vpack.c.b16 %v1484, %v1476
  %v1933 = vpack.c.b16 %v1485, %v1477
  %v1934 = vpack.c.b16 %v1486, %v1478
  %v1935 = vpack.c.b16 %v1495, %v1487
  %v1936 = vpack.c.b16 %v1496, %v1488
  %v1937 = vpack.c.b16 %v1497, %v1489
  %v1938 = vpack.c.b16 %v1498, %v1490
  %v1939 = vpack.c.b16 %v1499, %v1491
  %v1940 = vpack.c.b16 %v1500, %v1492
  %v1941 = vpack.c.b16 %v1501, %v1493
  %v1942 = vpack.c.b16 %v1502, %v1494
  %v1943 = vpack.c.b16 %v1511, %v1503
  %v1944 = vpack.c.b16 %v1512, %v1504
  %v1945 = vpack.c.b16 %v1513, %v1505
  %v1946 = vpack.c.b16 %v1514, %v1506
  %v1947 = vpack.c.b16 %v1515, %v1507
  %v1948 = vpack.c.b16 %v1516, %v1508
  %v1949 = vpack.c.b16 %v1517, %v1509
  %v1950 = vpack.c.b16 %v1518, %v1510
  %v1951 = vpack.c.b16 %v1527, %v1519
  %v1952 = vpack.c.b16 %v1528, %v1520
  %v1953 = vpack.c.b16 %v1529, %v1521
  %v1954 = vpack.c.b16 %v1530, %v1522
  %v1955 = vpack.c.b16 %v1531, %v1523
  %v1956 = vpack.c.b16 %v1532, %v1524
  %v1957 = vpack.c.b16 %v1533, %v1525
  %v1958 = vpack.c.b16 %v1534, %v1526
  %v1959 = vpack.c.b16 %v1543, %v1535
  %v1960 = vpack.c.b16 %v1544, %v1536
  %v1961 = vpack.c.b16 %v1545, %v1537
  %v1962 = vpack.c.b16 %v1546, %v1538
  %v1963 = vpack.c.b16 %v1547, %v1539
  %v1964 = vpack.c.b16 %v1548, %v1540
  %v1965 = vpack.c.b16 %v1549, %v1541
  %v1966 = vpack.c.b16 %v1550, %v1542
  %v1967 = vpack.c.b16 %v1559, %v1551
  %v1968 = vpack.c.b16 %v1560, %v1552
  %v1969 = vpack.c.b16 %v1561, %v1553
  %v1970 = vpack.c.b16 %v1562, %v1554
  %v1971 = vpack.c.b16 %v1563, %v1555
  %v1972 = vpack.c.b16 %v1564, %v1556
  %v1973 = vpack.c.b16 %v1565, %v1557
  %v1974 = vpack.c.b16 %v1566, %v1558
  %v1975 = vpack.c.b16 %v1575, %v1567
  %v1976 = vpack.c.b16 %v1576, %v1568
  %v1977 = vpack.c.b16 %v1577, %v1569
  %v1978 = vpack.c.b16 %v1578, %v1570
  %v1979 = vpack.c.b16 %v1579, %v1571
  %v1980 = vpack.c.b16 %v1580, %v1572
  %v1981 = vpack.c.b16 %v1581, %v1573
  %v1982 = vpack.c.b16 %v1582, %v1574
  %v1983 = vpack.c.b16 %v1591, %v1583
  %v1984 = vpack.c.b16 %v1592, %v1584
  %v1985 = vpack.c.b16 %v1593, %v1585
  %v1986 = vpack.c.b16 %v1594, %v1586
  %v1987 = vpack.c.b16 %v1595, %v1587
  %v1988 = vpack.c.b16 %v1596, %v1588
  %v1989 = vpack.c.b16 %v1597, %v1589
  %v1990 = vpack.c.b16 %v1598, %v1590
  %v1991 = vpack.c.b16 %v1607, %v1599
  %v1992 = vpack.c.b16 %v1608, %v1600
  %v1993 = vpack.c.b16 %v1609, %v1601
  %v1994 = vpack.c.b16 %v1610, %v1602
  %v1995 = vpack.c.b16 %v1611, %v1603
  %v1996 = vpack.c.b16 %v1612, %v1604
  %v1997 = vpack.c.b16 %v1613, %v1605
  %v1998 = vpack.c.b16 %v1614, %v1606
  %2383 = vmatprep.subr.bf16.mxu0 %v1672
  %2384 = vmatpush1.bf16.msra.mxu0 %v1671
  %2385 = vmatprep.subr.bf16.mxu0 %v1664
  %2386 = vmatpush1.bf16.msra.mxu0 %v1663
  %2387 = vmatprep.subr.bf16.mxu0 %v1656
  %2388 = vmatpush1.bf16.msra.mxu0 %v1655
  %2389 = vmatprep.subr.bf16.mxu0 %v1648
  %2390 = vmatpush1.bf16.msra.mxu0 %v1647
  %2391 = vmatprep.subr.bf16.mxu0 %v1640
  %2392 = vmatpush1.bf16.msra.mxu0 %v1639
  %2393 = vmatprep.subr.bf16.mxu0 %v1632
  %2394 = vmatpush1.bf16.msra.mxu0 %v1631
  %2395 = vmatprep.subr.bf16.mxu0 %v1624
  %2396 = vmatpush1.bf16.msra.mxu0 %v1623
  %2397 = vmatprep.subr.bf16.mxu0 %v1616
  %2398 = vmatpush1.bf16.msra.mxu0 %v1615
  %2399 = vmatprep.subr.bf16.mxu0 %v1736
  %2400 = vmatpush2.bf16.msra.mxu0 %v1735
  %2401 = vmatprep.subr.bf16.mxu0 %v1728
  %2402 = vmatpush2.bf16.msra.mxu0 %v1727
  %2403 = vmatprep.subr.bf16.mxu0 %v1720
  %2404 = vmatpush2.bf16.msra.mxu0 %v1719
  %2405 = vmatprep.subr.bf16.mxu0 %v1712
  %2406 = vmatpush2.bf16.msra.mxu0 %v1711
  %2407 = vmatprep.subr.bf16.mxu0 %v1704
  %2408 = vmatpush2.bf16.msra.mxu0 %v1703
  %2409 = vmatprep.subr.bf16.mxu0 %v1696
  %2410 = vmatpush2.bf16.msra.mxu0 %v1695
  %2411 = vmatprep.subr.bf16.mxu0 %v1688
  %2412 = vmatpush2.bf16.msra.mxu0 %v1687
  %2413 = vmatprep.subr.bf16.mxu0 %v1680
  %2414 = vmatpush2.bf16.msra.mxu0 %v1679
  %2415 = vmatprep.mubr.bf16.mxu0 %v447
  %2416 = vmatmul.mubr.bf16.gmra.mxu0 %v433
  %v2417 = vpop.f32.mrf.mxu0
  %v2418 = vadd.f32 0.0, %v2417
  %v2419 = vpop.f32.mrf.mxu0
  %v2420 = vadd.f32 0.0, %v2419
  %v2421 = vpop.f32.mrf.mxu0
  %v2422 = vpop.f32.mrf.mxu0
  %2423 = vdwg.mxu0
  %2424 = vmatprep.subr.bf16.mxu0 %v1800
  %2425 = vmatpush1.bf16.msra.mxu0 %v1799
  %2426 = vmatprep.subr.bf16.mxu0 %v1792
  %2427 = vmatpush1.bf16.msra.mxu0 %v1791
  %2428 = vmatprep.subr.bf16.mxu0 %v1784
  %2429 = vmatpush1.bf16.msra.mxu0 %v1783
  %2430 = vmatprep.subr.bf16.mxu0 %v1776
  %2431 = vmatpush1.bf16.msra.mxu0 %v1775
  %2432 = vmatprep.subr.bf16.mxu0 %v1768
  %2433 = vmatpush1.bf16.msra.mxu0 %v1767
  %2434 = vmatprep.subr.bf16.mxu0 %v1760
  %2435 = vmatpush1.bf16.msra.mxu0 %v1759
  %2436 = vmatprep.subr.bf16.mxu0 %v1752
  %2437 = vmatpush1.bf16.msra.mxu0 %v1751
  %2438 = vmatprep.subr.bf16.mxu0 %v1744
  %2439 = vmatpush1.bf16.msra.mxu0 %v1743
  %2440 = vmatprep.subr.bf16.mxu0 %v1864
  %2441 = vmatpush2.bf16.msra.mxu0 %v1863
  %2442 = vmatprep.subr.bf16.mxu0 %v1856
  %2443 = vmatpush2.bf16.msra.mxu0 %v1855
  %2444 = vmatprep.subr.bf16.mxu0 %v1848
  %2445 = vmatpush2.bf16.msra.mxu0 %v1847
  %2446 = vmatprep.subr.bf16.mxu0 %v1840
  %2447 = vmatpush2.bf16.msra.mxu0 %v1839
  %2448 = vmatprep.subr.bf16.mxu0 %v1832
  %2449 = vmatpush2.bf16.msra.mxu0 %v1831
  %2450 = vmatprep.subr.bf16.mxu0 %v1824
  %2451 = vmatpush2.bf16.msra.mxu0 %v1823
  %2452 = vmatprep.subr.bf16.mxu0 %v1816
  %2453 = vmatpush2.bf16.msra.mxu0 %v1815
  %2454 = vmatprep.subr.bf16.mxu0 %v1808
  %2455 = vmatpush2.bf16.msra.mxu0 %v1807
  %2456 = vmatprep.mubr.bf16.mxu0 %v456
  %2457 = vmatmul.mubr.bf16.gmra.mxu0 %v455
  %v2458 = vpop.f32.mrf.mxu0
  %v2459 = vadd.f32 %v2418, %v2458
  %v2460 = vpop.f32.mrf.mxu0
  %v2461 = vadd.f32 %v2420, %v2460
  %v2462 = vpop.f32.mrf.mxu0
  %v2463 = vpop.f32.mrf.mxu0
  %2464 = vdwg.mxu0
  %2465 = vmatprep.subr.bf16.mxu0 %v1928
  %2466 = vmatpush1.bf16.msra.mxu0 %v1927
  %2467 = vmatprep.subr.bf16.mxu0 %v1920
  %2468 = vmatpush1.bf16.msra.mxu0 %v1919
  %2469 = vmatprep.subr.bf16.mxu0 %v1912
  %2470 = vmatpush1.bf16.msra.mxu0 %v1911
  %2471 = vmatprep.subr.bf16.mxu0 %v1904
  %2472 = vmatpush1.bf16.msra.mxu0 %v1903
  %2473 = vmatprep.subr.bf16.mxu0 %v1896
  %2474 = vmatpush1.bf16.msra.mxu0 %v1895
  %2475 = vmatprep.subr.bf16.mxu0 %v1888
  %2476 = vmatpush1.bf16.msra.mxu0 %v1887
  %2477 = vmatprep.subr.bf16.mxu0 %v1880
  %2478 = vmatpush1.bf16.msra.mxu0 %v1879
  %2479 = vmatprep.subr.bf16.mxu0 %v1872
  %2480 = vmatpush1.bf16.msra.mxu0 %v1871
  %2481 = vmatprep.subr.bf16.mxu0 %v1992
  %2482 = vmatpush2.bf16.msra.mxu0 %v1991
  %2483 = vmatprep.subr.bf16.mxu0 %v1984
  %2484 = vmatpush2.bf16.msra.mxu0 %v1983
  %2485 = vmatprep.subr.bf16.mxu0 %v1976
  %2486 = vmatpush2.bf16.msra.mxu0 %v1975
  %2487 = vmatprep.subr.bf16.mxu0 %v1968
  %2488 = vmatpush2.bf16.msra.mxu0 %v1967
  %2489 = vmatprep.subr.bf16.mxu0 %v1960
  %2490 = vmatpush2.bf16.msra.mxu0 %v1959
  %2491 = vmatprep.subr.bf16.mxu0 %v1952
  %2492 = vmatpush2.bf16.msra.mxu0 %v1951
  %2493 = vmatprep.subr.bf16.mxu0 %v1944
  %2494 = vmatpush2.bf16.msra.mxu0 %v1943
  %2495 = vmatprep.subr.bf16.mxu0 %v1936
  %2496 = vmatpush2.bf16.msra.mxu0 %v1935
  %2497 = vmatprep.mubr.bf16.mxu0 %v454
  %2498 = vmatmul.mubr.bf16.gmra.mxu0 %v440
  %v2499 = vpop.f32.mrf.mxu0
  %v2500 = vadd.f32 %v2459, %v2499
  %v2501 = vpop.f32.mrf.mxu0
  %v2502 = vadd.f32 %v2461, %v2501
  %v2503 = vpop.f32.mrf.mxu0
  %v2504 = vpop.f32.mrf.mxu0
  %2505 = vdwg.mxu0
  %2506 = vmatprep.subr.bf16.mxu0 %v1674
  %2507 = vmatpush1.bf16.msra.mxu0 %v1673
  %2508 = vmatprep.subr.bf16.mxu0 %v1666
  %2509 = vmatpush1.bf16.msra.mxu0 %v1665
  %2510 = vmatprep.subr.bf16.mxu0 %v1658
  %2511 = vmatpush1.bf16.msra.mxu0 %v1657
  %2512 = vmatprep.subr.bf16.mxu0 %v1650
  %2513 = vmatpush1.bf16.msra.mxu0 %v1649
  %2514 = vmatprep.subr.bf16.mxu0 %v1642
  %2515 = vmatpush1.bf16.msra.mxu0 %v1641
  %2516 = vmatprep.subr.bf16.mxu0 %v1634
  %2517 = vmatpush1.bf16.msra.mxu0 %v1633
  %2518 = vmatprep.subr.bf16.mxu0 %v1626
  %2519 = vmatpush1.bf16.msra.mxu0 %v1625
  %2520 = vmatprep.subr.bf16.mxu0 %v1618
  %2521 = vmatpush1.bf16.msra.mxu0 %v1617
  %2522 = vmatprep.subr.bf16.mxu0 %v1738
  %2523 = vmatpush2.bf16.msra.mxu0 %v1737
  %2524 = vmatprep.subr.bf16.mxu0 %v1730
  %2525 = vmatpush2.bf16.msra.mxu0 %v1729
  %2526 = vmatprep.subr.bf16.mxu0 %v1722
  %2527 = vmatpush2.bf16.msra.mxu0 %v1721
  %2528 = vmatprep.subr.bf16.mxu0 %v1714
  %2529 = vmatpush2.bf16.msra.mxu0 %v1713
  %2530 = vmatprep.subr.bf16.mxu0 %v1706
  %2531 = vmatpush2.bf16.msra.mxu0 %v1705
  %2532 = vmatprep.subr.bf16.mxu0 %v1698
  %2533 = vmatpush2.bf16.msra.mxu0 %v1697
  %2534 = vmatprep.subr.bf16.mxu0 %v1690
  %2535 = vmatpush2.bf16.msra.mxu0 %v1689
  %2536 = vmatprep.subr.bf16.mxu0 %v1682
  %2537 = vmatpush2.bf16.msra.mxu0 %v1681
  %2538 = vmatprep.mubr.bf16.mxu0 %v447
  %2539 = vmatmul.mubr.bf16.gmra.mxu0 %v433
  %v2540 = vpop.f32.mrf.mxu0
  %v2541 = vadd.f32 0.0, %v2540
  %v2542 = vpop.f32.mrf.mxu0
  %v2543 = vadd.f32 0.0, %v2542
  %v2544 = vpop.f32.mrf.mxu0
  %v2545 = vpop.f32.mrf.mxu0
  %2546 = vdwg.mxu0
  %2547 = vmatprep.subr.bf16.mxu0 %v1802
  %2548 = vmatpush1.bf16.msra.mxu0 %v1801
  %2549 = vmatprep.subr.bf16.mxu0 %v1794
  %2550 = vmatpush1.bf16.msra.mxu0 %v1793
  %2551 = vmatprep.subr.bf16.mxu0 %v1786
  %2552 = vmatpush1.bf16.msra.mxu0 %v1785
  %2553 = vmatprep.subr.bf16.mxu0 %v1778
  %2554 = vmatpush1.bf16.msra.mxu0 %v1777
  %2555 = vmatprep.subr.bf16.mxu0 %v1770
  %2556 = vmatpush1.bf16.msra.mxu0 %v1769
  %2557 = vmatprep.subr.bf16.mxu0 %v1762
  %2558 = vmatpush1.bf16.msra.mxu0 %v1761
  %2559 = vmatprep.subr.bf16.mxu0 %v1754
  %2560 = vmatpush1.bf16.msra.mxu0 %v1753
  %2561 = vmatprep.subr.bf16.mxu0 %v1746
  %2562 = vmatpush1.bf16.msra.mxu0 %v1745
  %2563 = vmatprep.subr.bf16.mxu0 %v1866
  %2564 = vmatpush2.bf16.msra.mxu0 %v1865
  %2565 = vmatprep.subr.bf16.mxu0 %v1858
  %2566 = vmatpush2.bf16.msra.mxu0 %v1857
  %2567 = vmatprep.subr.bf16.mxu0 %v1850
  %2568 = vmatpush2.bf16.msra.mxu0 %v1849
  %2569 = vmatprep.subr.bf16.mxu0 %v1842
  %2570 = vmatpush2.bf16.msra.mxu0 %v1841
  %2571 = vmatprep.subr.bf16.mxu0 %v1834
  %2572 = vmatpush2.bf16.msra.mxu0 %v1833
  %2573 = vmatprep.subr.bf16.mxu0 %v1826
  %2574 = vmatpush2.bf16.msra.mxu0 %v1825
  %2575 = vmatprep.subr.bf16.mxu0 %v1818
  %2576 = vmatpush2.bf16.msra.mxu0 %v1817
  %2577 = vmatprep.subr.bf16.mxu0 %v1810
  %2578 = vmatpush2.bf16.msra.mxu0 %v1809
  %2579 = vmatprep.mubr.bf16.mxu0 %v456
  %2580 = vmatmul.mubr.bf16.gmra.mxu0 %v455
  %v2581 = vpop.f32.mrf.mxu0
  %v2582 = vadd.f32 %v2541, %v2581
  %v2583 = vpop.f32.mrf.mxu0
  %v2584 = vadd.f32 %v2543, %v2583
  %v2585 = vpop.f32.mrf.mxu0
  %v2586 = vpop.f32.mrf.mxu0
  %2587 = vdwg.mxu0
  %2588 = vmatprep.subr.bf16.mxu0 %v1930
  %2589 = vmatpush1.bf16.msra.mxu0 %v1929
  %2590 = vmatprep.subr.bf16.mxu0 %v1922
  %2591 = vmatpush1.bf16.msra.mxu0 %v1921
  %2592 = vmatprep.subr.bf16.mxu0 %v1914
  %2593 = vmatpush1.bf16.msra.mxu0 %v1913
  %2594 = vmatprep.subr.bf16.mxu0 %v1906
  %2595 = vmatpush1.bf16.msra.mxu0 %v1905
  %2596 = vmatprep.subr.bf16.mxu0 %v1898
  %2597 = vmatpush1.bf16.msra.mxu0 %v1897
  %2598 = vmatprep.subr.bf16.mxu0 %v1890
  %2599 = vmatpush1.bf16.msra.mxu0 %v1889
  %2600 = vmatprep.subr.bf16.mxu0 %v1882
  %2601 = vmatpush1.bf16.msra.mxu0 %v1881
  %2602 = vmatprep.subr.bf16.mxu0 %v1874
  %2603 = vmatpush1.bf16.msra.mxu0 %v1873
  %2604 = vmatprep.subr.bf16.mxu0 %v1994
  %2605 = vmatpush2.bf16.msra.mxu0 %v1993
  %2606 = vmatprep.subr.bf16.mxu0 %v1986
  %2607 = vmatpush2.bf16.msra.mxu0 %v1985
  %2608 = vmatprep.subr.bf16.mxu0 %v1978
  %2609 = vmatpush2.bf16.msra.mxu0 %v1977
  %2610 = vmatprep.subr.bf16.mxu0 %v1970
  %2611 = vmatpush2.bf16.msra.mxu0 %v1969
  %2612 = vmatprep.subr.bf16.mxu0 %v1962
  %2613 = vmatpush2.bf16.msra.mxu0 %v1961
  %2614 = vmatprep.subr.bf16.mxu0 %v1954
  %2615 = vmatpush2.bf16.msra.mxu0 %v1953
  %2616 = vmatprep.subr.bf16.mxu0 %v1946
  %2617 = vmatpush2.bf16.msra.mxu0 %v1945
  %2618 = vmatprep.subr.bf16.mxu0 %v1938
  %2619 = vmatpush2.bf16.msra.mxu0 %v1937
  %2620 = vmatprep.mubr.bf16.mxu0 %v454
  %2621 = vmatmul.mubr.bf16.gmra.mxu0 %v440
  %v2622 = vpop.f32.mrf.mxu0
  %v2623 = vadd.f32 %v2582, %v2622
  %v2624 = vpop.f32.mrf.mxu0
  %v2625 = vadd.f32 %v2584, %v2624
  %v2626 = vpop.f32.mrf.mxu0
  %v2627 = vpop.f32.mrf.mxu0
  %2628 = vdwg.mxu0
  %2629 = vmatprep.subr.bf16.mxu0 %v1676
  %2630 = vmatpush1.bf16.msra.mxu0 %v1675
  %2631 = vmatprep.subr.bf16.mxu0 %v1668
  %2632 = vmatpush1.bf16.msra.mxu0 %v1667
  %2633 = vmatprep.subr.bf16.mxu0 %v1660
  %2634 = vmatpush1.bf16.msra.mxu0 %v1659
  %2635 = vmatprep.subr.bf16.mxu0 %v1652
  %2636 = vmatpush1.bf16.msra.mxu0 %v1651
  %2637 = vmatprep.subr.bf16.mxu0 %v1644
  %2638 = vmatpush1.bf16.msra.mxu0 %v1643
  %2639 = vmatprep.subr.bf16.mxu0 %v1636
  %2640 = vmatpush1.bf16.msra.mxu0 %v1635
  %2641 = vmatprep.subr.bf16.mxu0 %v1628
  %2642 = vmatpush1.bf16.msra.mxu0 %v1627
  %2643 = vmatprep.subr.bf16.mxu0 %v1620
  %2644 = vmatpush1.bf16.msra.mxu0 %v1619
  %2645 = vmatprep.subr.bf16.mxu0 %v1740
  %2646 = vmatpush2.bf16.msra.mxu0 %v1739
  %2647 = vmatprep.subr.bf16.mxu0 %v1732
  %2648 = vmatpush2.bf16.msra.mxu0 %v1731
  %2649 = vmatprep.subr.bf16.mxu0 %v1724
  %2650 = vmatpush2.bf16.msra.mxu0 %v1723
  %2651 = vmatprep.subr.bf16.mxu0 %v1716
  %2652 = vmatpush2.bf16.msra.mxu0 %v1715
  %2653 = vmatprep.subr.bf16.mxu0 %v1708
  %2654 = vmatpush2.bf16.msra.mxu0 %v1707
  %2655 = vmatprep.subr.bf16.mxu0 %v1700
  %2656 = vmatpush2.bf16.msra.mxu0 %v1699
  %2657 = vmatprep.subr.bf16.mxu0 %v1692
  %2658 = vmatpush2.bf16.msra.mxu0 %v1691
  %2659 = vmatprep.subr.bf16.mxu0 %v1684
  %2660 = vmatpush2.bf16.msra.mxu0 %v1683
  %2661 = vmatprep.mubr.bf16.mxu0 %v447
  %2662 = vmatmul.mubr.bf16.gmra.mxu0 %v433
  %v2663 = vpop.f32.mrf.mxu0
  %v2664 = vadd.f32 0.0, %v2663
  %v2665 = vpop.f32.mrf.mxu0
  %v2666 = vadd.f32 0.0, %v2665
  %v2667 = vpop.f32.mrf.mxu0
  %v2668 = vpop.f32.mrf.mxu0
  %2669 = vdwg.mxu0
  %2670 = vmatprep.subr.bf16.mxu0 %v1804
  %2671 = vmatpush1.bf16.msra.mxu0 %v1803
  %2672 = vmatprep.subr.bf16.mxu0 %v1796
  %2673 = vmatpush1.bf16.msra.mxu0 %v1795
  %2674 = vmatprep.subr.bf16.mxu0 %v1788
  %2675 = vmatpush1.bf16.msra.mxu0 %v1787
  %2676 = vmatprep.subr.bf16.mxu0 %v1780
  %2677 = vmatpush1.bf16.msra.mxu0 %v1779
  %2678 = vmatprep.subr.bf16.mxu0 %v1772
  %2679 = vmatpush1.bf16.msra.mxu0 %v1771
  %2680 = vmatprep.subr.bf16.mxu0 %v1764
  %2681 = vmatpush1.bf16.msra.mxu0 %v1763
  %2682 = vmatprep.subr.bf16.mxu0 %v1756
  %2683 = vmatpush1.bf16.msra.mxu0 %v1755
  %2684 = vmatprep.subr.bf16.mxu0 %v1748
  %2685 = vmatpush1.bf16.msra.mxu0 %v1747
  %2686 = vmatprep.subr.bf16.mxu0 %v1868
  %2687 = vmatpush2.bf16.msra.mxu0 %v1867
  %2688 = vmatprep.subr.bf16.mxu0 %v1860
  %2689 = vmatpush2.bf16.msra.mxu0 %v1859
  %2690 = vmatprep.subr.bf16.mxu0 %v1852
  %2691 = vmatpush2.bf16.msra.mxu0 %v1851
  %2692 = vmatprep.subr.bf16.mxu0 %v1844
  %2693 = vmatpush2.bf16.msra.mxu0 %v1843
  %2694 = vmatprep.subr.bf16.mxu0 %v1836
  %2695 = vmatpush2.bf16.msra.mxu0 %v1835
  %2696 = vmatprep.subr.bf16.mxu0 %v1828
  %2697 = vmatpush2.bf16.msra.mxu0 %v1827
  %2698 = vmatprep.subr.bf16.mxu0 %v1820
  %2699 = vmatpush2.bf16.msra.mxu0 %v1819
  %2700 = vmatprep.subr.bf16.mxu0 %v1812
  %2701 = vmatpush2.bf16.msra.mxu0 %v1811
  %2702 = vmatprep.mubr.bf16.mxu0 %v456
  %2703 = vmatmul.mubr.bf16.gmra.mxu0 %v455
  %v2704 = vpop.f32.mrf.mxu0
  %v2705 = vadd.f32 %v2664, %v2704
  %v2706 = vpop.f32.mrf.mxu0
  %v2707 = vadd.f32 %v2666, %v2706
  %v2708 = vpop.f32.mrf.mxu0
  %v2709 = vpop.f32.mrf.mxu0
  %2710 = vdwg.mxu0
  %2711 = vmatprep.subr.bf16.mxu0 %v1932
  %2712 = vmatpush1.bf16.msra.mxu0 %v1931
  %2713 = vmatprep.subr.bf16.mxu0 %v1924
  %2714 = vmatpush1.bf16.msra.mxu0 %v1923
  %2715 = vmatprep.subr.bf16.mxu0 %v1916
  %2716 = vmatpush1.bf16.msra.mxu0 %v1915
  %2717 = vmatprep.subr.bf16.mxu0 %v1908
  %2718 = vmatpush1.bf16.msra.mxu0 %v1907
  %2719 = vmatprep.subr.bf16.mxu0 %v1900
  %2720 = vmatpush1.bf16.msra.mxu0 %v1899
  %2721 = vmatprep.subr.bf16.mxu0 %v1892
  %2722 = vmatpush1.bf16.msra.mxu0 %v1891
  %2723 = vmatprep.subr.bf16.mxu0 %v1884
  %2724 = vmatpush1.bf16.msra.mxu0 %v1883
  %2725 = vmatprep.subr.bf16.mxu0 %v1876
  %2726 = vmatpush1.bf16.msra.mxu0 %v1875
  %2727 = vmatprep.subr.bf16.mxu0 %v1996
  %2728 = vmatpush2.bf16.msra.mxu0 %v1995
  %2729 = vmatprep.subr.bf16.mxu0 %v1988
  %2730 = vmatpush2.bf16.msra.mxu0 %v1987
  %2731 = vmatprep.subr.bf16.mxu0 %v1980
  %2732 = vmatpush2.bf16.msra.mxu0 %v1979
  %2733 = vmatprep.subr.bf16.mxu0 %v1972
  %2734 = vmatpush2.bf16.msra.mxu0 %v1971
  %2735 = vmatprep.subr.bf16.mxu0 %v1964
  %2736 = vmatpush2.bf16.msra.mxu0 %v1963
  %2737 = vmatprep.subr.bf16.mxu0 %v1956
  %2738 = vmatpush2.bf16.msra.mxu0 %v1955
  %2739 = vmatprep.subr.bf16.mxu0 %v1948
  %2740 = vmatpush2.bf16.msra.mxu0 %v1947
  %2741 = vmatprep.subr.bf16.mxu0 %v1940
  %2742 = vmatpush2.bf16.msra.mxu0 %v1939
  %2743 = vmatprep.mubr.bf16.mxu0 %v454
  %2744 = vmatmul.mubr.bf16.gmra.mxu0 %v440
  %v2745 = vpop.f32.mrf.mxu0
  %v2746 = vadd.f32 %v2705, %v2745
  %v2747 = vpop.f32.mrf.mxu0
  %v2748 = vadd.f32 %v2707, %v2747
  %v2749 = vpop.f32.mrf.mxu0
  %v2750 = vpop.f32.mrf.mxu0
  %2751 = vdwg.mxu0
  %2752 = vmatprep.subr.bf16.mxu0 %v1678
  %2753 = vmatpush1.bf16.msra.mxu0 %v1677
  %2754 = vmatprep.subr.bf16.mxu0 %v1670
  %2755 = vmatpush1.bf16.msra.mxu0 %v1669
  %2756 = vmatprep.subr.bf16.mxu0 %v1662
  %2757 = vmatpush1.bf16.msra.mxu0 %v1661
  %2758 = vmatprep.subr.bf16.mxu0 %v1654
  %2759 = vmatpush1.bf16.msra.mxu0 %v1653
  %2760 = vmatprep.subr.bf16.mxu0 %v1646
  %2761 = vmatpush1.bf16.msra.mxu0 %v1645
  %2762 = vmatprep.subr.bf16.mxu0 %v1638
  %2763 = vmatpush1.bf16.msra.mxu0 %v1637
  %2764 = vmatprep.subr.bf16.mxu0 %v1630
  %2765 = vmatpush1.bf16.msra.mxu0 %v1629
  %2766 = vmatprep.subr.bf16.mxu0 %v1622
  %2767 = vmatpush1.bf16.msra.mxu0 %v1621
  %2768 = vmatprep.subr.bf16.mxu0 %v1742
  %2769 = vmatpush2.bf16.msra.mxu0 %v1741
  %2770 = vmatprep.subr.bf16.mxu0 %v1734
  %2771 = vmatpush2.bf16.msra.mxu0 %v1733
  %2772 = vmatprep.subr.bf16.mxu0 %v1726
  %2773 = vmatpush2.bf16.msra.mxu0 %v1725
  %2774 = vmatprep.subr.bf16.mxu0 %v1718
  %2775 = vmatpush2.bf16.msra.mxu0 %v1717
  %2776 = vmatprep.subr.bf16.mxu0 %v1710
  %2777 = vmatpush2.bf16.msra.mxu0 %v1709
  %2778 = vmatprep.subr.bf16.mxu0 %v1702
  %2779 = vmatpush2.bf16.msra.mxu0 %v1701
  %2780 = vmatprep.subr.bf16.mxu0 %v1694
  %2781 = vmatpush2.bf16.msra.mxu0 %v1693
  %2782 = vmatprep.subr.bf16.mxu0 %v1686
  %2783 = vmatpush2.bf16.msra.mxu0 %v1685
  %2784 = vmatprep.mubr.bf16.mxu0 %v447
  %2785 = vmatmul.mubr.bf16.gmra.mxu0 %v433
  %v2786 = vpop.f32.mrf.mxu0
  %v2787 = vadd.f32 0.0, %v2786
  %v2788 = vpop.f32.mrf.mxu0
  %v2789 = vadd.f32 0.0, %v2788
  %v2790 = vpop.f32.mrf.mxu0
  %v2791 = vpop.f32.mrf.mxu0
  %2792 = vdwg.mxu0
  %2793 = vmatprep.subr.bf16.mxu0 %v1806
  %2794 = vmatpush1.bf16.msra.mxu0 %v1805
  %2795 = vmatprep.subr.bf16.mxu0 %v1798
  %2796 = vmatpush1.bf16.msra.mxu0 %v1797
  %2797 = vmatprep.subr.bf16.mxu0 %v1790
  %2798 = vmatpush1.bf16.msra.mxu0 %v1789
  %2799 = vmatprep.subr.bf16.mxu0 %v1782
  %2800 = vmatpush1.bf16.msra.mxu0 %v1781
  %2801 = vmatprep.subr.bf16.mxu0 %v1774
  %2802 = vmatpush1.bf16.msra.mxu0 %v1773
  %2803 = vmatprep.subr.bf16.mxu0 %v1766
  %2804 = vmatpush1.bf16.msra.mxu0 %v1765
  %2805 = vmatprep.subr.bf16.mxu0 %v1758
  %2806 = vmatpush1.bf16.msra.mxu0 %v1757
  %2807 = vmatprep.subr.bf16.mxu0 %v1750
  %2808 = vmatpush1.bf16.msra.mxu0 %v1749
  %2809 = vmatprep.subr.bf16.mxu0 %v1870
  %2810 = vmatpush2.bf16.msra.mxu0 %v1869
  %2811 = vmatprep.subr.bf16.mxu0 %v1862
  %2812 = vmatpush2.bf16.msra.mxu0 %v1861
  %2813 = vmatprep.subr.bf16.mxu0 %v1854
  %2814 = vmatpush2.bf16.msra.mxu0 %v1853
  %2815 = vmatprep.subr.bf16.mxu0 %v1846
  %2816 = vmatpush2.bf16.msra.mxu0 %v1845
  %2817 = vmatprep.subr.bf16.mxu0 %v1838
  %2818 = vmatpush2.bf16.msra.mxu0 %v1837
  %2819 = vmatprep.subr.bf16.mxu0 %v1830
  %2820 = vmatpush2.bf16.msra.mxu0 %v1829
  %2821 = vmatprep.subr.bf16.mxu0 %v1822
  %2822 = vmatpush2.bf16.msra.mxu0 %v1821
  %2823 = vmatprep.subr.bf16.mxu0 %v1814
  %2824 = vmatpush2.bf16.msra.mxu0 %v1813
  %2825 = vmatprep.mubr.bf16.mxu0 %v456
  %2826 = vmatmul.mubr.bf16.gmra.mxu0 %v455
  %v2827 = vpop.f32.mrf.mxu0
  %v2828 = vadd.f32 %v2787, %v2827
  %v2829 = vpop.f32.mrf.mxu0
  %v2830 = vadd.f32 %v2789, %v2829
  %v2831 = vpop.f32.mrf.mxu0
  %v2832 = vpop.f32.mrf.mxu0
  %2833 = vdwg.mxu0
  %2834 = vmatprep.subr.bf16.mxu0 %v1934
  %2835 = vmatpush1.bf16.msra.mxu0 %v1933
  %2836 = vmatprep.subr.bf16.mxu0 %v1926
  %2837 = vmatpush1.bf16.msra.mxu0 %v1925
  %2838 = vmatprep.subr.bf16.mxu0 %v1918
  %2839 = vmatpush1.bf16.msra.mxu0 %v1917
  %2840 = vmatprep.subr.bf16.mxu0 %v1910
  %2841 = vmatpush1.bf16.msra.mxu0 %v1909
  %2842 = vmatprep.subr.bf16.mxu0 %v1902
  %2843 = vmatpush1.bf16.msra.mxu0 %v1901
  %2844 = vmatprep.subr.bf16.mxu0 %v1894
  %2845 = vmatpush1.bf16.msra.mxu0 %v1893
  %2846 = vmatprep.subr.bf16.mxu0 %v1886
  %2847 = vmatpush1.bf16.msra.mxu0 %v1885
  %2848 = vmatprep.subr.bf16.mxu0 %v1878
  %2849 = vmatpush1.bf16.msra.mxu0 %v1877
  %2850 = vmatprep.subr.bf16.mxu0 %v1998
  %2851 = vmatpush2.bf16.msra.mxu0 %v1997
  %2852 = vmatprep.subr.bf16.mxu0 %v1990
  %2853 = vmatpush2.bf16.msra.mxu0 %v1989
  %2854 = vmatprep.subr.bf16.mxu0 %v1982
  %2855 = vmatpush2.bf16.msra.mxu0 %v1981
  %2856 = vmatprep.subr.bf16.mxu0 %v1974
  %2857 = vmatpush2.bf16.msra.mxu0 %v1973
  %2858 = vmatprep.subr.bf16.mxu0 %v1966
  %2859 = vmatpush2.bf16.msra.mxu0 %v1965
  %2860 = vmatprep.subr.bf16.mxu0 %v1958
  %2861 = vmatpush2.bf16.msra.mxu0 %v1957
  %2862 = vmatprep.subr.bf16.mxu0 %v1950
  %2863 = vmatpush2.bf16.msra.mxu0 %v1949
  %2864 = vmatprep.subr.bf16.mxu0 %v1942
  %2865 = vmatpush2.bf16.msra.mxu0 %v1941
  %2866 = vmatprep.mubr.bf16.mxu0 %v454
  %2867 = vmatmul.mubr.bf16.gmra.mxu0 %v440
  %v2868 = vpop.f32.mrf.mxu0
  %v2869 = vadd.f32 %v2828, %v2868
  %v2870 = vpop.f32.mrf.mxu0
  %v2871 = vadd.f32 %v2830, %v2870
  %v2872 = vpop.f32.mrf.mxu0
  %v2873 = vpop.f32.mrf.mxu0
  %2874 = vdwg.mxu0
  %vm2875 = vcmask 1041408
  %v2876 = vsel %vm2875, %v2500, 0.0
  %v2877 = vrot.slane %v2876, 4
  %v2878 = vadd.f32 %v2876, %v2877
  %v2879 = vrot.slane %v2878, 2
  %v2880 = vadd.f32 %v2878, %v2879
  %v2881 = vrot.slane %v2880, 1
  %v2882 = vadd.f32 %v2880, %v2881
  %v2883 = vsel %vm2875, %v2502, 0.0
  %v2884 = vrot.slane %v2883, 4
  %v2885 = vadd.f32 %v2883, %v2884
  %v2886 = vrot.slane %v2885, 2
  %v2887 = vadd.f32 %v2885, %v2886
  %v2888 = vrot.slane %v2887, 1
  %v2889 = vadd.f32 %v2887, %v2888
  %v2890 = vsel %vm2875, %v2623, 0.0
  %v2891 = vrot.slane %v2890, 4
  %v2892 = vadd.f32 %v2890, %v2891
  %v2893 = vrot.slane %v2892, 2
  %v2894 = vadd.f32 %v2892, %v2893
  %v2895 = vrot.slane %v2894, 1
  %v2896 = vadd.f32 %v2894, %v2895
  %v2897 = vsel %vm2875, %v2625, 0.0
  %v2898 = vrot.slane %v2897, 4
  %v2899 = vadd.f32 %v2897, %v2898
  %v2900 = vrot.slane %v2899, 2
  %v2901 = vadd.f32 %v2899, %v2900
  %v2902 = vrot.slane %v2901, 1
  %v2903 = vadd.f32 %v2901, %v2902
  %v2904 = vsel %vm2875, %v2746, 0.0
  %v2905 = vrot.slane %v2904, 4
  %v2906 = vadd.f32 %v2904, %v2905
  %v2907 = vrot.slane %v2906, 2
  %v2908 = vadd.f32 %v2906, %v2907
  %v2909 = vrot.slane %v2908, 1
  %v2910 = vadd.f32 %v2908, %v2909
  %v2911 = vsel %vm2875, %v2748, 0.0
  %v2912 = vrot.slane %v2911, 4
  %v2913 = vadd.f32 %v2911, %v2912
  %v2914 = vrot.slane %v2913, 2
  %v2915 = vadd.f32 %v2913, %v2914
  %v2916 = vrot.slane %v2915, 1
  %v2917 = vadd.f32 %v2915, %v2916
  %v2918 = vsel %vm2875, %v2869, 0.0
  %v2919 = vrot.slane %v2918, 4
  %v2920 = vadd.f32 %v2918, %v2919
  %v2921 = vrot.slane %v2920, 2
  %v2922 = vadd.f32 %v2920, %v2921
  %v2923 = vrot.slane %v2922, 1
  %v2924 = vadd.f32 %v2922, %v2923
  %v2925 = vsel %vm2875, %v2871, 0.0
  %v2926 = vrot.slane %v2925, 4
  %v2927 = vadd.f32 %v2925, %v2926
  %v2928 = vrot.slane %v2927, 2
  %v2929 = vadd.f32 %v2927, %v2928
  %v2930 = vrot.slane %v2929, 1
  %v2931 = vadd.f32 %v2929, %v2930
  %v2932 = vrcp.pop 2.0
  %v2933 = vmul.f32 %v2882, %v2932
  %v2934 = vmul.f32 %v2889, %v2932
  %v2935 = vmul.f32 %v2896, %v2932
  %v2936 = vmul.f32 %v2903, %v2932
  %v2937 = vmul.f32 %v2910, %v2932
  %v2938 = vmul.f32 %v2917, %v2932
  %v2939 = vmul.f32 %v2924, %v2932
  %v2940 = vmul.f32 %v2931, %v2932
  %v2941 = vsub.f32 %v2500, %v2933
  %v2942 = vsub.f32 %v2502, %v2934
  %v2943 = vsub.f32 %v2623, %v2935
  %v2944 = vsub.f32 %v2625, %v2936
  %v2945 = vsub.f32 %v2746, %v2937
  %v2946 = vsub.f32 %v2748, %v2938
  %v2947 = vsub.f32 %v2869, %v2939
  %v2948 = vsub.f32 %v2871, %v2940
  %v2949 = vmul.f32 %v2941, %v2941
  %v2950 = vmul.f32 %v2942, %v2942
  %v2951 = vmul.f32 %v2943, %v2943
  %v2952 = vmul.f32 %v2944, %v2944
  %v2953 = vmul.f32 %v2945, %v2945
  %v2954 = vmul.f32 %v2946, %v2946
  %v2955 = vmul.f32 %v2947, %v2947
  %v2956 = vmul.f32 %v2948, %v2948
  %v2957 = vsel %vm2875, %v2949, 0.0
  %v2958 = vrot.slane %v2957, 4
  %v2959 = vadd.f32 %v2957, %v2958
  %v2960 = vrot.slane %v2959, 2
  %v2961 = vadd.f32 %v2959, %v2960
  %v2962 = vrot.slane %v2961, 1
  %v2963 = vadd.f32 %v2961, %v2962
  %v2964 = vsel %vm2875, %v2950, 0.0
  %v2965 = vrot.slane %v2964, 4
  %v2966 = vadd.f32 %v2964, %v2965
  %v2967 = vrot.slane %v2966, 2
  %v2968 = vadd.f32 %v2966, %v2967
  %v2969 = vrot.slane %v2968, 1
  %v2970 = vadd.f32 %v2968, %v2969
  %v2971 = vsel %vm2875, %v2951, 0.0
  %v2972 = vrot.slane %v2971, 4
  %v2973 = vadd.f32 %v2971, %v2972
  %v2974 = vrot.slane %v2973, 2
  %v2975 = vadd.f32 %v2973, %v2974
  %v2976 = vrot.slane %v2975, 1
  %v2977 = vadd.f32 %v2975, %v2976
  %v2978 = vsel %vm2875, %v2952, 0.0
  %v2979 = vrot.slane %v2978, 4
  %v2980 = vadd.f32 %v2978, %v2979
  %v2981 = vrot.slane %v2980, 2
  %v2982 = vadd.f32 %v2980, %v2981
  %v2983 = vrot.slane %v2982, 1
  %v2984 = vadd.f32 %v2982, %v2983
  %v2985 = vsel %vm2875, %v2953, 0.0
  %v2986 = vrot.slane %v2985, 4
  %v2987 = vadd.f32 %v2985, %v2986
  %v2988 = vrot.slane %v2987, 2
  %v2989 = vadd.f32 %v2987, %v2988
  %v2990 = vrot.slane %v2989, 1
  %v2991 = vadd.f32 %v2989, %v2990
  %v2992 = vsel %vm2875, %v2954, 0.0
  %v2993 = vrot.slane %v2992, 4
  %v2994 = vadd.f32 %v2992, %v2993
  %v2995 = vrot.slane %v2994, 2
  %v2996 = vadd.f32 %v2994, %v2995
  %v2997 = vrot.slane %v2996, 1
  %v2998 = vadd.f32 %v2996, %v2997
  %v2999 = vsel %vm2875, %v2955, 0.0
  %v3000 = vrot.slane %v2999, 4
  %v3001 = vadd.f32 %v2999, %v3000
  %v3002 = vrot.slane %v3001, 2
  %v3003 = vadd.f32 %v3001, %v3002
  %v3004 = vrot.slane %v3003, 1
  %v3005 = vadd.f32 %v3003, %v3004
  %v3006 = vsel %vm2875, %v2956, 0.0
  %v3007 = vrot.slane %v3006, 4
  %v3008 = vadd.f32 %v3006, %v3007
  %v3009 = vrot.slane %v3008, 2
  %v3010 = vadd.f32 %v3008, %v3009
  %v3011 = vrot.slane %v3010, 1
  %v3012 = vadd.f32 %v3010, %v3011
  %v3013 = vmul.f32 %v2963, %v2932
  %v3014 = vmul.f32 %v2970, %v2932
  %v3015 = vmul.f32 %v2977, %v2932
  %v3016 = vmul.f32 %v2984, %v2932
  %v3017 = vmul.f32 %v2991, %v2932
  %v3018 = vmul.f32 %v2998, %v2932
  %v3019 = vmul.f32 %v3005, %v2932
  %v3020 = vmul.f32 %v3012, %v2932
  %v3021 = vadd.f32 %v3013, 1e-05
  %v3022 = vadd.f32 %v3014, 1e-05
  %v3023 = vadd.f32 %v3015, 1e-05
  %v3024 = vadd.f32 %v3016, 1e-05
  %v3025 = vadd.f32 %v3017, 1e-05
  %v3026 = vadd.f32 %v3018, 1e-05
  %v3027 = vadd.f32 %v3019, 1e-05
  %v3028 = vadd.f32 %v3020, 1e-05
  %v3029 = vrsqrt.pop %v3021
  %v3030 = vrsqrt.pop %v3022
  %v3031 = vrsqrt.pop %v3023
  %v3032 = vrsqrt.pop %v3024
  %v3033 = vrsqrt.pop %v3025
  %v3034 = vrsqrt.pop %v3026
  %v3035 = vrsqrt.pop %v3027
  %v3036 = vrsqrt.pop %v3028
  %v3037 = vmul.f32 %v2941, %v3029
  %v3038 = vmul.f32 %v2942, %v3030
  %v3039 = vmul.f32 %v2943, %v3031
  %v3040 = vmul.f32 %v2944, %v3032
  %v3041 = vmul.f32 %v2945, %v3033
  %v3042 = vmul.f32 %v2946, %v3034
  %v3043 = vmul.f32 %v2947, %v3035
  %v3044 = vmul.f32 %v2948, %v3036
  %v3045 = vld [vmem:[%s2] sm:$0xff]
  %v3047 = vlaneseq
  %v3048 = vshrl.u32 %v3047, 7
  %v3049 = vsub.s32 0, %v3048
  %v3050 = vrot.slane %v3045, %v3049
  %v3051 = vlaneseq
  %v3052 = vshrl.u32 %v3051, 7
  %v3053 = vsub.s32 1, %v3052
  %v3054 = vrot.slane %v3045, %v3053
  %v3055 = vlaneseq
  %v3056 = vshrl.u32 %v3055, 7
  %v3057 = vsub.s32 2, %v3056
  %v3058 = vrot.slane %v3045, %v3057
  %v3059 = vlaneseq
  %v3060 = vshrl.u32 %v3059, 7
  %v3061 = vsub.s32 3, %v3060
  %v3062 = vrot.slane %v3045, %v3061
  %v3063 = vlaneseq
  %v3064 = vshrl.u32 %v3063, 7
  %v3065 = vsub.s32 4, %v3064
  %v3066 = vrot.slane %v3045, %v3065
  %v3067 = vlaneseq
  %v3068 = vshrl.u32 %v3067, 7
  %v3069 = vsub.s32 5, %v3068
  %v3070 = vrot.slane %v3045, %v3069
  %v3071 = vlaneseq
  %v3072 = vshrl.u32 %v3071, 7
  %v3073 = vsub.s32 6, %v3072
  %v3074 = vrot.slane %v3045, %v3073
  %v3075 = vlaneseq
  %v3076 = vshrl.u32 %v3075, 7
  %v3077 = vsub.s32 7, %v3076
  %v3078 = vrot.slane %v3045, %v3077
  %v3087 = vmul.f32 %v3037, %v3050
  %v3088 = vmul.f32 %v3038, %v3054
  %v3089 = vmul.f32 %v3039, %v3058
  %v3090 = vmul.f32 %v3040, %v3062
  %v3091 = vmul.f32 %v3041, %v3066
  %v3092 = vmul.f32 %v3042, %v3070
  %v3093 = vmul.f32 %v3043, %v3074
  %v3094 = vmul.f32 %v3044, %v3078
  %v3095 = vld [vmem:[%s3] sm:$0xff]
  %v3097 = vlaneseq
  %v3098 = vshrl.u32 %v3097, 7
  %v3099 = vsub.s32 0, %v3098
  %v3100 = vrot.slane %v3095, %v3099
  %v3101 = vlaneseq
  %v3102 = vshrl.u32 %v3101, 7
  %v3103 = vsub.s32 1, %v3102
  %v3104 = vrot.slane %v3095, %v3103
  %v3105 = vlaneseq
  %v3106 = vshrl.u32 %v3105, 7
  %v3107 = vsub.s32 2, %v3106
  %v3108 = vrot.slane %v3095, %v3107
  %v3109 = vlaneseq
  %v3110 = vshrl.u32 %v3109, 7
  %v3111 = vsub.s32 3, %v3110
  %v3112 = vrot.slane %v3095, %v3111
  %v3113 = vlaneseq
  %v3114 = vshrl.u32 %v3113, 7
  %v3115 = vsub.s32 4, %v3114
  %v3116 = vrot.slane %v3095, %v3115
  %v3117 = vlaneseq
  %v3118 = vshrl.u32 %v3117, 7
  %v3119 = vsub.s32 5, %v3118
  %v3120 = vrot.slane %v3095, %v3119
  %v3121 = vlaneseq
  %v3122 = vshrl.u32 %v3121, 7
  %v3123 = vsub.s32 6, %v3122
  %v3124 = vrot.slane %v3095, %v3123
  %v3125 = vlaneseq
  %v3126 = vshrl.u32 %v3125, 7
  %v3127 = vsub.s32 7, %v3126
  %v3128 = vrot.slane %v3095, %v3127
  %v3137 = vadd.f32 %v3087, %v3100
  %v3138 = vadd.f32 %v3088, %v3104
  %v3139 = vadd.f32 %v3089, %v3108
  %v3140 = vadd.f32 %v3090, %v3112
  %v3141 = vadd.f32 %v3091, %v3116
  %v3142 = vadd.f32 %v3092, %v3120
  %v3143 = vadd.f32 %v3093, %v3124
  %v3144 = vadd.f32 %v3094, %v3128
  %vm3145 = vcmp.ge.f32.partialorder %v3137, 0.0
  %vm3146 = vcmp.ge.f32.partialorder %v3138, 0.0
  %vm3147 = vcmp.ge.f32.partialorder %v3139, 0.0
  %vm3148 = vcmp.ge.f32.partialorder %v3140, 0.0
  %vm3149 = vcmp.ge.f32.partialorder %v3141, 0.0
  %vm3150 = vcmp.ge.f32.partialorder %v3142, 0.0
  %vm3151 = vcmp.ge.f32.partialorder %v3143, 0.0
  %vm3152 = vcmp.ge.f32.partialorder %v3144, 0.0
  %v3153 = vmul.f32 %v3137, 0.2
  %v3154 = vmul.f32 %v3138, 0.2
  %v3155 = vmul.f32 %v3139, 0.2
  %v3156 = vmul.f32 %v3140, 0.2
  %v3157 = vmul.f32 %v3141, 0.2
  %v3158 = vmul.f32 %v3142, 0.2
  %v3159 = vmul.f32 %v3143, 0.2
  %v3160 = vmul.f32 %v3144, 0.2
  %v3161 = vsel %vm3145, %v3137, %v3153
  %v3162 = vsel %vm3146, %v3138, %v3154
  %v3163 = vsel %vm3147, %v3139, %v3155
  %v3164 = vsel %vm3148, %v3140, %v3156
  %v3165 = vsel %vm3149, %v3141, %v3157
  %v3166 = vsel %vm3150, %v3142, %v3158
  %v3167 = vsel %vm3151, %v3143, %v3159
  %v3168 = vsel %vm3152, %v3144, %v3160
  %v3169 = vpack.c.bf16 %v3161, %v3161
  %v3170 = vpack.c.bf16 %v3162, %v3162
  %v3171 = vpack.c.bf16 %v3163, %v3163
  %v3172 = vpack.c.bf16 %v3164, %v3164
  %v3173 = vpack.c.bf16 %v3165, %v3165
  %v3174 = vpack.c.bf16 %v3166, %v3166
  %v3175 = vpack.c.bf16 %v3167, %v3167
  %v3176 = vpack.c.bf16 %v3168, %v3168
  %v3177 = vld [vmem:[%s4] sm:$0xf]
  %v3178 = vld [vmem:[%s4 + $0x4] sm:$0xf]
  %v3179 = vld [vmem:[%s4 + $0x8] sm:$0xf]
  %v3180 = vld [vmem:[%s4 + $0xc] sm:$0xf]
  %v3181 = vld [vmem:[%s4 + $0x10] sm:$0xf]
  %v3182 = vld [vmem:[%s4 + $0x14] sm:$0xf]
  %v3183 = vld [vmem:[%s4 + $0x18] sm:$0xf]
  %v3184 = vld [vmem:[%s4 + $0x1c] sm:$0xf]
  %v3185 = vld [vmem:[%s4 + $0x20] sm:$0xf]
  %v3186 = vld [vmem:[%s4 + $0x24] sm:$0xf]
  %v3187 = vld [vmem:[%s4 + $0x28] sm:$0xf]
  %v3188 = vld [vmem:[%s4 + $0x2c] sm:$0xf]
  %v3189 = vld [vmem:[%s4 + $0x30] sm:$0xf]
  %v3190 = vld [vmem:[%s4 + $0x34] sm:$0xf]
  %v3191 = vld [vmem:[%s4 + $0x38] sm:$0xf]
  %v3192 = vld [vmem:[%s4 + $0x3c] sm:$0xf]
  %v3193 = vld [vmem:[%s4 + $0x40] sm:$0xf]
  %v3194 = vld [vmem:[%s4 + $0x44] sm:$0xf]
  %v3195 = vld [vmem:[%s4 + $0x48] sm:$0xf]
  %v3196 = vld [vmem:[%s4 + $0x4c] sm:$0xf]
  %v3197 = vld [vmem:[%s4 + $0x50] sm:$0xf]
  %v3198 = vld [vmem:[%s4 + $0x54] sm:$0xf]
  %v3199 = vld [vmem:[%s4 + $0x58] sm:$0xf]
  %v3200 = vld [vmem:[%s4 + $0x5c] sm:$0xf]
  %v3201 = vld [vmem:[%s4 + $0x60] sm:$0xf]
  %v3202 = vld [vmem:[%s4 + $0x64] sm:$0xf]
  %v3203 = vld [vmem:[%s4 + $0x68] sm:$0xf]
  %v3204 = vld [vmem:[%s4 + $0x6c] sm:$0xf]
  %v3205 = vld [vmem:[%s4 + $0x70] sm:$0xf]
  %v3206 = vld [vmem:[%s4 + $0x74] sm:$0xf]
  %v3207 = vld [vmem:[%s4 + $0x78] sm:$0xf]
  %v3208 = vld [vmem:[%s4 + $0x7c] sm:$0xf]
  %v3209 = vld [vmem:[%s4 + $0x80] sm:$0xf]
  %v3210 = vld [vmem:[%s4 + $0x84] sm:$0xf]
  %v3211 = vld [vmem:[%s4 + $0x88] sm:$0xf]
  %v3212 = vld [vmem:[%s4 + $0x8c] sm:$0xf]
  %v3213 = vld [vmem:[%s4 + $0x90] sm:$0xf]
  %v3214 = vld [vmem:[%s4 + $0x94] sm:$0xf]
  %v3215 = vld [vmem:[%s4 + $0x98] sm:$0xf]
  %v3216 = vld [vmem:[%s4 + $0x9c] sm:$0xf]
  %v3217 = vld [vmem:[%s4 + $0xa0] sm:$0xf]
  %v3218 = vld [vmem:[%s4 + $0xa4] sm:$0xf]
  %v3219 = vld [vmem:[%s4 + $0xa8] sm:$0xf]
  %v3220 = vld [vmem:[%s4 + $0xac] sm:$0xf]
  %v3221 = vld [vmem:[%s4 + $0xb0] sm:$0xf]
  %v3222 = vld [vmem:[%s4 + $0xb4] sm:$0xf]
  %v3223 = vld [vmem:[%s4 + $0xb8] sm:$0xf]
  %v3224 = vld [vmem:[%s4 + $0xbc] sm:$0xf]
  %v3225 = vld [vmem:[%s4 + $0xc0] sm:$0xf]
  %v3226 = vld [vmem:[%s4 + $0xc4] sm:$0xf]
  %v3227 = vld [vmem:[%s4 + $0xc8] sm:$0xf]
  %v3228 = vld [vmem:[%s4 + $0xcc] sm:$0xf]
  %v3229 = vld [vmem:[%s4 + $0xd0] sm:$0xf]
  %v3230 = vld [vmem:[%s4 + $0xd4] sm:$0xf]
  %v3231 = vld [vmem:[%s4 + $0xd8] sm:$0xf]
  %v3232 = vld [vmem:[%s4 + $0xdc] sm:$0xf]
  %v3233 = vld [vmem:[%s4 + $0xe0] sm:$0xf]
  %v3234 = vld [vmem:[%s4 + $0xe4] sm:$0xf]
  %v3235 = vld [vmem:[%s4 + $0xe8] sm:$0xf]
  %v3236 = vld [vmem:[%s4 + $0xec] sm:$0xf]
  %v3237 = vld [vmem:[%s4 + $0xf0] sm:$0xf]
  %v3238 = vld [vmem:[%s4 + $0xf4] sm:$0xf]
  %v3239 = vld [vmem:[%s4 + $0xf8] sm:$0xf]
  %v3240 = vld [vmem:[%s4 + $0xfc] sm:$0xf]
  %v3241 = vld [vmem:[%s4 + $0x100] sm:$0xf]
  %v3242 = vld [vmem:[%s4 + $0x104] sm:$0xf]
  %v3243 = vld [vmem:[%s4 + $0x108] sm:$0xf]
  %v3244 = vld [vmem:[%s4 + $0x10c] sm:$0xf]
  %v3245 = vld [vmem:[%s4 + $0x110] sm:$0xf]
  %v3246 = vld [vmem:[%s4 + $0x114] sm:$0xf]
  %v3247 = vld [vmem:[%s4 + $0x118] sm:$0xf]
  %v3248 = vld [vmem:[%s4 + $0x11c] sm:$0xf]
  %v3249 = vld [vmem:[%s4 + $0x120] sm:$0xf]
  %v3250 = vld [vmem:[%s4 + $0x124] sm:$0xf]
  %v3251 = vld [vmem:[%s4 + $0x128] sm:$0xf]
  %v3252 = vld [vmem:[%s4 + $0x12c] sm:$0xf]
  %v3253 = vld [vmem:[%s4 + $0x130] sm:$0xf]
  %v3254 = vld [vmem:[%s4 + $0x134] sm:$0xf]
  %v3255 = vld [vmem:[%s4 + $0x138] sm:$0xf]
  %v3256 = vld [vmem:[%s4 + $0x13c] sm:$0xf]
  %v3257 = vld [vmem:[%s4 + $0x140] sm:$0xf]
  %v3258 = vld [vmem:[%s4 + $0x144] sm:$0xf]
  %v3259 = vld [vmem:[%s4 + $0x148] sm:$0xf]
  %v3260 = vld [vmem:[%s4 + $0x14c] sm:$0xf]
  %v3261 = vld [vmem:[%s4 + $0x150] sm:$0xf]
  %v3262 = vld [vmem:[%s4 + $0x154] sm:$0xf]
  %v3263 = vld [vmem:[%s4 + $0x158] sm:$0xf]
  %v3264 = vld [vmem:[%s4 + $0x15c] sm:$0xf]
  %v3265 = vld [vmem:[%s4 + $0x160] sm:$0xf]
  %v3266 = vld [vmem:[%s4 + $0x164] sm:$0xf]
  %v3267 = vld [vmem:[%s4 + $0x168] sm:$0xf]
  %v3268 = vld [vmem:[%s4 + $0x16c] sm:$0xf]
  %v3269 = vld [vmem:[%s4 + $0x170] sm:$0xf]
  %v3270 = vld [vmem:[%s4 + $0x174] sm:$0xf]
  %v3271 = vld [vmem:[%s4 + $0x178] sm:$0xf]
  %v3272 = vld [vmem:[%s4 + $0x17c] sm:$0xf]
  %v3273 = vld [vmem:[%s4 + $0x180] sm:$0xf]
  %v3274 = vld [vmem:[%s4 + $0x184] sm:$0xf]
  %v3275 = vld [vmem:[%s4 + $0x188] sm:$0xf]
  %v3276 = vld [vmem:[%s4 + $0x18c] sm:$0xf]
  %v3277 = vld [vmem:[%s4 + $0x190] sm:$0xf]
  %v3278 = vld [vmem:[%s4 + $0x194] sm:$0xf]
  %v3279 = vld [vmem:[%s4 + $0x198] sm:$0xf]
  %v3280 = vld [vmem:[%s4 + $0x19c] sm:$0xf]
  %v3281 = vld [vmem:[%s4 + $0x1a0] sm:$0xf]
  %v3282 = vld [vmem:[%s4 + $0x1a4] sm:$0xf]
  %v3283 = vld [vmem:[%s4 + $0x1a8] sm:$0xf]
  %v3284 = vld [vmem:[%s4 + $0x1ac] sm:$0xf]
  %v3285 = vld [vmem:[%s4 + $0x1b0] sm:$0xf]
  %v3286 = vld [vmem:[%s4 + $0x1b4] sm:$0xf]
  %v3287 = vld [vmem:[%s4 + $0x1b8] sm:$0xf]
  %v3288 = vld [vmem:[%s4 + $0x1bc] sm:$0xf]
  %v3289 = vld [vmem:[%s4 + $0x1c0] sm:$0xf]
  %v3290 = vld [vmem:[%s4 + $0x1c4] sm:$0xf]
  %v3291 = vld [vmem:[%s4 + $0x1c8] sm:$0xf]
  %v3292 = vld [vmem:[%s4 + $0x1cc] sm:$0xf]
  %v3293 = vld [vmem:[%s4 + $0x1d0] sm:$0xf]
  %v3294 = vld [vmem:[%s4 + $0x1d4] sm:$0xf]
  %v3295 = vld [vmem:[%s4 + $0x1d8] sm:$0xf]
  %v3296 = vld [vmem:[%s4 + $0x1dc] sm:$0xf]
  %v3297 = vld [vmem:[%s4 + $0x1e0] sm:$0xf]
  %v3298 = vld [vmem:[%s4 + $0x1e4] sm:$0xf]
  %v3299 = vld [vmem:[%s4 + $0x1e8] sm:$0xf]
  %v3300 = vld [vmem:[%s4 + $0x1ec] sm:$0xf]
  %v3301 = vld [vmem:[%s4 + $0x1f0] sm:$0xf]
  %v3302 = vld [vmem:[%s4 + $0x1f4] sm:$0xf]
  %v3303 = vld [vmem:[%s4 + $0x1f8] sm:$0xf]
  %v3304 = vld [vmem:[%s4 + $0x1fc] sm:$0xf]
  %v3305 = vld [vmem:[%s5] sm:$0x1]
  %v3307 = vlaneseq
  %v3308 = vshrl.u32 %v3307, 7
  %v3309 = vsub.s32 0, %v3308
  %v3310 = vrot.slane %v3305, %v3309
  %v3440 = vunpack.c.l.b16 %v3177
  %v3441 = vunpack.c.l.b16 %v3178
  %v3442 = vunpack.c.l.b16 %v3179
  %v3443 = vunpack.c.l.b16 %v3180
  %v3444 = vunpack.c.l.b16 %v3181
  %v3445 = vunpack.c.l.b16 %v3182
  %v3446 = vunpack.c.l.b16 %v3183
  %v3447 = vunpack.c.l.b16 %v3184
  %v3448 = vunpack.c.l.b16 %v3185
  %v3449 = vunpack.c.l.b16 %v3186
  %v3450 = vunpack.c.l.b16 %v3187
  %v3451 = vunpack.c.l.b16 %v3188
  %v3452 = vunpack.c.l.b16 %v3189
  %v3453 = vunpack.c.l.b16 %v3190
  %v3454 = vunpack.c.l.b16 %v3191
  %v3455 = vunpack.c.l.b16 %v3192
  %v3456 = vunpack.c.l.b16 %v3193
  %v3457 = vunpack.c.l.b16 %v3194
  %v3458 = vunpack.c.l.b16 %v3195
  %v3459 = vunpack.c.l.b16 %v3196
  %v3460 = vunpack.c.l.b16 %v3197
  %v3461 = vunpack.c.l.b16 %v3198
  %v3462 = vunpack.c.l.b16 %v3199
  %v3463 = vunpack.c.l.b16 %v3200
  %v3464 = vunpack.c.l.b16 %v3201
  %v3465 = vunpack.c.l.b16 %v3202
  %v3466 = vunpack.c.l.b16 %v3203
  %v3467 = vunpack.c.l.b16 %v3204
  %v3468 = vunpack.c.l.b16 %v3205
  %v3469 = vunpack.c.l.b16 %v3206
  %v3470 = vunpack.c.l.b16 %v3207
  %v3471 = vunpack.c.l.b16 %v3208
  %v3472 = vunpack.c.l.b16 %v3209
  %v3473 = vunpack.c.l.b16 %v3210
  %v3474 = vunpack.c.l.b16 %v3211
  %v3475 = vunpack.c.l.b16 %v3212
  %v3476 = vunpack.c.l.b16 %v3213
  %v3477 = vunpack.c.l.b16 %v3214
  %v3478 = vunpack.c.l.b16 %v3215
  %v3479 = vunpack.c.l.b16 %v3216
  %v3480 = vunpack.c.l.b16 %v3217
  %v3481 = vunpack.c.l.b16 %v3218
  %v3482 = vunpack.c.l.b16 %v3219
  %v3483 = vunpack.c.l.b16 %v3220
  %v3484 = vunpack.c.l.b16 %v3221
  %v3485 = vunpack.c.l.b16 %v3222
  %v3486 = vunpack.c.l.b16 %v3223
  %v3487 = vunpack.c.l.b16 %v3224
  %v3488 = vunpack.c.l.b16 %v3225
  %v3489 = vunpack.c.l.b16 %v3226
  %v3490 = vunpack.c.l.b16 %v3227
  %v3491 = vunpack.c.l.b16 %v3228
  %v3492 = vunpack.c.l.b16 %v3229
  %v3493 = vunpack.c.l.b16 %v3230
  %v3494 = vunpack.c.l.b16 %v3231
  %v3495 = vunpack.c.l.b16 %v3232
  %v3496 = vunpack.c.l.b16 %v3233
  %v3497 = vunpack.c.l.b16 %v3234
  %v3498 = vunpack.c.l.b16 %v3235
  %v3499 = vunpack.c.l.b16 %v3236
  %v3500 = vunpack.c.l.b16 %v3237
  %v3501 = vunpack.c.l.b16 %v3238
  %v3502 = vunpack.c.l.b16 %v3239
  %v3503 = vunpack.c.l.b16 %v3240
  %v3504 = vunpack.c.l.b16 %v3241
  %v3505 = vunpack.c.l.b16 %v3242
  %v3506 = vunpack.c.l.b16 %v3243
  %v3507 = vunpack.c.l.b16 %v3244
  %v3508 = vunpack.c.l.b16 %v3245
  %v3509 = vunpack.c.l.b16 %v3246
  %v3510 = vunpack.c.l.b16 %v3247
  %v3511 = vunpack.c.l.b16 %v3248
  %v3512 = vunpack.c.l.b16 %v3249
  %v3513 = vunpack.c.l.b16 %v3250
  %v3514 = vunpack.c.l.b16 %v3251
  %v3515 = vunpack.c.l.b16 %v3252
  %v3516 = vunpack.c.l.b16 %v3253
  %v3517 = vunpack.c.l.b16 %v3254
  %v3518 = vunpack.c.l.b16 %v3255
  %v3519 = vunpack.c.l.b16 %v3256
  %v3520 = vunpack.c.l.b16 %v3257
  %v3521 = vunpack.c.l.b16 %v3258
  %v3522 = vunpack.c.l.b16 %v3259
  %v3523 = vunpack.c.l.b16 %v3260
  %v3524 = vunpack.c.l.b16 %v3261
  %v3525 = vunpack.c.l.b16 %v3262
  %v3526 = vunpack.c.l.b16 %v3263
  %v3527 = vunpack.c.l.b16 %v3264
  %v3528 = vunpack.c.l.b16 %v3265
  %v3529 = vunpack.c.l.b16 %v3266
  %v3530 = vunpack.c.l.b16 %v3267
  %v3531 = vunpack.c.l.b16 %v3268
  %v3532 = vunpack.c.l.b16 %v3269
  %v3533 = vunpack.c.l.b16 %v3270
  %v3534 = vunpack.c.l.b16 %v3271
  %v3535 = vunpack.c.l.b16 %v3272
  %v3536 = vunpack.c.l.b16 %v3273
  %v3537 = vunpack.c.l.b16 %v3274
  %v3538 = vunpack.c.l.b16 %v3275
  %v3539 = vunpack.c.l.b16 %v3276
  %v3540 = vunpack.c.l.b16 %v3277
  %v3541 = vunpack.c.l.b16 %v3278
  %v3542 = vunpack.c.l.b16 %v3279
  %v3543 = vunpack.c.l.b16 %v3280
  %v3544 = vunpack.c.l.b16 %v3281
  %v3545 = vunpack.c.l.b16 %v3282
  %v3546 = vunpack.c.l.b16 %v3283
  %v3547 = vunpack.c.l.b16 %v3284
  %v3548 = vunpack.c.l.b16 %v3285
  %v3549 = vunpack.c.l.b16 %v3286
  %v3550 = vunpack.c.l.b16 %v3287
  %v3551 = vunpack.c.l.b16 %v3288
  %v3552 = vunpack.c.l.b16 %v3289
  %v3553 = vunpack.c.l.b16 %v3290
  %v3554 = vunpack.c.l.b16 %v3291
  %v3555 = vunpack.c.l.b16 %v3292
  %v3556 = vunpack.c.l.b16 %v3293
  %v3557 = vunpack.c.l.b16 %v3294
  %v3558 = vunpack.c.l.b16 %v3295
  %v3559 = vunpack.c.l.b16 %v3296
  %v3560 = vunpack.c.l.b16 %v3297
  %v3561 = vunpack.c.l.b16 %v3298
  %v3562 = vunpack.c.l.b16 %v3299
  %v3563 = vunpack.c.l.b16 %v3300
  %v3564 = vunpack.c.l.b16 %v3301
  %v3565 = vunpack.c.l.b16 %v3302
  %v3566 = vunpack.c.l.b16 %v3303
  %v3567 = vunpack.c.l.b16 %v3304
  %v3568 = vpack.c.b16 %v3441, %v3440
  %v3569 = vpack.c.b16 %v3443, %v3442
  %v3570 = vpack.c.b16 %v3445, %v3444
  %v3571 = vpack.c.b16 %v3447, %v3446
  %v3572 = vpack.c.b16 %v3449, %v3448
  %v3573 = vpack.c.b16 %v3451, %v3450
  %v3574 = vpack.c.b16 %v3453, %v3452
  %v3575 = vpack.c.b16 %v3455, %v3454
  %v3576 = vpack.c.b16 %v3457, %v3456
  %v3577 = vpack.c.b16 %v3459, %v3458
  %v3578 = vpack.c.b16 %v3461, %v3460
  %v3579 = vpack.c.b16 %v3463, %v3462
  %v3580 = vpack.c.b16 %v3465, %v3464
  %v3581 = vpack.c.b16 %v3467, %v3466
  %v3582 = vpack.c.b16 %v3469, %v3468
  %v3583 = vpack.c.b16 %v3471, %v3470
  %v3584 = vpack.c.b16 %v3473, %v3472
  %v3585 = vpack.c.b16 %v3475, %v3474
  %v3586 = vpack.c.b16 %v3477, %v3476
  %v3587 = vpack.c.b16 %v3479, %v3478
  %v3588 = vpack.c.b16 %v3481, %v3480
  %v3589 = vpack.c.b16 %v3483, %v3482
  %v3590 = vpack.c.b16 %v3485, %v3484
  %v3591 = vpack.c.b16 %v3487, %v3486
  %v3592 = vpack.c.b16 %v3489, %v3488
  %v3593 = vpack.c.b16 %v3491, %v3490
  %v3594 = vpack.c.b16 %v3493, %v3492
  %v3595 = vpack.c.b16 %v3495, %v3494
  %v3596 = vpack.c.b16 %v3497, %v3496
  %v3597 = vpack.c.b16 %v3499, %v3498
  %v3598 = vpack.c.b16 %v3501, %v3500
  %v3599 = vpack.c.b16 %v3503, %v3502
  %v3600 = vpack.c.b16 %v3505, %v3504
  %v3601 = vpack.c.b16 %v3507, %v3506
  %v3602 = vpack.c.b16 %v3509, %v3508
  %v3603 = vpack.c.b16 %v3511, %v3510
  %v3604 = vpack.c.b16 %v3513, %v3512
  %v3605 = vpack.c.b16 %v3515, %v3514
  %v3606 = vpack.c.b16 %v3517, %v3516
  %v3607 = vpack.c.b16 %v3519, %v3518
  %v3608 = vpack.c.b16 %v3521, %v3520
  %v3609 = vpack.c.b16 %v3523, %v3522
  %v3610 = vpack.c.b16 %v3525, %v3524
  %v3611 = vpack.c.b16 %v3527, %v3526
  %v3612 = vpack.c.b16 %v3529, %v3528
  %v3613 = vpack.c.b16 %v3531, %v3530
  %v3614 = vpack.c.b16 %v3533, %v3532
  %v3615 = vpack.c.b16 %v3535, %v3534
  %v3616 = vpack.c.b16 %v3537, %v3536
  %v3617 = vpack.c.b16 %v3539, %v3538
  %v3618 = vpack.c.b16 %v3541, %v3540
  %v3619 = vpack.c.b16 %v3543, %v3542
  %v3620 = vpack.c.b16 %v3545, %v3544
  %v3621 = vpack.c.b16 %v3547, %v3546
  %v3622 = vpack.c.b16 %v3549, %v3548
  %v3623 = vpack.c.b16 %v3551, %v3550
  %v3624 = vpack.c.b16 %v3553, %v3552
  %v3625 = vpack.c.b16 %v3555, %v3554
  %v3626 = vpack.c.b16 %v3557, %v3556
  %v3627 = vpack.c.b16 %v3559, %v3558
  %v3628 = vpack.c.b16 %v3561, %v3560
  %v3629 = vpack.c.b16 %v3563, %v3562
  %v3630 = vpack.c.b16 %v3565, %v3564
  %v3631 = vpack.c.b16 %v3567, %v3566
  %3696 = vmatprep.subr.bf16.mxu0 0
  %3697 = vmatpush1.bf16.msra.mxu0 %v3575
  %3698 = vmatprep.subr.bf16.mxu0 0
  %3699 = vmatpush1.bf16.msra.mxu0 %v3574
  %3700 = vmatprep.subr.bf16.mxu0 0
  %3701 = vmatpush1.bf16.msra.mxu0 %v3573
  %3702 = vmatprep.subr.bf16.mxu0 0
  %3703 = vmatpush1.bf16.msra.mxu0 %v3572
  %3704 = vmatprep.subr.bf16.mxu0 0
  %3705 = vmatpush1.bf16.msra.mxu0 %v3571
  %3706 = vmatprep.subr.bf16.mxu0 0
  %3707 = vmatpush1.bf16.msra.mxu0 %v3570
  %3708 = vmatprep.subr.bf16.mxu0 0
  %3709 = vmatpush1.bf16.msra.mxu0 %v3569
  %3710 = vmatprep.subr.bf16.mxu0 0
  %3711 = vmatpush1.bf16.msra.mxu0 %v3568
  %3712 = vmatprep.subr.bf16.mxu0 0
  %3713 = vmatpush2.bf16.msra.mxu0 %v3583
  %3714 = vmatprep.subr.bf16.mxu0 0
  %3715 = vmatpush2.bf16.msra.mxu0 %v3582
  %3716 = vmatprep.subr.bf16.mxu0 0
  %3717 = vmatpush2.bf16.msra.mxu0 %v3581
  %3718 = vmatprep.subr.bf16.mxu0 0
  %3719 = vmatpush2.bf16.msra.mxu0 %v3580
  %3720 = vmatprep.subr.bf16.mxu0 0
  %3721 = vmatpush2.bf16.msra.mxu0 %v3579
  %3722 = vmatprep.subr.bf16.mxu0 0
  %3723 = vmatpush2.bf16.msra.mxu0 %v3578
  %3724 = vmatprep.subr.bf16.mxu0 0
  %3725 = vmatpush2.bf16.msra.mxu0 %v3577
  %3726 = vmatprep.subr.bf16.mxu0 0
  %3727 = vmatpush2.bf16.msra.mxu0 %v3576
  %3728 = vmatprep.mubr.bf16.mxu0 %v3170
  %3729 = vmatmul.mubr.bf16.gmra.mxu0 %v3169
  %v3730 = vpop.f32.mrf.mxu0
  %v3731 = vadd.f32 %v3310, %v3730
  %v3732 = vpop.f32.mrf.mxu0
  %v3733 = vpop.f32.mrf.mxu0
  %v3734 = vpop.f32.mrf.mxu0
  %3735 = vdwg.mxu0
  %3736 = vmatprep.subr.bf16.mxu0 0
  %3737 = vmatpush1.bf16.msra.mxu0 %v3591
  %3738 = vmatprep.subr.bf16.mxu0 0
  %3739 = vmatpush1.bf16.msra.mxu0 %v3590
  %3740 = vmatprep.subr.bf16.mxu0 0
  %3741 = vmatpush1.bf16.msra.mxu0 %v3589
  %3742 = vmatprep.subr.bf16.mxu0 0
  %3743 = vmatpush1.bf16.msra.mxu0 %v3588
  %3744 = vmatprep.subr.bf16.mxu0 0
  %3745 = vmatpush1.bf16.msra.mxu0 %v3587
  %3746 = vmatprep.subr.bf16.mxu0 0
  %3747 = vmatpush1.bf16.msra.mxu0 %v3586
  %3748 = vmatprep.subr.bf16.mxu0 0
  %3749 = vmatpush1.bf16.msra.mxu0 %v3585
  %3750 = vmatprep.subr.bf16.mxu0 0
  %3751 = vmatpush1.bf16.msra.mxu0 %v3584
  %3752 = vmatprep.subr.bf16.mxu0 0
  %3753 = vmatpush2.bf16.msra.mxu0 %v3599
  %3754 = vmatprep.subr.bf16.mxu0 0
  %3755 = vmatpush2.bf16.msra.mxu0 %v3598
  %3756 = vmatprep.subr.bf16.mxu0 0
  %3757 = vmatpush2.bf16.msra.mxu0 %v3597
  %3758 = vmatprep.subr.bf16.mxu0 0
  %3759 = vmatpush2.bf16.msra.mxu0 %v3596
  %3760 = vmatprep.subr.bf16.mxu0 0
  %3761 = vmatpush2.bf16.msra.mxu0 %v3595
  %3762 = vmatprep.subr.bf16.mxu0 0
  %3763 = vmatpush2.bf16.msra.mxu0 %v3594
  %3764 = vmatprep.subr.bf16.mxu0 0
  %3765 = vmatpush2.bf16.msra.mxu0 %v3593
  %3766 = vmatprep.subr.bf16.mxu0 0
  %3767 = vmatpush2.bf16.msra.mxu0 %v3592
  %3768 = vmatprep.mubr.bf16.mxu0 %v3172
  %3769 = vmatmul.mubr.bf16.gmra.mxu0 %v3171
  %v3770 = vpop.f32.mrf.mxu0
  %v3771 = vadd.f32 %v3731, %v3770
  %v3772 = vpop.f32.mrf.mxu0
  %v3773 = vpop.f32.mrf.mxu0
  %v3774 = vpop.f32.mrf.mxu0
  %3775 = vdwg.mxu0
  %3776 = vmatprep.subr.bf16.mxu0 0
  %3777 = vmatpush1.bf16.msra.mxu0 %v3607
  %3778 = vmatprep.subr.bf16.mxu0 0
  %3779 = vmatpush1.bf16.msra.mxu0 %v3606
  %3780 = vmatprep.subr.bf16.mxu0 0
  %3781 = vmatpush1.bf16.msra.mxu0 %v3605
  %3782 = vmatprep.subr.bf16.mxu0 0
  %3783 = vmatpush1.bf16.msra.mxu0 %v3604
  %3784 = vmatprep.subr.bf16.mxu0 0
  %3785 = vmatpush1.bf16.msra.mxu0 %v3603
  %3786 = vmatprep.subr.bf16.mxu0 0
  %3787 = vmatpush1.bf16.msra.mxu0 %v3602
  %3788 = vmatprep.subr.bf16.mxu0 0
  %3789 = vmatpush1.bf16.msra.mxu0 %v3601
  %3790 = vmatprep.subr.bf16.mxu0 0
  %3791 = vmatpush1.bf16.msra.mxu0 %v3600
  %3792 = vmatprep.subr.bf16.mxu0 0
  %3793 = vmatpush2.bf16.msra.mxu0 %v3615
  %3794 = vmatprep.subr.bf16.mxu0 0
  %3795 = vmatpush2.bf16.msra.mxu0 %v3614
  %3796 = vmatprep.subr.bf16.mxu0 0
  %3797 = vmatpush2.bf16.msra.mxu0 %v3613
  %3798 = vmatprep.subr.bf16.mxu0 0
  %3799 = vmatpush2.bf16.msra.mxu0 %v3612
  %3800 = vmatprep.subr.bf16.mxu0 0
  %3801 = vmatpush2.bf16.msra.mxu0 %v3611
  %3802 = vmatprep.subr.bf16.mxu0 0
  %3803 = vmatpush2.bf16.msra.mxu0 %v3610
  %3804 = vmatprep.subr.bf16.mxu0 0
  %3805 = vmatpush2.bf16.msra.mxu0 %v3609
  %3806 = vmatprep.subr.bf16.mxu0 0
  %3807 = vmatpush2.bf16.msra.mxu0 %v3608
  %3808 = vmatprep.mubr.bf16.mxu0 %v3174
  %3809 = vmatmul.mubr.bf16.gmra.mxu0 %v3173
  %v3810 = vpop.f32.mrf.mxu0
  %v3811 = vadd.f32 %v3771, %v3810
  %v3812 = vpop.f32.mrf.mxu0
  %v3813 = vpop.f32.mrf.mxu0
  %v3814 = vpop.f32.mrf.mxu0
  %3815 = vdwg.mxu0
  %3816 = vmatprep.subr.bf16.mxu0 0
  %3817 = vmatpush1.bf16.msra.mxu0 %v3623
  %3818 = vmatprep.subr.bf16.mxu0 0
  %3819 = vmatpush1.bf16.msra.mxu0 %v3622
  %3820 = vmatprep.subr.bf16.mxu0 0
  %3821 = vmatpush1.bf16.msra.mxu0 %v3621
  %3822 = vmatprep.subr.bf16.mxu0 0
  %3823 = vmatpush1.bf16.msra.mxu0 %v3620
  %3824 = vmatprep.subr.bf16.mxu0 0
  %3825 = vmatpush1.bf16.msra.mxu0 %v3619
  %3826 = vmatprep.subr.bf16.mxu0 0
  %3827 = vmatpush1.bf16.msra.mxu0 %v3618
  %3828 = vmatprep.subr.bf16.mxu0 0
  %3829 = vmatpush1.bf16.msra.mxu0 %v3617
  %3830 = vmatprep.subr.bf16.mxu0 0
  %3831 = vmatpush1.bf16.msra.mxu0 %v3616
  %3832 = vmatprep.subr.bf16.mxu0 0
  %3833 = vmatpush2.bf16.msra.mxu0 %v3631
  %3834 = vmatprep.subr.bf16.mxu0 0
  %3835 = vmatpush2.bf16.msra.mxu0 %v3630
  %3836 = vmatprep.subr.bf16.mxu0 0
  %3837 = vmatpush2.bf16.msra.mxu0 %v3629
  %3838 = vmatprep.subr.bf16.mxu0 0
  %3839 = vmatpush2.bf16.msra.mxu0 %v3628
  %3840 = vmatprep.subr.bf16.mxu0 0
  %3841 = vmatpush2.bf16.msra.mxu0 %v3627
  %3842 = vmatprep.subr.bf16.mxu0 0
  %3843 = vmatpush2.bf16.msra.mxu0 %v3626
  %3844 = vmatprep.subr.bf16.mxu0 0
  %3845 = vmatpush2.bf16.msra.mxu0 %v3625
  %3846 = vmatprep.subr.bf16.mxu0 0
  %3847 = vmatpush2.bf16.msra.mxu0 %v3624
  %3848 = vmatprep.mubr.bf16.mxu0 %v3176
  %3849 = vmatmul.mubr.bf16.gmra.mxu0 %v3175
  %v3850 = vpop.f32.mrf.mxu0
  %v3851 = vadd.f32 %v3811, %v3850
  %v3852 = vpop.f32.mrf.mxu0
  %v3853 = vpop.f32.mrf.mxu0
  %v3854 = vpop.f32.mrf.mxu0
  %3855 = vdwg.mxu0
  %vm3856 = vcmask 254976
  %3857 = vst.msk [vmem:[%s6] sm:$0x3] %vm3856, %v3851
  // Predicated region
  $region26: #{lidar_encoder_forward.9} parent=0 // pred_check
    _
  $region27: #{lidar_encoder_forward.9} parent=0 // pred_check_branch
    %3859 = sbr.rel (0) target = $region29
  $region28: #{lidar_encoder_forward.9} parent=0 // pred_region
    _
  $region29: #{lidar_encoder_forward.9} parent=0 // pred_fallthru
    _
  // Predicated region
  $region30: #{lidar_encoder_forward.9} parent=0 // pred_check
    _
  $region31: #{lidar_encoder_forward.9} parent=0 // pred_check_branch
    %3861 = sbr.rel (0) target = $region33
  $region32: #{lidar_encoder_forward.9} parent=0 // pred_region
    _
  $region33: #{lidar_encoder_forward.9} parent=0 // pred_fallthru
    _

</llo_original>
